<compile_context>
chip_gen: v6e
topology: v6e:2x2x1
jax: 0.10.0
libtpu: 0.0.40
codegen_flags: <defaults>
</compile_context>

<pallas_src>
import functools

import jax
import jax.numpy as jnp
from jax.experimental import pallas as pl
from jax.experimental.pallas import tpu as pltpu


def _relation_fusing_kernel(x_ref, w_ref, sel_ref, bcast_ref, out_ref, *,
                            num_relations, negative_slope):
    # x_ref:     (R, tN, H*Dn)    node features, heads folded into lanes
    # w_ref:     (R, H*Dn, H*Dn)  block-diagonal per-relation node weights
    # sel_ref:   (R, H*Dn, H)     per-relation score selector (holds relp per head)
    # bcast_ref: (H, H*Dn)        0/1 head -> lane-block broadcast matrix
    # out_ref:   (tN, H*Dn)       fused output (lane-dense)
    R = num_relations
    bcast = bcast_ref[...]

    m = None    # (tN, H) running max of leaky-relu'd scores
    l = None    # (tN, H) running softmax denominator
    acc = None  # (tN, H*Dn) running weighted feature accumulator
    for r in range(R):
        feats = jnp.dot(x_ref[r], w_ref[r],
                        preferred_element_type=jnp.float32)            # (tN, H*Dn)
        s = jnp.dot(feats, sel_ref[r],
                    preferred_element_type=jnp.float32)                # (tN, H)
        s = jnp.where(s >= 0, s, negative_slope * s)                   # leaky relu
        if r == 0:
            m = s
            l = jnp.ones_like(s)
            acc = feats
        else:
            m_new = jnp.maximum(m, s)
            alpha = jnp.exp(m - m_new)                                 # (tN, H)
            p = jnp.exp(s - m_new)                                     # (tN, H)
            l = alpha * l + p
            alpha_b = jnp.dot(alpha, bcast, preferred_element_type=jnp.float32)
            p_b = jnp.dot(p, bcast, preferred_element_type=jnp.float32)
            acc = alpha_b * acc + p_b * feats
            m = m_new

    inv = pl.reciprocal(l, approx=True)                                # (tN, H)
    inv_b = jnp.dot(inv, bcast, preferred_element_type=jnp.float32)    # (tN, H*Dn)
    out_ref[...] = (acc * inv_b).astype(out_ref.dtype)


def relation_fusing(dst_node_features,
                    dst_relation_embeddings,
                    dst_node_feature_transformation_weight,
                    dst_relation_embedding_transformation_weight,
                    *,
                    num_heads, node_hidden_dim, relation_hidden_dim,
                    negative_slope=0.2, tile_n=512):
    """Pallas implementation of RelationFusing.forward (dropout p=0 -> identity)."""
    if len(dst_node_features) == 1:
        # Mirrors the PyTorch module's short-circuit (raw features returned).
        return dst_node_features[0]

    R = len(dst_node_features)
    N = dst_node_features[0].shape[0]
    H, Dn, Dr = num_heads, node_hidden_dim, relation_hidden_dim
    HDn = H * Dn

    tile_n = min(tile_n, N)
    assert N % tile_n == 0, (N, tile_n)

    # (R, N, H*Dn): heads stay folded in the lane axis -> no HBM transpose pass.
    x = jnp.stack(dst_node_features, 0).reshape(R, N, HDn)

    w = jnp.stack(dst_node_feature_transformation_weight, 0).reshape(R, H, Dn, Dn)
    rel = jnp.stack(dst_relation_embeddings, 0).reshape(R, H, Dr)
    rw = jnp.stack(dst_relation_embedding_transformation_weight, 0).reshape(R, H, Dr, Dn)

    eye_h = jnp.eye(H, dtype=jnp.float32)
    # Block-diagonal node weight: one (H*Dn, H*Dn) matmul per relation.
    w_bd = jnp.einsum('rhde,hg->rhdge', w, eye_h).reshape(R, HDn, HDn)
    # Relation projection hoisted out of the kernel and baked into a selector so
    # the attention logits are feats @ sel[r] -> (tN, H).
    relp = jnp.einsum('rhc,rhcd->rhd', rel, rw)                     # (R, H, Dn)
    sel = jnp.einsum('rhd,hg->rhdg', relp, eye_h).reshape(R, HDn, H)
    # Head -> lane-block broadcast matrix: (tN, H) @ bcast -> (tN, H*Dn).
    bcast = jnp.repeat(eye_h, Dn, axis=1)                           # (H, H*Dn)

    kernel = functools.partial(_relation_fusing_kernel,
                               num_relations=R,
                               negative_slope=negative_slope)

    out = pl.pallas_call(
        kernel,
        out_shape=jax.ShapeDtypeStruct((N, HDn), jnp.float32),
        grid_spec=pltpu.PrefetchScalarGridSpec(
            num_scalar_prefetch=0,
            grid=(N // tile_n,),
            in_specs=[
                pl.BlockSpec((R, tile_n, HDn), lambda i: (0, i, 0)),
                pl.BlockSpec((R, HDn, HDn), lambda i: (0, 0, 0)),
                pl.BlockSpec((R, HDn, H), lambda i: (0, 0, 0)),
                pl.BlockSpec((H, HDn), lambda i: (0, 0)),
            ],
            out_specs=pl.BlockSpec((tile_n, HDn), lambda i: (i, 0)),
        ),
        compiler_params=pltpu.CompilerParams(
            dimension_semantics=("parallel",)),
    )(x, w_bd, sel, bcast)

    return out   # already (N, H*Dn), lane-dense


def _reference(dst_node_features, dst_relation_embeddings, node_w, rel_w,
               *, num_heads, node_hidden_dim, relation_hidden_dim,
               negative_slope=0.2):
    """Plain-JAX mirror of the PyTorch forward, for verification."""
    R = len(dst_node_features)
    N = dst_node_features[0].shape[0]
    H, Dn, Dr = num_heads, node_hidden_dim, relation_hidden_dim
    x = jnp.stack(dst_node_features, 0).reshape(R, N, H, Dn)
    rel = jnp.stack(dst_relation_embeddings, 0).reshape(R, H, Dr)
    w = jnp.stack(node_w, 0).reshape(R, H, Dn, Dn)
    rw = jnp.stack(rel_w, 0).reshape(R, H, Dr, Dn)
    feats = jnp.einsum('abcd,acde->abce', x, w)
    relp = jnp.einsum('abc,abcd->abd', rel, rw)
    scores = jnp.sum(feats * relp[:, None], axis=-1, keepdims=True)
    scores = jnp.where(scores >= 0, scores, negative_slope * scores)
    attn = jax.nn.softmax(scores, axis=0)
    fused = jnp.sum(feats * attn, axis=0)
    return fused.reshape(N, H * Dn)


if __name__ == "__main__":
    # Small, deterministic problem. N=1024 with tile_n=512 gives a grid of 2
    # (keeps both v7x TensorCores busy via the "parallel" axis).
    R = 3                 # number of relations
    N = 1024              # number of destination nodes
    H = 4                 # num_heads
    Dn = 32               # node_hidden_dim   (H*Dn = 128 -> lane-dense)
    Dr = 16               # relation_hidden_dim

    key = jax.random.PRNGKey(0)
    keys = jax.random.split(key, 4 * R)

    dst_node_features = [
        jax.random.normal(keys[i], (N, H * Dn), dtype=jnp.float32) for i in range(R)
    ]
    dst_relation_embeddings = [
        jax.random.normal(keys[R + i], (H * Dr,), dtype=jnp.float32) for i in range(R)
    ]
    node_w = [
        0.1 * jax.random.normal(keys[2 * R + i], (H, Dn, Dn), dtype=jnp.float32)
        for i in range(R)
    ]
    rel_w = [
        0.1 * jax.random.normal(keys[3 * R + i], (H, Dr, Dn), dtype=jnp.float32)
        for i in range(R)
    ]

    out = relation_fusing(
        dst_node_features, dst_relation_embeddings, node_w, rel_w,
        num_heads=H, node_hidden_dim=Dn, relation_hidden_dim=Dr,
        negative_slope=0.2, tile_n=512)
    out = jax.block_until_ready(out)

    ref = _reference(
        dst_node_features, dst_relation_embeddings, node_w, rel_w,
        num_heads=H, node_hidden_dim=Dn, relation_hidden_dim=Dr,
        negative_slope=0.2)

    assert out.shape == (N, H * Dn), out.shape
    assert jnp.all(jnp.isfinite(out))
    assert jnp.allclose(out, ref, rtol=1e-2, atol=1e-2), float(
        jnp.max(jnp.abs(out - ref)))

    # TODO(synk): dropout omitted — module default p=0.0 makes it an identity.
    print("KERNEL_OK")
</pallas_src>

<mosaic_0001>
module attributes {stable_mosaic.version = 11 : i64} {
  func.func @_relation_fusing_kernel(%arg0: i32, %arg1: memref<3x512x128xf32, #tpu.memory_space<vmem>>, %arg2: memref<3x128x128xf32, #tpu.memory_space<vmem>>, %arg3: memref<3x128x4xf32, #tpu.memory_space<vmem>>, %arg4: memref<4x128xf32, #tpu.memory_space<vmem>>, %arg5: memref<512x128xf32, #tpu.memory_space<vmem>>) attributes {dimension_semantics = [#tpu.dimension_semantics<parallel>], iteration_bounds = array<i64: 2>, scalar_prefetch = 0 : i64, scratch_operands = 0 : i64, tpu.core_type = #tpu.core_type<tc>, window_params = [{transform_indices = @transform_0, window_bounds = array<i64: 3, 512, 128>}, {pipeline_mode = #tpu.pipeline_mode<synchronous>, transform_indices = @transform_1, window_bounds = array<i64: 3, 128, 128>}, {pipeline_mode = #tpu.pipeline_mode<synchronous>, transform_indices = @transform_2, window_bounds = array<i64: 3, 128, 4>}, {pipeline_mode = #tpu.pipeline_mode<synchronous>, transform_indices = @transform_3, window_bounds = array<i64: 4, 128>}, {transform_indices = @transform_4, window_bounds = array<i64: 512, 128>}]} {
    %c0 = arith.constant 0 : index
    %c0_0 = arith.constant 0 : index
    %0 = vector.load %arg4[%c0, %c0_0] : memref<4x128xf32, #tpu.memory_space<vmem>>, vector<4x128xf32>
    %c0_1 = arith.constant 0 : index
    %c0_2 = arith.constant 0 : index
    %c0_3 = arith.constant 0 : index
    %1 = vector.load %arg1[%c0_1, %c0_2, %c0_3] : memref<3x512x128xf32, #tpu.memory_space<vmem>>, vector<1x512x128xf32>
    %2 = vector.shape_cast %1 : vector<1x512x128xf32> to vector<512x128xf32>
    %c0_4 = arith.constant 0 : index
    %c0_5 = arith.constant 0 : index
    %c0_6 = arith.constant 0 : index
    %3 = vector.load %arg2[%c0_4, %c0_5, %c0_6] : memref<3x128x128xf32, #tpu.memory_space<vmem>>, vector<1x128x128xf32>
    %4 = vector.shape_cast %3 : vector<1x128x128xf32> to vector<128x128xf32>
    %cst = arith.constant dense<0.000000e+00> : vector<512x128xf32>
    %5 = tpu.matmul %2, %4, %cst {dimension_numbers = #tpu.dot_dimension_numbers<[1], [0], [0], [1], [0, 0, 1, 1], [], []>} : vector<512x128xf32>, vector<128x128xf32>, vector<512x128xf32> -> vector<512x128xf32>
    %c0_7 = arith.constant 0 : index
    %c0_8 = arith.constant 0 : index
    %c0_9 = arith.constant 0 : index
    %6 = vector.load %arg3[%c0_7, %c0_8, %c0_9] : memref<3x128x4xf32, #tpu.memory_space<vmem>>, vector<1x128x4xf32>
    %7 = vector.shape_cast %6 : vector<1x128x4xf32> to vector<128x4xf32>
    %cst_10 = arith.constant dense<0.000000e+00> : vector<512x4xf32>
    %8 = tpu.matmul %5, %7, %cst_10 {dimension_numbers = #tpu.dot_dimension_numbers<[1], [0], [0], [1], [0, 0, 1, 1], [], []>} : vector<512x128xf32>, vector<128x4xf32>, vector<512x4xf32> -> vector<512x4xf32>
    %cst_11 = arith.constant 0.000000e+00 : f32
    %9 = vector.broadcast %cst_11 : f32 to vector<512x4xf32>
    %10 = arith.cmpf oge, %8, %9 : vector<512x4xf32>
    %cst_12 = arith.constant 2.000000e-01 : f32
    %11 = vector.broadcast %cst_12 : f32 to vector<512x4xf32>
    %12 = arith.mulf %11, %8 : vector<512x4xf32>
    %13 = arith.select %10, %8, %12 : vector<512x4xi1>, vector<512x4xf32>
    %cst_13 = arith.constant 1.000000e+00 : f32
    %14 = vector.broadcast %cst_13 : f32 to vector<512x4xf32>
    %c1 = arith.constant 1 : index
    %c0_14 = arith.constant 0 : index
    %c0_15 = arith.constant 0 : index
    %15 = vector.load %arg1[%c1, %c0_14, %c0_15] : memref<3x512x128xf32, #tpu.memory_space<vmem>>, vector<1x512x128xf32>
    %16 = vector.shape_cast %15 : vector<1x512x128xf32> to vector<512x128xf32>
    %c1_16 = arith.constant 1 : index
    %c0_17 = arith.constant 0 : index
    %c0_18 = arith.constant 0 : index
    %17 = vector.load %arg2[%c1_16, %c0_17, %c0_18] : memref<3x128x128xf32, #tpu.memory_space<vmem>>, vector<1x128x128xf32>
    %18 = vector.shape_cast %17 : vector<1x128x128xf32> to vector<128x128xf32>
    %cst_19 = arith.constant dense<0.000000e+00> : vector<512x128xf32>
    %19 = tpu.matmul %16, %18, %cst_19 {dimension_numbers = #tpu.dot_dimension_numbers<[1], [0], [0], [1], [0, 0, 1, 1], [], []>} : vector<512x128xf32>, vector<128x128xf32>, vector<512x128xf32> -> vector<512x128xf32>
    %c1_20 = arith.constant 1 : index
    %c0_21 = arith.constant 0 : index
    %c0_22 = arith.constant 0 : index
    %20 = vector.load %arg3[%c1_20, %c0_21, %c0_22] : memref<3x128x4xf32, #tpu.memory_space<vmem>>, vector<1x128x4xf32>
    %21 = vector.shape_cast %20 : vector<1x128x4xf32> to vector<128x4xf32>
    %cst_23 = arith.constant dense<0.000000e+00> : vector<512x4xf32>
    %22 = tpu.matmul %19, %21, %cst_23 {dimension_numbers = #tpu.dot_dimension_numbers<[1], [0], [0], [1], [0, 0, 1, 1], [], []>} : vector<512x128xf32>, vector<128x4xf32>, vector<512x4xf32> -> vector<512x4xf32>
    %cst_24 = arith.constant 0.000000e+00 : f32
    %23 = vector.broadcast %cst_24 : f32 to vector<512x4xf32>
    %24 = arith.cmpf oge, %22, %23 : vector<512x4xf32>
    %cst_25 = arith.constant 2.000000e-01 : f32
    %25 = vector.broadcast %cst_25 : f32 to vector<512x4xf32>
    %26 = arith.mulf %25, %22 : vector<512x4xf32>
    %27 = arith.select %24, %22, %26 : vector<512x4xi1>, vector<512x4xf32>
    %28 = arith.maximumf %13, %27 : vector<512x4xf32>
    %29 = arith.subf %13, %28 : vector<512x4xf32>
    %30 = math.exp %29 : vector<512x4xf32>
    %31 = arith.subf %27, %28 : vector<512x4xf32>
    %32 = math.exp %31 : vector<512x4xf32>
    %33 = arith.mulf %30, %14 : vector<512x4xf32>
    %34 = arith.addf %33, %32 : vector<512x4xf32>
    %cst_26 = arith.constant dense<0.000000e+00> : vector<512x128xf32>
    %35 = tpu.matmul %30, %0, %cst_26 {dimension_numbers = #tpu.dot_dimension_numbers<[1], [0], [0], [1], [0, 0, 1, 1], [], []>} : vector<512x4xf32>, vector<4x128xf32>, vector<512x128xf32> -> vector<512x128xf32>
    %cst_27 = arith.constant dense<0.000000e+00> : vector<512x128xf32>
    %36 = tpu.matmul %32, %0, %cst_27 {dimension_numbers = #tpu.dot_dimension_numbers<[1], [0], [0], [1], [0, 0, 1, 1], [], []>} : vector<512x4xf32>, vector<4x128xf32>, vector<512x128xf32> -> vector<512x128xf32>
    %37 = arith.mulf %35, %5 : vector<512x128xf32>
    %38 = arith.mulf %36, %19 : vector<512x128xf32>
    %39 = arith.addf %37, %38 : vector<512x128xf32>
    %c2 = arith.constant 2 : index
    %c0_28 = arith.constant 0 : index
    %c0_29 = arith.constant 0 : index
    %40 = vector.load %arg1[%c2, %c0_28, %c0_29] : memref<3x512x128xf32, #tpu.memory_space<vmem>>, vector<1x512x128xf32>
    %41 = vector.shape_cast %40 : vector<1x512x128xf32> to vector<512x128xf32>
    %c2_30 = arith.constant 2 : index
    %c0_31 = arith.constant 0 : index
    %c0_32 = arith.constant 0 : index
    %42 = vector.load %arg2[%c2_30, %c0_31, %c0_32] : memref<3x128x128xf32, #tpu.memory_space<vmem>>, vector<1x128x128xf32>
    %43 = vector.shape_cast %42 : vector<1x128x128xf32> to vector<128x128xf32>
    %cst_33 = arith.constant dense<0.000000e+00> : vector<512x128xf32>
    %44 = tpu.matmul %41, %43, %cst_33 {dimension_numbers = #tpu.dot_dimension_numbers<[1], [0], [0], [1], [0, 0, 1, 1], [], []>} : vector<512x128xf32>, vector<128x128xf32>, vector<512x128xf32> -> vector<512x128xf32>
    %c2_34 = arith.constant 2 : index
    %c0_35 = arith.constant 0 : index
    %c0_36 = arith.constant 0 : index
    %45 = vector.load %arg3[%c2_34, %c0_35, %c0_36] : memref<3x128x4xf32, #tpu.memory_space<vmem>>, vector<1x128x4xf32>
    %46 = vector.shape_cast %45 : vector<1x128x4xf32> to vector<128x4xf32>
    %cst_37 = arith.constant dense<0.000000e+00> : vector<512x4xf32>
    %47 = tpu.matmul %44, %46, %cst_37 {dimension_numbers = #tpu.dot_dimension_numbers<[1], [0], [0], [1], [0, 0, 1, 1], [], []>} : vector<512x128xf32>, vector<128x4xf32>, vector<512x4xf32> -> vector<512x4xf32>
    %cst_38 = arith.constant 0.000000e+00 : f32
    %48 = vector.broadcast %cst_38 : f32 to vector<512x4xf32>
    %49 = arith.cmpf oge, %47, %48 : vector<512x4xf32>
    %cst_39 = arith.constant 2.000000e-01 : f32
    %50 = vector.broadcast %cst_39 : f32 to vector<512x4xf32>
    %51 = arith.mulf %50, %47 : vector<512x4xf32>
    %52 = arith.select %49, %47, %51 : vector<512x4xi1>, vector<512x4xf32>
    %53 = arith.maximumf %28, %52 : vector<512x4xf32>
    %54 = arith.subf %28, %53 : vector<512x4xf32>
    %55 = math.exp %54 : vector<512x4xf32>
    %56 = arith.subf %52, %53 : vector<512x4xf32>
    %57 = math.exp %56 : vector<512x4xf32>
    %58 = arith.mulf %55, %34 : vector<512x4xf32>
    %59 = arith.addf %58, %57 : vector<512x4xf32>
    %cst_40 = arith.constant dense<0.000000e+00> : vector<512x128xf32>
    %60 = tpu.matmul %55, %0, %cst_40 {dimension_numbers = #tpu.dot_dimension_numbers<[1], [0], [0], [1], [0, 0, 1, 1], [], []>} : vector<512x4xf32>, vector<4x128xf32>, vector<512x128xf32> -> vector<512x128xf32>
    %cst_41 = arith.constant dense<0.000000e+00> : vector<512x128xf32>
    %61 = tpu.matmul %57, %0, %cst_41 {dimension_numbers = #tpu.dot_dimension_numbers<[1], [0], [0], [1], [0, 0, 1, 1], [], []>} : vector<512x4xf32>, vector<4x128xf32>, vector<512x128xf32> -> vector<512x128xf32>
    %62 = arith.mulf %60, %39 : vector<512x128xf32>
    %63 = arith.mulf %61, %44 : vector<512x128xf32>
    %64 = arith.addf %62, %63 : vector<512x128xf32>
    %65 = tpu.reciprocal %59 {approx = true} : vector<512x4xf32> -> vector<512x4xf32>
    %cst_42 = arith.constant dense<0.000000e+00> : vector<512x128xf32>
    %66 = tpu.matmul %65, %0, %cst_42 {dimension_numbers = #tpu.dot_dimension_numbers<[1], [0], [0], [1], [0, 0, 1, 1], [], []>} : vector<512x4xf32>, vector<4x128xf32>, vector<512x128xf32> -> vector<512x128xf32>
    %67 = arith.mulf %64, %66 : vector<512x128xf32>
    %c0_43 = arith.constant 0 : index
    %c0_44 = arith.constant 0 : index
    %68 = vector.load %arg5[%c0_43, %c0_44] : memref<512x128xf32, #tpu.memory_space<vmem>>, vector<512x128xf32>
    tpu.vector_store %arg5[%c0_43, %c0_44], %67 {strides = array<i32>} : memref<512x128xf32, #tpu.memory_space<vmem>>, vector<512x128xf32>,
    return
  }
  func.func @transform_0(%arg0: i32) -> (i32, i32, i32) {
    %c0_i32 = arith.constant 0 : i32
    %c0_i32_0 = arith.constant 0 : i32
    %c0_i32_1 = arith.constant 0 : i32
    return %c0_i32, %arg0, %c0_i32_0 : i32, i32, i32
  }
  func.func @transform_1(%arg0: i32) -> (i32, i32, i32) {
    %c0_i32 = arith.constant 0 : i32
    %c0_i32_0 = arith.constant 0 : i32
    %c0_i32_1 = arith.constant 0 : i32
    %c0_i32_2 = arith.constant 0 : i32
    return %c0_i32, %c0_i32_0, %c0_i32_1 : i32, i32, i32
  }
  func.func @transform_2(%arg0: i32) -> (i32, i32, i32) {
    %c0_i32 = arith.constant 0 : i32
    %c0_i32_0 = arith.constant 0 : i32
    %c0_i32_1 = arith.constant 0 : i32
    %c0_i32_2 = arith.constant 0 : i32
    return %c0_i32, %c0_i32_0, %c0_i32_1 : i32, i32, i32
  }
  func.func @transform_3(%arg0: i32) -> (i32, i32) {
    %c0_i32 = arith.constant 0 : i32
    %c0_i32_0 = arith.constant 0 : i32
    %c0_i32_1 = arith.constant 0 : i32
    return %c0_i32, %c0_i32_0 : i32, i32
  }
  func.func @transform_4(%arg0: i32) -> (i32, i32) {
    %c0_i32 = arith.constant 0 : i32
    %c0_i32_0 = arith.constant 0 : i32
    return %arg0, %c0_i32 : i32, i32
  }
}

</mosaic_0001>

<llo_original>
// kernel: tpu_custom_call.1
$region0: #{tpu_custom_call.1}
  #allocation0 [shape = 'u32[]', space=smem, size = 0x4, offset = 0x4, fixed_abs, tag = 'smem constant byte address 0x4 - core index']
  #allocation1 [shape = 'u32[144,128]{1,0:T(1,128)}', space=vmem, size = 0x12000, scoped, tag = 'internal scratch']
  #allocation9 [shape = 's32[]', space=sflag, size = 0x4, offset = 0, fixed_abs, tag = 'sflag constant byte address 0x0 - dummy sync flag']
  %s0 = inlined_call_operand.hbm [shape: f32[3,1024,128], index: 0, kind: input, shape index: {}]
  %s1 = inlined_call_operand.hbm [shape: f32[3,128,128], index: 1, kind: input, shape index: {}]
  %s2 = inlined_call_operand.vmem [shape: f32[3,128,4], index: 2, kind: input, shape index: {}]
  %s3 = inlined_call_operand.hbm [shape: f32[4,128], index: 3, kind: input, shape index: {}]
  %s4 = inlined_call_operand.hbm [shape: f32[1024,128], index: 4, kind: output, shape index: {}]
  %s5 = sld [smem:[#allocation0]]
  $region61: #{tpu_custom_call.1} parent=0
    _
  %s7 = ssub.s32 1, %s5
  %s8 = scalar_select 0, %s7, %s5
  $region1: #{tpu_custom_call.1} parent=0
    #allocation2 [shape = 'u8[1572864]{0}', space=vmem, size = 0x180000, scoped, tag = 'input window, operand 0']
    #allocation3 [shape = 's32[2]{0}', space=sflag, size = 0x8, scoped, tag = 'scoped memory for tpu_custom_call.1']
    #allocation4 [shape = 's32[2]{0}', space=sflag, size = 0x8, scoped, tag = 'scoped memory for tpu_custom_call.1']
    #allocation5 [shape = 'u8[196608]{0}', space=vmem, size = 0x30000, scoped, tag = 'input window, operand 1, single buffered']
    #allocation6 [shape = 's32[1]{0}', space=sflag, size = 0x4, scoped, tag = 'scoped memory for tpu_custom_call.1']
    #allocation7 [shape = 'u8[2048]{0}', space=vmem, size = 0x800, scoped, tag = 'input window, operand 3, single buffered']
    #allocation8 [shape = 'u8[524288]{0}', space=vmem, size = 0x80000, scoped, tag = 'output window, operand 0']
    %9 = vsyncpa [#allocation3], 0
    %s10 = scalar_lea.sflag [#allocation3], 1
    %11 = vsyncpa %s10, 0
    %12 = vsyncpa [#allocation6], 0
    %13 = vsyncpa [#allocation4], 0
    %s14 = scalar_lea.sflag [#allocation4], 1
    %15 = vsyncpa %s14, 0
    loop: start=0, step=1, limit=4
    $region2: #{tpu_custom_call.1} parent=1 // loop_pre_header
      _
    $region3: #{tpu_custom_call.1} parent=1 // loop_header
      %s17 = sphi 0, %s21
      %p18 = scmp.ge.s32.totalorder %s17, 4
      %s27 = sphi 0, %s29
      %s30 = sphi 0, %s27
      %s31 = sphi 0, %s30
      %s47 = sphi 0, %s31
      %s51 = sphi 0, %s51
      %s53 = sphi 0, %s51
      %s54 = sphi 0, %s53
      %s68 = sphi 0, %s54
      %s72 = sphi 0, %s72
      %s74 = sphi 0, %s72
      %s75 = sphi 0, %s74
      %s89 = sphi 0, %s75
      %s93 = sphi 0, %s93
      %s95 = sphi 0, %s93
      %s96 = sphi 0, %s95
      %s110 = sphi 0, %s96
      %s116 = sphi 0, %s118
      %s119 = sphi 0, %s116
      %s120 = sphi 0, %s119
      %s136 = sphi 0, %s120
    $region4: #{tpu_custom_call.1} parent=1 // loop_header_branch
      %20 = sbr.rel (%p18) target = $region8
    $region5: #{tpu_custom_call.1} parent=1 // loop_body
      %s22 = ssub.s32 %s17, 1
      %s23 = ssub.s32 %s17, 2
      %s24 = sadd.s32 %s17, 1
      %s25 = ssub.s32 %s17, %s24
      %p26 = scmp.eq.s32.totalorder %s25, 0
      %s28 = sadd.s32 %s27, 1
      %s29 = scalar_select %p26, %s27, %s28
      %p32 = pneg %p26
      %p33 = scmp.eq.s32.totalorder %s17, 1
      %p34 = por %p32, %p33
      %p35 = scmp.ne.s32.totalorder %s27, %s30
      %p36 = scmp.eq.s32.totalorder %s17, 0
      %p37 = por %p35, %p36
      %p38 = scmp.ne.s32.totalorder %s27, %s30
      %p39 = scmp.eq.s32.totalorder %s22, 1
      %p40 = por %p38, %p39
      %p41 = scmp.ne.s32.totalorder %s30, %s31
      %p42 = scmp.eq.s32.totalorder %s22, 0
      %p43 = por %p41, %p42
      %p44 = scmp.ne.s32.totalorder %s30, %s31
      %p45 = scmp.eq.s32.totalorder %s23, 1
      %p46 = por %p44, %p45
      %p48 = scmp.ne.s32.totalorder %s31, %s47
      %p49 = scmp.eq.s32.totalorder %s23, 0
      %p50 = por %p48, %p49
      %s52 = sadd.s32 %s51, 1
      %p55 = scmp.eq.s32.totalorder %s17, 1
      %p56 = scmp.ne.s32.totalorder %s51, %s53
      %p57 = scmp.eq.s32.totalorder %s17, 0
      %p58 = por %p56, %p57
      %p59 = scmp.ne.s32.totalorder %s51, %s53
      %p60 = scmp.eq.s32.totalorder %s22, 1
      %p61 = por %p59, %p60
      %p62 = scmp.ne.s32.totalorder %s53, %s54
      %p63 = scmp.eq.s32.totalorder %s22, 0
      %p64 = por %p62, %p63
      %p65 = scmp.ne.s32.totalorder %s53, %s54
      %p66 = scmp.eq.s32.totalorder %s23, 1
      %p67 = por %p65, %p66
      %p69 = scmp.ne.s32.totalorder %s54, %s68
      %p70 = scmp.eq.s32.totalorder %s23, 0
      %p71 = por %p69, %p70
      %s73 = sadd.s32 %s72, 1
      %p76 = scmp.eq.s32.totalorder %s17, 1
      %p77 = scmp.ne.s32.totalorder %s72, %s74
      %p78 = scmp.eq.s32.totalorder %s17, 0
      %p79 = por %p77, %p78
      %p80 = scmp.ne.s32.totalorder %s72, %s74
      %p81 = scmp.eq.s32.totalorder %s22, 1
      %p82 = por %p80, %p81
      %p83 = scmp.ne.s32.totalorder %s74, %s75
      %p84 = scmp.eq.s32.totalorder %s22, 0
      %p85 = por %p83, %p84
      %p86 = scmp.ne.s32.totalorder %s74, %s75
      %p87 = scmp.eq.s32.totalorder %s23, 1
      %p88 = por %p86, %p87
      %p90 = scmp.ne.s32.totalorder %s75, %s89
      %p91 = scmp.eq.s32.totalorder %s23, 0
      %p92 = por %p90, %p91
      %s94 = sadd.s32 %s93, 1
      %p97 = scmp.eq.s32.totalorder %s17, 1
      %p98 = scmp.ne.s32.totalorder %s93, %s95
      %p99 = scmp.eq.s32.totalorder %s17, 0
      %p100 = por %p98, %p99
      %p101 = scmp.ne.s32.totalorder %s93, %s95
      %p102 = scmp.eq.s32.totalorder %s22, 1
      %p103 = por %p101, %p102
      %p104 = scmp.ne.s32.totalorder %s95, %s96
      %p105 = scmp.eq.s32.totalorder %s22, 0
      %p106 = por %p104, %p105
      %p107 = scmp.ne.s32.totalorder %s95, %s96
      %p108 = scmp.eq.s32.totalorder %s23, 1
      %p109 = por %p107, %p108
      %p111 = scmp.ne.s32.totalorder %s96, %s110
      %p112 = scmp.eq.s32.totalorder %s23, 0
      %p113 = por %p111, %p112
      %s114 = ssub.s32 %s17, %s24
      %p115 = scmp.eq.s32.totalorder %s114, 0
      %s117 = sadd.s32 %s116, 1
      %s118 = scalar_select %p115, %s116, %s117
      %p121 = pneg %p115
      %p122 = scmp.eq.s32.totalorder %s17, 1
      %p123 = por %p121, %p122
      %p124 = scmp.ne.s32.totalorder %s116, %s119
      %p125 = scmp.eq.s32.totalorder %s17, 0
      %p126 = por %p124, %p125
      %p127 = scmp.ne.s32.totalorder %s116, %s119
      %p128 = scmp.eq.s32.totalorder %s22, 1
      %p129 = por %p127, %p128
      %p130 = scmp.ne.s32.totalorder %s119, %s120
      %p131 = scmp.eq.s32.totalorder %s22, 0
      %p132 = por %p130, %p131
      %p133 = scmp.ne.s32.totalorder %s119, %s120
      %p134 = scmp.eq.s32.totalorder %s23, 1
      %p135 = por %p133, %p134
      %p137 = scmp.ne.s32.totalorder %s120, %s136
      %p138 = scmp.eq.s32.totalorder %s23, 0
      %p139 = por %p137, %p138
      %p140 = scmp.le.s32.totalorder 1, %s17
      %p141 = scmp.lt.s32.totalorder %s17, 3
      %p142 = pnand %p140, %p141
      %p143 = pneg %p142
      // Predicated region
      $region9: #{tpu_custom_call.1} parent=5 // pred_check
        _
      $region10: #{tpu_custom_call.1} parent=5 // pred_check_branch
        %145 = sbr.rel (%p142) target = $region12
      $region11: #{tpu_custom_call.1} parent=5 // pred_region
        %s146 = ssub.s32 %s17, 1
        // Predicated region
        $region13: #{tpu_custom_call.1} parent=11 // pred_check
          %p147 = pneg %p64
        $region14: #{tpu_custom_call.1} parent=11 // pred_check_branch
          %149 = sbr.rel (%p147) target = $region16
        $region15: #{tpu_custom_call.1} parent=11 // pred_region
          %s151 = ssub.s32 6144, 6144
          %152 = vsyncadd [#allocation6], %s151
          %s153 = sshll.u32 [#allocation5], 4
          %s154 = int_to_ptr.vmem [resolvable:$true] %s153
          %159 = dma.hbm_to_vmem [thread:$0]  %s1, 6144, %s154, [#allocation6], 128, 128, 8
        $region16: #{tpu_custom_call.1} parent=11 // pred_fallthru
          _
        // Predicated region
        $region17: #{tpu_custom_call.1} parent=11 // pred_check
          %p160 = pneg %p85
        $region18: #{tpu_custom_call.1} parent=11 // pred_check_branch
          %162 = sbr.rel (%p160) target = $region20
        $region19: #{tpu_custom_call.1} parent=11 // pred_region
          _
        $region20: #{tpu_custom_call.1} parent=11 // pred_fallthru
          _
        // Predicated region
        $region21: #{tpu_custom_call.1} parent=11 // pred_check
          %p163 = pneg %p106
        $region22: #{tpu_custom_call.1} parent=11 // pred_check_branch
          %165 = sbr.rel (%p163) target = $region24
        $region23: #{tpu_custom_call.1} parent=11 // pred_region
          %s167 = ssub.s32 64, 64
          %168 = vsyncadd [#allocation6], %s167
          %s170 = sshll.u32 [#allocation7], 4
          %s171 = int_to_ptr.vmem [resolvable:$true] %s170
          %173 = dma.hbm_to_vmem [thread:$0]  %s3, 64, %s171, [#allocation6]
        $region24: #{tpu_custom_call.1} parent=11 // pred_fallthru
          _
      $region12: #{tpu_custom_call.1} parent=5 // pred_fallthru
        _
      %p174 = scmp.lt.s32.totalorder %s17, 2
      // Predicated region
      $region25: #{tpu_custom_call.1} parent=5 // pred_check
        %p175 = pneg %p174
      $region26: #{tpu_custom_call.1} parent=5 // pred_check_branch
        %177 = sbr.rel (%p175) target = $region28
      $region27: #{tpu_custom_call.1} parent=5 // pred_region
        // Predicated region
        $region29: #{tpu_custom_call.1} parent=27 // pred_check
          %p178 = pneg %p37
        $region30: #{tpu_custom_call.1} parent=27 // pred_check_branch
          %180 = sbr.rel (%p178) target = $region32
        $region31: #{tpu_custom_call.1} parent=27 // pred_region
          #allocation10 [shape = 'u32[6]{0}', space=smem, size = 0x18, scoped, tag = 'DMA stride descriptor']
          %s181 = sand.u32 %s27, 1
          %s182 = scalar_lea.sflag [#allocation3], %s181
          %s183 = sand.u32 %s27, 1
          %s184 = smul.addr %s183, 1536
          %s185 = scalar_lea.vmem [#allocation2], %s184
          %s186 = smul.u32 64, %s17
          %s188 = ssub.s32 24576, 24576
          %189 = vsyncadd %s182, %s188
          %s190 = smul.addr %s186, 128
          %s191 = scalar_lea.hbm %s0, %s190
          %s193 = sshll.u32 1, 14
          %s194 = sxor.u32 4294967295, %s193
          %s196 = sld [smem:[#allocation0]]
          %s197 = sadd.s32 2, %s196
          %s199 = sshll.u32 7, 26
          %s200 = sxor.u32 4294967295, %s199
          %s201 = sand.u32 0, %s200
          %s202 = sshll.u32 %s197, 26
          %s203 = sor.u32 %s201, %s202
          %s204 = sshll.u32 %s185, 4
          %s205 = int_to_ptr.vmem [resolvable:$true] %s204
          %211 = sst [smem:[#allocation10]] 16384
          %s212 = scalar_lea.smem [#allocation10], 1
          %213 = sst [smem:[%s212]] 8192
          %s214 = scalar_lea.smem [#allocation10], 2
          %215 = sst [smem:[%s214]] 64
          %s216 = scalar_lea.smem [#allocation10], 3
          %217 = sst [smem:[%s216]] 128
          %s218 = scalar_lea.smem [#allocation10], 4
          %219 = sst [smem:[%s218]] 128
          %s220 = scalar_lea.smem [#allocation10], 5
          %221 = sst [smem:[%s220]] 8
          %223 = dma.general %s191, 24576, %s205, %s182, 131072, [#allocation10], %s203, 0
        $region32: #{tpu_custom_call.1} parent=27 // pred_fallthru
          _
      $region28: #{tpu_custom_call.1} parent=5 // pred_fallthru
        _
      %p224 = scmp.le.s32.totalorder 1, %s17
      %p225 = scmp.lt.s32.totalorder %s17, 3
      %p226 = pnand %p224, %p225
      %p227 = pneg %p226
      // Predicated region
      $region33: #{tpu_custom_call.1} parent=5 // pred_check
        _
      $region34: #{tpu_custom_call.1} parent=5 // pred_check_branch
        %229 = sbr.rel (%p226) target = $region36
      $region35: #{tpu_custom_call.1} parent=5 // pred_region
        %s230 = ssub.s32 %s17, 1
        %s231 = sand.u32 %s30, 1
        %s232 = scalar_lea.sflag [#allocation3], %s231
        %s233 = sand.u32 %s30, 1
        %s234 = smul.addr %s233, 1536
        %s235 = scalar_lea.vmem [#allocation2], %s234
        // Predicated region
        $region37: #{tpu_custom_call.1} parent=35 // pred_check
          %p236 = pneg %p43
        $region38: #{tpu_custom_call.1} parent=35 // pred_check_branch
          %238 = sbr.rel (%p236) target = $region40
        $region39: #{tpu_custom_call.1} parent=35 // pred_region
          %239 = dma.done %s232, 24576
        $region40: #{tpu_custom_call.1} parent=35 // pred_fallthru
          _
        // Predicated region
        $region41: #{tpu_custom_call.1} parent=35 // pred_check
          %p240 = pneg %p64
        $region42: #{tpu_custom_call.1} parent=35 // pred_check_branch
          %242 = sbr.rel (%p240) target = $region44
        $region43: #{tpu_custom_call.1} parent=35 // pred_region
          %243 = dma.done [#allocation6], 6144
        $region44: #{tpu_custom_call.1} parent=35 // pred_fallthru
          _
        // Predicated region
        $region45: #{tpu_custom_call.1} parent=35 // pred_check
          %p244 = pneg %p106
        $region46: #{tpu_custom_call.1} parent=35 // pred_check_branch
          %246 = sbr.rel (%p244) target = $region48
        $region47: #{tpu_custom_call.1} parent=35 // pred_region
          %247 = dma.done [#allocation6], 64
        $region48: #{tpu_custom_call.1} parent=35 // pred_fallthru
          _
        %s248 = sand.u32 %s30, 1
        %s249 = scalar_lea.sflag [#allocation3], %s248
        %s250 = sand.u32 %s30, 1
        %s251 = smul.addr %s250, 1536
        %s252 = scalar_lea.vmem [#allocation2], %s251
        %p253 = pneg %p43
        %p254 = pneg %p40
        %p255 = pneg %p64
        %p256 = pneg %p61
        %p257 = pneg %p85
        %p258 = pneg %p82
        %p259 = pneg %p106
        %p260 = pneg %p103
        %p261 = pneg %p132
        %p262 = pneg %p129
        %s263 = sand.u32 %s119, 1
        %s264 = scalar_lea.sflag [#allocation4], %s263
        %s265 = sand.u32 %s119, 1
        %s266 = smul.addr %s265, 512
        %s267 = scalar_lea.vmem [#allocation8], %s266
        %s268 = smul.u32 64, %s22
        %s269 = smul.u32 64, %s22
        %v270 = vld [vmem:[#allocation7] sm:$0xf]
        %v271 = vld [vmem:[%s235] sm:$0xff]
        %v272 = vld [vmem:[%s235 + $0x8] sm:$0xff]
        %v273 = vld [vmem:[%s235 + $0x10] sm:$0xff]
        %v274 = vld [vmem:[%s235 + $0x18] sm:$0xff]
        %v275 = vld [vmem:[%s235 + $0x20] sm:$0xff]
        %v276 = vld [vmem:[%s235 + $0x28] sm:$0xff]
        %v277 = vld [vmem:[%s235 + $0x30] sm:$0xff]
        %v278 = vld [vmem:[%s235 + $0x38] sm:$0xff]
        %v279 = vld [vmem:[%s235 + $0x40] sm:$0xff]
        %v280 = vld [vmem:[%s235 + $0x48] sm:$0xff]
        %v281 = vld [vmem:[%s235 + $0x50] sm:$0xff]
        %v282 = vld [vmem:[%s235 + $0x58] sm:$0xff]
        %v283 = vld [vmem:[%s235 + $0x60] sm:$0xff]
        %v284 = vld [vmem:[%s235 + $0x68] sm:$0xff]
        %v285 = vld [vmem:[%s235 + $0x70] sm:$0xff]
        %v286 = vld [vmem:[%s235 + $0x78] sm:$0xff]
        %v287 = vld [vmem:[%s235 + $0x80] sm:$0xff]
        %v288 = vld [vmem:[%s235 + $0x88] sm:$0xff]
        %v289 = vld [vmem:[%s235 + $0x90] sm:$0xff]
        %v290 = vld [vmem:[%s235 + $0x98] sm:$0xff]
        %v291 = vld [vmem:[%s235 + $0xa0] sm:$0xff]
        %v292 = vld [vmem:[%s235 + $0xa8] sm:$0xff]
        %v293 = vld [vmem:[%s235 + $0xb0] sm:$0xff]
        %v294 = vld [vmem:[%s235 + $0xb8] sm:$0xff]
        %v295 = vld [vmem:[%s235 + $0xc0] sm:$0xff]
        %v296 = vld [vmem:[%s235 + $0xc8] sm:$0xff]
        %v297 = vld [vmem:[%s235 + $0xd0] sm:$0xff]
        %v298 = vld [vmem:[%s235 + $0xd8] sm:$0xff]
        %v299 = vld [vmem:[%s235 + $0xe0] sm:$0xff]
        %v300 = vld [vmem:[%s235 + $0xe8] sm:$0xff]
        %v301 = vld [vmem:[%s235 + $0xf0] sm:$0xff]
        %v302 = vld [vmem:[%s235 + $0xf8] sm:$0xff]
        %v303 = vld [vmem:[%s235 + $0x100] sm:$0xff]
        %v304 = vld [vmem:[%s235 + $0x108] sm:$0xff]
        %v305 = vld [vmem:[%s235 + $0x110] sm:$0xff]
        %v306 = vld [vmem:[%s235 + $0x118] sm:$0xff]
        %v307 = vld [vmem:[%s235 + $0x120] sm:$0xff]
        %v308 = vld [vmem:[%s235 + $0x128] sm:$0xff]
        %v309 = vld [vmem:[%s235 + $0x130] sm:$0xff]
        %v310 = vld [vmem:[%s235 + $0x138] sm:$0xff]
        %v311 = vld [vmem:[%s235 + $0x140] sm:$0xff]
        %v312 = vld [vmem:[%s235 + $0x148] sm:$0xff]
        %v313 = vld [vmem:[%s235 + $0x150] sm:$0xff]
        %v314 = vld [vmem:[%s235 + $0x158] sm:$0xff]
        %v315 = vld [vmem:[%s235 + $0x160] sm:$0xff]
        %v316 = vld [vmem:[%s235 + $0x168] sm:$0xff]
        %v317 = vld [vmem:[%s235 + $0x170] sm:$0xff]
        %v318 = vld [vmem:[%s235 + $0x178] sm:$0xff]
        %v319 = vld [vmem:[%s235 + $0x180] sm:$0xff]
        %v320 = vld [vmem:[%s235 + $0x188] sm:$0xff]
        %v321 = vld [vmem:[%s235 + $0x190] sm:$0xff]
        %v322 = vld [vmem:[%s235 + $0x198] sm:$0xff]
        %v323 = vld [vmem:[%s235 + $0x1a0] sm:$0xff]
        %v324 = vld [vmem:[%s235 + $0x1a8] sm:$0xff]
        %v325 = vld [vmem:[%s235 + $0x1b0] sm:$0xff]
        %v326 = vld [vmem:[%s235 + $0x1b8] sm:$0xff]
        %v327 = vld [vmem:[%s235 + $0x1c0] sm:$0xff]
        %v328 = vld [vmem:[%s235 + $0x1c8] sm:$0xff]
        %v329 = vld [vmem:[%s235 + $0x1d0] sm:$0xff]
        %v330 = vld [vmem:[%s235 + $0x1d8] sm:$0xff]
        %v331 = vld [vmem:[%s235 + $0x1e0] sm:$0xff]
        %v332 = vld [vmem:[%s235 + $0x1e8] sm:$0xff]
        %v333 = vld [vmem:[%s235 + $0x1f0] sm:$0xff]
        %v334 = vld [vmem:[%s235 + $0x1f8] sm:$0xff]
        %v335 = vld [vmem:[#allocation5] sm:$0xff]
        %v336 = vld [vmem:[#allocation5 + $0x8] sm:$0xff]
        %v337 = vld [vmem:[#allocation5 + $0x10] sm:$0xff]
        %v338 = vld [vmem:[#allocation5 + $0x18] sm:$0xff]
        %v339 = vld [vmem:[#allocation5 + $0x20] sm:$0xff]
        %v340 = vld [vmem:[#allocation5 + $0x28] sm:$0xff]
        %v341 = vld [vmem:[#allocation5 + $0x30] sm:$0xff]
        %v342 = vld [vmem:[#allocation5 + $0x38] sm:$0xff]
        %v343 = vld [vmem:[#allocation5 + $0x40] sm:$0xff]
        %v344 = vld [vmem:[#allocation5 + $0x48] sm:$0xff]
        %v345 = vld [vmem:[#allocation5 + $0x50] sm:$0xff]
        %v346 = vld [vmem:[#allocation5 + $0x58] sm:$0xff]
        %v347 = vld [vmem:[#allocation5 + $0x60] sm:$0xff]
        %v348 = vld [vmem:[#allocation5 + $0x68] sm:$0xff]
        %v349 = vld [vmem:[#allocation5 + $0x70] sm:$0xff]
        %v350 = vld [vmem:[#allocation5 + $0x78] sm:$0xff]
        %351 = vmatprep.subr.mxu0 0.0
        %352 = vmatpush1.msra.mxu0 %v350
        %353 = vmatprep.subr.mxu0 0.0
        %354 = vmatpush1.msra.mxu0 %v349
        %355 = vmatprep.subr.mxu0 0.0
        %356 = vmatpush1.msra.mxu0 %v348
        %357 = vmatprep.subr.mxu0 0.0
        %358 = vmatpush1.msra.mxu0 %v347
        %359 = vmatprep.subr.mxu0 0.0
        %360 = vmatpush1.msra.mxu0 %v346
        %361 = vmatprep.subr.mxu0 0.0
        %362 = vmatpush1.msra.mxu0 %v345
        %363 = vmatprep.subr.mxu0 0.0
        %364 = vmatpush1.msra.mxu0 %v344
        %365 = vmatprep.subr.mxu0 0.0
        %366 = vmatpush1.msra.mxu0 %v343
        %367 = vmatprep.subr.mxu0 0.0
        %368 = vmatpush1.msra.mxu0 %v342
        %369 = vmatprep.subr.mxu0 0.0
        %370 = vmatpush1.msra.mxu0 %v341
        %371 = vmatprep.subr.mxu0 0.0
        %372 = vmatpush1.msra.mxu0 %v340
        %373 = vmatprep.subr.mxu0 0.0
        %374 = vmatpush1.msra.mxu0 %v339
        %375 = vmatprep.subr.mxu0 0.0
        %376 = vmatpush1.msra.mxu0 %v338
        %377 = vmatprep.subr.mxu0 0.0
        %378 = vmatpush1.msra.mxu0 %v337
        %379 = vmatprep.subr.mxu0 0.0
        %380 = vmatpush1.msra.mxu0 %v336
        %381 = vmatprep.subr.mxu0 0.0
        %382 = vmatpush1.msra.mxu0 %v335
        %383 = vmatprep.subr.mxu0 0.0
        %384 = vmatpush2.msra.mxu0 0.0
        %385 = vmatprep.subr.mxu0 0.0
        %386 = vmatpush2.msra.mxu0 0.0
        %387 = vmatprep.subr.mxu0 0.0
        %388 = vmatpush2.msra.mxu0 0.0
        %389 = vmatprep.subr.mxu0 0.0
        %390 = vmatpush2.msra.mxu0 0.0
        %391 = vmatprep.subr.mxu0 0.0
        %392 = vmatpush2.msra.mxu0 0.0
        %393 = vmatprep.subr.mxu0 0.0
        %394 = vmatpush2.msra.mxu0 0.0
        %395 = vmatprep.subr.mxu0 0.0
        %396 = vmatpush2.msra.mxu0 0.0
        %397 = vmatprep.subr.mxu0 0.0
        %398 = vmatpush2.msra.mxu0 0.0
        %399 = vmatprep.subr.mxu0 0.0
        %400 = vmatpush2.msra.mxu0 0.0
        %401 = vmatprep.subr.mxu0 0.0
        %402 = vmatpush2.msra.mxu0 0.0
        %403 = vmatprep.subr.mxu0 0.0
        %404 = vmatpush2.msra.mxu0 0.0
        %405 = vmatprep.subr.mxu0 0.0
        %406 = vmatpush2.msra.mxu0 0.0
        %407 = vmatprep.subr.mxu0 0.0
        %408 = vmatpush2.msra.mxu0 0.0
        %409 = vmatprep.subr.mxu0 0.0
        %410 = vmatpush2.msra.mxu0 0.0
        %411 = vmatprep.subr.mxu0 0.0
        %412 = vmatpush2.msra.mxu0 0.0
        %413 = vmatprep.subr.mxu0 0.0
        %414 = vmatpush2.msra.mxu0 0.0
        %415 = vmatprep.mubr.f32.mxu0 0.0
        %416 = vmatmul.mubr.f32.gmra.mxu0 %v271
        %v417 = vpop.f32.mrf.mxu0
        %v418 = vadd.f32 0.0, %v417
        %v419 = vpop.f32.mrf.mxu0
        %420 = vmatprep.mubr.f32.mxu0 0.0
        %421 = vmatmul.mubr.f32.gmra.mxu0 %v272
        %v422 = vpop.f32.mrf.mxu0
        %v423 = vadd.f32 0.0, %v422
        %v424 = vpop.f32.mrf.mxu0
        %425 = vmatprep.mubr.f32.mxu0 0.0
        %426 = vmatmul.mubr.f32.gmra.mxu0 %v273
        %v427 = vpop.f32.mrf.mxu0
        %v428 = vadd.f32 0.0, %v427
        %v429 = vpop.f32.mrf.mxu0
        %430 = vmatprep.mubr.f32.mxu0 0.0
        %431 = vmatmul.mubr.f32.gmra.mxu0 %v274
        %v432 = vpop.f32.mrf.mxu0
        %v433 = vadd.f32 0.0, %v432
        %v434 = vpop.f32.mrf.mxu0
        %435 = vmatprep.mubr.f32.mxu0 0.0
        %436 = vmatmul.mubr.f32.gmra.mxu0 %v275
        %v437 = vpop.f32.mrf.mxu0
        %v438 = vadd.f32 0.0, %v437
        %v439 = vpop.f32.mrf.mxu0
        %440 = vmatprep.mubr.f32.mxu0 0.0
        %441 = vmatmul.mubr.f32.gmra.mxu0 %v276
        %v442 = vpop.f32.mrf.mxu0
        %v443 = vadd.f32 0.0, %v442
        %v444 = vpop.f32.mrf.mxu0
        %445 = vmatprep.mubr.f32.mxu0 0.0
        %446 = vmatmul.mubr.f32.gmra.mxu0 %v277
        %v447 = vpop.f32.mrf.mxu0
        %v448 = vadd.f32 0.0, %v447
        %v449 = vpop.f32.mrf.mxu0
        %450 = vmatprep.mubr.f32.mxu0 0.0
        %451 = vmatmul.mubr.f32.gmra.mxu0 %v278
        %v452 = vpop.f32.mrf.mxu0
        %v453 = vadd.f32 0.0, %v452
        %v454 = vpop.f32.mrf.mxu0
        %455 = vmatprep.mubr.f32.mxu0 0.0
        %456 = vmatmul.mubr.f32.gmra.mxu0 %v279
        %v457 = vpop.f32.mrf.mxu0
        %v458 = vadd.f32 0.0, %v457
        %v459 = vpop.f32.mrf.mxu0
        %460 = vmatprep.mubr.f32.mxu0 0.0
        %461 = vmatmul.mubr.f32.gmra.mxu0 %v280
        %v462 = vpop.f32.mrf.mxu0
        %v463 = vadd.f32 0.0, %v462
        %v464 = vpop.f32.mrf.mxu0
        %465 = vmatprep.mubr.f32.mxu0 0.0
        %466 = vmatmul.mubr.f32.gmra.mxu0 %v281
        %v467 = vpop.f32.mrf.mxu0
        %v468 = vadd.f32 0.0, %v467
        %v469 = vpop.f32.mrf.mxu0
        %470 = vmatprep.mubr.f32.mxu0 0.0
        %471 = vmatmul.mubr.f32.gmra.mxu0 %v282
        %v472 = vpop.f32.mrf.mxu0
        %v473 = vadd.f32 0.0, %v472
        %v474 = vpop.f32.mrf.mxu0
        %475 = vmatprep.mubr.f32.mxu0 0.0
        %476 = vmatmul.mubr.f32.gmra.mxu0 %v283
        %v477 = vpop.f32.mrf.mxu0
        %v478 = vadd.f32 0.0, %v477
        %v479 = vpop.f32.mrf.mxu0
        %480 = vmatprep.mubr.f32.mxu0 0.0
        %481 = vmatmul.mubr.f32.gmra.mxu0 %v284
        %v482 = vpop.f32.mrf.mxu0
        %v483 = vadd.f32 0.0, %v482
        %v484 = vpop.f32.mrf.mxu0
        %485 = vmatprep.mubr.f32.mxu0 0.0
        %486 = vmatmul.mubr.f32.gmra.mxu0 %v285
        %v487 = vpop.f32.mrf.mxu0
        %v488 = vadd.f32 0.0, %v487
        %v489 = vpop.f32.mrf.mxu0
        %490 = vmatprep.mubr.f32.mxu0 0.0
        %491 = vmatmul.mubr.f32.gmra.mxu0 %v286
        %v492 = vpop.f32.mrf.mxu0
        %v493 = vadd.f32 0.0, %v492
        %v494 = vpop.f32.mrf.mxu0
        %495 = vmatprep.mubr.f32.mxu0 0.0
        %496 = vmatmul.mubr.f32.gmra.mxu0 %v287
        %v497 = vpop.f32.mrf.mxu0
        %v498 = vadd.f32 0.0, %v497
        %v499 = vpop.f32.mrf.mxu0
        %500 = vmatprep.mubr.f32.mxu0 0.0
        %501 = vmatmul.mubr.f32.gmra.mxu0 %v288
        %v502 = vpop.f32.mrf.mxu0
        %v503 = vadd.f32 0.0, %v502
        %v504 = vpop.f32.mrf.mxu0
        %505 = vmatprep.mubr.f32.mxu0 0.0
        %506 = vmatmul.mubr.f32.gmra.mxu0 %v289
        %v507 = vpop.f32.mrf.mxu0
        %v508 = vadd.f32 0.0, %v507
        %v509 = vpop.f32.mrf.mxu0
        %510 = vmatprep.mubr.f32.mxu0 0.0
        %511 = vmatmul.mubr.f32.gmra.mxu0 %v290
        %v512 = vpop.f32.mrf.mxu0
        %v513 = vadd.f32 0.0, %v512
        %v514 = vpop.f32.mrf.mxu0
        %515 = vmatprep.mubr.f32.mxu0 0.0
        %516 = vmatmul.mubr.f32.gmra.mxu0 %v291
        %v517 = vpop.f32.mrf.mxu0
        %v518 = vadd.f32 0.0, %v517
        %v519 = vpop.f32.mrf.mxu0
        %520 = vmatprep.mubr.f32.mxu0 0.0
        %521 = vmatmul.mubr.f32.gmra.mxu0 %v292
        %v522 = vpop.f32.mrf.mxu0
        %v523 = vadd.f32 0.0, %v522
        %v524 = vpop.f32.mrf.mxu0
        %525 = vmatprep.mubr.f32.mxu0 0.0
        %526 = vmatmul.mubr.f32.gmra.mxu0 %v293
        %v527 = vpop.f32.mrf.mxu0
        %v528 = vadd.f32 0.0, %v527
        %v529 = vpop.f32.mrf.mxu0
        %530 = vmatprep.mubr.f32.mxu0 0.0
        %531 = vmatmul.mubr.f32.gmra.mxu0 %v294
        %v532 = vpop.f32.mrf.mxu0
        %v533 = vadd.f32 0.0, %v532
        %v534 = vpop.f32.mrf.mxu0
        %535 = vmatprep.mubr.f32.mxu0 0.0
        %536 = vmatmul.mubr.f32.gmra.mxu0 %v295
        %v537 = vpop.f32.mrf.mxu0
        %v538 = vadd.f32 0.0, %v537
        %v539 = vpop.f32.mrf.mxu0
        %540 = vmatprep.mubr.f32.mxu0 0.0
        %541 = vmatmul.mubr.f32.gmra.mxu0 %v296
        %v542 = vpop.f32.mrf.mxu0
        %v543 = vadd.f32 0.0, %v542
        %v544 = vpop.f32.mrf.mxu0
        %545 = vmatprep.mubr.f32.mxu0 0.0
        %546 = vmatmul.mubr.f32.gmra.mxu0 %v297
        %v547 = vpop.f32.mrf.mxu0
        %v548 = vadd.f32 0.0, %v547
        %v549 = vpop.f32.mrf.mxu0
        %550 = vmatprep.mubr.f32.mxu0 0.0
        %551 = vmatmul.mubr.f32.gmra.mxu0 %v298
        %v552 = vpop.f32.mrf.mxu0
        %v553 = vadd.f32 0.0, %v552
        %v554 = vpop.f32.mrf.mxu0
        %555 = vmatprep.mubr.f32.mxu0 0.0
        %556 = vmatmul.mubr.f32.gmra.mxu0 %v299
        %v557 = vpop.f32.mrf.mxu0
        %v558 = vadd.f32 0.0, %v557
        %v559 = vpop.f32.mrf.mxu0
        %560 = vmatprep.mubr.f32.mxu0 0.0
        %561 = vmatmul.mubr.f32.gmra.mxu0 %v300
        %v562 = vpop.f32.mrf.mxu0
        %v563 = vadd.f32 0.0, %v562
        %v564 = vpop.f32.mrf.mxu0
        %565 = vmatprep.mubr.f32.mxu0 0.0
        %566 = vmatmul.mubr.f32.gmra.mxu0 %v301
        %v567 = vpop.f32.mrf.mxu0
        %v568 = vadd.f32 0.0, %v567
        %v569 = vpop.f32.mrf.mxu0
        %570 = vmatprep.mubr.f32.mxu0 0.0
        %571 = vmatmul.mubr.f32.gmra.mxu0 %v302
        %v572 = vpop.f32.mrf.mxu0
        %v573 = vadd.f32 0.0, %v572
        %v574 = vpop.f32.mrf.mxu0
        %575 = vmatprep.mubr.f32.mxu0 0.0
        %576 = vmatmul.mubr.f32.gmra.mxu0 %v303
        %v577 = vpop.f32.mrf.mxu0
        %v578 = vadd.f32 0.0, %v577
        %v579 = vpop.f32.mrf.mxu0
        %580 = vmatprep.mubr.f32.mxu0 0.0
        %581 = vmatmul.mubr.f32.gmra.mxu0 %v304
        %v582 = vpop.f32.mrf.mxu0
        %v583 = vadd.f32 0.0, %v582
        %v584 = vpop.f32.mrf.mxu0
        %585 = vmatprep.mubr.f32.mxu0 0.0
        %586 = vmatmul.mubr.f32.gmra.mxu0 %v305
        %v587 = vpop.f32.mrf.mxu0
        %v588 = vadd.f32 0.0, %v587
        %v589 = vpop.f32.mrf.mxu0
        %590 = vmatprep.mubr.f32.mxu0 0.0
        %591 = vmatmul.mubr.f32.gmra.mxu0 %v306
        %v592 = vpop.f32.mrf.mxu0
        %v593 = vadd.f32 0.0, %v592
        %v594 = vpop.f32.mrf.mxu0
        %595 = vmatprep.mubr.f32.mxu0 0.0
        %596 = vmatmul.mubr.f32.gmra.mxu0 %v307
        %v597 = vpop.f32.mrf.mxu0
        %v598 = vadd.f32 0.0, %v597
        %v599 = vpop.f32.mrf.mxu0
        %600 = vmatprep.mubr.f32.mxu0 0.0
        %601 = vmatmul.mubr.f32.gmra.mxu0 %v308
        %v602 = vpop.f32.mrf.mxu0
        %v603 = vadd.f32 0.0, %v602
        %v604 = vpop.f32.mrf.mxu0
        %605 = vmatprep.mubr.f32.mxu0 0.0
        %606 = vmatmul.mubr.f32.gmra.mxu0 %v309
        %v607 = vpop.f32.mrf.mxu0
        %v608 = vadd.f32 0.0, %v607
        %v609 = vpop.f32.mrf.mxu0
        %610 = vmatprep.mubr.f32.mxu0 0.0
        %611 = vmatmul.mubr.f32.gmra.mxu0 %v310
        %v612 = vpop.f32.mrf.mxu0
        %v613 = vadd.f32 0.0, %v612
        %v614 = vpop.f32.mrf.mxu0
        %615 = vmatprep.mubr.f32.mxu0 0.0
        %616 = vmatmul.mubr.f32.gmra.mxu0 %v311
        %v617 = vpop.f32.mrf.mxu0
        %v618 = vadd.f32 0.0, %v617
        %v619 = vpop.f32.mrf.mxu0
        %620 = vmatprep.mubr.f32.mxu0 0.0
        %621 = vmatmul.mubr.f32.gmra.mxu0 %v312
        %v622 = vpop.f32.mrf.mxu0
        %v623 = vadd.f32 0.0, %v622
        %v624 = vpop.f32.mrf.mxu0
        %625 = vmatprep.mubr.f32.mxu0 0.0
        %626 = vmatmul.mubr.f32.gmra.mxu0 %v313
        %v627 = vpop.f32.mrf.mxu0
        %v628 = vadd.f32 0.0, %v627
        %v629 = vpop.f32.mrf.mxu0
        %630 = vmatprep.mubr.f32.mxu0 0.0
        %631 = vmatmul.mubr.f32.gmra.mxu0 %v314
        %v632 = vpop.f32.mrf.mxu0
        %v633 = vadd.f32 0.0, %v632
        %v634 = vpop.f32.mrf.mxu0
        %635 = vmatprep.mubr.f32.mxu0 0.0
        %636 = vmatmul.mubr.f32.gmra.mxu0 %v315
        %v637 = vpop.f32.mrf.mxu0
        %v638 = vadd.f32 0.0, %v637
        %v639 = vpop.f32.mrf.mxu0
        %640 = vmatprep.mubr.f32.mxu0 0.0
        %641 = vmatmul.mubr.f32.gmra.mxu0 %v316
        %v642 = vpop.f32.mrf.mxu0
        %v643 = vadd.f32 0.0, %v642
        %v644 = vpop.f32.mrf.mxu0
        %645 = vmatprep.mubr.f32.mxu0 0.0
        %646 = vmatmul.mubr.f32.gmra.mxu0 %v317
        %v647 = vpop.f32.mrf.mxu0
        %v648 = vadd.f32 0.0, %v647
        %v649 = vpop.f32.mrf.mxu0
        %650 = vmatprep.mubr.f32.mxu0 0.0
        %651 = vmatmul.mubr.f32.gmra.mxu0 %v318
        %v652 = vpop.f32.mrf.mxu0
        %v653 = vadd.f32 0.0, %v652
        %v654 = vpop.f32.mrf.mxu0
        %655 = vmatprep.mubr.f32.mxu0 0.0
        %656 = vmatmul.mubr.f32.gmra.mxu0 %v319
        %v657 = vpop.f32.mrf.mxu0
        %v658 = vadd.f32 0.0, %v657
        %v659 = vpop.f32.mrf.mxu0
        %660 = vmatprep.mubr.f32.mxu0 0.0
        %661 = vmatmul.mubr.f32.gmra.mxu0 %v320
        %v662 = vpop.f32.mrf.mxu0
        %v663 = vadd.f32 0.0, %v662
        %v664 = vpop.f32.mrf.mxu0
        %665 = vmatprep.mubr.f32.mxu0 0.0
        %666 = vmatmul.mubr.f32.gmra.mxu0 %v321
        %v667 = vpop.f32.mrf.mxu0
        %v668 = vadd.f32 0.0, %v667
        %v669 = vpop.f32.mrf.mxu0
        %670 = vmatprep.mubr.f32.mxu0 0.0
        %671 = vmatmul.mubr.f32.gmra.mxu0 %v322
        %v672 = vpop.f32.mrf.mxu0
        %v673 = vadd.f32 0.0, %v672
        %v674 = vpop.f32.mrf.mxu0
        %675 = vmatprep.mubr.f32.mxu0 0.0
        %676 = vmatmul.mubr.f32.gmra.mxu0 %v323
        %v677 = vpop.f32.mrf.mxu0
        %v678 = vadd.f32 0.0, %v677
        %v679 = vpop.f32.mrf.mxu0
        %680 = vmatprep.mubr.f32.mxu0 0.0
        %681 = vmatmul.mubr.f32.gmra.mxu0 %v324
        %v682 = vpop.f32.mrf.mxu0
        %v683 = vadd.f32 0.0, %v682
        %v684 = vpop.f32.mrf.mxu0
        %685 = vmatprep.mubr.f32.mxu0 0.0
        %686 = vmatmul.mubr.f32.gmra.mxu0 %v325
        %v687 = vpop.f32.mrf.mxu0
        %v688 = vadd.f32 0.0, %v687
        %v689 = vpop.f32.mrf.mxu0
        %690 = vmatprep.mubr.f32.mxu0 0.0
        %691 = vmatmul.mubr.f32.gmra.mxu0 %v326
        %v692 = vpop.f32.mrf.mxu0
        %v693 = vadd.f32 0.0, %v692
        %v694 = vpop.f32.mrf.mxu0
        %695 = vmatprep.mubr.f32.mxu0 0.0
        %696 = vmatmul.mubr.f32.gmra.mxu0 %v327
        %v697 = vpop.f32.mrf.mxu0
        %v698 = vadd.f32 0.0, %v697
        %v699 = vpop.f32.mrf.mxu0
        %700 = vmatprep.mubr.f32.mxu0 0.0
        %701 = vmatmul.mubr.f32.gmra.mxu0 %v328
        %v702 = vpop.f32.mrf.mxu0
        %v703 = vadd.f32 0.0, %v702
        %v704 = vpop.f32.mrf.mxu0
        %705 = vmatprep.mubr.f32.mxu0 0.0
        %706 = vmatmul.mubr.f32.gmra.mxu0 %v329
        %v707 = vpop.f32.mrf.mxu0
        %v708 = vadd.f32 0.0, %v707
        %v709 = vpop.f32.mrf.mxu0
        %710 = vmatprep.mubr.f32.mxu0 0.0
        %711 = vmatmul.mubr.f32.gmra.mxu0 %v330
        %v712 = vpop.f32.mrf.mxu0
        %v713 = vadd.f32 0.0, %v712
        %v714 = vpop.f32.mrf.mxu0
        %715 = vmatprep.mubr.f32.mxu0 0.0
        %716 = vmatmul.mubr.f32.gmra.mxu0 %v331
        %v717 = vpop.f32.mrf.mxu0
        %v718 = vadd.f32 0.0, %v717
        %v719 = vpop.f32.mrf.mxu0
        %720 = vmatprep.mubr.f32.mxu0 0.0
        %721 = vmatmul.mubr.f32.gmra.mxu0 %v332
        %v722 = vpop.f32.mrf.mxu0
        %v723 = vadd.f32 0.0, %v722
        %v724 = vpop.f32.mrf.mxu0
        %725 = vmatprep.mubr.f32.mxu0 0.0
        %726 = vmatmul.mubr.f32.gmra.mxu0 %v333
        %v727 = vpop.f32.mrf.mxu0
        %v728 = vadd.f32 0.0, %v727
        %v729 = vpop.f32.mrf.mxu0
        %730 = vmatprep.mubr.f32.mxu0 0.0
        %731 = vmatmul.mubr.f32.gmra.mxu0 %v334
        %v732 = vpop.f32.mrf.mxu0
        %v733 = vadd.f32 0.0, %v732
        %v734 = vpop.f32.mrf.mxu0
        %735 = vdwg.mxu0
        %v736 = vld [vmem:[%s2] sm:$0xff]
        %v737 = vld [vmem:[%s2 + $0x8] sm:$0xff]
        %v738 = vld [vmem:[%s2 + $0x10] sm:$0xff]
        %v739 = vld [vmem:[%s2 + $0x18] sm:$0xff]
        %v740 = vld [vmem:[%s2 + $0x20] sm:$0xff]
        %v741 = vld [vmem:[%s2 + $0x28] sm:$0xff]
        %v742 = vld [vmem:[%s2 + $0x30] sm:$0xff]
        %v743 = vld [vmem:[%s2 + $0x38] sm:$0xff]
        %v744 = vld [vmem:[%s2 + $0x40] sm:$0xff]
        %v745 = vld [vmem:[%s2 + $0x48] sm:$0xff]
        %v746 = vld [vmem:[%s2 + $0x50] sm:$0xff]
        %v747 = vld [vmem:[%s2 + $0x58] sm:$0xff]
        %v748 = vld [vmem:[%s2 + $0x60] sm:$0xff]
        %v749 = vld [vmem:[%s2 + $0x68] sm:$0xff]
        %v750 = vld [vmem:[%s2 + $0x70] sm:$0xff]
        %v751 = vld [vmem:[%s2 + $0x78] sm:$0xff]
        %752 = vmatprep.subr.mxu0 0.0
        %753 = vmatpush1.msra.mxu0 %v751
        %754 = vmatprep.subr.mxu0 0.0
        %755 = vmatpush1.msra.mxu0 %v750
        %756 = vmatprep.subr.mxu0 0.0
        %757 = vmatpush1.msra.mxu0 %v749
        %758 = vmatprep.subr.mxu0 0.0
        %759 = vmatpush1.msra.mxu0 %v748
        %760 = vmatprep.subr.mxu0 0.0
        %761 = vmatpush1.msra.mxu0 %v747
        %762 = vmatprep.subr.mxu0 0.0
        %763 = vmatpush1.msra.mxu0 %v746
        %764 = vmatprep.subr.mxu0 0.0
        %765 = vmatpush1.msra.mxu0 %v745
        %766 = vmatprep.subr.mxu0 0.0
        %767 = vmatpush1.msra.mxu0 %v744
        %768 = vmatprep.subr.mxu0 0.0
        %769 = vmatpush1.msra.mxu0 %v743
        %770 = vmatprep.subr.mxu0 0.0
        %771 = vmatpush1.msra.mxu0 %v742
        %772 = vmatprep.subr.mxu0 0.0
        %773 = vmatpush1.msra.mxu0 %v741
        %774 = vmatprep.subr.mxu0 0.0
        %775 = vmatpush1.msra.mxu0 %v740
        %776 = vmatprep.subr.mxu0 0.0
        %777 = vmatpush1.msra.mxu0 %v739
        %778 = vmatprep.subr.mxu0 0.0
        %779 = vmatpush1.msra.mxu0 %v738
        %780 = vmatprep.subr.mxu0 0.0
        %781 = vmatpush1.msra.mxu0 %v737
        %782 = vmatprep.subr.mxu0 0.0
        %783 = vmatpush1.msra.mxu0 %v736
        %784 = vmatprep.subr.mxu0 0.0
        %785 = vmatpush2.msra.mxu0 0.0
        %786 = vmatprep.subr.mxu0 0.0
        %787 = vmatpush2.msra.mxu0 0.0
        %788 = vmatprep.subr.mxu0 0.0
        %789 = vmatpush2.msra.mxu0 0.0
        %790 = vmatprep.subr.mxu0 0.0
        %791 = vmatpush2.msra.mxu0 0.0
        %792 = vmatprep.subr.mxu0 0.0
        %793 = vmatpush2.msra.mxu0 0.0
        %794 = vmatprep.subr.mxu0 0.0
        %795 = vmatpush2.msra.mxu0 0.0
        %796 = vmatprep.subr.mxu0 0.0
        %797 = vmatpush2.msra.mxu0 0.0
        %798 = vmatprep.subr.mxu0 0.0
        %799 = vmatpush2.msra.mxu0 0.0
        %800 = vmatprep.subr.mxu0 0.0
        %801 = vmatpush2.msra.mxu0 0.0
        %802 = vmatprep.subr.mxu0 0.0
        %803 = vmatpush2.msra.mxu0 0.0
        %804 = vmatprep.subr.mxu0 0.0
        %805 = vmatpush2.msra.mxu0 0.0
        %806 = vmatprep.subr.mxu0 0.0
        %807 = vmatpush2.msra.mxu0 0.0
        %808 = vmatprep.subr.mxu0 0.0
        %809 = vmatpush2.msra.mxu0 0.0
        %810 = vmatprep.subr.mxu0 0.0
        %811 = vmatpush2.msra.mxu0 0.0
        %812 = vmatprep.subr.mxu0 0.0
        %813 = vmatpush2.msra.mxu0 0.0
        %814 = vmatprep.subr.mxu0 0.0
        %815 = vmatpush2.msra.mxu0 0.0
        %816 = vmatprep.mubr.f32.mxu0 0.0
        %817 = vmatmul.mubr.f32.gmra.mxu0 %v418
        %v818 = vpop.f32.mrf.mxu0
        %v819 = vadd.f32 0.0, %v818
        %v820 = vpop.f32.mrf.mxu0
        %821 = vmatprep.mubr.f32.mxu0 0.0
        %822 = vmatmul.mubr.f32.gmra.mxu0 %v423
        %v823 = vpop.f32.mrf.mxu0
        %v824 = vadd.f32 0.0, %v823
        %v825 = vpop.f32.mrf.mxu0
        %826 = vmatprep.mubr.f32.mxu0 0.0
        %827 = vmatmul.mubr.f32.gmra.mxu0 %v428
        %v828 = vpop.f32.mrf.mxu0
        %v829 = vadd.f32 0.0, %v828
        %v830 = vpop.f32.mrf.mxu0
        %831 = vmatprep.mubr.f32.mxu0 0.0
        %832 = vmatmul.mubr.f32.gmra.mxu0 %v433
        %v833 = vpop.f32.mrf.mxu0
        %v834 = vadd.f32 0.0, %v833
        %v835 = vpop.f32.mrf.mxu0
        %836 = vmatprep.mubr.f32.mxu0 0.0
        %837 = vmatmul.mubr.f32.gmra.mxu0 %v438
        %v838 = vpop.f32.mrf.mxu0
        %v839 = vadd.f32 0.0, %v838
        %v840 = vpop.f32.mrf.mxu0
        %841 = vmatprep.mubr.f32.mxu0 0.0
        %842 = vmatmul.mubr.f32.gmra.mxu0 %v443
        %v843 = vpop.f32.mrf.mxu0
        %v844 = vadd.f32 0.0, %v843
        %v845 = vpop.f32.mrf.mxu0
        %846 = vmatprep.mubr.f32.mxu0 0.0
        %847 = vmatmul.mubr.f32.gmra.mxu0 %v448
        %v848 = vpop.f32.mrf.mxu0
        %v849 = vadd.f32 0.0, %v848
        %v850 = vpop.f32.mrf.mxu0
        %851 = vmatprep.mubr.f32.mxu0 0.0
        %852 = vmatmul.mubr.f32.gmra.mxu0 %v453
        %v853 = vpop.f32.mrf.mxu0
        %v854 = vadd.f32 0.0, %v853
        %v855 = vpop.f32.mrf.mxu0
        %856 = vmatprep.mubr.f32.mxu0 0.0
        %857 = vmatmul.mubr.f32.gmra.mxu0 %v458
        %v858 = vpop.f32.mrf.mxu0
        %v859 = vadd.f32 0.0, %v858
        %v860 = vpop.f32.mrf.mxu0
        %861 = vmatprep.mubr.f32.mxu0 0.0
        %862 = vmatmul.mubr.f32.gmra.mxu0 %v463
        %v863 = vpop.f32.mrf.mxu0
        %v864 = vadd.f32 0.0, %v863
        %v865 = vpop.f32.mrf.mxu0
        %866 = vmatprep.mubr.f32.mxu0 0.0
        %867 = vmatmul.mubr.f32.gmra.mxu0 %v468
        %v868 = vpop.f32.mrf.mxu0
        %v869 = vadd.f32 0.0, %v868
        %v870 = vpop.f32.mrf.mxu0
        %871 = vmatprep.mubr.f32.mxu0 0.0
        %872 = vmatmul.mubr.f32.gmra.mxu0 %v473
        %v873 = vpop.f32.mrf.mxu0
        %v874 = vadd.f32 0.0, %v873
        %v875 = vpop.f32.mrf.mxu0
        %876 = vmatprep.mubr.f32.mxu0 0.0
        %877 = vmatmul.mubr.f32.gmra.mxu0 %v478
        %v878 = vpop.f32.mrf.mxu0
        %v879 = vadd.f32 0.0, %v878
        %v880 = vpop.f32.mrf.mxu0
        %881 = vmatprep.mubr.f32.mxu0 0.0
        %882 = vmatmul.mubr.f32.gmra.mxu0 %v483
        %v883 = vpop.f32.mrf.mxu0
        %v884 = vadd.f32 0.0, %v883
        %v885 = vpop.f32.mrf.mxu0
        %886 = vmatprep.mubr.f32.mxu0 0.0
        %887 = vmatmul.mubr.f32.gmra.mxu0 %v488
        %v888 = vpop.f32.mrf.mxu0
        %v889 = vadd.f32 0.0, %v888
        %v890 = vpop.f32.mrf.mxu0
        %891 = vmatprep.mubr.f32.mxu0 0.0
        %892 = vmatmul.mubr.f32.gmra.mxu0 %v493
        %v893 = vpop.f32.mrf.mxu0
        %v894 = vadd.f32 0.0, %v893
        %v895 = vpop.f32.mrf.mxu0
        %896 = vmatprep.mubr.f32.mxu0 0.0
        %897 = vmatmul.mubr.f32.gmra.mxu0 %v498
        %v898 = vpop.f32.mrf.mxu0
        %v899 = vadd.f32 0.0, %v898
        %v900 = vpop.f32.mrf.mxu0
        %901 = vmatprep.mubr.f32.mxu0 0.0
        %902 = vmatmul.mubr.f32.gmra.mxu0 %v503
        %v903 = vpop.f32.mrf.mxu0
        %v904 = vadd.f32 0.0, %v903
        %v905 = vpop.f32.mrf.mxu0
        %906 = vmatprep.mubr.f32.mxu0 0.0
        %907 = vmatmul.mubr.f32.gmra.mxu0 %v508
        %v908 = vpop.f32.mrf.mxu0
        %v909 = vadd.f32 0.0, %v908
        %v910 = vpop.f32.mrf.mxu0
        %911 = vmatprep.mubr.f32.mxu0 0.0
        %912 = vmatmul.mubr.f32.gmra.mxu0 %v513
        %v913 = vpop.f32.mrf.mxu0
        %v914 = vadd.f32 0.0, %v913
        %v915 = vpop.f32.mrf.mxu0
        %916 = vmatprep.mubr.f32.mxu0 0.0
        %917 = vmatmul.mubr.f32.gmra.mxu0 %v518
        %v918 = vpop.f32.mrf.mxu0
        %v919 = vadd.f32 0.0, %v918
        %v920 = vpop.f32.mrf.mxu0
        %921 = vmatprep.mubr.f32.mxu0 0.0
        %922 = vmatmul.mubr.f32.gmra.mxu0 %v523
        %v923 = vpop.f32.mrf.mxu0
        %v924 = vadd.f32 0.0, %v923
        %v925 = vpop.f32.mrf.mxu0
        %926 = vmatprep.mubr.f32.mxu0 0.0
        %927 = vmatmul.mubr.f32.gmra.mxu0 %v528
        %v928 = vpop.f32.mrf.mxu0
        %v929 = vadd.f32 0.0, %v928
        %v930 = vpop.f32.mrf.mxu0
        %931 = vmatprep.mubr.f32.mxu0 0.0
        %932 = vmatmul.mubr.f32.gmra.mxu0 %v533
        %v933 = vpop.f32.mrf.mxu0
        %v934 = vadd.f32 0.0, %v933
        %v935 = vpop.f32.mrf.mxu0
        %936 = vmatprep.mubr.f32.mxu0 0.0
        %937 = vmatmul.mubr.f32.gmra.mxu0 %v538
        %v938 = vpop.f32.mrf.mxu0
        %v939 = vadd.f32 0.0, %v938
        %v940 = vpop.f32.mrf.mxu0
        %941 = vmatprep.mubr.f32.mxu0 0.0
        %942 = vmatmul.mubr.f32.gmra.mxu0 %v543
        %v943 = vpop.f32.mrf.mxu0
        %v944 = vadd.f32 0.0, %v943
        %v945 = vpop.f32.mrf.mxu0
        %946 = vmatprep.mubr.f32.mxu0 0.0
        %947 = vmatmul.mubr.f32.gmra.mxu0 %v548
        %v948 = vpop.f32.mrf.mxu0
        %v949 = vadd.f32 0.0, %v948
        %v950 = vpop.f32.mrf.mxu0
        %951 = vmatprep.mubr.f32.mxu0 0.0
        %952 = vmatmul.mubr.f32.gmra.mxu0 %v553
        %v953 = vpop.f32.mrf.mxu0
        %v954 = vadd.f32 0.0, %v953
        %v955 = vpop.f32.mrf.mxu0
        %956 = vmatprep.mubr.f32.mxu0 0.0
        %957 = vmatmul.mubr.f32.gmra.mxu0 %v558
        %v958 = vpop.f32.mrf.mxu0
        %v959 = vadd.f32 0.0, %v958
        %v960 = vpop.f32.mrf.mxu0
        %961 = vmatprep.mubr.f32.mxu0 0.0
        %962 = vmatmul.mubr.f32.gmra.mxu0 %v563
        %v963 = vpop.f32.mrf.mxu0
        %v964 = vadd.f32 0.0, %v963
        %v965 = vpop.f32.mrf.mxu0
        %966 = vmatprep.mubr.f32.mxu0 0.0
        %967 = vmatmul.mubr.f32.gmra.mxu0 %v568
        %v968 = vpop.f32.mrf.mxu0
        %v969 = vadd.f32 0.0, %v968
        %v970 = vpop.f32.mrf.mxu0
        %971 = vmatprep.mubr.f32.mxu0 0.0
        %972 = vmatmul.mubr.f32.gmra.mxu0 %v573
        %v973 = vpop.f32.mrf.mxu0
        %v974 = vadd.f32 0.0, %v973
        %v975 = vpop.f32.mrf.mxu0
        %976 = vmatprep.mubr.f32.mxu0 0.0
        %977 = vmatmul.mubr.f32.gmra.mxu0 %v578
        %v978 = vpop.f32.mrf.mxu0
        %v979 = vadd.f32 0.0, %v978
        %v980 = vpop.f32.mrf.mxu0
        %981 = vmatprep.mubr.f32.mxu0 0.0
        %982 = vmatmul.mubr.f32.gmra.mxu0 %v583
        %v983 = vpop.f32.mrf.mxu0
        %v984 = vadd.f32 0.0, %v983
        %v985 = vpop.f32.mrf.mxu0
        %986 = vmatprep.mubr.f32.mxu0 0.0
        %987 = vmatmul.mubr.f32.gmra.mxu0 %v588
        %v988 = vpop.f32.mrf.mxu0
        %v989 = vadd.f32 0.0, %v988
        %v990 = vpop.f32.mrf.mxu0
        %991 = vmatprep.mubr.f32.mxu0 0.0
        %992 = vmatmul.mubr.f32.gmra.mxu0 %v593
        %v993 = vpop.f32.mrf.mxu0
        %v994 = vadd.f32 0.0, %v993
        %v995 = vpop.f32.mrf.mxu0
        %996 = vmatprep.mubr.f32.mxu0 0.0
        %997 = vmatmul.mubr.f32.gmra.mxu0 %v598
        %v998 = vpop.f32.mrf.mxu0
        %v999 = vadd.f32 0.0, %v998
        %v1000 = vpop.f32.mrf.mxu0
        %1001 = vmatprep.mubr.f32.mxu0 0.0
        %1002 = vmatmul.mubr.f32.gmra.mxu0 %v603
        %v1003 = vpop.f32.mrf.mxu0
        %v1004 = vadd.f32 0.0, %v1003
        %v1005 = vpop.f32.mrf.mxu0
        %1006 = vmatprep.mubr.f32.mxu0 0.0
        %1007 = vmatmul.mubr.f32.gmra.mxu0 %v608
        %v1008 = vpop.f32.mrf.mxu0
        %v1009 = vadd.f32 0.0, %v1008
        %v1010 = vpop.f32.mrf.mxu0
        %1011 = vmatprep.mubr.f32.mxu0 0.0
        %1012 = vmatmul.mubr.f32.gmra.mxu0 %v613
        %v1013 = vpop.f32.mrf.mxu0
        %v1014 = vadd.f32 0.0, %v1013
        %v1015 = vpop.f32.mrf.mxu0
        %1016 = vmatprep.mubr.f32.mxu0 0.0
        %1017 = vmatmul.mubr.f32.gmra.mxu0 %v618
        %v1018 = vpop.f32.mrf.mxu0
        %v1019 = vadd.f32 0.0, %v1018
        %v1020 = vpop.f32.mrf.mxu0
        %1021 = vmatprep.mubr.f32.mxu0 0.0
        %1022 = vmatmul.mubr.f32.gmra.mxu0 %v623
        %v1023 = vpop.f32.mrf.mxu0
        %v1024 = vadd.f32 0.0, %v1023
        %v1025 = vpop.f32.mrf.mxu0
        %1026 = vmatprep.mubr.f32.mxu0 0.0
        %1027 = vmatmul.mubr.f32.gmra.mxu0 %v628
        %v1028 = vpop.f32.mrf.mxu0
        %v1029 = vadd.f32 0.0, %v1028
        %v1030 = vpop.f32.mrf.mxu0
        %1031 = vmatprep.mubr.f32.mxu0 0.0
        %1032 = vmatmul.mubr.f32.gmra.mxu0 %v633
        %v1033 = vpop.f32.mrf.mxu0
        %v1034 = vadd.f32 0.0, %v1033
        %v1035 = vpop.f32.mrf.mxu0
        %1036 = vmatprep.mubr.f32.mxu0 0.0
        %1037 = vmatmul.mubr.f32.gmra.mxu0 %v638
        %v1038 = vpop.f32.mrf.mxu0
        %v1039 = vadd.f32 0.0, %v1038
        %v1040 = vpop.f32.mrf.mxu0
        %1041 = vmatprep.mubr.f32.mxu0 0.0
        %1042 = vmatmul.mubr.f32.gmra.mxu0 %v643
        %v1043 = vpop.f32.mrf.mxu0
        %v1044 = vadd.f32 0.0, %v1043
        %v1045 = vpop.f32.mrf.mxu0
        %1046 = vmatprep.mubr.f32.mxu0 0.0
        %1047 = vmatmul.mubr.f32.gmra.mxu0 %v648
        %v1048 = vpop.f32.mrf.mxu0
        %v1049 = vadd.f32 0.0, %v1048
        %v1050 = vpop.f32.mrf.mxu0
        %1051 = vmatprep.mubr.f32.mxu0 0.0
        %1052 = vmatmul.mubr.f32.gmra.mxu0 %v653
        %v1053 = vpop.f32.mrf.mxu0
        %v1054 = vadd.f32 0.0, %v1053
        %v1055 = vpop.f32.mrf.mxu0
        %1056 = vmatprep.mubr.f32.mxu0 0.0
        %1057 = vmatmul.mubr.f32.gmra.mxu0 %v658
        %v1058 = vpop.f32.mrf.mxu0
        %v1059 = vadd.f32 0.0, %v1058
        %v1060 = vpop.f32.mrf.mxu0
        %1061 = vmatprep.mubr.f32.mxu0 0.0
        %1062 = vmatmul.mubr.f32.gmra.mxu0 %v663
        %v1063 = vpop.f32.mrf.mxu0
        %v1064 = vadd.f32 0.0, %v1063
        %v1065 = vpop.f32.mrf.mxu0
        %1066 = vmatprep.mubr.f32.mxu0 0.0
        %1067 = vmatmul.mubr.f32.gmra.mxu0 %v668
        %v1068 = vpop.f32.mrf.mxu0
        %v1069 = vadd.f32 0.0, %v1068
        %v1070 = vpop.f32.mrf.mxu0
        %1071 = vmatprep.mubr.f32.mxu0 0.0
        %1072 = vmatmul.mubr.f32.gmra.mxu0 %v673
        %v1073 = vpop.f32.mrf.mxu0
        %v1074 = vadd.f32 0.0, %v1073
        %v1075 = vpop.f32.mrf.mxu0
        %1076 = vmatprep.mubr.f32.mxu0 0.0
        %1077 = vmatmul.mubr.f32.gmra.mxu0 %v678
        %v1078 = vpop.f32.mrf.mxu0
        %v1079 = vadd.f32 0.0, %v1078
        %v1080 = vpop.f32.mrf.mxu0
        %1081 = vmatprep.mubr.f32.mxu0 0.0
        %1082 = vmatmul.mubr.f32.gmra.mxu0 %v683
        %v1083 = vpop.f32.mrf.mxu0
        %v1084 = vadd.f32 0.0, %v1083
        %v1085 = vpop.f32.mrf.mxu0
        %1086 = vmatprep.mubr.f32.mxu0 0.0
        %1087 = vmatmul.mubr.f32.gmra.mxu0 %v688
        %v1088 = vpop.f32.mrf.mxu0
        %v1089 = vadd.f32 0.0, %v1088
        %v1090 = vpop.f32.mrf.mxu0
        %1091 = vmatprep.mubr.f32.mxu0 0.0
        %1092 = vmatmul.mubr.f32.gmra.mxu0 %v693
        %v1093 = vpop.f32.mrf.mxu0
        %v1094 = vadd.f32 0.0, %v1093
        %v1095 = vpop.f32.mrf.mxu0
        %1096 = vmatprep.mubr.f32.mxu0 0.0
        %1097 = vmatmul.mubr.f32.gmra.mxu0 %v698
        %v1098 = vpop.f32.mrf.mxu0
        %v1099 = vadd.f32 0.0, %v1098
        %v1100 = vpop.f32.mrf.mxu0
        %1101 = vmatprep.mubr.f32.mxu0 0.0
        %1102 = vmatmul.mubr.f32.gmra.mxu0 %v703
        %v1103 = vpop.f32.mrf.mxu0
        %v1104 = vadd.f32 0.0, %v1103
        %v1105 = vpop.f32.mrf.mxu0
        %1106 = vmatprep.mubr.f32.mxu0 0.0
        %1107 = vmatmul.mubr.f32.gmra.mxu0 %v708
        %v1108 = vpop.f32.mrf.mxu0
        %v1109 = vadd.f32 0.0, %v1108
        %v1110 = vpop.f32.mrf.mxu0
        %1111 = vmatprep.mubr.f32.mxu0 0.0
        %1112 = vmatmul.mubr.f32.gmra.mxu0 %v713
        %v1113 = vpop.f32.mrf.mxu0
        %v1114 = vadd.f32 0.0, %v1113
        %v1115 = vpop.f32.mrf.mxu0
        %1116 = vmatprep.mubr.f32.mxu0 0.0
        %1117 = vmatmul.mubr.f32.gmra.mxu0 %v718
        %v1118 = vpop.f32.mrf.mxu0
        %v1119 = vadd.f32 0.0, %v1118
        %v1120 = vpop.f32.mrf.mxu0
        %1121 = vmatprep.mubr.f32.mxu0 0.0
        %1122 = vmatmul.mubr.f32.gmra.mxu0 %v723
        %v1123 = vpop.f32.mrf.mxu0
        %v1124 = vadd.f32 0.0, %v1123
        %v1125 = vpop.f32.mrf.mxu0
        %1126 = vmatprep.mubr.f32.mxu0 0.0
        %1127 = vmatmul.mubr.f32.gmra.mxu0 %v728
        %v1128 = vpop.f32.mrf.mxu0
        %v1129 = vadd.f32 0.0, %v1128
        %v1130 = vpop.f32.mrf.mxu0
        %1131 = vmatprep.mubr.f32.mxu0 0.0
        %1132 = vmatmul.mubr.f32.gmra.mxu0 %v733
        %v1133 = vpop.f32.mrf.mxu0
        %v1134 = vadd.f32 0.0, %v1133
        %v1135 = vpop.f32.mrf.mxu0
        %1136 = vdwg.mxu0
        %vm1137 = vcmp.ge.f32.partialorder %v819, 0.0
        %vm1138 = vcmp.ge.f32.partialorder %v824, 0.0
        %vm1139 = vcmp.ge.f32.partialorder %v829, 0.0
        %vm1140 = vcmp.ge.f32.partialorder %v834, 0.0
        %vm1141 = vcmp.ge.f32.partialorder %v839, 0.0
        %vm1142 = vcmp.ge.f32.partialorder %v844, 0.0
        %vm1143 = vcmp.ge.f32.partialorder %v849, 0.0
        %vm1144 = vcmp.ge.f32.partialorder %v854, 0.0
        %vm1145 = vcmp.ge.f32.partialorder %v859, 0.0
        %vm1146 = vcmp.ge.f32.partialorder %v864, 0.0
        %vm1147 = vcmp.ge.f32.partialorder %v869, 0.0
        %vm1148 = vcmp.ge.f32.partialorder %v874, 0.0
        %vm1149 = vcmp.ge.f32.partialorder %v879, 0.0
        %vm1150 = vcmp.ge.f32.partialorder %v884, 0.0
        %vm1151 = vcmp.ge.f32.partialorder %v889, 0.0
        %vm1152 = vcmp.ge.f32.partialorder %v894, 0.0
        %vm1153 = vcmp.ge.f32.partialorder %v899, 0.0
        %vm1154 = vcmp.ge.f32.partialorder %v904, 0.0
        %vm1155 = vcmp.ge.f32.partialorder %v909, 0.0
        %vm1156 = vcmp.ge.f32.partialorder %v914, 0.0
        %vm1157 = vcmp.ge.f32.partialorder %v919, 0.0
        %vm1158 = vcmp.ge.f32.partialorder %v924, 0.0
        %vm1159 = vcmp.ge.f32.partialorder %v929, 0.0
        %vm1160 = vcmp.ge.f32.partialorder %v934, 0.0
        %vm1161 = vcmp.ge.f32.partialorder %v939, 0.0
        %vm1162 = vcmp.ge.f32.partialorder %v944, 0.0
        %vm1163 = vcmp.ge.f32.partialorder %v949, 0.0
        %vm1164 = vcmp.ge.f32.partialorder %v954, 0.0
        %vm1165 = vcmp.ge.f32.partialorder %v959, 0.0
        %vm1166 = vcmp.ge.f32.partialorder %v964, 0.0
        %vm1167 = vcmp.ge.f32.partialorder %v969, 0.0
        %vm1168 = vcmp.ge.f32.partialorder %v974, 0.0
        %vm1169 = vcmp.ge.f32.partialorder %v979, 0.0
        %vm1170 = vcmp.ge.f32.partialorder %v984, 0.0
        %vm1171 = vcmp.ge.f32.partialorder %v989, 0.0
        %vm1172 = vcmp.ge.f32.partialorder %v994, 0.0
        %vm1173 = vcmp.ge.f32.partialorder %v999, 0.0
        %vm1174 = vcmp.ge.f32.partialorder %v1004, 0.0
        %vm1175 = vcmp.ge.f32.partialorder %v1009, 0.0
        %vm1176 = vcmp.ge.f32.partialorder %v1014, 0.0
        %vm1177 = vcmp.ge.f32.partialorder %v1019, 0.0
        %vm1178 = vcmp.ge.f32.partialorder %v1024, 0.0
        %vm1179 = vcmp.ge.f32.partialorder %v1029, 0.0
        %vm1180 = vcmp.ge.f32.partialorder %v1034, 0.0
        %vm1181 = vcmp.ge.f32.partialorder %v1039, 0.0
        %vm1182 = vcmp.ge.f32.partialorder %v1044, 0.0
        %vm1183 = vcmp.ge.f32.partialorder %v1049, 0.0
        %vm1184 = vcmp.ge.f32.partialorder %v1054, 0.0
        %vm1185 = vcmp.ge.f32.partialorder %v1059, 0.0
        %vm1186 = vcmp.ge.f32.partialorder %v1064, 0.0
        %vm1187 = vcmp.ge.f32.partialorder %v1069, 0.0
        %vm1188 = vcmp.ge.f32.partialorder %v1074, 0.0
        %vm1189 = vcmp.ge.f32.partialorder %v1079, 0.0
        %vm1190 = vcmp.ge.f32.partialorder %v1084, 0.0
        %vm1191 = vcmp.ge.f32.partialorder %v1089, 0.0
        %vm1192 = vcmp.ge.f32.partialorder %v1094, 0.0
        %vm1193 = vcmp.ge.f32.partialorder %v1099, 0.0
        %vm1194 = vcmp.ge.f32.partialorder %v1104, 0.0
        %vm1195 = vcmp.ge.f32.partialorder %v1109, 0.0
        %vm1196 = vcmp.ge.f32.partialorder %v1114, 0.0
        %vm1197 = vcmp.ge.f32.partialorder %v1119, 0.0
        %vm1198 = vcmp.ge.f32.partialorder %v1124, 0.0
        %vm1199 = vcmp.ge.f32.partialorder %v1129, 0.0
        %vm1200 = vcmp.ge.f32.partialorder %v1134, 0.0
        %v1201 = vmul.f32 %v819, 0.2
        %v1202 = vmul.f32 %v824, 0.2
        %v1203 = vmul.f32 %v829, 0.2
        %v1204 = vmul.f32 %v834, 0.2
        %v1205 = vmul.f32 %v839, 0.2
        %v1206 = vmul.f32 %v844, 0.2
        %v1207 = vmul.f32 %v849, 0.2
        %v1208 = vmul.f32 %v854, 0.2
        %v1209 = vmul.f32 %v859, 0.2
        %v1210 = vmul.f32 %v864, 0.2
        %v1211 = vmul.f32 %v869, 0.2
        %v1212 = vmul.f32 %v874, 0.2
        %v1213 = vmul.f32 %v879, 0.2
        %v1214 = vmul.f32 %v884, 0.2
        %v1215 = vmul.f32 %v889, 0.2
        %v1216 = vmul.f32 %v894, 0.2
        %v1217 = vmul.f32 %v899, 0.2
        %v1218 = vmul.f32 %v904, 0.2
        %v1219 = vmul.f32 %v909, 0.2
        %v1220 = vmul.f32 %v914, 0.2
        %v1221 = vmul.f32 %v919, 0.2
        %v1222 = vmul.f32 %v924, 0.2
        %v1223 = vmul.f32 %v929, 0.2
        %v1224 = vmul.f32 %v934, 0.2
        %v1225 = vmul.f32 %v939, 0.2
        %v1226 = vmul.f32 %v944, 0.2
        %v1227 = vmul.f32 %v949, 0.2
        %v1228 = vmul.f32 %v954, 0.2
        %v1229 = vmul.f32 %v959, 0.2
        %v1230 = vmul.f32 %v964, 0.2
        %v1231 = vmul.f32 %v969, 0.2
        %v1232 = vmul.f32 %v974, 0.2
        %v1233 = vmul.f32 %v979, 0.2
        %v1234 = vmul.f32 %v984, 0.2
        %v1235 = vmul.f32 %v989, 0.2
        %v1236 = vmul.f32 %v994, 0.2
        %v1237 = vmul.f32 %v999, 0.2
        %v1238 = vmul.f32 %v1004, 0.2
        %v1239 = vmul.f32 %v1009, 0.2
        %v1240 = vmul.f32 %v1014, 0.2
        %v1241 = vmul.f32 %v1019, 0.2
        %v1242 = vmul.f32 %v1024, 0.2
        %v1243 = vmul.f32 %v1029, 0.2
        %v1244 = vmul.f32 %v1034, 0.2
        %v1245 = vmul.f32 %v1039, 0.2
        %v1246 = vmul.f32 %v1044, 0.2
        %v1247 = vmul.f32 %v1049, 0.2
        %v1248 = vmul.f32 %v1054, 0.2
        %v1249 = vmul.f32 %v1059, 0.2
        %v1250 = vmul.f32 %v1064, 0.2
        %v1251 = vmul.f32 %v1069, 0.2
        %v1252 = vmul.f32 %v1074, 0.2
        %v1253 = vmul.f32 %v1079, 0.2
        %v1254 = vmul.f32 %v1084, 0.2
        %v1255 = vmul.f32 %v1089, 0.2
        %v1256 = vmul.f32 %v1094, 0.2
        %v1257 = vmul.f32 %v1099, 0.2
        %v1258 = vmul.f32 %v1104, 0.2
        %v1259 = vmul.f32 %v1109, 0.2
        %v1260 = vmul.f32 %v1114, 0.2
        %v1261 = vmul.f32 %v1119, 0.2
        %v1262 = vmul.f32 %v1124, 0.2
        %v1263 = vmul.f32 %v1129, 0.2
        %v1264 = vmul.f32 %v1134, 0.2
        %v1265 = vsel %vm1137, %v819, %v1201
        %v1266 = vsel %vm1138, %v824, %v1202
        %v1267 = vsel %vm1139, %v829, %v1203
        %v1268 = vsel %vm1140, %v834, %v1204
        %v1269 = vsel %vm1141, %v839, %v1205
        %v1270 = vsel %vm1142, %v844, %v1206
        %v1271 = vsel %vm1143, %v849, %v1207
        %v1272 = vsel %vm1144, %v854, %v1208
        %v1273 = vsel %vm1145, %v859, %v1209
        %v1274 = vsel %vm1146, %v864, %v1210
        %v1275 = vsel %vm1147, %v869, %v1211
        %v1276 = vsel %vm1148, %v874, %v1212
        %v1277 = vsel %vm1149, %v879, %v1213
        %v1278 = vsel %vm1150, %v884, %v1214
        %v1279 = vsel %vm1151, %v889, %v1215
        %v1280 = vsel %vm1152, %v894, %v1216
        %v1281 = vsel %vm1153, %v899, %v1217
        %v1282 = vsel %vm1154, %v904, %v1218
        %v1283 = vsel %vm1155, %v909, %v1219
        %v1284 = vsel %vm1156, %v914, %v1220
        %v1285 = vsel %vm1157, %v919, %v1221
        %v1286 = vsel %vm1158, %v924, %v1222
        %v1287 = vsel %vm1159, %v929, %v1223
        %v1288 = vsel %vm1160, %v934, %v1224
        %v1289 = vsel %vm1161, %v939, %v1225
        %v1290 = vsel %vm1162, %v944, %v1226
        %v1291 = vsel %vm1163, %v949, %v1227
        %v1292 = vsel %vm1164, %v954, %v1228
        %v1293 = vsel %vm1165, %v959, %v1229
        %v1294 = vsel %vm1166, %v964, %v1230
        %v1295 = vsel %vm1167, %v969, %v1231
        %v1296 = vsel %vm1168, %v974, %v1232
        %v1297 = vsel %vm1169, %v979, %v1233
        %v1298 = vsel %vm1170, %v984, %v1234
        %v1299 = vsel %vm1171, %v989, %v1235
        %v1300 = vsel %vm1172, %v994, %v1236
        %v1301 = vsel %vm1173, %v999, %v1237
        %v1302 = vsel %vm1174, %v1004, %v1238
        %v1303 = vsel %vm1175, %v1009, %v1239
        %v1304 = vsel %vm1176, %v1014, %v1240
        %v1305 = vsel %vm1177, %v1019, %v1241
        %v1306 = vsel %vm1178, %v1024, %v1242
        %v1307 = vsel %vm1179, %v1029, %v1243
        %v1308 = vsel %vm1180, %v1034, %v1244
        %v1309 = vsel %vm1181, %v1039, %v1245
        %v1310 = vsel %vm1182, %v1044, %v1246
        %v1311 = vsel %vm1183, %v1049, %v1247
        %v1312 = vsel %vm1184, %v1054, %v1248
        %v1313 = vsel %vm1185, %v1059, %v1249
        %v1314 = vsel %vm1186, %v1064, %v1250
        %v1315 = vsel %vm1187, %v1069, %v1251
        %v1316 = vsel %vm1188, %v1074, %v1252
        %v1317 = vsel %vm1189, %v1079, %v1253
        %v1318 = vsel %vm1190, %v1084, %v1254
        %v1319 = vsel %vm1191, %v1089, %v1255
        %v1320 = vsel %vm1192, %v1094, %v1256
        %v1321 = vsel %vm1193, %v1099, %v1257
        %v1322 = vsel %vm1194, %v1104, %v1258
        %v1323 = vsel %vm1195, %v1109, %v1259
        %v1324 = vsel %vm1196, %v1114, %v1260
        %v1325 = vsel %vm1197, %v1119, %v1261
        %v1326 = vsel %vm1198, %v1124, %v1262
        %v1327 = vsel %vm1199, %v1129, %v1263
        %v1328 = vsel %vm1200, %v1134, %v1264
        %s1329 = scalar_lea.vmem %s235, 512 [#allocation2]
        %v1330 = vld [vmem:[%s1329] sm:$0xff]
        %v1331 = vld [vmem:[%s1329 + $0x8] sm:$0xff]
        %v1332 = vld [vmem:[%s1329 + $0x10] sm:$0xff]
        %v1333 = vld [vmem:[%s1329 + $0x18] sm:$0xff]
        %v1334 = vld [vmem:[%s1329 + $0x20] sm:$0xff]
        %v1335 = vld [vmem:[%s1329 + $0x28] sm:$0xff]
        %v1336 = vld [vmem:[%s1329 + $0x30] sm:$0xff]
        %v1337 = vld [vmem:[%s1329 + $0x38] sm:$0xff]
        %v1338 = vld [vmem:[%s1329 + $0x40] sm:$0xff]
        %v1339 = vld [vmem:[%s1329 + $0x48] sm:$0xff]
        %v1340 = vld [vmem:[%s1329 + $0x50] sm:$0xff]
        %v1341 = vld [vmem:[%s1329 + $0x58] sm:$0xff]
        %v1342 = vld [vmem:[%s1329 + $0x60] sm:$0xff]
        %v1343 = vld [vmem:[%s1329 + $0x68] sm:$0xff]
        %v1344 = vld [vmem:[%s1329 + $0x70] sm:$0xff]
        %v1345 = vld [vmem:[%s1329 + $0x78] sm:$0xff]
        %v1346 = vld [vmem:[%s1329 + $0x80] sm:$0xff]
        %v1347 = vld [vmem:[%s1329 + $0x88] sm:$0xff]
        %v1348 = vld [vmem:[%s1329 + $0x90] sm:$0xff]
        %v1349 = vld [vmem:[%s1329 + $0x98] sm:$0xff]
        %v1350 = vld [vmem:[%s1329 + $0xa0] sm:$0xff]
        %v1351 = vld [vmem:[%s1329 + $0xa8] sm:$0xff]
        %v1352 = vld [vmem:[%s1329 + $0xb0] sm:$0xff]
        %v1353 = vld [vmem:[%s1329 + $0xb8] sm:$0xff]
        %v1354 = vld [vmem:[%s1329 + $0xc0] sm:$0xff]
        %v1355 = vld [vmem:[%s1329 + $0xc8] sm:$0xff]
        %v1356 = vld [vmem:[%s1329 + $0xd0] sm:$0xff]
        %v1357 = vld [vmem:[%s1329 + $0xd8] sm:$0xff]
        %v1358 = vld [vmem:[%s1329 + $0xe0] sm:$0xff]
        %v1359 = vld [vmem:[%s1329 + $0xe8] sm:$0xff]
        %v1360 = vld [vmem:[%s1329 + $0xf0] sm:$0xff]
        %v1361 = vld [vmem:[%s1329 + $0xf8] sm:$0xff]
        %v1362 = vld [vmem:[%s1329 + $0x100] sm:$0xff]
        %v1363 = vld [vmem:[%s1329 + $0x108] sm:$0xff]
        %v1364 = vld [vmem:[%s1329 + $0x110] sm:$0xff]
        %v1365 = vld [vmem:[%s1329 + $0x118] sm:$0xff]
        %v1366 = vld [vmem:[%s1329 + $0x120] sm:$0xff]
        %v1367 = vld [vmem:[%s1329 + $0x128] sm:$0xff]
        %v1368 = vld [vmem:[%s1329 + $0x130] sm:$0xff]
        %v1369 = vld [vmem:[%s1329 + $0x138] sm:$0xff]
        %v1370 = vld [vmem:[%s1329 + $0x140] sm:$0xff]
        %v1371 = vld [vmem:[%s1329 + $0x148] sm:$0xff]
        %v1372 = vld [vmem:[%s1329 + $0x150] sm:$0xff]
        %v1373 = vld [vmem:[%s1329 + $0x158] sm:$0xff]
        %v1374 = vld [vmem:[%s1329 + $0x160] sm:$0xff]
        %v1375 = vld [vmem:[%s1329 + $0x168] sm:$0xff]
        %v1376 = vld [vmem:[%s1329 + $0x170] sm:$0xff]
        %v1377 = vld [vmem:[%s1329 + $0x178] sm:$0xff]
        %v1378 = vld [vmem:[%s1329 + $0x180] sm:$0xff]
        %v1379 = vld [vmem:[%s1329 + $0x188] sm:$0xff]
        %v1380 = vld [vmem:[%s1329 + $0x190] sm:$0xff]
        %v1381 = vld [vmem:[%s1329 + $0x198] sm:$0xff]
        %v1382 = vld [vmem:[%s1329 + $0x1a0] sm:$0xff]
        %v1383 = vld [vmem:[%s1329 + $0x1a8] sm:$0xff]
        %v1384 = vld [vmem:[%s1329 + $0x1b0] sm:$0xff]
        %v1385 = vld [vmem:[%s1329 + $0x1b8] sm:$0xff]
        %v1386 = vld [vmem:[%s1329 + $0x1c0] sm:$0xff]
        %v1387 = vld [vmem:[%s1329 + $0x1c8] sm:$0xff]
        %v1388 = vld [vmem:[%s1329 + $0x1d0] sm:$0xff]
        %v1389 = vld [vmem:[%s1329 + $0x1d8] sm:$0xff]
        %v1390 = vld [vmem:[%s1329 + $0x1e0] sm:$0xff]
        %v1391 = vld [vmem:[%s1329 + $0x1e8] sm:$0xff]
        %v1392 = vld [vmem:[%s1329 + $0x1f0] sm:$0xff]
        %v1393 = vld [vmem:[%s1329 + $0x1f8] sm:$0xff]
        %s1394 = scalar_lea.vmem [#allocation5], 128
        %v1395 = vld [vmem:[%s1394] sm:$0xff]
        %v1396 = vld [vmem:[%s1394 + $0x8] sm:$0xff]
        %v1397 = vld [vmem:[%s1394 + $0x10] sm:$0xff]
        %v1398 = vld [vmem:[%s1394 + $0x18] sm:$0xff]
        %v1399 = vld [vmem:[%s1394 + $0x20] sm:$0xff]
        %v1400 = vld [vmem:[%s1394 + $0x28] sm:$0xff]
        %v1401 = vld [vmem:[%s1394 + $0x30] sm:$0xff]
        %v1402 = vld [vmem:[%s1394 + $0x38] sm:$0xff]
        %v1403 = vld [vmem:[%s1394 + $0x40] sm:$0xff]
        %v1404 = vld [vmem:[%s1394 + $0x48] sm:$0xff]
        %v1405 = vld [vmem:[%s1394 + $0x50] sm:$0xff]
        %v1406 = vld [vmem:[%s1394 + $0x58] sm:$0xff]
        %v1407 = vld [vmem:[%s1394 + $0x60] sm:$0xff]
        %v1408 = vld [vmem:[%s1394 + $0x68] sm:$0xff]
        %v1409 = vld [vmem:[%s1394 + $0x70] sm:$0xff]
        %v1410 = vld [vmem:[%s1394 + $0x78] sm:$0xff]
        %1411 = vmatprep.subr.mxu0 0.0
        %1412 = vmatpush1.msra.mxu0 %v1410
        %1413 = vmatprep.subr.mxu0 0.0
        %1414 = vmatpush1.msra.mxu0 %v1409
        %1415 = vmatprep.subr.mxu0 0.0
        %1416 = vmatpush1.msra.mxu0 %v1408
        %1417 = vmatprep.subr.mxu0 0.0
        %1418 = vmatpush1.msra.mxu0 %v1407
        %1419 = vmatprep.subr.mxu0 0.0
        %1420 = vmatpush1.msra.mxu0 %v1406
        %1421 = vmatprep.subr.mxu0 0.0
        %1422 = vmatpush1.msra.mxu0 %v1405
        %1423 = vmatprep.subr.mxu0 0.0
        %1424 = vmatpush1.msra.mxu0 %v1404
        %1425 = vmatprep.subr.mxu0 0.0
        %1426 = vmatpush1.msra.mxu0 %v1403
        %1427 = vmatprep.subr.mxu0 0.0
        %1428 = vmatpush1.msra.mxu0 %v1402
        %1429 = vmatprep.subr.mxu0 0.0
        %1430 = vmatpush1.msra.mxu0 %v1401
        %1431 = vmatprep.subr.mxu0 0.0
        %1432 = vmatpush1.msra.mxu0 %v1400
        %1433 = vmatprep.subr.mxu0 0.0
        %1434 = vmatpush1.msra.mxu0 %v1399
        %1435 = vmatprep.subr.mxu0 0.0
        %1436 = vmatpush1.msra.mxu0 %v1398
        %1437 = vmatprep.subr.mxu0 0.0
        %1438 = vmatpush1.msra.mxu0 %v1397
        %1439 = vmatprep.subr.mxu0 0.0
        %1440 = vmatpush1.msra.mxu0 %v1396
        %1441 = vmatprep.subr.mxu0 0.0
        %1442 = vmatpush1.msra.mxu0 %v1395
        %1443 = vmatprep.subr.mxu0 0.0
        %1444 = vmatpush2.msra.mxu0 0.0
        %1445 = vmatprep.subr.mxu0 0.0
        %1446 = vmatpush2.msra.mxu0 0.0
        %1447 = vmatprep.subr.mxu0 0.0
        %1448 = vmatpush2.msra.mxu0 0.0
        %1449 = vmatprep.subr.mxu0 0.0
        %1450 = vmatpush2.msra.mxu0 0.0
        %1451 = vmatprep.subr.mxu0 0.0
        %1452 = vmatpush2.msra.mxu0 0.0
        %1453 = vmatprep.subr.mxu0 0.0
        %1454 = vmatpush2.msra.mxu0 0.0
        %1455 = vmatprep.subr.mxu0 0.0
        %1456 = vmatpush2.msra.mxu0 0.0
        %1457 = vmatprep.subr.mxu0 0.0
        %1458 = vmatpush2.msra.mxu0 0.0
        %1459 = vmatprep.subr.mxu0 0.0
        %1460 = vmatpush2.msra.mxu0 0.0
        %1461 = vmatprep.subr.mxu0 0.0
        %1462 = vmatpush2.msra.mxu0 0.0
        %1463 = vmatprep.subr.mxu0 0.0
        %1464 = vmatpush2.msra.mxu0 0.0
        %1465 = vmatprep.subr.mxu0 0.0
        %1466 = vmatpush2.msra.mxu0 0.0
        %1467 = vmatprep.subr.mxu0 0.0
        %1468 = vmatpush2.msra.mxu0 0.0
        %1469 = vmatprep.subr.mxu0 0.0
        %1470 = vmatpush2.msra.mxu0 0.0
        %1471 = vmatprep.subr.mxu0 0.0
        %1472 = vmatpush2.msra.mxu0 0.0
        %1473 = vmatprep.subr.mxu0 0.0
        %1474 = vmatpush2.msra.mxu0 0.0
        %1475 = vmatprep.mubr.f32.mxu0 0.0
        %1476 = vmatmul.mubr.f32.gmra.mxu0 %v1330
        %v1477 = vpop.f32.mrf.mxu0
        %v1478 = vadd.f32 0.0, %v1477
        %v1479 = vpop.f32.mrf.mxu0
        %1480 = vmatprep.mubr.f32.mxu0 0.0
        %1481 = vmatmul.mubr.f32.gmra.mxu0 %v1331
        %v1482 = vpop.f32.mrf.mxu0
        %v1483 = vadd.f32 0.0, %v1482
        %v1484 = vpop.f32.mrf.mxu0
        %1485 = vmatprep.mubr.f32.mxu0 0.0
        %1486 = vmatmul.mubr.f32.gmra.mxu0 %v1332
        %v1487 = vpop.f32.mrf.mxu0
        %v1488 = vadd.f32 0.0, %v1487
        %v1489 = vpop.f32.mrf.mxu0
        %1490 = vmatprep.mubr.f32.mxu0 0.0
        %1491 = vmatmul.mubr.f32.gmra.mxu0 %v1333
        %v1492 = vpop.f32.mrf.mxu0
        %v1493 = vadd.f32 0.0, %v1492
        %v1494 = vpop.f32.mrf.mxu0
        %1495 = vmatprep.mubr.f32.mxu0 0.0
        %1496 = vmatmul.mubr.f32.gmra.mxu0 %v1334
        %v1497 = vpop.f32.mrf.mxu0
        %v1498 = vadd.f32 0.0, %v1497
        %v1499 = vpop.f32.mrf.mxu0
        %1500 = vmatprep.mubr.f32.mxu0 0.0
        %1501 = vmatmul.mubr.f32.gmra.mxu0 %v1335
        %v1502 = vpop.f32.mrf.mxu0
        %v1503 = vadd.f32 0.0, %v1502
        %v1504 = vpop.f32.mrf.mxu0
        %1505 = vmatprep.mubr.f32.mxu0 0.0
        %1506 = vmatmul.mubr.f32.gmra.mxu0 %v1336
        %v1507 = vpop.f32.mrf.mxu0
        %v1508 = vadd.f32 0.0, %v1507
        %v1509 = vpop.f32.mrf.mxu0
        %1510 = vmatprep.mubr.f32.mxu0 0.0
        %1511 = vmatmul.mubr.f32.gmra.mxu0 %v1337
        %v1512 = vpop.f32.mrf.mxu0
        %v1513 = vadd.f32 0.0, %v1512
        %v1514 = vpop.f32.mrf.mxu0
        %1515 = vmatprep.mubr.f32.mxu0 0.0
        %1516 = vmatmul.mubr.f32.gmra.mxu0 %v1338
        %v1517 = vpop.f32.mrf.mxu0
        %v1518 = vadd.f32 0.0, %v1517
        %v1519 = vpop.f32.mrf.mxu0
        %1520 = vmatprep.mubr.f32.mxu0 0.0
        %1521 = vmatmul.mubr.f32.gmra.mxu0 %v1339
        %v1522 = vpop.f32.mrf.mxu0
        %v1523 = vadd.f32 0.0, %v1522
        %v1524 = vpop.f32.mrf.mxu0
        %1525 = vmatprep.mubr.f32.mxu0 0.0
        %1526 = vmatmul.mubr.f32.gmra.mxu0 %v1340
        %v1527 = vpop.f32.mrf.mxu0
        %v1528 = vadd.f32 0.0, %v1527
        %v1529 = vpop.f32.mrf.mxu0
        %1530 = vmatprep.mubr.f32.mxu0 0.0
        %1531 = vmatmul.mubr.f32.gmra.mxu0 %v1341
        %v1532 = vpop.f32.mrf.mxu0
        %v1533 = vadd.f32 0.0, %v1532
        %v1534 = vpop.f32.mrf.mxu0
        %1535 = vmatprep.mubr.f32.mxu0 0.0
        %1536 = vmatmul.mubr.f32.gmra.mxu0 %v1342
        %v1537 = vpop.f32.mrf.mxu0
        %v1538 = vadd.f32 0.0, %v1537
        %v1539 = vpop.f32.mrf.mxu0
        %1540 = vmatprep.mubr.f32.mxu0 0.0
        %1541 = vmatmul.mubr.f32.gmra.mxu0 %v1343
        %v1542 = vpop.f32.mrf.mxu0
        %v1543 = vadd.f32 0.0, %v1542
        %v1544 = vpop.f32.mrf.mxu0
        %1545 = vmatprep.mubr.f32.mxu0 0.0
        %1546 = vmatmul.mubr.f32.gmra.mxu0 %v1344
        %v1547 = vpop.f32.mrf.mxu0
        %v1548 = vadd.f32 0.0, %v1547
        %v1549 = vpop.f32.mrf.mxu0
        %1550 = vmatprep.mubr.f32.mxu0 0.0
        %1551 = vmatmul.mubr.f32.gmra.mxu0 %v1345
        %v1552 = vpop.f32.mrf.mxu0
        %v1553 = vadd.f32 0.0, %v1552
        %v1554 = vpop.f32.mrf.mxu0
        %1555 = vmatprep.mubr.f32.mxu0 0.0
        %1556 = vmatmul.mubr.f32.gmra.mxu0 %v1346
        %v1557 = vpop.f32.mrf.mxu0
        %v1558 = vadd.f32 0.0, %v1557
        %v1559 = vpop.f32.mrf.mxu0
        %1560 = vmatprep.mubr.f32.mxu0 0.0
        %1561 = vmatmul.mubr.f32.gmra.mxu0 %v1347
        %v1562 = vpop.f32.mrf.mxu0
        %v1563 = vadd.f32 0.0, %v1562
        %v1564 = vpop.f32.mrf.mxu0
        %1565 = vmatprep.mubr.f32.mxu0 0.0
        %1566 = vmatmul.mubr.f32.gmra.mxu0 %v1348
        %v1567 = vpop.f32.mrf.mxu0
        %v1568 = vadd.f32 0.0, %v1567
        %v1569 = vpop.f32.mrf.mxu0
        %1570 = vmatprep.mubr.f32.mxu0 0.0
        %1571 = vmatmul.mubr.f32.gmra.mxu0 %v1349
        %v1572 = vpop.f32.mrf.mxu0
        %v1573 = vadd.f32 0.0, %v1572
        %v1574 = vpop.f32.mrf.mxu0
        %1575 = vmatprep.mubr.f32.mxu0 0.0
        %1576 = vmatmul.mubr.f32.gmra.mxu0 %v1350
        %v1577 = vpop.f32.mrf.mxu0
        %v1578 = vadd.f32 0.0, %v1577
        %v1579 = vpop.f32.mrf.mxu0
        %1580 = vmatprep.mubr.f32.mxu0 0.0
        %1581 = vmatmul.mubr.f32.gmra.mxu0 %v1351
        %v1582 = vpop.f32.mrf.mxu0
        %v1583 = vadd.f32 0.0, %v1582
        %v1584 = vpop.f32.mrf.mxu0
        %1585 = vmatprep.mubr.f32.mxu0 0.0
        %1586 = vmatmul.mubr.f32.gmra.mxu0 %v1352
        %v1587 = vpop.f32.mrf.mxu0
        %v1588 = vadd.f32 0.0, %v1587
        %v1589 = vpop.f32.mrf.mxu0
        %1590 = vmatprep.mubr.f32.mxu0 0.0
        %1591 = vmatmul.mubr.f32.gmra.mxu0 %v1353
        %v1592 = vpop.f32.mrf.mxu0
        %v1593 = vadd.f32 0.0, %v1592
        %v1594 = vpop.f32.mrf.mxu0
        %1595 = vmatprep.mubr.f32.mxu0 0.0
        %1596 = vmatmul.mubr.f32.gmra.mxu0 %v1354
        %v1597 = vpop.f32.mrf.mxu0
        %v1598 = vadd.f32 0.0, %v1597
        %v1599 = vpop.f32.mrf.mxu0
        %1600 = vmatprep.mubr.f32.mxu0 0.0
        %1601 = vmatmul.mubr.f32.gmra.mxu0 %v1355
        %v1602 = vpop.f32.mrf.mxu0
        %v1603 = vadd.f32 0.0, %v1602
        %v1604 = vpop.f32.mrf.mxu0
        %1605 = vmatprep.mubr.f32.mxu0 0.0
        %1606 = vmatmul.mubr.f32.gmra.mxu0 %v1356
        %v1607 = vpop.f32.mrf.mxu0
        %v1608 = vadd.f32 0.0, %v1607
        %v1609 = vpop.f32.mrf.mxu0
        %1610 = vmatprep.mubr.f32.mxu0 0.0
        %1611 = vmatmul.mubr.f32.gmra.mxu0 %v1357
        %v1612 = vpop.f32.mrf.mxu0
        %v1613 = vadd.f32 0.0, %v1612
        %v1614 = vpop.f32.mrf.mxu0
        %1615 = vmatprep.mubr.f32.mxu0 0.0
        %1616 = vmatmul.mubr.f32.gmra.mxu0 %v1358
        %v1617 = vpop.f32.mrf.mxu0
        %v1618 = vadd.f32 0.0, %v1617
        %v1619 = vpop.f32.mrf.mxu0
        %1620 = vmatprep.mubr.f32.mxu0 0.0
        %1621 = vmatmul.mubr.f32.gmra.mxu0 %v1359
        %v1622 = vpop.f32.mrf.mxu0
        %v1623 = vadd.f32 0.0, %v1622
        %v1624 = vpop.f32.mrf.mxu0
        %1625 = vmatprep.mubr.f32.mxu0 0.0
        %1626 = vmatmul.mubr.f32.gmra.mxu0 %v1360
        %v1627 = vpop.f32.mrf.mxu0
        %v1628 = vadd.f32 0.0, %v1627
        %v1629 = vpop.f32.mrf.mxu0
        %1630 = vmatprep.mubr.f32.mxu0 0.0
        %1631 = vmatmul.mubr.f32.gmra.mxu0 %v1361
        %v1632 = vpop.f32.mrf.mxu0
        %v1633 = vadd.f32 0.0, %v1632
        %v1634 = vpop.f32.mrf.mxu0
        %1635 = vmatprep.mubr.f32.mxu0 0.0
        %1636 = vmatmul.mubr.f32.gmra.mxu0 %v1362
        %v1637 = vpop.f32.mrf.mxu0
        %v1638 = vadd.f32 0.0, %v1637
        %v1639 = vpop.f32.mrf.mxu0
        %1640 = vmatprep.mubr.f32.mxu0 0.0
        %1641 = vmatmul.mubr.f32.gmra.mxu0 %v1363
        %v1642 = vpop.f32.mrf.mxu0
        %v1643 = vadd.f32 0.0, %v1642
        %v1644 = vpop.f32.mrf.mxu0
        %1645 = vmatprep.mubr.f32.mxu0 0.0
        %1646 = vmatmul.mubr.f32.gmra.mxu0 %v1364
        %v1647 = vpop.f32.mrf.mxu0
        %v1648 = vadd.f32 0.0, %v1647
        %v1649 = vpop.f32.mrf.mxu0
        %1650 = vmatprep.mubr.f32.mxu0 0.0
        %1651 = vmatmul.mubr.f32.gmra.mxu0 %v1365
        %v1652 = vpop.f32.mrf.mxu0
        %v1653 = vadd.f32 0.0, %v1652
        %v1654 = vpop.f32.mrf.mxu0
        %1655 = vmatprep.mubr.f32.mxu0 0.0
        %1656 = vmatmul.mubr.f32.gmra.mxu0 %v1366
        %v1657 = vpop.f32.mrf.mxu0
        %v1658 = vadd.f32 0.0, %v1657
        %v1659 = vpop.f32.mrf.mxu0
        %1660 = vmatprep.mubr.f32.mxu0 0.0
        %1661 = vmatmul.mubr.f32.gmra.mxu0 %v1367
        %v1662 = vpop.f32.mrf.mxu0
        %v1663 = vadd.f32 0.0, %v1662
        %v1664 = vpop.f32.mrf.mxu0
        %1665 = vmatprep.mubr.f32.mxu0 0.0
        %1666 = vmatmul.mubr.f32.gmra.mxu0 %v1368
        %v1667 = vpop.f32.mrf.mxu0
        %v1668 = vadd.f32 0.0, %v1667
        %v1669 = vpop.f32.mrf.mxu0
        %1670 = vmatprep.mubr.f32.mxu0 0.0
        %1671 = vmatmul.mubr.f32.gmra.mxu0 %v1369
        %v1672 = vpop.f32.mrf.mxu0
        %v1673 = vadd.f32 0.0, %v1672
        %v1674 = vpop.f32.mrf.mxu0
        %1675 = vmatprep.mubr.f32.mxu0 0.0
        %1676 = vmatmul.mubr.f32.gmra.mxu0 %v1370
        %v1677 = vpop.f32.mrf.mxu0
        %v1678 = vadd.f32 0.0, %v1677
        %v1679 = vpop.f32.mrf.mxu0
        %1680 = vmatprep.mubr.f32.mxu0 0.0
        %1681 = vmatmul.mubr.f32.gmra.mxu0 %v1371
        %v1682 = vpop.f32.mrf.mxu0
        %v1683 = vadd.f32 0.0, %v1682
        %v1684 = vpop.f32.mrf.mxu0
        %1685 = vmatprep.mubr.f32.mxu0 0.0
        %1686 = vmatmul.mubr.f32.gmra.mxu0 %v1372
        %v1687 = vpop.f32.mrf.mxu0
        %v1688 = vadd.f32 0.0, %v1687
        %v1689 = vpop.f32.mrf.mxu0
        %1690 = vmatprep.mubr.f32.mxu0 0.0
        %1691 = vmatmul.mubr.f32.gmra.mxu0 %v1373
        %v1692 = vpop.f32.mrf.mxu0
        %v1693 = vadd.f32 0.0, %v1692
        %v1694 = vpop.f32.mrf.mxu0
        %1695 = vmatprep.mubr.f32.mxu0 0.0
        %1696 = vmatmul.mubr.f32.gmra.mxu0 %v1374
        %v1697 = vpop.f32.mrf.mxu0
        %v1698 = vadd.f32 0.0, %v1697
        %v1699 = vpop.f32.mrf.mxu0
        %1700 = vmatprep.mubr.f32.mxu0 0.0
        %1701 = vmatmul.mubr.f32.gmra.mxu0 %v1375
        %v1702 = vpop.f32.mrf.mxu0
        %v1703 = vadd.f32 0.0, %v1702
        %v1704 = vpop.f32.mrf.mxu0
        %1705 = vmatprep.mubr.f32.mxu0 0.0
        %1706 = vmatmul.mubr.f32.gmra.mxu0 %v1376
        %v1707 = vpop.f32.mrf.mxu0
        %v1708 = vadd.f32 0.0, %v1707
        %v1709 = vpop.f32.mrf.mxu0
        %1710 = vmatprep.mubr.f32.mxu0 0.0
        %1711 = vmatmul.mubr.f32.gmra.mxu0 %v1377
        %v1712 = vpop.f32.mrf.mxu0
        %v1713 = vadd.f32 0.0, %v1712
        %v1714 = vpop.f32.mrf.mxu0
        %1715 = vmatprep.mubr.f32.mxu0 0.0
        %1716 = vmatmul.mubr.f32.gmra.mxu0 %v1378
        %v1717 = vpop.f32.mrf.mxu0
        %v1718 = vadd.f32 0.0, %v1717
        %v1719 = vpop.f32.mrf.mxu0
        %1720 = vmatprep.mubr.f32.mxu0 0.0
        %1721 = vmatmul.mubr.f32.gmra.mxu0 %v1379
        %v1722 = vpop.f32.mrf.mxu0
        %v1723 = vadd.f32 0.0, %v1722
        %v1724 = vpop.f32.mrf.mxu0
        %1725 = vmatprep.mubr.f32.mxu0 0.0
        %1726 = vmatmul.mubr.f32.gmra.mxu0 %v1380
        %v1727 = vpop.f32.mrf.mxu0
        %v1728 = vadd.f32 0.0, %v1727
        %v1729 = vpop.f32.mrf.mxu0
        %1730 = vmatprep.mubr.f32.mxu0 0.0
        %1731 = vmatmul.mubr.f32.gmra.mxu0 %v1381
        %v1732 = vpop.f32.mrf.mxu0
        %v1733 = vadd.f32 0.0, %v1732
        %v1734 = vpop.f32.mrf.mxu0
        %1735 = vmatprep.mubr.f32.mxu0 0.0
        %1736 = vmatmul.mubr.f32.gmra.mxu0 %v1382
        %v1737 = vpop.f32.mrf.mxu0
        %v1738 = vadd.f32 0.0, %v1737
        %v1739 = vpop.f32.mrf.mxu0
        %1740 = vmatprep.mubr.f32.mxu0 0.0
        %1741 = vmatmul.mubr.f32.gmra.mxu0 %v1383
        %v1742 = vpop.f32.mrf.mxu0
        %v1743 = vadd.f32 0.0, %v1742
        %v1744 = vpop.f32.mrf.mxu0
        %1745 = vmatprep.mubr.f32.mxu0 0.0
        %1746 = vmatmul.mubr.f32.gmra.mxu0 %v1384
        %v1747 = vpop.f32.mrf.mxu0
        %v1748 = vadd.f32 0.0, %v1747
        %v1749 = vpop.f32.mrf.mxu0
        %1750 = vmatprep.mubr.f32.mxu0 0.0
        %1751 = vmatmul.mubr.f32.gmra.mxu0 %v1385
        %v1752 = vpop.f32.mrf.mxu0
        %v1753 = vadd.f32 0.0, %v1752
        %v1754 = vpop.f32.mrf.mxu0
        %1755 = vmatprep.mubr.f32.mxu0 0.0
        %1756 = vmatmul.mubr.f32.gmra.mxu0 %v1386
        %v1757 = vpop.f32.mrf.mxu0
        %v1758 = vadd.f32 0.0, %v1757
        %v1759 = vpop.f32.mrf.mxu0
        %1760 = vmatprep.mubr.f32.mxu0 0.0
        %1761 = vmatmul.mubr.f32.gmra.mxu0 %v1387
        %v1762 = vpop.f32.mrf.mxu0
        %v1763 = vadd.f32 0.0, %v1762
        %v1764 = vpop.f32.mrf.mxu0
        %1765 = vmatprep.mubr.f32.mxu0 0.0
        %1766 = vmatmul.mubr.f32.gmra.mxu0 %v1388
        %v1767 = vpop.f32.mrf.mxu0
        %v1768 = vadd.f32 0.0, %v1767
        %v1769 = vpop.f32.mrf.mxu0
        %1770 = vmatprep.mubr.f32.mxu0 0.0
        %1771 = vmatmul.mubr.f32.gmra.mxu0 %v1389
        %v1772 = vpop.f32.mrf.mxu0
        %v1773 = vadd.f32 0.0, %v1772
        %v1774 = vpop.f32.mrf.mxu0
        %1775 = vmatprep.mubr.f32.mxu0 0.0
        %1776 = vmatmul.mubr.f32.gmra.mxu0 %v1390
        %v1777 = vpop.f32.mrf.mxu0
        %v1778 = vadd.f32 0.0, %v1777
        %v1779 = vpop.f32.mrf.mxu0
        %1780 = vmatprep.mubr.f32.mxu0 0.0
        %1781 = vmatmul.mubr.f32.gmra.mxu0 %v1391
        %v1782 = vpop.f32.mrf.mxu0
        %v1783 = vadd.f32 0.0, %v1782
        %v1784 = vpop.f32.mrf.mxu0
        %1785 = vmatprep.mubr.f32.mxu0 0.0
        %1786 = vmatmul.mubr.f32.gmra.mxu0 %v1392
        %v1787 = vpop.f32.mrf.mxu0
        %v1788 = vadd.f32 0.0, %v1787
        %v1789 = vpop.f32.mrf.mxu0
        %1790 = vmatprep.mubr.f32.mxu0 0.0
        %1791 = vmatmul.mubr.f32.gmra.mxu0 %v1393
        %v1792 = vpop.f32.mrf.mxu0
        %v1793 = vadd.f32 0.0, %v1792
        %v1794 = vpop.f32.mrf.mxu0
        %1795 = vdwg.mxu0
        %s1796 = scalar_lea.vmem %s2, 128
        %v1797 = vld [vmem:[%s1796] sm:$0xff]
        %v1798 = vld [vmem:[%s1796 + $0x8] sm:$0xff]
        %v1799 = vld [vmem:[%s1796 + $0x10] sm:$0xff]
        %v1800 = vld [vmem:[%s1796 + $0x18] sm:$0xff]
        %v1801 = vld [vmem:[%s1796 + $0x20] sm:$0xff]
        %v1802 = vld [vmem:[%s1796 + $0x28] sm:$0xff]
        %v1803 = vld [vmem:[%s1796 + $0x30] sm:$0xff]
        %v1804 = vld [vmem:[%s1796 + $0x38] sm:$0xff]
        %v1805 = vld [vmem:[%s1796 + $0x40] sm:$0xff]
        %v1806 = vld [vmem:[%s1796 + $0x48] sm:$0xff]
        %v1807 = vld [vmem:[%s1796 + $0x50] sm:$0xff]
        %v1808 = vld [vmem:[%s1796 + $0x58] sm:$0xff]
        %v1809 = vld [vmem:[%s1796 + $0x60] sm:$0xff]
        %v1810 = vld [vmem:[%s1796 + $0x68] sm:$0xff]
        %v1811 = vld [vmem:[%s1796 + $0x70] sm:$0xff]
        %v1812 = vld [vmem:[%s1796 + $0x78] sm:$0xff]
        %1813 = vmatprep.subr.mxu0 0.0
        %1814 = vmatpush1.msra.mxu0 %v1812
        %1815 = vmatprep.subr.mxu0 0.0
        %1816 = vmatpush1.msra.mxu0 %v1811
        %1817 = vmatprep.subr.mxu0 0.0
        %1818 = vmatpush1.msra.mxu0 %v1810
        %1819 = vmatprep.subr.mxu0 0.0
        %1820 = vmatpush1.msra.mxu0 %v1809
        %1821 = vmatprep.subr.mxu0 0.0
        %1822 = vmatpush1.msra.mxu0 %v1808
        %1823 = vmatprep.subr.mxu0 0.0
        %1824 = vmatpush1.msra.mxu0 %v1807
        %1825 = vmatprep.subr.mxu0 0.0
        %1826 = vmatpush1.msra.mxu0 %v1806
        %1827 = vmatprep.subr.mxu0 0.0
        %1828 = vmatpush1.msra.mxu0 %v1805
        %1829 = vmatprep.subr.mxu0 0.0
        %1830 = vmatpush1.msra.mxu0 %v1804
        %1831 = vmatprep.subr.mxu0 0.0
        %1832 = vmatpush1.msra.mxu0 %v1803
        %1833 = vmatprep.subr.mxu0 0.0
        %1834 = vmatpush1.msra.mxu0 %v1802
        %1835 = vmatprep.subr.mxu0 0.0
        %1836 = vmatpush1.msra.mxu0 %v1801
        %1837 = vmatprep.subr.mxu0 0.0
        %1838 = vmatpush1.msra.mxu0 %v1800
        %1839 = vmatprep.subr.mxu0 0.0
        %1840 = vmatpush1.msra.mxu0 %v1799
        %1841 = vmatprep.subr.mxu0 0.0
        %1842 = vmatpush1.msra.mxu0 %v1798
        %1843 = vmatprep.subr.mxu0 0.0
        %1844 = vmatpush1.msra.mxu0 %v1797
        %1845 = vmatprep.subr.mxu0 0.0
        %1846 = vmatpush2.msra.mxu0 0.0
        %1847 = vmatprep.subr.mxu0 0.0
        %1848 = vmatpush2.msra.mxu0 0.0
        %1849 = vmatprep.subr.mxu0 0.0
        %1850 = vmatpush2.msra.mxu0 0.0
        %1851 = vmatprep.subr.mxu0 0.0
        %1852 = vmatpush2.msra.mxu0 0.0
        %1853 = vmatprep.subr.mxu0 0.0
        %1854 = vmatpush2.msra.mxu0 0.0
        %1855 = vmatprep.subr.mxu0 0.0
        %1856 = vmatpush2.msra.mxu0 0.0
        %1857 = vmatprep.subr.mxu0 0.0
        %1858 = vmatpush2.msra.mxu0 0.0
        %1859 = vmatprep.subr.mxu0 0.0
        %1860 = vmatpush2.msra.mxu0 0.0
        %1861 = vmatprep.subr.mxu0 0.0
        %1862 = vmatpush2.msra.mxu0 0.0
        %1863 = vmatprep.subr.mxu0 0.0
        %1864 = vmatpush2.msra.mxu0 0.0
        %1865 = vmatprep.subr.mxu0 0.0
        %1866 = vmatpush2.msra.mxu0 0.0
        %1867 = vmatprep.subr.mxu0 0.0
        %1868 = vmatpush2.msra.mxu0 0.0
        %1869 = vmatprep.subr.mxu0 0.0
        %1870 = vmatpush2.msra.mxu0 0.0
        %1871 = vmatprep.subr.mxu0 0.0
        %1872 = vmatpush2.msra.mxu0 0.0
        %1873 = vmatprep.subr.mxu0 0.0
        %1874 = vmatpush2.msra.mxu0 0.0
        %1875 = vmatprep.subr.mxu0 0.0
        %1876 = vmatpush2.msra.mxu0 0.0
        %1877 = vmatprep.mubr.f32.mxu0 0.0
        %1878 = vmatmul.mubr.f32.gmra.mxu0 %v1478
        %v1879 = vpop.f32.mrf.mxu0
        %v1880 = vadd.f32 0.0, %v1879
        %v1881 = vpop.f32.mrf.mxu0
        %1882 = vmatprep.mubr.f32.mxu0 0.0
        %1883 = vmatmul.mubr.f32.gmra.mxu0 %v1483
        %v1884 = vpop.f32.mrf.mxu0
        %v1885 = vadd.f32 0.0, %v1884
        %v1886 = vpop.f32.mrf.mxu0
        %1887 = vmatprep.mubr.f32.mxu0 0.0
        %1888 = vmatmul.mubr.f32.gmra.mxu0 %v1488
        %v1889 = vpop.f32.mrf.mxu0
        %v1890 = vadd.f32 0.0, %v1889
        %v1891 = vpop.f32.mrf.mxu0
        %1892 = vmatprep.mubr.f32.mxu0 0.0
        %1893 = vmatmul.mubr.f32.gmra.mxu0 %v1493
        %v1894 = vpop.f32.mrf.mxu0
        %v1895 = vadd.f32 0.0, %v1894
        %v1896 = vpop.f32.mrf.mxu0
        %1897 = vmatprep.mubr.f32.mxu0 0.0
        %1898 = vmatmul.mubr.f32.gmra.mxu0 %v1498
        %v1899 = vpop.f32.mrf.mxu0
        %v1900 = vadd.f32 0.0, %v1899
        %v1901 = vpop.f32.mrf.mxu0
        %1902 = vmatprep.mubr.f32.mxu0 0.0
        %1903 = vmatmul.mubr.f32.gmra.mxu0 %v1503
        %v1904 = vpop.f32.mrf.mxu0
        %v1905 = vadd.f32 0.0, %v1904
        %v1906 = vpop.f32.mrf.mxu0
        %1907 = vmatprep.mubr.f32.mxu0 0.0
        %1908 = vmatmul.mubr.f32.gmra.mxu0 %v1508
        %v1909 = vpop.f32.mrf.mxu0
        %v1910 = vadd.f32 0.0, %v1909
        %v1911 = vpop.f32.mrf.mxu0
        %1912 = vmatprep.mubr.f32.mxu0 0.0
        %1913 = vmatmul.mubr.f32.gmra.mxu0 %v1513
        %v1914 = vpop.f32.mrf.mxu0
        %v1915 = vadd.f32 0.0, %v1914
        %v1916 = vpop.f32.mrf.mxu0
        %1917 = vmatprep.mubr.f32.mxu0 0.0
        %1918 = vmatmul.mubr.f32.gmra.mxu0 %v1518
        %v1919 = vpop.f32.mrf.mxu0
        %v1920 = vadd.f32 0.0, %v1919
        %v1921 = vpop.f32.mrf.mxu0
        %1922 = vmatprep.mubr.f32.mxu0 0.0
        %1923 = vmatmul.mubr.f32.gmra.mxu0 %v1523
        %v1924 = vpop.f32.mrf.mxu0
        %v1925 = vadd.f32 0.0, %v1924
        %v1926 = vpop.f32.mrf.mxu0
        %1927 = vmatprep.mubr.f32.mxu0 0.0
        %1928 = vmatmul.mubr.f32.gmra.mxu0 %v1528
        %v1929 = vpop.f32.mrf.mxu0
        %v1930 = vadd.f32 0.0, %v1929
        %v1931 = vpop.f32.mrf.mxu0
        %1932 = vmatprep.mubr.f32.mxu0 0.0
        %1933 = vmatmul.mubr.f32.gmra.mxu0 %v1533
        %v1934 = vpop.f32.mrf.mxu0
        %v1935 = vadd.f32 0.0, %v1934
        %v1936 = vpop.f32.mrf.mxu0
        %1937 = vmatprep.mubr.f32.mxu0 0.0
        %1938 = vmatmul.mubr.f32.gmra.mxu0 %v1538
        %v1939 = vpop.f32.mrf.mxu0
        %v1940 = vadd.f32 0.0, %v1939
        %v1941 = vpop.f32.mrf.mxu0
        %1942 = vmatprep.mubr.f32.mxu0 0.0
        %1943 = vmatmul.mubr.f32.gmra.mxu0 %v1543
        %v1944 = vpop.f32.mrf.mxu0
        %v1945 = vadd.f32 0.0, %v1944
        %v1946 = vpop.f32.mrf.mxu0
        %1947 = vmatprep.mubr.f32.mxu0 0.0
        %1948 = vmatmul.mubr.f32.gmra.mxu0 %v1548
        %v1949 = vpop.f32.mrf.mxu0
        %v1950 = vadd.f32 0.0, %v1949
        %v1951 = vpop.f32.mrf.mxu0
        %1952 = vmatprep.mubr.f32.mxu0 0.0
        %1953 = vmatmul.mubr.f32.gmra.mxu0 %v1553
        %v1954 = vpop.f32.mrf.mxu0
        %v1955 = vadd.f32 0.0, %v1954
        %v1956 = vpop.f32.mrf.mxu0
        %1957 = vmatprep.mubr.f32.mxu0 0.0
        %1958 = vmatmul.mubr.f32.gmra.mxu0 %v1558
        %v1959 = vpop.f32.mrf.mxu0
        %v1960 = vadd.f32 0.0, %v1959
        %v1961 = vpop.f32.mrf.mxu0
        %1962 = vmatprep.mubr.f32.mxu0 0.0
        %1963 = vmatmul.mubr.f32.gmra.mxu0 %v1563
        %v1964 = vpop.f32.mrf.mxu0
        %v1965 = vadd.f32 0.0, %v1964
        %v1966 = vpop.f32.mrf.mxu0
        %1967 = vmatprep.mubr.f32.mxu0 0.0
        %1968 = vmatmul.mubr.f32.gmra.mxu0 %v1568
        %v1969 = vpop.f32.mrf.mxu0
        %v1970 = vadd.f32 0.0, %v1969
        %v1971 = vpop.f32.mrf.mxu0
        %1972 = vmatprep.mubr.f32.mxu0 0.0
        %1973 = vmatmul.mubr.f32.gmra.mxu0 %v1573
        %v1974 = vpop.f32.mrf.mxu0
        %v1975 = vadd.f32 0.0, %v1974
        %v1976 = vpop.f32.mrf.mxu0
        %1977 = vmatprep.mubr.f32.mxu0 0.0
        %1978 = vmatmul.mubr.f32.gmra.mxu0 %v1578
        %v1979 = vpop.f32.mrf.mxu0
        %v1980 = vadd.f32 0.0, %v1979
        %v1981 = vpop.f32.mrf.mxu0
        %1982 = vmatprep.mubr.f32.mxu0 0.0
        %1983 = vmatmul.mubr.f32.gmra.mxu0 %v1583
        %v1984 = vpop.f32.mrf.mxu0
        %v1985 = vadd.f32 0.0, %v1984
        %v1986 = vpop.f32.mrf.mxu0
        %1987 = vmatprep.mubr.f32.mxu0 0.0
        %1988 = vmatmul.mubr.f32.gmra.mxu0 %v1588
        %v1989 = vpop.f32.mrf.mxu0
        %v1990 = vadd.f32 0.0, %v1989
        %v1991 = vpop.f32.mrf.mxu0
        %1992 = vmatprep.mubr.f32.mxu0 0.0
        %1993 = vmatmul.mubr.f32.gmra.mxu0 %v1593
        %v1994 = vpop.f32.mrf.mxu0
        %v1995 = vadd.f32 0.0, %v1994
        %v1996 = vpop.f32.mrf.mxu0
        %1997 = vmatprep.mubr.f32.mxu0 0.0
        %1998 = vmatmul.mubr.f32.gmra.mxu0 %v1598
        %v1999 = vpop.f32.mrf.mxu0
        %v2000 = vadd.f32 0.0, %v1999
        %v2001 = vpop.f32.mrf.mxu0
        %2002 = vmatprep.mubr.f32.mxu0 0.0
        %2003 = vmatmul.mubr.f32.gmra.mxu0 %v1603
        %v2004 = vpop.f32.mrf.mxu0
        %v2005 = vadd.f32 0.0, %v2004
        %v2006 = vpop.f32.mrf.mxu0
        %2007 = vmatprep.mubr.f32.mxu0 0.0
        %2008 = vmatmul.mubr.f32.gmra.mxu0 %v1608
        %v2009 = vpop.f32.mrf.mxu0
        %v2010 = vadd.f32 0.0, %v2009
        %v2011 = vpop.f32.mrf.mxu0
        %2012 = vmatprep.mubr.f32.mxu0 0.0
        %2013 = vmatmul.mubr.f32.gmra.mxu0 %v1613
        %v2014 = vpop.f32.mrf.mxu0
        %v2015 = vadd.f32 0.0, %v2014
        %v2016 = vpop.f32.mrf.mxu0
        %2017 = vmatprep.mubr.f32.mxu0 0.0
        %2018 = vmatmul.mubr.f32.gmra.mxu0 %v1618
        %v2019 = vpop.f32.mrf.mxu0
        %v2020 = vadd.f32 0.0, %v2019
        %v2021 = vpop.f32.mrf.mxu0
        %2022 = vmatprep.mubr.f32.mxu0 0.0
        %2023 = vmatmul.mubr.f32.gmra.mxu0 %v1623
        %v2024 = vpop.f32.mrf.mxu0
        %v2025 = vadd.f32 0.0, %v2024
        %v2026 = vpop.f32.mrf.mxu0
        %2027 = vmatprep.mubr.f32.mxu0 0.0
        %2028 = vmatmul.mubr.f32.gmra.mxu0 %v1628
        %v2029 = vpop.f32.mrf.mxu0
        %v2030 = vadd.f32 0.0, %v2029
        %v2031 = vpop.f32.mrf.mxu0
        %2032 = vmatprep.mubr.f32.mxu0 0.0
        %2033 = vmatmul.mubr.f32.gmra.mxu0 %v1633
        %v2034 = vpop.f32.mrf.mxu0
        %v2035 = vadd.f32 0.0, %v2034
        %v2036 = vpop.f32.mrf.mxu0
        %2037 = vmatprep.mubr.f32.mxu0 0.0
        %2038 = vmatmul.mubr.f32.gmra.mxu0 %v1638
        %v2039 = vpop.f32.mrf.mxu0
        %v2040 = vadd.f32 0.0, %v2039
        %v2041 = vpop.f32.mrf.mxu0
        %2042 = vmatprep.mubr.f32.mxu0 0.0
        %2043 = vmatmul.mubr.f32.gmra.mxu0 %v1643
        %v2044 = vpop.f32.mrf.mxu0
        %v2045 = vadd.f32 0.0, %v2044
        %v2046 = vpop.f32.mrf.mxu0
        %2047 = vmatprep.mubr.f32.mxu0 0.0
        %2048 = vmatmul.mubr.f32.gmra.mxu0 %v1648
        %v2049 = vpop.f32.mrf.mxu0
        %v2050 = vadd.f32 0.0, %v2049
        %v2051 = vpop.f32.mrf.mxu0
        %2052 = vmatprep.mubr.f32.mxu0 0.0
        %2053 = vmatmul.mubr.f32.gmra.mxu0 %v1653
        %v2054 = vpop.f32.mrf.mxu0
        %v2055 = vadd.f32 0.0, %v2054
        %v2056 = vpop.f32.mrf.mxu0
        %2057 = vmatprep.mubr.f32.mxu0 0.0
        %2058 = vmatmul.mubr.f32.gmra.mxu0 %v1658
        %v2059 = vpop.f32.mrf.mxu0
        %v2060 = vadd.f32 0.0, %v2059
        %v2061 = vpop.f32.mrf.mxu0
        %2062 = vmatprep.mubr.f32.mxu0 0.0
        %2063 = vmatmul.mubr.f32.gmra.mxu0 %v1663
        %v2064 = vpop.f32.mrf.mxu0
        %v2065 = vadd.f32 0.0, %v2064
        %v2066 = vpop.f32.mrf.mxu0
        %2067 = vmatprep.mubr.f32.mxu0 0.0
        %2068 = vmatmul.mubr.f32.gmra.mxu0 %v1668
        %v2069 = vpop.f32.mrf.mxu0
        %v2070 = vadd.f32 0.0, %v2069
        %v2071 = vpop.f32.mrf.mxu0
        %2072 = vmatprep.mubr.f32.mxu0 0.0
        %2073 = vmatmul.mubr.f32.gmra.mxu0 %v1673
        %v2074 = vpop.f32.mrf.mxu0
        %v2075 = vadd.f32 0.0, %v2074
        %v2076 = vpop.f32.mrf.mxu0
        %2077 = vmatprep.mubr.f32.mxu0 0.0
        %2078 = vmatmul.mubr.f32.gmra.mxu0 %v1678
        %v2079 = vpop.f32.mrf.mxu0
        %v2080 = vadd.f32 0.0, %v2079
        %v2081 = vpop.f32.mrf.mxu0
        %2082 = vmatprep.mubr.f32.mxu0 0.0
        %2083 = vmatmul.mubr.f32.gmra.mxu0 %v1683
        %v2084 = vpop.f32.mrf.mxu0
        %v2085 = vadd.f32 0.0, %v2084
        %v2086 = vpop.f32.mrf.mxu0
        %2087 = vmatprep.mubr.f32.mxu0 0.0
        %2088 = vmatmul.mubr.f32.gmra.mxu0 %v1688
        %v2089 = vpop.f32.mrf.mxu0
        %v2090 = vadd.f32 0.0, %v2089
        %v2091 = vpop.f32.mrf.mxu0
        %2092 = vmatprep.mubr.f32.mxu0 0.0
        %2093 = vmatmul.mubr.f32.gmra.mxu0 %v1693
        %v2094 = vpop.f32.mrf.mxu0
        %v2095 = vadd.f32 0.0, %v2094
        %v2096 = vpop.f32.mrf.mxu0
        %2097 = vmatprep.mubr.f32.mxu0 0.0
        %2098 = vmatmul.mubr.f32.gmra.mxu0 %v1698
        %v2099 = vpop.f32.mrf.mxu0
        %v2100 = vadd.f32 0.0, %v2099
        %v2101 = vpop.f32.mrf.mxu0
        %2102 = vmatprep.mubr.f32.mxu0 0.0
        %2103 = vmatmul.mubr.f32.gmra.mxu0 %v1703
        %v2104 = vpop.f32.mrf.mxu0
        %v2105 = vadd.f32 0.0, %v2104
        %v2106 = vpop.f32.mrf.mxu0
        %2107 = vmatprep.mubr.f32.mxu0 0.0
        %2108 = vmatmul.mubr.f32.gmra.mxu0 %v1708
        %v2109 = vpop.f32.mrf.mxu0
        %v2110 = vadd.f32 0.0, %v2109
        %v2111 = vpop.f32.mrf.mxu0
        %2112 = vmatprep.mubr.f32.mxu0 0.0
        %2113 = vmatmul.mubr.f32.gmra.mxu0 %v1713
        %v2114 = vpop.f32.mrf.mxu0
        %v2115 = vadd.f32 0.0, %v2114
        %v2116 = vpop.f32.mrf.mxu0
        %2117 = vmatprep.mubr.f32.mxu0 0.0
        %2118 = vmatmul.mubr.f32.gmra.mxu0 %v1718
        %v2119 = vpop.f32.mrf.mxu0
        %v2120 = vadd.f32 0.0, %v2119
        %v2121 = vpop.f32.mrf.mxu0
        %2122 = vmatprep.mubr.f32.mxu0 0.0
        %2123 = vmatmul.mubr.f32.gmra.mxu0 %v1723
        %v2124 = vpop.f32.mrf.mxu0
        %v2125 = vadd.f32 0.0, %v2124
        %v2126 = vpop.f32.mrf.mxu0
        %2127 = vmatprep.mubr.f32.mxu0 0.0
        %2128 = vmatmul.mubr.f32.gmra.mxu0 %v1728
        %v2129 = vpop.f32.mrf.mxu0
        %v2130 = vadd.f32 0.0, %v2129
        %v2131 = vpop.f32.mrf.mxu0
        %2132 = vmatprep.mubr.f32.mxu0 0.0
        %2133 = vmatmul.mubr.f32.gmra.mxu0 %v1733
        %v2134 = vpop.f32.mrf.mxu0
        %v2135 = vadd.f32 0.0, %v2134
        %v2136 = vpop.f32.mrf.mxu0
        %2137 = vmatprep.mubr.f32.mxu0 0.0
        %2138 = vmatmul.mubr.f32.gmra.mxu0 %v1738
        %v2139 = vpop.f32.mrf.mxu0
        %v2140 = vadd.f32 0.0, %v2139
        %v2141 = vpop.f32.mrf.mxu0
        %2142 = vmatprep.mubr.f32.mxu0 0.0
        %2143 = vmatmul.mubr.f32.gmra.mxu0 %v1743
        %v2144 = vpop.f32.mrf.mxu0
        %v2145 = vadd.f32 0.0, %v2144
        %v2146 = vpop.f32.mrf.mxu0
        %2147 = vmatprep.mubr.f32.mxu0 0.0
        %2148 = vmatmul.mubr.f32.gmra.mxu0 %v1748
        %v2149 = vpop.f32.mrf.mxu0
        %v2150 = vadd.f32 0.0, %v2149
        %v2151 = vpop.f32.mrf.mxu0
        %2152 = vmatprep.mubr.f32.mxu0 0.0
        %2153 = vmatmul.mubr.f32.gmra.mxu0 %v1753
        %v2154 = vpop.f32.mrf.mxu0
        %v2155 = vadd.f32 0.0, %v2154
        %v2156 = vpop.f32.mrf.mxu0
        %2157 = vmatprep.mubr.f32.mxu0 0.0
        %2158 = vmatmul.mubr.f32.gmra.mxu0 %v1758
        %v2159 = vpop.f32.mrf.mxu0
        %v2160 = vadd.f32 0.0, %v2159
        %v2161 = vpop.f32.mrf.mxu0
        %2162 = vmatprep.mubr.f32.mxu0 0.0
        %2163 = vmatmul.mubr.f32.gmra.mxu0 %v1763
        %v2164 = vpop.f32.mrf.mxu0
        %v2165 = vadd.f32 0.0, %v2164
        %v2166 = vpop.f32.mrf.mxu0
        %2167 = vmatprep.mubr.f32.mxu0 0.0
        %2168 = vmatmul.mubr.f32.gmra.mxu0 %v1768
        %v2169 = vpop.f32.mrf.mxu0
        %v2170 = vadd.f32 0.0, %v2169
        %v2171 = vpop.f32.mrf.mxu0
        %2172 = vmatprep.mubr.f32.mxu0 0.0
        %2173 = vmatmul.mubr.f32.gmra.mxu0 %v1773
        %v2174 = vpop.f32.mrf.mxu0
        %v2175 = vadd.f32 0.0, %v2174
        %v2176 = vpop.f32.mrf.mxu0
        %2177 = vmatprep.mubr.f32.mxu0 0.0
        %2178 = vmatmul.mubr.f32.gmra.mxu0 %v1778
        %v2179 = vpop.f32.mrf.mxu0
        %v2180 = vadd.f32 0.0, %v2179
        %v2181 = vpop.f32.mrf.mxu0
        %2182 = vmatprep.mubr.f32.mxu0 0.0
        %2183 = vmatmul.mubr.f32.gmra.mxu0 %v1783
        %v2184 = vpop.f32.mrf.mxu0
        %v2185 = vadd.f32 0.0, %v2184
        %v2186 = vpop.f32.mrf.mxu0
        %2187 = vmatprep.mubr.f32.mxu0 0.0
        %2188 = vmatmul.mubr.f32.gmra.mxu0 %v1788
        %v2189 = vpop.f32.mrf.mxu0
        %v2190 = vadd.f32 0.0, %v2189
        %v2191 = vpop.f32.mrf.mxu0
        %2192 = vmatprep.mubr.f32.mxu0 0.0
        %2193 = vmatmul.mubr.f32.gmra.mxu0 %v1793
        %v2194 = vpop.f32.mrf.mxu0
        %v2195 = vadd.f32 0.0, %v2194
        %v2196 = vpop.f32.mrf.mxu0
        %2197 = vdwg.mxu0
        %vm2198 = vcmp.ge.f32.partialorder %v1880, 0.0
        %vm2199 = vcmp.ge.f32.partialorder %v1885, 0.0
        %vm2200 = vcmp.ge.f32.partialorder %v1890, 0.0
        %vm2201 = vcmp.ge.f32.partialorder %v1895, 0.0
        %vm2202 = vcmp.ge.f32.partialorder %v1900, 0.0
        %vm2203 = vcmp.ge.f32.partialorder %v1905, 0.0
        %vm2204 = vcmp.ge.f32.partialorder %v1910, 0.0
        %vm2205 = vcmp.ge.f32.partialorder %v1915, 0.0
        %vm2206 = vcmp.ge.f32.partialorder %v1920, 0.0
        %vm2207 = vcmp.ge.f32.partialorder %v1925, 0.0
        %vm2208 = vcmp.ge.f32.partialorder %v1930, 0.0
        %vm2209 = vcmp.ge.f32.partialorder %v1935, 0.0
        %vm2210 = vcmp.ge.f32.partialorder %v1940, 0.0
        %vm2211 = vcmp.ge.f32.partialorder %v1945, 0.0
        %vm2212 = vcmp.ge.f32.partialorder %v1950, 0.0
        %vm2213 = vcmp.ge.f32.partialorder %v1955, 0.0
        %vm2214 = vcmp.ge.f32.partialorder %v1960, 0.0
        %vm2215 = vcmp.ge.f32.partialorder %v1965, 0.0
        %vm2216 = vcmp.ge.f32.partialorder %v1970, 0.0
        %vm2217 = vcmp.ge.f32.partialorder %v1975, 0.0
        %vm2218 = vcmp.ge.f32.partialorder %v1980, 0.0
        %vm2219 = vcmp.ge.f32.partialorder %v1985, 0.0
        %vm2220 = vcmp.ge.f32.partialorder %v1990, 0.0
        %vm2221 = vcmp.ge.f32.partialorder %v1995, 0.0
        %vm2222 = vcmp.ge.f32.partialorder %v2000, 0.0
        %vm2223 = vcmp.ge.f32.partialorder %v2005, 0.0
        %vm2224 = vcmp.ge.f32.partialorder %v2010, 0.0
        %vm2225 = vcmp.ge.f32.partialorder %v2015, 0.0
        %vm2226 = vcmp.ge.f32.partialorder %v2020, 0.0
        %vm2227 = vcmp.ge.f32.partialorder %v2025, 0.0
        %vm2228 = vcmp.ge.f32.partialorder %v2030, 0.0
        %vm2229 = vcmp.ge.f32.partialorder %v2035, 0.0
        %vm2230 = vcmp.ge.f32.partialorder %v2040, 0.0
        %vm2231 = vcmp.ge.f32.partialorder %v2045, 0.0
        %vm2232 = vcmp.ge.f32.partialorder %v2050, 0.0
        %vm2233 = vcmp.ge.f32.partialorder %v2055, 0.0
        %vm2234 = vcmp.ge.f32.partialorder %v2060, 0.0
        %vm2235 = vcmp.ge.f32.partialorder %v2065, 0.0
        %vm2236 = vcmp.ge.f32.partialorder %v2070, 0.0
        %vm2237 = vcmp.ge.f32.partialorder %v2075, 0.0
        %vm2238 = vcmp.ge.f32.partialorder %v2080, 0.0
        %vm2239 = vcmp.ge.f32.partialorder %v2085, 0.0
        %vm2240 = vcmp.ge.f32.partialorder %v2090, 0.0
        %vm2241 = vcmp.ge.f32.partialorder %v2095, 0.0
        %vm2242 = vcmp.ge.f32.partialorder %v2100, 0.0
        %vm2243 = vcmp.ge.f32.partialorder %v2105, 0.0
        %vm2244 = vcmp.ge.f32.partialorder %v2110, 0.0
        %vm2245 = vcmp.ge.f32.partialorder %v2115, 0.0
        %vm2246 = vcmp.ge.f32.partialorder %v2120, 0.0
        %vm2247 = vcmp.ge.f32.partialorder %v2125, 0.0
        %vm2248 = vcmp.ge.f32.partialorder %v2130, 0.0
        %vm2249 = vcmp.ge.f32.partialorder %v2135, 0.0
        %vm2250 = vcmp.ge.f32.partialorder %v2140, 0.0
        %vm2251 = vcmp.ge.f32.partialorder %v2145, 0.0
        %vm2252 = vcmp.ge.f32.partialorder %v2150, 0.0
        %vm2253 = vcmp.ge.f32.partialorder %v2155, 0.0
        %vm2254 = vcmp.ge.f32.partialorder %v2160, 0.0
        %vm2255 = vcmp.ge.f32.partialorder %v2165, 0.0
        %vm2256 = vcmp.ge.f32.partialorder %v2170, 0.0
        %vm2257 = vcmp.ge.f32.partialorder %v2175, 0.0
        %vm2258 = vcmp.ge.f32.partialorder %v2180, 0.0
        %vm2259 = vcmp.ge.f32.partialorder %v2185, 0.0
        %vm2260 = vcmp.ge.f32.partialorder %v2190, 0.0
        %vm2261 = vcmp.ge.f32.partialorder %v2195, 0.0
        %v2262 = vmul.f32 %v1880, 0.2
        %v2263 = vmul.f32 %v1885, 0.2
        %v2264 = vmul.f32 %v1890, 0.2
        %v2265 = vmul.f32 %v1895, 0.2
        %v2266 = vmul.f32 %v1900, 0.2
        %v2267 = vmul.f32 %v1905, 0.2
        %v2268 = vmul.f32 %v1910, 0.2
        %v2269 = vmul.f32 %v1915, 0.2
        %v2270 = vmul.f32 %v1920, 0.2
        %v2271 = vmul.f32 %v1925, 0.2
        %v2272 = vmul.f32 %v1930, 0.2
        %v2273 = vmul.f32 %v1935, 0.2
        %v2274 = vmul.f32 %v1940, 0.2
        %v2275 = vmul.f32 %v1945, 0.2
        %v2276 = vmul.f32 %v1950, 0.2
        %v2277 = vmul.f32 %v1955, 0.2
        %v2278 = vmul.f32 %v1960, 0.2
        %v2279 = vmul.f32 %v1965, 0.2
        %v2280 = vmul.f32 %v1970, 0.2
        %v2281 = vmul.f32 %v1975, 0.2
        %v2282 = vmul.f32 %v1980, 0.2
        %v2283 = vmul.f32 %v1985, 0.2
        %v2284 = vmul.f32 %v1990, 0.2
        %v2285 = vmul.f32 %v1995, 0.2
        %v2286 = vmul.f32 %v2000, 0.2
        %v2287 = vmul.f32 %v2005, 0.2
        %v2288 = vmul.f32 %v2010, 0.2
        %v2289 = vmul.f32 %v2015, 0.2
        %v2290 = vmul.f32 %v2020, 0.2
        %v2291 = vmul.f32 %v2025, 0.2
        %v2292 = vmul.f32 %v2030, 0.2
        %v2293 = vmul.f32 %v2035, 0.2
        %v2294 = vmul.f32 %v2040, 0.2
        %v2295 = vmul.f32 %v2045, 0.2
        %v2296 = vmul.f32 %v2050, 0.2
        %v2297 = vmul.f32 %v2055, 0.2
        %v2298 = vmul.f32 %v2060, 0.2
        %v2299 = vmul.f32 %v2065, 0.2
        %v2300 = vmul.f32 %v2070, 0.2
        %v2301 = vmul.f32 %v2075, 0.2
        %v2302 = vmul.f32 %v2080, 0.2
        %v2303 = vmul.f32 %v2085, 0.2
        %v2304 = vmul.f32 %v2090, 0.2
        %v2305 = vmul.f32 %v2095, 0.2
        %v2306 = vmul.f32 %v2100, 0.2
        %v2307 = vmul.f32 %v2105, 0.2
        %v2308 = vmul.f32 %v2110, 0.2
        %v2309 = vmul.f32 %v2115, 0.2
        %v2310 = vmul.f32 %v2120, 0.2
        %v2311 = vmul.f32 %v2125, 0.2
        %v2312 = vmul.f32 %v2130, 0.2
        %v2313 = vmul.f32 %v2135, 0.2
        %v2314 = vmul.f32 %v2140, 0.2
        %v2315 = vmul.f32 %v2145, 0.2
        %v2316 = vmul.f32 %v2150, 0.2
        %v2317 = vmul.f32 %v2155, 0.2
        %v2318 = vmul.f32 %v2160, 0.2
        %v2319 = vmul.f32 %v2165, 0.2
        %v2320 = vmul.f32 %v2170, 0.2
        %v2321 = vmul.f32 %v2175, 0.2
        %v2322 = vmul.f32 %v2180, 0.2
        %v2323 = vmul.f32 %v2185, 0.2
        %v2324 = vmul.f32 %v2190, 0.2
        %v2325 = vmul.f32 %v2195, 0.2
        %v2326 = vsel %vm2198, %v1880, %v2262
        %v2327 = vsel %vm2199, %v1885, %v2263
        %v2328 = vsel %vm2200, %v1890, %v2264
        %v2329 = vsel %vm2201, %v1895, %v2265
        %v2330 = vsel %vm2202, %v1900, %v2266
        %v2331 = vsel %vm2203, %v1905, %v2267
        %v2332 = vsel %vm2204, %v1910, %v2268
        %v2333 = vsel %vm2205, %v1915, %v2269
        %v2334 = vsel %vm2206, %v1920, %v2270
        %v2335 = vsel %vm2207, %v1925, %v2271
        %v2336 = vsel %vm2208, %v1930, %v2272
        %v2337 = vsel %vm2209, %v1935, %v2273
        %v2338 = vsel %vm2210, %v1940, %v2274
        %v2339 = vsel %vm2211, %v1945, %v2275
        %v2340 = vsel %vm2212, %v1950, %v2276
        %v2341 = vsel %vm2213, %v1955, %v2277
        %v2342 = vsel %vm2214, %v1960, %v2278
        %v2343 = vsel %vm2215, %v1965, %v2279
        %v2344 = vsel %vm2216, %v1970, %v2280
        %v2345 = vsel %vm2217, %v1975, %v2281
        %v2346 = vsel %vm2218, %v1980, %v2282
        %v2347 = vsel %vm2219, %v1985, %v2283
        %v2348 = vsel %vm2220, %v1990, %v2284
        %v2349 = vsel %vm2221, %v1995, %v2285
        %v2350 = vsel %vm2222, %v2000, %v2286
        %v2351 = vsel %vm2223, %v2005, %v2287
        %v2352 = vsel %vm2224, %v2010, %v2288
        %v2353 = vsel %vm2225, %v2015, %v2289
        %v2354 = vsel %vm2226, %v2020, %v2290
        %v2355 = vsel %vm2227, %v2025, %v2291
        %v2356 = vsel %vm2228, %v2030, %v2292
        %v2357 = vsel %vm2229, %v2035, %v2293
        %v2358 = vsel %vm2230, %v2040, %v2294
        %v2359 = vsel %vm2231, %v2045, %v2295
        %v2360 = vsel %vm2232, %v2050, %v2296
        %v2361 = vsel %vm2233, %v2055, %v2297
        %v2362 = vsel %vm2234, %v2060, %v2298
        %v2363 = vsel %vm2235, %v2065, %v2299
        %v2364 = vsel %vm2236, %v2070, %v2300
        %v2365 = vsel %vm2237, %v2075, %v2301
        %v2366 = vsel %vm2238, %v2080, %v2302
        %v2367 = vsel %vm2239, %v2085, %v2303
        %v2368 = vsel %vm2240, %v2090, %v2304
        %v2369 = vsel %vm2241, %v2095, %v2305
        %v2370 = vsel %vm2242, %v2100, %v2306
        %v2371 = vsel %vm2243, %v2105, %v2307
        %v2372 = vsel %vm2244, %v2110, %v2308
        %v2373 = vsel %vm2245, %v2115, %v2309
        %v2374 = vsel %vm2246, %v2120, %v2310
        %v2375 = vsel %vm2247, %v2125, %v2311
        %v2376 = vsel %vm2248, %v2130, %v2312
        %v2377 = vsel %vm2249, %v2135, %v2313
        %v2378 = vsel %vm2250, %v2140, %v2314
        %v2379 = vsel %vm2251, %v2145, %v2315
        %v2380 = vsel %vm2252, %v2150, %v2316
        %v2381 = vsel %vm2253, %v2155, %v2317
        %v2382 = vsel %vm2254, %v2160, %v2318
        %v2383 = vsel %vm2255, %v2165, %v2319
        %v2384 = vsel %vm2256, %v2170, %v2320
        %v2385 = vsel %vm2257, %v2175, %v2321
        %v2386 = vsel %vm2258, %v2180, %v2322
        %v2387 = vsel %vm2259, %v2185, %v2323
        %v2388 = vsel %vm2260, %v2190, %v2324
        %v2389 = vsel %vm2261, %v2195, %v2325
        %v2390 = vmax.f32 %v1265, %v2326
        %v2391 = vmax.f32 %v1266, %v2327
        %v2392 = vmax.f32 %v1267, %v2328
        %v2393 = vmax.f32 %v1268, %v2329
        %v2394 = vmax.f32 %v1269, %v2330
        %v2395 = vmax.f32 %v1270, %v2331
        %v2396 = vmax.f32 %v1271, %v2332
        %v2397 = vmax.f32 %v1272, %v2333
        %v2398 = vmax.f32 %v1273, %v2334
        %v2399 = vmax.f32 %v1274, %v2335
        %v2400 = vmax.f32 %v1275, %v2336
        %v2401 = vmax.f32 %v1276, %v2337
        %v2402 = vmax.f32 %v1277, %v2338
        %v2403 = vmax.f32 %v1278, %v2339
        %v2404 = vmax.f32 %v1279, %v2340
        %v2405 = vmax.f32 %v1280, %v2341
        %v2406 = vmax.f32 %v1281, %v2342
        %v2407 = vmax.f32 %v1282, %v2343
        %v2408 = vmax.f32 %v1283, %v2344
        %v2409 = vmax.f32 %v1284, %v2345
        %v2410 = vmax.f32 %v1285, %v2346
        %v2411 = vmax.f32 %v1286, %v2347
        %v2412 = vmax.f32 %v1287, %v2348
        %v2413 = vmax.f32 %v1288, %v2349
        %v2414 = vmax.f32 %v1289, %v2350
        %v2415 = vmax.f32 %v1290, %v2351
        %v2416 = vmax.f32 %v1291, %v2352
        %v2417 = vmax.f32 %v1292, %v2353
        %v2418 = vmax.f32 %v1293, %v2354
        %v2419 = vmax.f32 %v1294, %v2355
        %v2420 = vmax.f32 %v1295, %v2356
        %v2421 = vmax.f32 %v1296, %v2357
        %v2422 = vmax.f32 %v1297, %v2358
        %v2423 = vmax.f32 %v1298, %v2359
        %v2424 = vmax.f32 %v1299, %v2360
        %v2425 = vmax.f32 %v1300, %v2361
        %v2426 = vmax.f32 %v1301, %v2362
        %v2427 = vmax.f32 %v1302, %v2363
        %v2428 = vmax.f32 %v1303, %v2364
        %v2429 = vmax.f32 %v1304, %v2365
        %v2430 = vmax.f32 %v1305, %v2366
        %v2431 = vmax.f32 %v1306, %v2367
        %v2432 = vmax.f32 %v1307, %v2368
        %v2433 = vmax.f32 %v1308, %v2369
        %v2434 = vmax.f32 %v1309, %v2370
        %v2435 = vmax.f32 %v1310, %v2371
        %v2436 = vmax.f32 %v1311, %v2372
        %v2437 = vmax.f32 %v1312, %v2373
        %v2438 = vmax.f32 %v1313, %v2374
        %v2439 = vmax.f32 %v1314, %v2375
        %v2440 = vmax.f32 %v1315, %v2376
        %v2441 = vmax.f32 %v1316, %v2377
        %v2442 = vmax.f32 %v1317, %v2378
        %v2443 = vmax.f32 %v1318, %v2379
        %v2444 = vmax.f32 %v1319, %v2380
        %v2445 = vmax.f32 %v1320, %v2381
        %v2446 = vmax.f32 %v1321, %v2382
        %v2447 = vmax.f32 %v1322, %v2383
        %v2448 = vmax.f32 %v1323, %v2384
        %v2449 = vmax.f32 %v1324, %v2385
        %v2450 = vmax.f32 %v1325, %v2386
        %v2451 = vmax.f32 %v1326, %v2387
        %v2452 = vmax.f32 %v1327, %v2388
        %v2453 = vmax.f32 %v1328, %v2389
        %v2454 = vsub.f32 %v1265, %v2390
        %v2455 = vsub.f32 %v1266, %v2391
        %v2456 = vsub.f32 %v1267, %v2392
        %v2457 = vsub.f32 %v1268, %v2393
        %v2458 = vsub.f32 %v1269, %v2394
        %v2459 = vsub.f32 %v1270, %v2395
        %v2460 = vsub.f32 %v1271, %v2396
        %v2461 = vsub.f32 %v1272, %v2397
        %v2462 = vsub.f32 %v1273, %v2398
        %v2463 = vsub.f32 %v1274, %v2399
        %v2464 = vsub.f32 %v1275, %v2400
        %v2465 = vsub.f32 %v1276, %v2401
        %v2466 = vsub.f32 %v1277, %v2402
        %v2467 = vsub.f32 %v1278, %v2403
        %v2468 = vsub.f32 %v1279, %v2404
        %v2469 = vsub.f32 %v1280, %v2405
        %v2470 = vsub.f32 %v1281, %v2406
        %v2471 = vsub.f32 %v1282, %v2407
        %v2472 = vsub.f32 %v1283, %v2408
        %v2473 = vsub.f32 %v1284, %v2409
        %v2474 = vsub.f32 %v1285, %v2410
        %v2475 = vsub.f32 %v1286, %v2411
        %v2476 = vsub.f32 %v1287, %v2412
        %v2477 = vsub.f32 %v1288, %v2413
        %v2478 = vsub.f32 %v1289, %v2414
        %v2479 = vsub.f32 %v1290, %v2415
        %v2480 = vsub.f32 %v1291, %v2416
        %v2481 = vsub.f32 %v1292, %v2417
        %v2482 = vsub.f32 %v1293, %v2418
        %v2483 = vsub.f32 %v1294, %v2419
        %v2484 = vsub.f32 %v1295, %v2420
        %v2485 = vsub.f32 %v1296, %v2421
        %v2486 = vsub.f32 %v1297, %v2422
        %v2487 = vsub.f32 %v1298, %v2423
        %v2488 = vsub.f32 %v1299, %v2424
        %v2489 = vsub.f32 %v1300, %v2425
        %v2490 = vsub.f32 %v1301, %v2426
        %v2491 = vsub.f32 %v1302, %v2427
        %v2492 = vsub.f32 %v1303, %v2428
        %v2493 = vsub.f32 %v1304, %v2429
        %v2494 = vsub.f32 %v1305, %v2430
        %v2495 = vsub.f32 %v1306, %v2431
        %v2496 = vsub.f32 %v1307, %v2432
        %v2497 = vsub.f32 %v1308, %v2433
        %v2498 = vsub.f32 %v1309, %v2434
        %v2499 = vsub.f32 %v1310, %v2435
        %v2500 = vsub.f32 %v1311, %v2436
        %v2501 = vsub.f32 %v1312, %v2437
        %v2502 = vsub.f32 %v1313, %v2438
        %v2503 = vsub.f32 %v1314, %v2439
        %v2504 = vsub.f32 %v1315, %v2440
        %v2505 = vsub.f32 %v1316, %v2441
        %v2506 = vsub.f32 %v1317, %v2442
        %v2507 = vsub.f32 %v1318, %v2443
        %v2508 = vsub.f32 %v1319, %v2444
        %v2509 = vsub.f32 %v1320, %v2445
        %v2510 = vsub.f32 %v1321, %v2446
        %v2511 = vsub.f32 %v1322, %v2447
        %v2512 = vsub.f32 %v1323, %v2448
        %v2513 = vsub.f32 %v1324, %v2449
        %v2514 = vsub.f32 %v1325, %v2450
        %v2515 = vsub.f32 %v1326, %v2451
        %v2516 = vsub.f32 %v1327, %v2452
        %v2517 = vsub.f32 %v1328, %v2453
        %v2518 = vmul.f32 %v2454, 1.442695
        %v2519 = vpow.pop %v2518
        %v2520 = vmul.f32 %v2455, 1.442695
        %v2521 = vpow.pop %v2520
        %v2522 = vmul.f32 %v2456, 1.442695
        %v2523 = vpow.pop %v2522
        %v2524 = vmul.f32 %v2457, 1.442695
        %v2525 = vpow.pop %v2524
        %v2526 = vmul.f32 %v2458, 1.442695
        %v2527 = vpow.pop %v2526
        %v2528 = vmul.f32 %v2459, 1.442695
        %v2529 = vpow.pop %v2528
        %v2530 = vmul.f32 %v2460, 1.442695
        %v2531 = vpow.pop %v2530
        %v2532 = vmul.f32 %v2461, 1.442695
        %v2533 = vpow.pop %v2532
        %v2534 = vmul.f32 %v2462, 1.442695
        %v2535 = vpow.pop %v2534
        %v2536 = vmul.f32 %v2463, 1.442695
        %v2537 = vpow.pop %v2536
        %v2538 = vmul.f32 %v2464, 1.442695
        %v2539 = vpow.pop %v2538
        %v2540 = vmul.f32 %v2465, 1.442695
        %v2541 = vpow.pop %v2540
        %v2542 = vmul.f32 %v2466, 1.442695
        %v2543 = vpow.pop %v2542
        %v2544 = vmul.f32 %v2467, 1.442695
        %v2545 = vpow.pop %v2544
        %v2546 = vmul.f32 %v2468, 1.442695
        %v2547 = vpow.pop %v2546
        %v2548 = vmul.f32 %v2469, 1.442695
        %v2549 = vpow.pop %v2548
        %v2550 = vmul.f32 %v2470, 1.442695
        %v2551 = vpow.pop %v2550
        %v2552 = vmul.f32 %v2471, 1.442695
        %v2553 = vpow.pop %v2552
        %v2554 = vmul.f32 %v2472, 1.442695
        %v2555 = vpow.pop %v2554
        %v2556 = vmul.f32 %v2473, 1.442695
        %v2557 = vpow.pop %v2556
        %v2558 = vmul.f32 %v2474, 1.442695
        %v2559 = vpow.pop %v2558
        %v2560 = vmul.f32 %v2475, 1.442695
        %v2561 = vpow.pop %v2560
        %v2562 = vmul.f32 %v2476, 1.442695
        %v2563 = vpow.pop %v2562
        %v2564 = vmul.f32 %v2477, 1.442695
        %v2565 = vpow.pop %v2564
        %v2566 = vmul.f32 %v2478, 1.442695
        %v2567 = vpow.pop %v2566
        %v2568 = vmul.f32 %v2479, 1.442695
        %v2569 = vpow.pop %v2568
        %v2570 = vmul.f32 %v2480, 1.442695
        %v2571 = vpow.pop %v2570
        %v2572 = vmul.f32 %v2481, 1.442695
        %v2573 = vpow.pop %v2572
        %v2574 = vmul.f32 %v2482, 1.442695
        %v2575 = vpow.pop %v2574
        %v2576 = vmul.f32 %v2483, 1.442695
        %v2577 = vpow.pop %v2576
        %v2578 = vmul.f32 %v2484, 1.442695
        %v2579 = vpow.pop %v2578
        %v2580 = vmul.f32 %v2485, 1.442695
        %v2581 = vpow.pop %v2580
        %v2582 = vmul.f32 %v2486, 1.442695
        %v2583 = vpow.pop %v2582
        %v2584 = vmul.f32 %v2487, 1.442695
        %v2585 = vpow.pop %v2584
        %v2586 = vmul.f32 %v2488, 1.442695
        %v2587 = vpow.pop %v2586
        %v2588 = vmul.f32 %v2489, 1.442695
        %v2589 = vpow.pop %v2588
        %v2590 = vmul.f32 %v2490, 1.442695
        %v2591 = vpow.pop %v2590
        %v2592 = vmul.f32 %v2491, 1.442695
        %v2593 = vpow.pop %v2592
        %v2594 = vmul.f32 %v2492, 1.442695
        %v2595 = vpow.pop %v2594
        %v2596 = vmul.f32 %v2493, 1.442695
        %v2597 = vpow.pop %v2596
        %v2598 = vmul.f32 %v2494, 1.442695
        %v2599 = vpow.pop %v2598
        %v2600 = vmul.f32 %v2495, 1.442695
        %v2601 = vpow.pop %v2600
        %v2602 = vmul.f32 %v2496, 1.442695
        %v2603 = vpow.pop %v2602
        %v2604 = vmul.f32 %v2497, 1.442695
        %v2605 = vpow.pop %v2604
        %v2606 = vmul.f32 %v2498, 1.442695
        %v2607 = vpow.pop %v2606
        %v2608 = vmul.f32 %v2499, 1.442695
        %v2609 = vpow.pop %v2608
        %v2610 = vmul.f32 %v2500, 1.442695
        %v2611 = vpow.pop %v2610
        %v2612 = vmul.f32 %v2501, 1.442695
        %v2613 = vpow.pop %v2612
        %v2614 = vmul.f32 %v2502, 1.442695
        %v2615 = vpow.pop %v2614
        %v2616 = vmul.f32 %v2503, 1.442695
        %v2617 = vpow.pop %v2616
        %v2618 = vmul.f32 %v2504, 1.442695
        %v2619 = vpow.pop %v2618
        %v2620 = vmul.f32 %v2505, 1.442695
        %v2621 = vpow.pop %v2620
        %v2622 = vmul.f32 %v2506, 1.442695
        %v2623 = vpow.pop %v2622
        %v2624 = vmul.f32 %v2507, 1.442695
        %v2625 = vpow.pop %v2624
        %v2626 = vmul.f32 %v2508, 1.442695
        %v2627 = vpow.pop %v2626
        %v2628 = vmul.f32 %v2509, 1.442695
        %v2629 = vpow.pop %v2628
        %v2630 = vmul.f32 %v2510, 1.442695
        %v2631 = vpow.pop %v2630
        %v2632 = vmul.f32 %v2511, 1.442695
        %v2633 = vpow.pop %v2632
        %v2634 = vmul.f32 %v2512, 1.442695
        %v2635 = vpow.pop %v2634
        %v2636 = vmul.f32 %v2513, 1.442695
        %v2637 = vpow.pop %v2636
        %v2638 = vmul.f32 %v2514, 1.442695
        %v2639 = vpow.pop %v2638
        %v2640 = vmul.f32 %v2515, 1.442695
        %v2641 = vpow.pop %v2640
        %v2642 = vmul.f32 %v2516, 1.442695
        %v2643 = vpow.pop %v2642
        %v2644 = vmul.f32 %v2517, 1.442695
        %v2645 = vpow.pop %v2644
        %v2646 = vsub.f32 %v2326, %v2390
        %v2647 = vsub.f32 %v2327, %v2391
        %v2648 = vsub.f32 %v2328, %v2392
        %v2649 = vsub.f32 %v2329, %v2393
        %v2650 = vsub.f32 %v2330, %v2394
        %v2651 = vsub.f32 %v2331, %v2395
        %v2652 = vsub.f32 %v2332, %v2396
        %v2653 = vsub.f32 %v2333, %v2397
        %v2654 = vsub.f32 %v2334, %v2398
        %v2655 = vsub.f32 %v2335, %v2399
        %v2656 = vsub.f32 %v2336, %v2400
        %v2657 = vsub.f32 %v2337, %v2401
        %v2658 = vsub.f32 %v2338, %v2402
        %v2659 = vsub.f32 %v2339, %v2403
        %v2660 = vsub.f32 %v2340, %v2404
        %v2661 = vsub.f32 %v2341, %v2405
        %v2662 = vsub.f32 %v2342, %v2406
        %v2663 = vsub.f32 %v2343, %v2407
        %v2664 = vsub.f32 %v2344, %v2408
        %v2665 = vsub.f32 %v2345, %v2409
        %v2666 = vsub.f32 %v2346, %v2410
        %v2667 = vsub.f32 %v2347, %v2411
        %v2668 = vsub.f32 %v2348, %v2412
        %v2669 = vsub.f32 %v2349, %v2413
        %v2670 = vsub.f32 %v2350, %v2414
        %v2671 = vsub.f32 %v2351, %v2415
        %v2672 = vsub.f32 %v2352, %v2416
        %v2673 = vsub.f32 %v2353, %v2417
        %v2674 = vsub.f32 %v2354, %v2418
        %v2675 = vsub.f32 %v2355, %v2419
        %v2676 = vsub.f32 %v2356, %v2420
        %v2677 = vsub.f32 %v2357, %v2421
        %v2678 = vsub.f32 %v2358, %v2422
        %v2679 = vsub.f32 %v2359, %v2423
        %v2680 = vsub.f32 %v2360, %v2424
        %v2681 = vsub.f32 %v2361, %v2425
        %v2682 = vsub.f32 %v2362, %v2426
        %v2683 = vsub.f32 %v2363, %v2427
        %v2684 = vsub.f32 %v2364, %v2428
        %v2685 = vsub.f32 %v2365, %v2429
        %v2686 = vsub.f32 %v2366, %v2430
        %v2687 = vsub.f32 %v2367, %v2431
        %v2688 = vsub.f32 %v2368, %v2432
        %v2689 = vsub.f32 %v2369, %v2433
        %v2690 = vsub.f32 %v2370, %v2434
        %v2691 = vsub.f32 %v2371, %v2435
        %v2692 = vsub.f32 %v2372, %v2436
        %v2693 = vsub.f32 %v2373, %v2437
        %v2694 = vsub.f32 %v2374, %v2438
        %v2695 = vsub.f32 %v2375, %v2439
        %v2696 = vsub.f32 %v2376, %v2440
        %v2697 = vsub.f32 %v2377, %v2441
        %v2698 = vsub.f32 %v2378, %v2442
        %v2699 = vsub.f32 %v2379, %v2443
        %v2700 = vsub.f32 %v2380, %v2444
        %v2701 = vsub.f32 %v2381, %v2445
        %v2702 = vsub.f32 %v2382, %v2446
        %v2703 = vsub.f32 %v2383, %v2447
        %v2704 = vsub.f32 %v2384, %v2448
        %v2705 = vsub.f32 %v2385, %v2449
        %v2706 = vsub.f32 %v2386, %v2450
        %v2707 = vsub.f32 %v2387, %v2451
        %v2708 = vsub.f32 %v2388, %v2452
        %v2709 = vsub.f32 %v2389, %v2453
        %v2710 = vmul.f32 %v2646, 1.442695
        %v2711 = vpow.pop %v2710
        %v2712 = vmul.f32 %v2647, 1.442695
        %v2713 = vpow.pop %v2712
        %v2714 = vmul.f32 %v2648, 1.442695
        %v2715 = vpow.pop %v2714
        %v2716 = vmul.f32 %v2649, 1.442695
        %v2717 = vpow.pop %v2716
        %v2718 = vmul.f32 %v2650, 1.442695
        %v2719 = vpow.pop %v2718
        %v2720 = vmul.f32 %v2651, 1.442695
        %v2721 = vpow.pop %v2720
        %v2722 = vmul.f32 %v2652, 1.442695
        %v2723 = vpow.pop %v2722
        %v2724 = vmul.f32 %v2653, 1.442695
        %v2725 = vpow.pop %v2724
        %v2726 = vmul.f32 %v2654, 1.442695
        %v2727 = vpow.pop %v2726
        %v2728 = vmul.f32 %v2655, 1.442695
        %v2729 = vpow.pop %v2728
        %v2730 = vmul.f32 %v2656, 1.442695
        %v2731 = vpow.pop %v2730
        %v2732 = vmul.f32 %v2657, 1.442695
        %v2733 = vpow.pop %v2732
        %v2734 = vmul.f32 %v2658, 1.442695
        %v2735 = vpow.pop %v2734
        %v2736 = vmul.f32 %v2659, 1.442695
        %v2737 = vpow.pop %v2736
        %v2738 = vmul.f32 %v2660, 1.442695
        %v2739 = vpow.pop %v2738
        %v2740 = vmul.f32 %v2661, 1.442695
        %v2741 = vpow.pop %v2740
        %v2742 = vmul.f32 %v2662, 1.442695
        %v2743 = vpow.pop %v2742
        %v2744 = vmul.f32 %v2663, 1.442695
        %v2745 = vpow.pop %v2744
        %v2746 = vmul.f32 %v2664, 1.442695
        %v2747 = vpow.pop %v2746
        %v2748 = vmul.f32 %v2665, 1.442695
        %v2749 = vpow.pop %v2748
        %v2750 = vmul.f32 %v2666, 1.442695
        %v2751 = vpow.pop %v2750
        %v2752 = vmul.f32 %v2667, 1.442695
        %v2753 = vpow.pop %v2752
        %v2754 = vmul.f32 %v2668, 1.442695
        %v2755 = vpow.pop %v2754
        %v2756 = vmul.f32 %v2669, 1.442695
        %v2757 = vpow.pop %v2756
        %v2758 = vmul.f32 %v2670, 1.442695
        %v2759 = vpow.pop %v2758
        %v2760 = vmul.f32 %v2671, 1.442695
        %v2761 = vpow.pop %v2760
        %v2762 = vmul.f32 %v2672, 1.442695
        %v2763 = vpow.pop %v2762
        %v2764 = vmul.f32 %v2673, 1.442695
        %v2765 = vpow.pop %v2764
        %v2766 = vmul.f32 %v2674, 1.442695
        %v2767 = vpow.pop %v2766
        %v2768 = vmul.f32 %v2675, 1.442695
        %v2769 = vpow.pop %v2768
        %v2770 = vmul.f32 %v2676, 1.442695
        %v2771 = vpow.pop %v2770
        %v2772 = vmul.f32 %v2677, 1.442695
        %v2773 = vpow.pop %v2772
        %v2774 = vmul.f32 %v2678, 1.442695
        %v2775 = vpow.pop %v2774
        %v2776 = vmul.f32 %v2679, 1.442695
        %v2777 = vpow.pop %v2776
        %v2778 = vmul.f32 %v2680, 1.442695
        %v2779 = vpow.pop %v2778
        %v2780 = vmul.f32 %v2681, 1.442695
        %v2781 = vpow.pop %v2780
        %v2782 = vmul.f32 %v2682, 1.442695
        %v2783 = vpow.pop %v2782
        %v2784 = vmul.f32 %v2683, 1.442695
        %v2785 = vpow.pop %v2784
        %v2786 = vmul.f32 %v2684, 1.442695
        %v2787 = vpow.pop %v2786
        %v2788 = vmul.f32 %v2685, 1.442695
        %v2789 = vpow.pop %v2788
        %v2790 = vmul.f32 %v2686, 1.442695
        %v2791 = vpow.pop %v2790
        %v2792 = vmul.f32 %v2687, 1.442695
        %v2793 = vpow.pop %v2792
        %v2794 = vmul.f32 %v2688, 1.442695
        %v2795 = vpow.pop %v2794
        %v2796 = vmul.f32 %v2689, 1.442695
        %v2797 = vpow.pop %v2796
        %v2798 = vmul.f32 %v2690, 1.442695
        %v2799 = vpow.pop %v2798
        %v2800 = vmul.f32 %v2691, 1.442695
        %v2801 = vpow.pop %v2800
        %v2802 = vmul.f32 %v2692, 1.442695
        %v2803 = vpow.pop %v2802
        %v2804 = vmul.f32 %v2693, 1.442695
        %v2805 = vpow.pop %v2804
        %v2806 = vmul.f32 %v2694, 1.442695
        %v2807 = vpow.pop %v2806
        %v2808 = vmul.f32 %v2695, 1.442695
        %v2809 = vpow.pop %v2808
        %v2810 = vmul.f32 %v2696, 1.442695
        %v2811 = vpow.pop %v2810
        %v2812 = vmul.f32 %v2697, 1.442695
        %v2813 = vpow.pop %v2812
        %v2814 = vmul.f32 %v2698, 1.442695
        %v2815 = vpow.pop %v2814
        %v2816 = vmul.f32 %v2699, 1.442695
        %v2817 = vpow.pop %v2816
        %v2818 = vmul.f32 %v2700, 1.442695
        %v2819 = vpow.pop %v2818
        %v2820 = vmul.f32 %v2701, 1.442695
        %v2821 = vpow.pop %v2820
        %v2822 = vmul.f32 %v2702, 1.442695
        %v2823 = vpow.pop %v2822
        %v2824 = vmul.f32 %v2703, 1.442695
        %v2825 = vpow.pop %v2824
        %v2826 = vmul.f32 %v2704, 1.442695
        %v2827 = vpow.pop %v2826
        %v2828 = vmul.f32 %v2705, 1.442695
        %v2829 = vpow.pop %v2828
        %v2830 = vmul.f32 %v2706, 1.442695
        %v2831 = vpow.pop %v2830
        %v2832 = vmul.f32 %v2707, 1.442695
        %v2833 = vpow.pop %v2832
        %v2834 = vmul.f32 %v2708, 1.442695
        %v2835 = vpow.pop %v2834
        %v2836 = vmul.f32 %v2709, 1.442695
        %v2837 = vpow.pop %v2836
        %v2838 = vadd.f32 %v2519, %v2711
        %v2839 = vadd.f32 %v2521, %v2713
        %v2840 = vadd.f32 %v2523, %v2715
        %v2841 = vadd.f32 %v2525, %v2717
        %v2842 = vadd.f32 %v2527, %v2719
        %v2843 = vadd.f32 %v2529, %v2721
        %v2844 = vadd.f32 %v2531, %v2723
        %v2845 = vadd.f32 %v2533, %v2725
        %v2846 = vadd.f32 %v2535, %v2727
        %v2847 = vadd.f32 %v2537, %v2729
        %v2848 = vadd.f32 %v2539, %v2731
        %v2849 = vadd.f32 %v2541, %v2733
        %v2850 = vadd.f32 %v2543, %v2735
        %v2851 = vadd.f32 %v2545, %v2737
        %v2852 = vadd.f32 %v2547, %v2739
        %v2853 = vadd.f32 %v2549, %v2741
        %v2854 = vadd.f32 %v2551, %v2743
        %v2855 = vadd.f32 %v2553, %v2745
        %v2856 = vadd.f32 %v2555, %v2747
        %v2857 = vadd.f32 %v2557, %v2749
        %v2858 = vadd.f32 %v2559, %v2751
        %v2859 = vadd.f32 %v2561, %v2753
        %v2860 = vadd.f32 %v2563, %v2755
        %v2861 = vadd.f32 %v2565, %v2757
        %v2862 = vadd.f32 %v2567, %v2759
        %v2863 = vadd.f32 %v2569, %v2761
        %v2864 = vadd.f32 %v2571, %v2763
        %v2865 = vadd.f32 %v2573, %v2765
        %v2866 = vadd.f32 %v2575, %v2767
        %v2867 = vadd.f32 %v2577, %v2769
        %v2868 = vadd.f32 %v2579, %v2771
        %v2869 = vadd.f32 %v2581, %v2773
        %v2870 = vadd.f32 %v2583, %v2775
        %v2871 = vadd.f32 %v2585, %v2777
        %v2872 = vadd.f32 %v2587, %v2779
        %v2873 = vadd.f32 %v2589, %v2781
        %v2874 = vadd.f32 %v2591, %v2783
        %v2875 = vadd.f32 %v2593, %v2785
        %v2876 = vadd.f32 %v2595, %v2787
        %v2877 = vadd.f32 %v2597, %v2789
        %v2878 = vadd.f32 %v2599, %v2791
        %v2879 = vadd.f32 %v2601, %v2793
        %v2880 = vadd.f32 %v2603, %v2795
        %v2881 = vadd.f32 %v2605, %v2797
        %v2882 = vadd.f32 %v2607, %v2799
        %v2883 = vadd.f32 %v2609, %v2801
        %v2884 = vadd.f32 %v2611, %v2803
        %v2885 = vadd.f32 %v2613, %v2805
        %v2886 = vadd.f32 %v2615, %v2807
        %v2887 = vadd.f32 %v2617, %v2809
        %v2888 = vadd.f32 %v2619, %v2811
        %v2889 = vadd.f32 %v2621, %v2813
        %v2890 = vadd.f32 %v2623, %v2815
        %v2891 = vadd.f32 %v2625, %v2817
        %v2892 = vadd.f32 %v2627, %v2819
        %v2893 = vadd.f32 %v2629, %v2821
        %v2894 = vadd.f32 %v2631, %v2823
        %v2895 = vadd.f32 %v2633, %v2825
        %v2896 = vadd.f32 %v2635, %v2827
        %v2897 = vadd.f32 %v2637, %v2829
        %v2898 = vadd.f32 %v2639, %v2831
        %v2899 = vadd.f32 %v2641, %v2833
        %v2900 = vadd.f32 %v2643, %v2835
        %v2901 = vadd.f32 %v2645, %v2837
        %vm2902 = vcmask 31744
        %v2904 = vsel %vm2902, %v2519, 0
        %v2907 = vsel %vm2902, %v2521, 0
        %v2910 = vsel %vm2902, %v2523, 0
        %v2913 = vsel %vm2902, %v2525, 0
        %v2916 = vsel %vm2902, %v2527, 0
        %v2919 = vsel %vm2902, %v2529, 0
        %v2922 = vsel %vm2902, %v2531, 0
        %v2925 = vsel %vm2902, %v2533, 0
        %v2928 = vsel %vm2902, %v2535, 0
        %v2931 = vsel %vm2902, %v2537, 0
        %v2934 = vsel %vm2902, %v2539, 0
        %v2937 = vsel %vm2902, %v2541, 0
        %v2940 = vsel %vm2902, %v2543, 0
        %v2943 = vsel %vm2902, %v2545, 0
        %v2946 = vsel %vm2902, %v2547, 0
        %v2949 = vsel %vm2902, %v2549, 0
        %v2952 = vsel %vm2902, %v2551, 0
        %v2955 = vsel %vm2902, %v2553, 0
        %v2958 = vsel %vm2902, %v2555, 0
        %v2961 = vsel %vm2902, %v2557, 0
        %v2964 = vsel %vm2902, %v2559, 0
        %v2967 = vsel %vm2902, %v2561, 0
        %v2970 = vsel %vm2902, %v2563, 0
        %v2973 = vsel %vm2902, %v2565, 0
        %v2976 = vsel %vm2902, %v2567, 0
        %v2979 = vsel %vm2902, %v2569, 0
        %v2982 = vsel %vm2902, %v2571, 0
        %v2985 = vsel %vm2902, %v2573, 0
        %v2988 = vsel %vm2902, %v2575, 0
        %v2991 = vsel %vm2902, %v2577, 0
        %v2994 = vsel %vm2902, %v2579, 0
        %v2997 = vsel %vm2902, %v2581, 0
        %v3000 = vsel %vm2902, %v2583, 0
        %v3003 = vsel %vm2902, %v2585, 0
        %v3006 = vsel %vm2902, %v2587, 0
        %v3009 = vsel %vm2902, %v2589, 0
        %v3012 = vsel %vm2902, %v2591, 0
        %v3015 = vsel %vm2902, %v2593, 0
        %v3018 = vsel %vm2902, %v2595, 0
        %v3021 = vsel %vm2902, %v2597, 0
        %v3024 = vsel %vm2902, %v2599, 0
        %v3027 = vsel %vm2902, %v2601, 0
        %v3030 = vsel %vm2902, %v2603, 0
        %v3033 = vsel %vm2902, %v2605, 0
        %v3036 = vsel %vm2902, %v2607, 0
        %v3039 = vsel %vm2902, %v2609, 0
        %v3042 = vsel %vm2902, %v2611, 0
        %v3045 = vsel %vm2902, %v2613, 0
        %v3048 = vsel %vm2902, %v2615, 0
        %v3051 = vsel %vm2902, %v2617, 0
        %v3054 = vsel %vm2902, %v2619, 0
        %v3057 = vsel %vm2902, %v2621, 0
        %v3060 = vsel %vm2902, %v2623, 0
        %v3063 = vsel %vm2902, %v2625, 0
        %v3066 = vsel %vm2902, %v2627, 0
        %v3069 = vsel %vm2902, %v2629, 0
        %v3072 = vsel %vm2902, %v2631, 0
        %v3075 = vsel %vm2902, %v2633, 0
        %v3078 = vsel %vm2902, %v2635, 0
        %v3081 = vsel %vm2902, %v2637, 0
        %v3084 = vsel %vm2902, %v2639, 0
        %v3087 = vsel %vm2902, %v2641, 0
        %v3090 = vsel %vm2902, %v2643, 0
        %v3093 = vsel %vm2902, %v2645, 0
        %vm3095 = vcmask 1043456
        %v3097 = vsel %vm3095, %v270, 0
        %3099 = vmatprep.subr.mxu0 0.0
        %3100 = vmatpush1.msra.mxu0 0.0
        %3101 = vmatprep.subr.mxu0 0.0
        %3102 = vmatpush1.msra.mxu0 0.0
        %3103 = vmatprep.subr.mxu0 0.0
        %3104 = vmatpush1.msra.mxu0 0.0
        %3105 = vmatprep.subr.mxu0 0.0
        %3106 = vmatpush1.msra.mxu0 0.0
        %3107 = vmatprep.subr.mxu0 0.0
        %3108 = vmatpush1.msra.mxu0 0.0
        %3109 = vmatprep.subr.mxu0 0.0
        %3110 = vmatpush1.msra.mxu0 0.0
        %3111 = vmatprep.subr.mxu0 0.0
        %3112 = vmatpush1.msra.mxu0 0.0
        %3113 = vmatprep.subr.mxu0 0.0
        %3114 = vmatpush1.msra.mxu0 0.0
        %3115 = vmatprep.subr.mxu0 0.0
        %3116 = vmatpush1.msra.mxu0 0.0
        %3117 = vmatprep.subr.mxu0 0.0
        %3118 = vmatpush1.msra.mxu0 0.0
        %3119 = vmatprep.subr.mxu0 0.0
        %3120 = vmatpush1.msra.mxu0 0.0
        %3121 = vmatprep.subr.mxu0 0.0
        %3122 = vmatpush1.msra.mxu0 0.0
        %3123 = vmatprep.subr.mxu0 0.0
        %3124 = vmatpush1.msra.mxu0 0.0
        %3125 = vmatprep.subr.mxu0 0.0
        %3126 = vmatpush1.msra.mxu0 0.0
        %3127 = vmatprep.subr.mxu0 0.0
        %3128 = vmatpush1.msra.mxu0 0.0
        %3129 = vmatprep.subr.mxu0 0.0
        %3130 = vmatpush1.msra.mxu0 %v3097
        %3131 = vmatprep.subr.mxu0 0.0
        %3132 = vmatpush2.msra.mxu0 0.0
        %3133 = vmatprep.subr.mxu0 0.0
        %3134 = vmatpush2.msra.mxu0 0.0
        %3135 = vmatprep.subr.mxu0 0.0
        %3136 = vmatpush2.msra.mxu0 0.0
        %3137 = vmatprep.subr.mxu0 0.0
        %3138 = vmatpush2.msra.mxu0 0.0
        %3139 = vmatprep.subr.mxu0 0.0
        %3140 = vmatpush2.msra.mxu0 0.0
        %3141 = vmatprep.subr.mxu0 0.0
        %3142 = vmatpush2.msra.mxu0 0.0
        %3143 = vmatprep.subr.mxu0 0.0
        %3144 = vmatpush2.msra.mxu0 0.0
        %3145 = vmatprep.subr.mxu0 0.0
        %3146 = vmatpush2.msra.mxu0 0.0
        %3147 = vmatprep.subr.mxu0 0.0
        %3148 = vmatpush2.msra.mxu0 0.0
        %3149 = vmatprep.subr.mxu0 0.0
        %3150 = vmatpush2.msra.mxu0 0.0
        %3151 = vmatprep.subr.mxu0 0.0
        %3152 = vmatpush2.msra.mxu0 0.0
        %3153 = vmatprep.subr.mxu0 0.0
        %3154 = vmatpush2.msra.mxu0 0.0
        %3155 = vmatprep.subr.mxu0 0.0
        %3156 = vmatpush2.msra.mxu0 0.0
        %3157 = vmatprep.subr.mxu0 0.0
        %3158 = vmatpush2.msra.mxu0 0.0
        %3159 = vmatprep.subr.mxu0 0.0
        %3160 = vmatpush2.msra.mxu0 0.0
        %3161 = vmatprep.subr.mxu0 0.0
        %3162 = vmatpush2.msra.mxu0 0.0
        %3163 = vmatprep.mubr.f32.mxu0 0.0
        %3164 = vmatmul.mubr.f32.gmra.mxu0 %v2904
        %v3165 = vpop.f32.mrf.mxu0
        %v3166 = vadd.f32 0.0, %v3165
        %v3167 = vpop.f32.mrf.mxu0
        %3168 = vmatprep.mubr.f32.mxu0 0.0
        %3169 = vmatmul.mubr.f32.gmra.mxu0 %v2907
        %v3170 = vpop.f32.mrf.mxu0
        %v3171 = vadd.f32 0.0, %v3170
        %v3172 = vpop.f32.mrf.mxu0
        %3173 = vmatprep.mubr.f32.mxu0 0.0
        %3174 = vmatmul.mubr.f32.gmra.mxu0 %v2910
        %v3175 = vpop.f32.mrf.mxu0
        %v3176 = vadd.f32 0.0, %v3175
        %v3177 = vpop.f32.mrf.mxu0
        %3178 = vmatprep.mubr.f32.mxu0 0.0
        %3179 = vmatmul.mubr.f32.gmra.mxu0 %v2913
        %v3180 = vpop.f32.mrf.mxu0
        %v3181 = vadd.f32 0.0, %v3180
        %v3182 = vpop.f32.mrf.mxu0
        %3183 = vmatprep.mubr.f32.mxu0 0.0
        %3184 = vmatmul.mubr.f32.gmra.mxu0 %v2916
        %v3185 = vpop.f32.mrf.mxu0
        %v3186 = vadd.f32 0.0, %v3185
        %v3187 = vpop.f32.mrf.mxu0
        %3188 = vmatprep.mubr.f32.mxu0 0.0
        %3189 = vmatmul.mubr.f32.gmra.mxu0 %v2919
        %v3190 = vpop.f32.mrf.mxu0
        %v3191 = vadd.f32 0.0, %v3190
        %v3192 = vpop.f32.mrf.mxu0
        %3193 = vmatprep.mubr.f32.mxu0 0.0
        %3194 = vmatmul.mubr.f32.gmra.mxu0 %v2922
        %v3195 = vpop.f32.mrf.mxu0
        %v3196 = vadd.f32 0.0, %v3195
        %v3197 = vpop.f32.mrf.mxu0
        %3198 = vmatprep.mubr.f32.mxu0 0.0
        %3199 = vmatmul.mubr.f32.gmra.mxu0 %v2925
        %v3200 = vpop.f32.mrf.mxu0
        %v3201 = vadd.f32 0.0, %v3200
        %v3202 = vpop.f32.mrf.mxu0
        %3203 = vmatprep.mubr.f32.mxu0 0.0
        %3204 = vmatmul.mubr.f32.gmra.mxu0 %v2928
        %v3205 = vpop.f32.mrf.mxu0
        %v3206 = vadd.f32 0.0, %v3205
        %v3207 = vpop.f32.mrf.mxu0
        %3208 = vmatprep.mubr.f32.mxu0 0.0
        %3209 = vmatmul.mubr.f32.gmra.mxu0 %v2931
        %v3210 = vpop.f32.mrf.mxu0
        %v3211 = vadd.f32 0.0, %v3210
        %v3212 = vpop.f32.mrf.mxu0
        %3213 = vmatprep.mubr.f32.mxu0 0.0
        %3214 = vmatmul.mubr.f32.gmra.mxu0 %v2934
        %v3215 = vpop.f32.mrf.mxu0
        %v3216 = vadd.f32 0.0, %v3215
        %v3217 = vpop.f32.mrf.mxu0
        %3218 = vmatprep.mubr.f32.mxu0 0.0
        %3219 = vmatmul.mubr.f32.gmra.mxu0 %v2937
        %v3220 = vpop.f32.mrf.mxu0
        %v3221 = vadd.f32 0.0, %v3220
        %v3222 = vpop.f32.mrf.mxu0
        %3223 = vmatprep.mubr.f32.mxu0 0.0
        %3224 = vmatmul.mubr.f32.gmra.mxu0 %v2940
        %v3225 = vpop.f32.mrf.mxu0
        %v3226 = vadd.f32 0.0, %v3225
        %v3227 = vpop.f32.mrf.mxu0
        %3228 = vmatprep.mubr.f32.mxu0 0.0
        %3229 = vmatmul.mubr.f32.gmra.mxu0 %v2943
        %v3230 = vpop.f32.mrf.mxu0
        %v3231 = vadd.f32 0.0, %v3230
        %v3232 = vpop.f32.mrf.mxu0
        %3233 = vmatprep.mubr.f32.mxu0 0.0
        %3234 = vmatmul.mubr.f32.gmra.mxu0 %v2946
        %v3235 = vpop.f32.mrf.mxu0
        %v3236 = vadd.f32 0.0, %v3235
        %v3237 = vpop.f32.mrf.mxu0
        %3238 = vmatprep.mubr.f32.mxu0 0.0
        %3239 = vmatmul.mubr.f32.gmra.mxu0 %v2949
        %v3240 = vpop.f32.mrf.mxu0
        %v3241 = vadd.f32 0.0, %v3240
        %v3242 = vpop.f32.mrf.mxu0
        %3243 = vmatprep.mubr.f32.mxu0 0.0
        %3244 = vmatmul.mubr.f32.gmra.mxu0 %v2952
        %v3245 = vpop.f32.mrf.mxu0
        %v3246 = vadd.f32 0.0, %v3245
        %v3247 = vpop.f32.mrf.mxu0
        %3248 = vmatprep.mubr.f32.mxu0 0.0
        %3249 = vmatmul.mubr.f32.gmra.mxu0 %v2955
        %v3250 = vpop.f32.mrf.mxu0
        %v3251 = vadd.f32 0.0, %v3250
        %v3252 = vpop.f32.mrf.mxu0
        %3253 = vmatprep.mubr.f32.mxu0 0.0
        %3254 = vmatmul.mubr.f32.gmra.mxu0 %v2958
        %v3255 = vpop.f32.mrf.mxu0
        %v3256 = vadd.f32 0.0, %v3255
        %v3257 = vpop.f32.mrf.mxu0
        %3258 = vmatprep.mubr.f32.mxu0 0.0
        %3259 = vmatmul.mubr.f32.gmra.mxu0 %v2961
        %v3260 = vpop.f32.mrf.mxu0
        %v3261 = vadd.f32 0.0, %v3260
        %v3262 = vpop.f32.mrf.mxu0
        %3263 = vmatprep.mubr.f32.mxu0 0.0
        %3264 = vmatmul.mubr.f32.gmra.mxu0 %v2964
        %v3265 = vpop.f32.mrf.mxu0
        %v3266 = vadd.f32 0.0, %v3265
        %v3267 = vpop.f32.mrf.mxu0
        %3268 = vmatprep.mubr.f32.mxu0 0.0
        %3269 = vmatmul.mubr.f32.gmra.mxu0 %v2967
        %v3270 = vpop.f32.mrf.mxu0
        %v3271 = vadd.f32 0.0, %v3270
        %v3272 = vpop.f32.mrf.mxu0
        %3273 = vmatprep.mubr.f32.mxu0 0.0
        %3274 = vmatmul.mubr.f32.gmra.mxu0 %v2970
        %v3275 = vpop.f32.mrf.mxu0
        %v3276 = vadd.f32 0.0, %v3275
        %v3277 = vpop.f32.mrf.mxu0
        %3278 = vmatprep.mubr.f32.mxu0 0.0
        %3279 = vmatmul.mubr.f32.gmra.mxu0 %v2973
        %v3280 = vpop.f32.mrf.mxu0
        %v3281 = vadd.f32 0.0, %v3280
        %v3282 = vpop.f32.mrf.mxu0
        %3283 = vmatprep.mubr.f32.mxu0 0.0
        %3284 = vmatmul.mubr.f32.gmra.mxu0 %v2976
        %v3285 = vpop.f32.mrf.mxu0
        %v3286 = vadd.f32 0.0, %v3285
        %v3287 = vpop.f32.mrf.mxu0
        %3288 = vmatprep.mubr.f32.mxu0 0.0
        %3289 = vmatmul.mubr.f32.gmra.mxu0 %v2979
        %v3290 = vpop.f32.mrf.mxu0
        %v3291 = vadd.f32 0.0, %v3290
        %v3292 = vpop.f32.mrf.mxu0
        %3293 = vmatprep.mubr.f32.mxu0 0.0
        %3294 = vmatmul.mubr.f32.gmra.mxu0 %v2982
        %v3295 = vpop.f32.mrf.mxu0
        %v3296 = vadd.f32 0.0, %v3295
        %v3297 = vpop.f32.mrf.mxu0
        %3298 = vmatprep.mubr.f32.mxu0 0.0
        %3299 = vmatmul.mubr.f32.gmra.mxu0 %v2985
        %v3300 = vpop.f32.mrf.mxu0
        %v3301 = vadd.f32 0.0, %v3300
        %v3302 = vpop.f32.mrf.mxu0
        %3303 = vmatprep.mubr.f32.mxu0 0.0
        %3304 = vmatmul.mubr.f32.gmra.mxu0 %v2988
        %v3305 = vpop.f32.mrf.mxu0
        %v3306 = vadd.f32 0.0, %v3305
        %v3307 = vpop.f32.mrf.mxu0
        %3308 = vmatprep.mubr.f32.mxu0 0.0
        %3309 = vmatmul.mubr.f32.gmra.mxu0 %v2991
        %v3310 = vpop.f32.mrf.mxu0
        %v3311 = vadd.f32 0.0, %v3310
        %v3312 = vpop.f32.mrf.mxu0
        %3313 = vmatprep.mubr.f32.mxu0 0.0
        %3314 = vmatmul.mubr.f32.gmra.mxu0 %v2994
        %v3315 = vpop.f32.mrf.mxu0
        %v3316 = vadd.f32 0.0, %v3315
        %v3317 = vpop.f32.mrf.mxu0
        %3318 = vmatprep.mubr.f32.mxu0 0.0
        %3319 = vmatmul.mubr.f32.gmra.mxu0 %v2997
        %v3320 = vpop.f32.mrf.mxu0
        %v3321 = vadd.f32 0.0, %v3320
        %v3322 = vpop.f32.mrf.mxu0
        %3323 = vmatprep.mubr.f32.mxu0 0.0
        %3324 = vmatmul.mubr.f32.gmra.mxu0 %v3000
        %v3325 = vpop.f32.mrf.mxu0
        %v3326 = vadd.f32 0.0, %v3325
        %v3327 = vpop.f32.mrf.mxu0
        %3328 = vmatprep.mubr.f32.mxu0 0.0
        %3329 = vmatmul.mubr.f32.gmra.mxu0 %v3003
        %v3330 = vpop.f32.mrf.mxu0
        %v3331 = vadd.f32 0.0, %v3330
        %v3332 = vpop.f32.mrf.mxu0
        %3333 = vmatprep.mubr.f32.mxu0 0.0
        %3334 = vmatmul.mubr.f32.gmra.mxu0 %v3006
        %v3335 = vpop.f32.mrf.mxu0
        %v3336 = vadd.f32 0.0, %v3335
        %v3337 = vpop.f32.mrf.mxu0
        %3338 = vmatprep.mubr.f32.mxu0 0.0
        %3339 = vmatmul.mubr.f32.gmra.mxu0 %v3009
        %v3340 = vpop.f32.mrf.mxu0
        %v3341 = vadd.f32 0.0, %v3340
        %v3342 = vpop.f32.mrf.mxu0
        %3343 = vmatprep.mubr.f32.mxu0 0.0
        %3344 = vmatmul.mubr.f32.gmra.mxu0 %v3012
        %v3345 = vpop.f32.mrf.mxu0
        %v3346 = vadd.f32 0.0, %v3345
        %v3347 = vpop.f32.mrf.mxu0
        %3348 = vmatprep.mubr.f32.mxu0 0.0
        %3349 = vmatmul.mubr.f32.gmra.mxu0 %v3015
        %v3350 = vpop.f32.mrf.mxu0
        %v3351 = vadd.f32 0.0, %v3350
        %v3352 = vpop.f32.mrf.mxu0
        %3353 = vmatprep.mubr.f32.mxu0 0.0
        %3354 = vmatmul.mubr.f32.gmra.mxu0 %v3018
        %v3355 = vpop.f32.mrf.mxu0
        %v3356 = vadd.f32 0.0, %v3355
        %v3357 = vpop.f32.mrf.mxu0
        %3358 = vmatprep.mubr.f32.mxu0 0.0
        %3359 = vmatmul.mubr.f32.gmra.mxu0 %v3021
        %v3360 = vpop.f32.mrf.mxu0
        %v3361 = vadd.f32 0.0, %v3360
        %v3362 = vpop.f32.mrf.mxu0
        %3363 = vmatprep.mubr.f32.mxu0 0.0
        %3364 = vmatmul.mubr.f32.gmra.mxu0 %v3024
        %v3365 = vpop.f32.mrf.mxu0
        %v3366 = vadd.f32 0.0, %v3365
        %v3367 = vpop.f32.mrf.mxu0
        %3368 = vmatprep.mubr.f32.mxu0 0.0
        %3369 = vmatmul.mubr.f32.gmra.mxu0 %v3027
        %v3370 = vpop.f32.mrf.mxu0
        %v3371 = vadd.f32 0.0, %v3370
        %v3372 = vpop.f32.mrf.mxu0
        %3373 = vmatprep.mubr.f32.mxu0 0.0
        %3374 = vmatmul.mubr.f32.gmra.mxu0 %v3030
        %v3375 = vpop.f32.mrf.mxu0
        %v3376 = vadd.f32 0.0, %v3375
        %v3377 = vpop.f32.mrf.mxu0
        %3378 = vmatprep.mubr.f32.mxu0 0.0
        %3379 = vmatmul.mubr.f32.gmra.mxu0 %v3033
        %v3380 = vpop.f32.mrf.mxu0
        %v3381 = vadd.f32 0.0, %v3380
        %v3382 = vpop.f32.mrf.mxu0
        %3383 = vmatprep.mubr.f32.mxu0 0.0
        %3384 = vmatmul.mubr.f32.gmra.mxu0 %v3036
        %v3385 = vpop.f32.mrf.mxu0
        %v3386 = vadd.f32 0.0, %v3385
        %v3387 = vpop.f32.mrf.mxu0
        %3388 = vmatprep.mubr.f32.mxu0 0.0
        %3389 = vmatmul.mubr.f32.gmra.mxu0 %v3039
        %v3390 = vpop.f32.mrf.mxu0
        %v3391 = vadd.f32 0.0, %v3390
        %v3392 = vpop.f32.mrf.mxu0
        %3393 = vmatprep.mubr.f32.mxu0 0.0
        %3394 = vmatmul.mubr.f32.gmra.mxu0 %v3042
        %v3395 = vpop.f32.mrf.mxu0
        %v3396 = vadd.f32 0.0, %v3395
        %v3397 = vpop.f32.mrf.mxu0
        %3398 = vmatprep.mubr.f32.mxu0 0.0
        %3399 = vmatmul.mubr.f32.gmra.mxu0 %v3045
        %v3400 = vpop.f32.mrf.mxu0
        %v3401 = vadd.f32 0.0, %v3400
        %v3402 = vpop.f32.mrf.mxu0
        %3403 = vmatprep.mubr.f32.mxu0 0.0
        %3404 = vmatmul.mubr.f32.gmra.mxu0 %v3048
        %v3405 = vpop.f32.mrf.mxu0
        %v3406 = vadd.f32 0.0, %v3405
        %v3407 = vpop.f32.mrf.mxu0
        %3408 = vmatprep.mubr.f32.mxu0 0.0
        %3409 = vmatmul.mubr.f32.gmra.mxu0 %v3051
        %v3410 = vpop.f32.mrf.mxu0
        %v3411 = vadd.f32 0.0, %v3410
        %v3412 = vpop.f32.mrf.mxu0
        %3413 = vmatprep.mubr.f32.mxu0 0.0
        %3414 = vmatmul.mubr.f32.gmra.mxu0 %v3054
        %v3415 = vpop.f32.mrf.mxu0
        %v3416 = vadd.f32 0.0, %v3415
        %v3417 = vpop.f32.mrf.mxu0
        %3418 = vmatprep.mubr.f32.mxu0 0.0
        %3419 = vmatmul.mubr.f32.gmra.mxu0 %v3057
        %v3420 = vpop.f32.mrf.mxu0
        %v3421 = vadd.f32 0.0, %v3420
        %v3422 = vpop.f32.mrf.mxu0
        %3423 = vmatprep.mubr.f32.mxu0 0.0
        %3424 = vmatmul.mubr.f32.gmra.mxu0 %v3060
        %v3425 = vpop.f32.mrf.mxu0
        %v3426 = vadd.f32 0.0, %v3425
        %v3427 = vpop.f32.mrf.mxu0
        %3428 = vmatprep.mubr.f32.mxu0 0.0
        %3429 = vmatmul.mubr.f32.gmra.mxu0 %v3063
        %v3430 = vpop.f32.mrf.mxu0
        %v3431 = vadd.f32 0.0, %v3430
        %v3432 = vpop.f32.mrf.mxu0
        %3433 = vmatprep.mubr.f32.mxu0 0.0
        %3434 = vmatmul.mubr.f32.gmra.mxu0 %v3066
        %v3435 = vpop.f32.mrf.mxu0
        %v3436 = vadd.f32 0.0, %v3435
        %v3437 = vpop.f32.mrf.mxu0
        %3438 = vmatprep.mubr.f32.mxu0 0.0
        %3439 = vmatmul.mubr.f32.gmra.mxu0 %v3069
        %v3440 = vpop.f32.mrf.mxu0
        %v3441 = vadd.f32 0.0, %v3440
        %v3442 = vpop.f32.mrf.mxu0
        %3443 = vmatprep.mubr.f32.mxu0 0.0
        %3444 = vmatmul.mubr.f32.gmra.mxu0 %v3072
        %v3445 = vpop.f32.mrf.mxu0
        %v3446 = vadd.f32 0.0, %v3445
        %v3447 = vpop.f32.mrf.mxu0
        %3448 = vmatprep.mubr.f32.mxu0 0.0
        %3449 = vmatmul.mubr.f32.gmra.mxu0 %v3075
        %v3450 = vpop.f32.mrf.mxu0
        %v3451 = vadd.f32 0.0, %v3450
        %v3452 = vpop.f32.mrf.mxu0
        %3453 = vmatprep.mubr.f32.mxu0 0.0
        %3454 = vmatmul.mubr.f32.gmra.mxu0 %v3078
        %v3455 = vpop.f32.mrf.mxu0
        %v3456 = vadd.f32 0.0, %v3455
        %v3457 = vpop.f32.mrf.mxu0
        %3458 = vmatprep.mubr.f32.mxu0 0.0
        %3459 = vmatmul.mubr.f32.gmra.mxu0 %v3081
        %v3460 = vpop.f32.mrf.mxu0
        %v3461 = vadd.f32 0.0, %v3460
        %v3462 = vpop.f32.mrf.mxu0
        %3463 = vmatprep.mubr.f32.mxu0 0.0
        %3464 = vmatmul.mubr.f32.gmra.mxu0 %v3084
        %v3465 = vpop.f32.mrf.mxu0
        %v3466 = vadd.f32 0.0, %v3465
        %v3467 = vpop.f32.mrf.mxu0
        %3468 = vmatprep.mubr.f32.mxu0 0.0
        %3469 = vmatmul.mubr.f32.gmra.mxu0 %v3087
        %v3470 = vpop.f32.mrf.mxu0
        %v3471 = vadd.f32 0.0, %v3470
        %v3472 = vpop.f32.mrf.mxu0
        %3473 = vmatprep.mubr.f32.mxu0 0.0
        %3474 = vmatmul.mubr.f32.gmra.mxu0 %v3090
        %v3475 = vpop.f32.mrf.mxu0
        %v3476 = vadd.f32 0.0, %v3475
        %v3477 = vpop.f32.mrf.mxu0
        %3478 = vmatprep.mubr.f32.mxu0 0.0
        %3479 = vmatmul.mubr.f32.gmra.mxu0 %v3093
        %v3480 = vpop.f32.mrf.mxu0
        %v3481 = vadd.f32 0.0, %v3480
        %v3482 = vpop.f32.mrf.mxu0
        %3483 = vdwg.mxu0
        %v3485 = vsel %vm2902, %v2711, 0
        %v3488 = vsel %vm2902, %v2713, 0
        %v3491 = vsel %vm2902, %v2715, 0
        %v3494 = vsel %vm2902, %v2717, 0
        %v3497 = vsel %vm2902, %v2719, 0
        %v3500 = vsel %vm2902, %v2721, 0
        %v3503 = vsel %vm2902, %v2723, 0
        %v3506 = vsel %vm2902, %v2725, 0
        %v3509 = vsel %vm2902, %v2727, 0
        %v3512 = vsel %vm2902, %v2729, 0
        %v3515 = vsel %vm2902, %v2731, 0
        %v3518 = vsel %vm2902, %v2733, 0
        %v3521 = vsel %vm2902, %v2735, 0
        %v3524 = vsel %vm2902, %v2737, 0
        %v3527 = vsel %vm2902, %v2739, 0
        %v3530 = vsel %vm2902, %v2741, 0
        %v3533 = vsel %vm2902, %v2743, 0
        %v3536 = vsel %vm2902, %v2745, 0
        %v3539 = vsel %vm2902, %v2747, 0
        %v3542 = vsel %vm2902, %v2749, 0
        %v3545 = vsel %vm2902, %v2751, 0
        %v3548 = vsel %vm2902, %v2753, 0
        %v3551 = vsel %vm2902, %v2755, 0
        %v3554 = vsel %vm2902, %v2757, 0
        %v3557 = vsel %vm2902, %v2759, 0
        %v3560 = vsel %vm2902, %v2761, 0
        %v3563 = vsel %vm2902, %v2763, 0
        %v3566 = vsel %vm2902, %v2765, 0
        %v3569 = vsel %vm2902, %v2767, 0
        %v3572 = vsel %vm2902, %v2769, 0
        %v3575 = vsel %vm2902, %v2771, 0
        %v3578 = vsel %vm2902, %v2773, 0
        %v3581 = vsel %vm2902, %v2775, 0
        %v3584 = vsel %vm2902, %v2777, 0
        %v3587 = vsel %vm2902, %v2779, 0
        %v3590 = vsel %vm2902, %v2781, 0
        %v3593 = vsel %vm2902, %v2783, 0
        %v3596 = vsel %vm2902, %v2785, 0
        %v3599 = vsel %vm2902, %v2787, 0
        %v3602 = vsel %vm2902, %v2789, 0
        %v3605 = vsel %vm2902, %v2791, 0
        %v3608 = vsel %vm2902, %v2793, 0
        %v3611 = vsel %vm2902, %v2795, 0
        %v3614 = vsel %vm2902, %v2797, 0
        %v3617 = vsel %vm2902, %v2799, 0
        %v3620 = vsel %vm2902, %v2801, 0
        %v3623 = vsel %vm2902, %v2803, 0
        %v3626 = vsel %vm2902, %v2805, 0
        %v3629 = vsel %vm2902, %v2807, 0
        %v3632 = vsel %vm2902, %v2809, 0
        %v3635 = vsel %vm2902, %v2811, 0
        %v3638 = vsel %vm2902, %v2813, 0
        %v3641 = vsel %vm2902, %v2815, 0
        %v3644 = vsel %vm2902, %v2817, 0
        %v3647 = vsel %vm2902, %v2819, 0
        %v3650 = vsel %vm2902, %v2821, 0
        %v3653 = vsel %vm2902, %v2823, 0
        %v3656 = vsel %vm2902, %v2825, 0
        %v3659 = vsel %vm2902, %v2827, 0
        %v3662 = vsel %vm2902, %v2829, 0
        %v3665 = vsel %vm2902, %v2831, 0
        %v3668 = vsel %vm2902, %v2833, 0
        %v3671 = vsel %vm2902, %v2835, 0
        %v3674 = vsel %vm2902, %v2837, 0
        %3676 = vmatprep.subr.mxu0 0.0
        %3677 = vmatpush1.msra.mxu0 0.0
        %3678 = vmatprep.subr.mxu0 0.0
        %3679 = vmatpush1.msra.mxu0 0.0
        %3680 = vmatprep.subr.mxu0 0.0
        %3681 = vmatpush1.msra.mxu0 0.0
        %3682 = vmatprep.subr.mxu0 0.0
        %3683 = vmatpush1.msra.mxu0 0.0
        %3684 = vmatprep.subr.mxu0 0.0
        %3685 = vmatpush1.msra.mxu0 0.0
        %3686 = vmatprep.subr.mxu0 0.0
        %3687 = vmatpush1.msra.mxu0 0.0
        %3688 = vmatprep.subr.mxu0 0.0
        %3689 = vmatpush1.msra.mxu0 0.0
        %3690 = vmatprep.subr.mxu0 0.0
        %3691 = vmatpush1.msra.mxu0 0.0
        %3692 = vmatprep.subr.mxu0 0.0
        %3693 = vmatpush1.msra.mxu0 0.0
        %3694 = vmatprep.subr.mxu0 0.0
        %3695 = vmatpush1.msra.mxu0 0.0
        %3696 = vmatprep.subr.mxu0 0.0
        %3697 = vmatpush1.msra.mxu0 0.0
        %3698 = vmatprep.subr.mxu0 0.0
        %3699 = vmatpush1.msra.mxu0 0.0
        %3700 = vmatprep.subr.mxu0 0.0
        %3701 = vmatpush1.msra.mxu0 0.0
        %3702 = vmatprep.subr.mxu0 0.0
        %3703 = vmatpush1.msra.mxu0 0.0
        %3704 = vmatprep.subr.mxu0 0.0
        %3705 = vmatpush1.msra.mxu0 0.0
        %3706 = vmatprep.subr.mxu0 0.0
        %3707 = vmatpush1.msra.mxu0 %v3097
        %3708 = vmatprep.subr.mxu0 0.0
        %3709 = vmatpush2.msra.mxu0 0.0
        %3710 = vmatprep.subr.mxu0 0.0
        %3711 = vmatpush2.msra.mxu0 0.0
        %3712 = vmatprep.subr.mxu0 0.0
        %3713 = vmatpush2.msra.mxu0 0.0
        %3714 = vmatprep.subr.mxu0 0.0
        %3715 = vmatpush2.msra.mxu0 0.0
        %3716 = vmatprep.subr.mxu0 0.0
        %3717 = vmatpush2.msra.mxu0 0.0
        %3718 = vmatprep.subr.mxu0 0.0
        %3719 = vmatpush2.msra.mxu0 0.0
        %3720 = vmatprep.subr.mxu0 0.0
        %3721 = vmatpush2.msra.mxu0 0.0
        %3722 = vmatprep.subr.mxu0 0.0
        %3723 = vmatpush2.msra.mxu0 0.0
        %3724 = vmatprep.subr.mxu0 0.0
        %3725 = vmatpush2.msra.mxu0 0.0
        %3726 = vmatprep.subr.mxu0 0.0
        %3727 = vmatpush2.msra.mxu0 0.0
        %3728 = vmatprep.subr.mxu0 0.0
        %3729 = vmatpush2.msra.mxu0 0.0
        %3730 = vmatprep.subr.mxu0 0.0
        %3731 = vmatpush2.msra.mxu0 0.0
        %3732 = vmatprep.subr.mxu0 0.0
        %3733 = vmatpush2.msra.mxu0 0.0
        %3734 = vmatprep.subr.mxu0 0.0
        %3735 = vmatpush2.msra.mxu0 0.0
        %3736 = vmatprep.subr.mxu0 0.0
        %3737 = vmatpush2.msra.mxu0 0.0
        %3738 = vmatprep.subr.mxu0 0.0
        %3739 = vmatpush2.msra.mxu0 0.0
        %3740 = vmatprep.mubr.f32.mxu0 0.0
        %3741 = vmatmul.mubr.f32.gmra.mxu0 %v3485
        %v3742 = vpop.f32.mrf.mxu0
        %v3743 = vadd.f32 0.0, %v3742
        %v3744 = vpop.f32.mrf.mxu0
        %3745 = vmatprep.mubr.f32.mxu0 0.0
        %3746 = vmatmul.mubr.f32.gmra.mxu0 %v3488
        %v3747 = vpop.f32.mrf.mxu0
        %v3748 = vadd.f32 0.0, %v3747
        %v3749 = vpop.f32.mrf.mxu0
        %3750 = vmatprep.mubr.f32.mxu0 0.0
        %3751 = vmatmul.mubr.f32.gmra.mxu0 %v3491
        %v3752 = vpop.f32.mrf.mxu0
        %v3753 = vadd.f32 0.0, %v3752
        %v3754 = vpop.f32.mrf.mxu0
        %3755 = vmatprep.mubr.f32.mxu0 0.0
        %3756 = vmatmul.mubr.f32.gmra.mxu0 %v3494
        %v3757 = vpop.f32.mrf.mxu0
        %v3758 = vadd.f32 0.0, %v3757
        %v3759 = vpop.f32.mrf.mxu0
        %3760 = vmatprep.mubr.f32.mxu0 0.0
        %3761 = vmatmul.mubr.f32.gmra.mxu0 %v3497
        %v3762 = vpop.f32.mrf.mxu0
        %v3763 = vadd.f32 0.0, %v3762
        %v3764 = vpop.f32.mrf.mxu0
        %3765 = vmatprep.mubr.f32.mxu0 0.0
        %3766 = vmatmul.mubr.f32.gmra.mxu0 %v3500
        %v3767 = vpop.f32.mrf.mxu0
        %v3768 = vadd.f32 0.0, %v3767
        %v3769 = vpop.f32.mrf.mxu0
        %3770 = vmatprep.mubr.f32.mxu0 0.0
        %3771 = vmatmul.mubr.f32.gmra.mxu0 %v3503
        %v3772 = vpop.f32.mrf.mxu0
        %v3773 = vadd.f32 0.0, %v3772
        %v3774 = vpop.f32.mrf.mxu0
        %3775 = vmatprep.mubr.f32.mxu0 0.0
        %3776 = vmatmul.mubr.f32.gmra.mxu0 %v3506
        %v3777 = vpop.f32.mrf.mxu0
        %v3778 = vadd.f32 0.0, %v3777
        %v3779 = vpop.f32.mrf.mxu0
        %3780 = vmatprep.mubr.f32.mxu0 0.0
        %3781 = vmatmul.mubr.f32.gmra.mxu0 %v3509
        %v3782 = vpop.f32.mrf.mxu0
        %v3783 = vadd.f32 0.0, %v3782
        %v3784 = vpop.f32.mrf.mxu0
        %3785 = vmatprep.mubr.f32.mxu0 0.0
        %3786 = vmatmul.mubr.f32.gmra.mxu0 %v3512
        %v3787 = vpop.f32.mrf.mxu0
        %v3788 = vadd.f32 0.0, %v3787
        %v3789 = vpop.f32.mrf.mxu0
        %3790 = vmatprep.mubr.f32.mxu0 0.0
        %3791 = vmatmul.mubr.f32.gmra.mxu0 %v3515
        %v3792 = vpop.f32.mrf.mxu0
        %v3793 = vadd.f32 0.0, %v3792
        %v3794 = vpop.f32.mrf.mxu0
        %3795 = vmatprep.mubr.f32.mxu0 0.0
        %3796 = vmatmul.mubr.f32.gmra.mxu0 %v3518
        %v3797 = vpop.f32.mrf.mxu0
        %v3798 = vadd.f32 0.0, %v3797
        %v3799 = vpop.f32.mrf.mxu0
        %3800 = vmatprep.mubr.f32.mxu0 0.0
        %3801 = vmatmul.mubr.f32.gmra.mxu0 %v3521
        %v3802 = vpop.f32.mrf.mxu0
        %v3803 = vadd.f32 0.0, %v3802
        %v3804 = vpop.f32.mrf.mxu0
        %3805 = vmatprep.mubr.f32.mxu0 0.0
        %3806 = vmatmul.mubr.f32.gmra.mxu0 %v3524
        %v3807 = vpop.f32.mrf.mxu0
        %v3808 = vadd.f32 0.0, %v3807
        %v3809 = vpop.f32.mrf.mxu0
        %3810 = vmatprep.mubr.f32.mxu0 0.0
        %3811 = vmatmul.mubr.f32.gmra.mxu0 %v3527
        %v3812 = vpop.f32.mrf.mxu0
        %v3813 = vadd.f32 0.0, %v3812
        %v3814 = vpop.f32.mrf.mxu0
        %3815 = vmatprep.mubr.f32.mxu0 0.0
        %3816 = vmatmul.mubr.f32.gmra.mxu0 %v3530
        %v3817 = vpop.f32.mrf.mxu0
        %v3818 = vadd.f32 0.0, %v3817
        %v3819 = vpop.f32.mrf.mxu0
        %3820 = vmatprep.mubr.f32.mxu0 0.0
        %3821 = vmatmul.mubr.f32.gmra.mxu0 %v3533
        %v3822 = vpop.f32.mrf.mxu0
        %v3823 = vadd.f32 0.0, %v3822
        %v3824 = vpop.f32.mrf.mxu0
        %3825 = vmatprep.mubr.f32.mxu0 0.0
        %3826 = vmatmul.mubr.f32.gmra.mxu0 %v3536
        %v3827 = vpop.f32.mrf.mxu0
        %v3828 = vadd.f32 0.0, %v3827
        %v3829 = vpop.f32.mrf.mxu0
        %3830 = vmatprep.mubr.f32.mxu0 0.0
        %3831 = vmatmul.mubr.f32.gmra.mxu0 %v3539
        %v3832 = vpop.f32.mrf.mxu0
        %v3833 = vadd.f32 0.0, %v3832
        %v3834 = vpop.f32.mrf.mxu0
        %3835 = vmatprep.mubr.f32.mxu0 0.0
        %3836 = vmatmul.mubr.f32.gmra.mxu0 %v3542
        %v3837 = vpop.f32.mrf.mxu0
        %v3838 = vadd.f32 0.0, %v3837
        %v3839 = vpop.f32.mrf.mxu0
        %3840 = vmatprep.mubr.f32.mxu0 0.0
        %3841 = vmatmul.mubr.f32.gmra.mxu0 %v3545
        %v3842 = vpop.f32.mrf.mxu0
        %v3843 = vadd.f32 0.0, %v3842
        %v3844 = vpop.f32.mrf.mxu0
        %3845 = vmatprep.mubr.f32.mxu0 0.0
        %3846 = vmatmul.mubr.f32.gmra.mxu0 %v3548
        %v3847 = vpop.f32.mrf.mxu0
        %v3848 = vadd.f32 0.0, %v3847
        %v3849 = vpop.f32.mrf.mxu0
        %3850 = vmatprep.mubr.f32.mxu0 0.0
        %3851 = vmatmul.mubr.f32.gmra.mxu0 %v3551
        %v3852 = vpop.f32.mrf.mxu0
        %v3853 = vadd.f32 0.0, %v3852
        %v3854 = vpop.f32.mrf.mxu0
        %3855 = vmatprep.mubr.f32.mxu0 0.0
        %3856 = vmatmul.mubr.f32.gmra.mxu0 %v3554
        %v3857 = vpop.f32.mrf.mxu0
        %v3858 = vadd.f32 0.0, %v3857
        %v3859 = vpop.f32.mrf.mxu0
        %3860 = vmatprep.mubr.f32.mxu0 0.0
        %3861 = vmatmul.mubr.f32.gmra.mxu0 %v3557
        %v3862 = vpop.f32.mrf.mxu0
        %v3863 = vadd.f32 0.0, %v3862
        %v3864 = vpop.f32.mrf.mxu0
        %3865 = vmatprep.mubr.f32.mxu0 0.0
        %3866 = vmatmul.mubr.f32.gmra.mxu0 %v3560
        %v3867 = vpop.f32.mrf.mxu0
        %v3868 = vadd.f32 0.0, %v3867
        %v3869 = vpop.f32.mrf.mxu0
        %3870 = vmatprep.mubr.f32.mxu0 0.0
        %3871 = vmatmul.mubr.f32.gmra.mxu0 %v3563
        %v3872 = vpop.f32.mrf.mxu0
        %v3873 = vadd.f32 0.0, %v3872
        %v3874 = vpop.f32.mrf.mxu0
        %3875 = vmatprep.mubr.f32.mxu0 0.0
        %3876 = vmatmul.mubr.f32.gmra.mxu0 %v3566
        %v3877 = vpop.f32.mrf.mxu0
        %v3878 = vadd.f32 0.0, %v3877
        %v3879 = vpop.f32.mrf.mxu0
        %3880 = vmatprep.mubr.f32.mxu0 0.0
        %3881 = vmatmul.mubr.f32.gmra.mxu0 %v3569
        %v3882 = vpop.f32.mrf.mxu0
        %v3883 = vadd.f32 0.0, %v3882
        %v3884 = vpop.f32.mrf.mxu0
        %3885 = vmatprep.mubr.f32.mxu0 0.0
        %3886 = vmatmul.mubr.f32.gmra.mxu0 %v3572
        %v3887 = vpop.f32.mrf.mxu0
        %v3888 = vadd.f32 0.0, %v3887
        %v3889 = vpop.f32.mrf.mxu0
        %3890 = vmatprep.mubr.f32.mxu0 0.0
        %3891 = vmatmul.mubr.f32.gmra.mxu0 %v3575
        %v3892 = vpop.f32.mrf.mxu0
        %v3893 = vadd.f32 0.0, %v3892
        %v3894 = vpop.f32.mrf.mxu0
        %3895 = vmatprep.mubr.f32.mxu0 0.0
        %3896 = vmatmul.mubr.f32.gmra.mxu0 %v3578
        %v3897 = vpop.f32.mrf.mxu0
        %v3898 = vadd.f32 0.0, %v3897
        %v3899 = vpop.f32.mrf.mxu0
        %3900 = vmatprep.mubr.f32.mxu0 0.0
        %3901 = vmatmul.mubr.f32.gmra.mxu0 %v3581
        %v3902 = vpop.f32.mrf.mxu0
        %v3903 = vadd.f32 0.0, %v3902
        %v3904 = vpop.f32.mrf.mxu0
        %3905 = vmatprep.mubr.f32.mxu0 0.0
        %3906 = vmatmul.mubr.f32.gmra.mxu0 %v3584
        %v3907 = vpop.f32.mrf.mxu0
        %v3908 = vadd.f32 0.0, %v3907
        %v3909 = vpop.f32.mrf.mxu0
        %3910 = vmatprep.mubr.f32.mxu0 0.0
        %3911 = vmatmul.mubr.f32.gmra.mxu0 %v3587
        %v3912 = vpop.f32.mrf.mxu0
        %v3913 = vadd.f32 0.0, %v3912
        %v3914 = vpop.f32.mrf.mxu0
        %3915 = vmatprep.mubr.f32.mxu0 0.0
        %3916 = vmatmul.mubr.f32.gmra.mxu0 %v3590
        %v3917 = vpop.f32.mrf.mxu0
        %v3918 = vadd.f32 0.0, %v3917
        %v3919 = vpop.f32.mrf.mxu0
        %3920 = vmatprep.mubr.f32.mxu0 0.0
        %3921 = vmatmul.mubr.f32.gmra.mxu0 %v3593
        %v3922 = vpop.f32.mrf.mxu0
        %v3923 = vadd.f32 0.0, %v3922
        %v3924 = vpop.f32.mrf.mxu0
        %3925 = vmatprep.mubr.f32.mxu0 0.0
        %3926 = vmatmul.mubr.f32.gmra.mxu0 %v3596
        %v3927 = vpop.f32.mrf.mxu0
        %v3928 = vadd.f32 0.0, %v3927
        %v3929 = vpop.f32.mrf.mxu0
        %3930 = vmatprep.mubr.f32.mxu0 0.0
        %3931 = vmatmul.mubr.f32.gmra.mxu0 %v3599
        %v3932 = vpop.f32.mrf.mxu0
        %v3933 = vadd.f32 0.0, %v3932
        %v3934 = vpop.f32.mrf.mxu0
        %3935 = vmatprep.mubr.f32.mxu0 0.0
        %3936 = vmatmul.mubr.f32.gmra.mxu0 %v3602
        %v3937 = vpop.f32.mrf.mxu0
        %v3938 = vadd.f32 0.0, %v3937
        %v3939 = vpop.f32.mrf.mxu0
        %3940 = vmatprep.mubr.f32.mxu0 0.0
        %3941 = vmatmul.mubr.f32.gmra.mxu0 %v3605
        %v3942 = vpop.f32.mrf.mxu0
        %v3943 = vadd.f32 0.0, %v3942
        %v3944 = vpop.f32.mrf.mxu0
        %3945 = vmatprep.mubr.f32.mxu0 0.0
        %3946 = vmatmul.mubr.f32.gmra.mxu0 %v3608
        %v3947 = vpop.f32.mrf.mxu0
        %v3948 = vadd.f32 0.0, %v3947
        %v3949 = vpop.f32.mrf.mxu0
        %3950 = vmatprep.mubr.f32.mxu0 0.0
        %3951 = vmatmul.mubr.f32.gmra.mxu0 %v3611
        %v3952 = vpop.f32.mrf.mxu0
        %v3953 = vadd.f32 0.0, %v3952
        %v3954 = vpop.f32.mrf.mxu0
        %3955 = vmatprep.mubr.f32.mxu0 0.0
        %3956 = vmatmul.mubr.f32.gmra.mxu0 %v3614
        %v3957 = vpop.f32.mrf.mxu0
        %v3958 = vadd.f32 0.0, %v3957
        %v3959 = vpop.f32.mrf.mxu0
        %3960 = vmatprep.mubr.f32.mxu0 0.0
        %3961 = vmatmul.mubr.f32.gmra.mxu0 %v3617
        %v3962 = vpop.f32.mrf.mxu0
        %v3963 = vadd.f32 0.0, %v3962
        %v3964 = vpop.f32.mrf.mxu0
        %3965 = vmatprep.mubr.f32.mxu0 0.0
        %3966 = vmatmul.mubr.f32.gmra.mxu0 %v3620
        %v3967 = vpop.f32.mrf.mxu0
        %v3968 = vadd.f32 0.0, %v3967
        %v3969 = vpop.f32.mrf.mxu0
        %3970 = vmatprep.mubr.f32.mxu0 0.0
        %3971 = vmatmul.mubr.f32.gmra.mxu0 %v3623
        %v3972 = vpop.f32.mrf.mxu0
        %v3973 = vadd.f32 0.0, %v3972
        %v3974 = vpop.f32.mrf.mxu0
        %3975 = vmatprep.mubr.f32.mxu0 0.0
        %3976 = vmatmul.mubr.f32.gmra.mxu0 %v3626
        %v3977 = vpop.f32.mrf.mxu0
        %v3978 = vadd.f32 0.0, %v3977
        %v3979 = vpop.f32.mrf.mxu0
        %3980 = vmatprep.mubr.f32.mxu0 0.0
        %3981 = vmatmul.mubr.f32.gmra.mxu0 %v3629
        %v3982 = vpop.f32.mrf.mxu0
        %v3983 = vadd.f32 0.0, %v3982
        %v3984 = vpop.f32.mrf.mxu0
        %3985 = vmatprep.mubr.f32.mxu0 0.0
        %3986 = vmatmul.mubr.f32.gmra.mxu0 %v3632
        %v3987 = vpop.f32.mrf.mxu0
        %v3988 = vadd.f32 0.0, %v3987
        %v3989 = vpop.f32.mrf.mxu0
        %3990 = vmatprep.mubr.f32.mxu0 0.0
        %3991 = vmatmul.mubr.f32.gmra.mxu0 %v3635
        %v3992 = vpop.f32.mrf.mxu0
        %v3993 = vadd.f32 0.0, %v3992
        %v3994 = vpop.f32.mrf.mxu0
        %3995 = vmatprep.mubr.f32.mxu0 0.0
        %3996 = vmatmul.mubr.f32.gmra.mxu0 %v3638
        %v3997 = vpop.f32.mrf.mxu0
        %v3998 = vadd.f32 0.0, %v3997
        %v3999 = vpop.f32.mrf.mxu0
        %4000 = vmatprep.mubr.f32.mxu0 0.0
        %4001 = vmatmul.mubr.f32.gmra.mxu0 %v3641
        %v4002 = vpop.f32.mrf.mxu0
        %v4003 = vadd.f32 0.0, %v4002
        %v4004 = vpop.f32.mrf.mxu0
        %4005 = vmatprep.mubr.f32.mxu0 0.0
        %4006 = vmatmul.mubr.f32.gmra.mxu0 %v3644
        %v4007 = vpop.f32.mrf.mxu0
        %v4008 = vadd.f32 0.0, %v4007
        %v4009 = vpop.f32.mrf.mxu0
        %4010 = vmatprep.mubr.f32.mxu0 0.0
        %4011 = vmatmul.mubr.f32.gmra.mxu0 %v3647
        %v4012 = vpop.f32.mrf.mxu0
        %v4013 = vadd.f32 0.0, %v4012
        %v4014 = vpop.f32.mrf.mxu0
        %4015 = vmatprep.mubr.f32.mxu0 0.0
        %4016 = vmatmul.mubr.f32.gmra.mxu0 %v3650
        %v4017 = vpop.f32.mrf.mxu0
        %v4018 = vadd.f32 0.0, %v4017
        %v4019 = vpop.f32.mrf.mxu0
        %4020 = vmatprep.mubr.f32.mxu0 0.0
        %4021 = vmatmul.mubr.f32.gmra.mxu0 %v3653
        %v4022 = vpop.f32.mrf.mxu0
        %v4023 = vadd.f32 0.0, %v4022
        %v4024 = vpop.f32.mrf.mxu0
        %4025 = vmatprep.mubr.f32.mxu0 0.0
        %4026 = vmatmul.mubr.f32.gmra.mxu0 %v3656
        %v4027 = vpop.f32.mrf.mxu0
        %v4028 = vadd.f32 0.0, %v4027
        %v4029 = vpop.f32.mrf.mxu0
        %4030 = vmatprep.mubr.f32.mxu0 0.0
        %4031 = vmatmul.mubr.f32.gmra.mxu0 %v3659
        %v4032 = vpop.f32.mrf.mxu0
        %v4033 = vadd.f32 0.0, %v4032
        %v4034 = vpop.f32.mrf.mxu0
        %4035 = vmatprep.mubr.f32.mxu0 0.0
        %4036 = vmatmul.mubr.f32.gmra.mxu0 %v3662
        %v4037 = vpop.f32.mrf.mxu0
        %v4038 = vadd.f32 0.0, %v4037
        %v4039 = vpop.f32.mrf.mxu0
        %4040 = vmatprep.mubr.f32.mxu0 0.0
        %4041 = vmatmul.mubr.f32.gmra.mxu0 %v3665
        %v4042 = vpop.f32.mrf.mxu0
        %v4043 = vadd.f32 0.0, %v4042
        %v4044 = vpop.f32.mrf.mxu0
        %4045 = vmatprep.mubr.f32.mxu0 0.0
        %4046 = vmatmul.mubr.f32.gmra.mxu0 %v3668
        %v4047 = vpop.f32.mrf.mxu0
        %v4048 = vadd.f32 0.0, %v4047
        %v4049 = vpop.f32.mrf.mxu0
        %4050 = vmatprep.mubr.f32.mxu0 0.0
        %4051 = vmatmul.mubr.f32.gmra.mxu0 %v3671
        %v4052 = vpop.f32.mrf.mxu0
        %v4053 = vadd.f32 0.0, %v4052
        %v4054 = vpop.f32.mrf.mxu0
        %4055 = vmatprep.mubr.f32.mxu0 0.0
        %4056 = vmatmul.mubr.f32.gmra.mxu0 %v3674
        %v4057 = vpop.f32.mrf.mxu0
        %v4058 = vadd.f32 0.0, %v4057
        %v4059 = vpop.f32.mrf.mxu0
        %4060 = vdwg.mxu0
        %v4061 = vmul.f32 %v3166, %v418
        %v4062 = vmul.f32 %v3171, %v423
        %v4063 = vmul.f32 %v3176, %v428
        %v4064 = vmul.f32 %v3181, %v433
        %v4065 = vmul.f32 %v3186, %v438
        %v4066 = vmul.f32 %v3191, %v443
        %v4067 = vmul.f32 %v3196, %v448
        %v4068 = vmul.f32 %v3201, %v453
        %v4069 = vmul.f32 %v3206, %v458
        %v4070 = vmul.f32 %v3211, %v463
        %v4071 = vmul.f32 %v3216, %v468
        %v4072 = vmul.f32 %v3221, %v473
        %v4073 = vmul.f32 %v3226, %v478
        %v4074 = vmul.f32 %v3231, %v483
        %v4075 = vmul.f32 %v3236, %v488
        %v4076 = vmul.f32 %v3241, %v493
        %v4077 = vmul.f32 %v3246, %v498
        %v4078 = vmul.f32 %v3251, %v503
        %v4079 = vmul.f32 %v3256, %v508
        %v4080 = vmul.f32 %v3261, %v513
        %v4081 = vmul.f32 %v3266, %v518
        %v4082 = vmul.f32 %v3271, %v523
        %v4083 = vmul.f32 %v3276, %v528
        %v4084 = vmul.f32 %v3281, %v533
        %v4085 = vmul.f32 %v3286, %v538
        %v4086 = vmul.f32 %v3291, %v543
        %v4087 = vmul.f32 %v3296, %v548
        %v4088 = vmul.f32 %v3301, %v553
        %v4089 = vmul.f32 %v3306, %v558
        %v4090 = vmul.f32 %v3311, %v563
        %v4091 = vmul.f32 %v3316, %v568
        %v4092 = vmul.f32 %v3321, %v573
        %v4093 = vmul.f32 %v3326, %v578
        %v4094 = vmul.f32 %v3331, %v583
        %v4095 = vmul.f32 %v3336, %v588
        %v4096 = vmul.f32 %v3341, %v593
        %v4097 = vmul.f32 %v3346, %v598
        %v4098 = vmul.f32 %v3351, %v603
        %v4099 = vmul.f32 %v3356, %v608
        %v4100 = vmul.f32 %v3361, %v613
        %v4101 = vmul.f32 %v3366, %v618
        %v4102 = vmul.f32 %v3371, %v623
        %v4103 = vmul.f32 %v3376, %v628
        %v4104 = vmul.f32 %v3381, %v633
        %v4105 = vmul.f32 %v3386, %v638
        %v4106 = vmul.f32 %v3391, %v643
        %v4107 = vmul.f32 %v3396, %v648
        %v4108 = vmul.f32 %v3401, %v653
        %v4109 = vmul.f32 %v3406, %v658
        %v4110 = vmul.f32 %v3411, %v663
        %v4111 = vmul.f32 %v3416, %v668
        %v4112 = vmul.f32 %v3421, %v673
        %v4113 = vmul.f32 %v3426, %v678
        %v4114 = vmul.f32 %v3431, %v683
        %v4115 = vmul.f32 %v3436, %v688
        %v4116 = vmul.f32 %v3441, %v693
        %v4117 = vmul.f32 %v3446, %v698
        %v4118 = vmul.f32 %v3451, %v703
        %v4119 = vmul.f32 %v3456, %v708
        %v4120 = vmul.f32 %v3461, %v713
        %v4121 = vmul.f32 %v3466, %v718
        %v4122 = vmul.f32 %v3471, %v723
        %v4123 = vmul.f32 %v3476, %v728
        %v4124 = vmul.f32 %v3481, %v733
        %v4125 = vmul.f32 %v3743, %v1478
        %v4126 = vmul.f32 %v3748, %v1483
        %v4127 = vmul.f32 %v3753, %v1488
        %v4128 = vmul.f32 %v3758, %v1493
        %v4129 = vmul.f32 %v3763, %v1498
        %v4130 = vmul.f32 %v3768, %v1503
        %v4131 = vmul.f32 %v3773, %v1508
        %v4132 = vmul.f32 %v3778, %v1513
        %v4133 = vmul.f32 %v3783, %v1518
        %v4134 = vmul.f32 %v3788, %v1523
        %v4135 = vmul.f32 %v3793, %v1528
        %v4136 = vmul.f32 %v3798, %v1533
        %v4137 = vmul.f32 %v3803, %v1538
        %v4138 = vmul.f32 %v3808, %v1543
        %v4139 = vmul.f32 %v3813, %v1548
        %v4140 = vmul.f32 %v3818, %v1553
        %v4141 = vmul.f32 %v3823, %v1558
        %v4142 = vmul.f32 %v3828, %v1563
        %v4143 = vmul.f32 %v3833, %v1568
        %v4144 = vmul.f32 %v3838, %v1573
        %v4145 = vmul.f32 %v3843, %v1578
        %v4146 = vmul.f32 %v3848, %v1583
        %v4147 = vmul.f32 %v3853, %v1588
        %v4148 = vmul.f32 %v3858, %v1593
        %v4149 = vmul.f32 %v3863, %v1598
        %v4150 = vmul.f32 %v3868, %v1603
        %v4151 = vmul.f32 %v3873, %v1608
        %v4152 = vmul.f32 %v3878, %v1613
        %v4153 = vmul.f32 %v3883, %v1618
        %v4154 = vmul.f32 %v3888, %v1623
        %v4155 = vmul.f32 %v3893, %v1628
        %v4156 = vmul.f32 %v3898, %v1633
        %v4157 = vmul.f32 %v3903, %v1638
        %v4158 = vmul.f32 %v3908, %v1643
        %v4159 = vmul.f32 %v3913, %v1648
        %v4160 = vmul.f32 %v3918, %v1653
        %v4161 = vmul.f32 %v3923, %v1658
        %v4162 = vmul.f32 %v3928, %v1663
        %v4163 = vmul.f32 %v3933, %v1668
        %v4164 = vmul.f32 %v3938, %v1673
        %v4165 = vmul.f32 %v3943, %v1678
        %v4166 = vmul.f32 %v3948, %v1683
        %v4167 = vmul.f32 %v3953, %v1688
        %v4168 = vmul.f32 %v3958, %v1693
        %v4169 = vmul.f32 %v3963, %v1698
        %v4170 = vmul.f32 %v3968, %v1703
        %v4171 = vmul.f32 %v3973, %v1708
        %v4172 = vmul.f32 %v3978, %v1713
        %v4173 = vmul.f32 %v3983, %v1718
        %v4174 = vmul.f32 %v3988, %v1723
        %v4175 = vmul.f32 %v3993, %v1728
        %v4176 = vmul.f32 %v3998, %v1733
        %v4177 = vmul.f32 %v4003, %v1738
        %v4178 = vmul.f32 %v4008, %v1743
        %v4179 = vmul.f32 %v4013, %v1748
        %v4180 = vmul.f32 %v4018, %v1753
        %v4181 = vmul.f32 %v4023, %v1758
        %v4182 = vmul.f32 %v4028, %v1763
        %v4183 = vmul.f32 %v4033, %v1768
        %v4184 = vmul.f32 %v4038, %v1773
        %v4185 = vmul.f32 %v4043, %v1778
        %v4186 = vmul.f32 %v4048, %v1783
        %v4187 = vmul.f32 %v4053, %v1788
        %v4188 = vmul.f32 %v4058, %v1793
        %v4189 = vadd.f32 %v4061, %v4125
        %v4190 = vadd.f32 %v4062, %v4126
        %v4191 = vadd.f32 %v4063, %v4127
        %v4192 = vadd.f32 %v4064, %v4128
        %v4193 = vadd.f32 %v4065, %v4129
        %v4194 = vadd.f32 %v4066, %v4130
        %v4195 = vadd.f32 %v4067, %v4131
        %v4196 = vadd.f32 %v4068, %v4132
        %v4197 = vadd.f32 %v4069, %v4133
        %v4198 = vadd.f32 %v4070, %v4134
        %v4199 = vadd.f32 %v4071, %v4135
        %v4200 = vadd.f32 %v4072, %v4136
        %v4201 = vadd.f32 %v4073, %v4137
        %v4202 = vadd.f32 %v4074, %v4138
        %v4203 = vadd.f32 %v4075, %v4139
        %v4204 = vadd.f32 %v4076, %v4140
        %v4205 = vadd.f32 %v4077, %v4141
        %v4206 = vadd.f32 %v4078, %v4142
        %v4207 = vadd.f32 %v4079, %v4143
        %v4208 = vadd.f32 %v4080, %v4144
        %v4209 = vadd.f32 %v4081, %v4145
        %v4210 = vadd.f32 %v4082, %v4146
        %v4211 = vadd.f32 %v4083, %v4147
        %v4212 = vadd.f32 %v4084, %v4148
        %v4213 = vadd.f32 %v4085, %v4149
        %v4214 = vadd.f32 %v4086, %v4150
        %v4215 = vadd.f32 %v4087, %v4151
        %v4216 = vadd.f32 %v4088, %v4152
        %v4217 = vadd.f32 %v4089, %v4153
        %v4218 = vadd.f32 %v4090, %v4154
        %v4219 = vadd.f32 %v4091, %v4155
        %v4220 = vadd.f32 %v4092, %v4156
        %v4221 = vadd.f32 %v4093, %v4157
        %v4222 = vadd.f32 %v4094, %v4158
        %v4223 = vadd.f32 %v4095, %v4159
        %v4224 = vadd.f32 %v4096, %v4160
        %v4225 = vadd.f32 %v4097, %v4161
        %v4226 = vadd.f32 %v4098, %v4162
        %v4227 = vadd.f32 %v4099, %v4163
        %v4228 = vadd.f32 %v4100, %v4164
        %v4229 = vadd.f32 %v4101, %v4165
        %v4230 = vadd.f32 %v4102, %v4166
        %v4231 = vadd.f32 %v4103, %v4167
        %v4232 = vadd.f32 %v4104, %v4168
        %v4233 = vadd.f32 %v4105, %v4169
        %v4234 = vadd.f32 %v4106, %v4170
        %v4235 = vadd.f32 %v4107, %v4171
        %v4236 = vadd.f32 %v4108, %v4172
        %v4237 = vadd.f32 %v4109, %v4173
        %v4238 = vadd.f32 %v4110, %v4174
        %v4239 = vadd.f32 %v4111, %v4175
        %v4240 = vadd.f32 %v4112, %v4176
        %v4241 = vadd.f32 %v4113, %v4177
        %v4242 = vadd.f32 %v4114, %v4178
        %v4243 = vadd.f32 %v4115, %v4179
        %v4244 = vadd.f32 %v4116, %v4180
        %v4245 = vadd.f32 %v4117, %v4181
        %v4246 = vadd.f32 %v4118, %v4182
        %v4247 = vadd.f32 %v4119, %v4183
        %v4248 = vadd.f32 %v4120, %v4184
        %v4249 = vadd.f32 %v4121, %v4185
        %v4250 = vadd.f32 %v4122, %v4186
        %v4251 = vadd.f32 %v4123, %v4187
        %v4252 = vadd.f32 %v4124, %v4188
        %s4253 = scalar_lea.vmem %s235, 1024 [#allocation2]
        %v4254 = vld [vmem:[%s4253] sm:$0xff]
        %v4255 = vld [vmem:[%s4253 + $0x8] sm:$0xff]
        %v4256 = vld [vmem:[%s4253 + $0x10] sm:$0xff]
        %v4257 = vld [vmem:[%s4253 + $0x18] sm:$0xff]
        %v4258 = vld [vmem:[%s4253 + $0x20] sm:$0xff]
        %v4259 = vld [vmem:[%s4253 + $0x28] sm:$0xff]
        %v4260 = vld [vmem:[%s4253 + $0x30] sm:$0xff]
        %v4261 = vld [vmem:[%s4253 + $0x38] sm:$0xff]
        %v4262 = vld [vmem:[%s4253 + $0x40] sm:$0xff]
        %v4263 = vld [vmem:[%s4253 + $0x48] sm:$0xff]
        %v4264 = vld [vmem:[%s4253 + $0x50] sm:$0xff]
        %v4265 = vld [vmem:[%s4253 + $0x58] sm:$0xff]
        %v4266 = vld [vmem:[%s4253 + $0x60] sm:$0xff]
        %v4267 = vld [vmem:[%s4253 + $0x68] sm:$0xff]
        %v4268 = vld [vmem:[%s4253 + $0x70] sm:$0xff]
        %v4269 = vld [vmem:[%s4253 + $0x78] sm:$0xff]
        %v4270 = vld [vmem:[%s4253 + $0x80] sm:$0xff]
        %v4271 = vld [vmem:[%s4253 + $0x88] sm:$0xff]
        %v4272 = vld [vmem:[%s4253 + $0x90] sm:$0xff]
        %v4273 = vld [vmem:[%s4253 + $0x98] sm:$0xff]
        %v4274 = vld [vmem:[%s4253 + $0xa0] sm:$0xff]
        %v4275 = vld [vmem:[%s4253 + $0xa8] sm:$0xff]
        %v4276 = vld [vmem:[%s4253 + $0xb0] sm:$0xff]
        %v4277 = vld [vmem:[%s4253 + $0xb8] sm:$0xff]
        %v4278 = vld [vmem:[%s4253 + $0xc0] sm:$0xff]
        %v4279 = vld [vmem:[%s4253 + $0xc8] sm:$0xff]
        %v4280 = vld [vmem:[%s4253 + $0xd0] sm:$0xff]
        %v4281 = vld [vmem:[%s4253 + $0xd8] sm:$0xff]
        %v4282 = vld [vmem:[%s4253 + $0xe0] sm:$0xff]
        %v4283 = vld [vmem:[%s4253 + $0xe8] sm:$0xff]
        %v4284 = vld [vmem:[%s4253 + $0xf0] sm:$0xff]
        %v4285 = vld [vmem:[%s4253 + $0xf8] sm:$0xff]
        %v4286 = vld [vmem:[%s4253 + $0x100] sm:$0xff]
        %v4287 = vld [vmem:[%s4253 + $0x108] sm:$0xff]
        %v4288 = vld [vmem:[%s4253 + $0x110] sm:$0xff]
        %v4289 = vld [vmem:[%s4253 + $0x118] sm:$0xff]
        %v4290 = vld [vmem:[%s4253 + $0x120] sm:$0xff]
        %v4291 = vld [vmem:[%s4253 + $0x128] sm:$0xff]
        %v4292 = vld [vmem:[%s4253 + $0x130] sm:$0xff]
        %v4293 = vld [vmem:[%s4253 + $0x138] sm:$0xff]
        %v4294 = vld [vmem:[%s4253 + $0x140] sm:$0xff]
        %v4295 = vld [vmem:[%s4253 + $0x148] sm:$0xff]
        %v4296 = vld [vmem:[%s4253 + $0x150] sm:$0xff]
        %v4297 = vld [vmem:[%s4253 + $0x158] sm:$0xff]
        %v4298 = vld [vmem:[%s4253 + $0x160] sm:$0xff]
        %v4299 = vld [vmem:[%s4253 + $0x168] sm:$0xff]
        %v4300 = vld [vmem:[%s4253 + $0x170] sm:$0xff]
        %v4301 = vld [vmem:[%s4253 + $0x178] sm:$0xff]
        %v4302 = vld [vmem:[%s4253 + $0x180] sm:$0xff]
        %v4303 = vld [vmem:[%s4253 + $0x188] sm:$0xff]
        %v4304 = vld [vmem:[%s4253 + $0x190] sm:$0xff]
        %v4305 = vld [vmem:[%s4253 + $0x198] sm:$0xff]
        %v4306 = vld [vmem:[%s4253 + $0x1a0] sm:$0xff]
        %v4307 = vld [vmem:[%s4253 + $0x1a8] sm:$0xff]
        %v4308 = vld [vmem:[%s4253 + $0x1b0] sm:$0xff]
        %v4309 = vld [vmem:[%s4253 + $0x1b8] sm:$0xff]
        %v4310 = vld [vmem:[%s4253 + $0x1c0] sm:$0xff]
        %v4311 = vld [vmem:[%s4253 + $0x1c8] sm:$0xff]
        %v4312 = vld [vmem:[%s4253 + $0x1d0] sm:$0xff]
        %v4313 = vld [vmem:[%s4253 + $0x1d8] sm:$0xff]
        %v4314 = vld [vmem:[%s4253 + $0x1e0] sm:$0xff]
        %v4315 = vld [vmem:[%s4253 + $0x1e8] sm:$0xff]
        %v4316 = vld [vmem:[%s4253 + $0x1f0] sm:$0xff]
        %v4317 = vld [vmem:[%s4253 + $0x1f8] sm:$0xff]
        %s4318 = scalar_lea.vmem [#allocation5], 256
        %v4319 = vld [vmem:[%s4318] sm:$0xff]
        %v4320 = vld [vmem:[%s4318 + $0x8] sm:$0xff]
        %v4321 = vld [vmem:[%s4318 + $0x10] sm:$0xff]
        %v4322 = vld [vmem:[%s4318 + $0x18] sm:$0xff]
        %v4323 = vld [vmem:[%s4318 + $0x20] sm:$0xff]
        %v4324 = vld [vmem:[%s4318 + $0x28] sm:$0xff]
        %v4325 = vld [vmem:[%s4318 + $0x30] sm:$0xff]
        %v4326 = vld [vmem:[%s4318 + $0x38] sm:$0xff]
        %v4327 = vld [vmem:[%s4318 + $0x40] sm:$0xff]
        %v4328 = vld [vmem:[%s4318 + $0x48] sm:$0xff]
        %v4329 = vld [vmem:[%s4318 + $0x50] sm:$0xff]
        %v4330 = vld [vmem:[%s4318 + $0x58] sm:$0xff]
        %v4331 = vld [vmem:[%s4318 + $0x60] sm:$0xff]
        %v4332 = vld [vmem:[%s4318 + $0x68] sm:$0xff]
        %v4333 = vld [vmem:[%s4318 + $0x70] sm:$0xff]
        %v4334 = vld [vmem:[%s4318 + $0x78] sm:$0xff]
        %4335 = vmatprep.subr.mxu0 0.0
        %4336 = vmatpush1.msra.mxu0 %v4334
        %4337 = vmatprep.subr.mxu0 0.0
        %4338 = vmatpush1.msra.mxu0 %v4333
        %4339 = vmatprep.subr.mxu0 0.0
        %4340 = vmatpush1.msra.mxu0 %v4332
        %4341 = vmatprep.subr.mxu0 0.0
        %4342 = vmatpush1.msra.mxu0 %v4331
        %4343 = vmatprep.subr.mxu0 0.0
        %4344 = vmatpush1.msra.mxu0 %v4330
        %4345 = vmatprep.subr.mxu0 0.0
        %4346 = vmatpush1.msra.mxu0 %v4329
        %4347 = vmatprep.subr.mxu0 0.0
        %4348 = vmatpush1.msra.mxu0 %v4328
        %4349 = vmatprep.subr.mxu0 0.0
        %4350 = vmatpush1.msra.mxu0 %v4327
        %4351 = vmatprep.subr.mxu0 0.0
        %4352 = vmatpush1.msra.mxu0 %v4326
        %4353 = vmatprep.subr.mxu0 0.0
        %4354 = vmatpush1.msra.mxu0 %v4325
        %4355 = vmatprep.subr.mxu0 0.0
        %4356 = vmatpush1.msra.mxu0 %v4324
        %4357 = vmatprep.subr.mxu0 0.0
        %4358 = vmatpush1.msra.mxu0 %v4323
        %4359 = vmatprep.subr.mxu0 0.0
        %4360 = vmatpush1.msra.mxu0 %v4322
        %4361 = vmatprep.subr.mxu0 0.0
        %4362 = vmatpush1.msra.mxu0 %v4321
        %4363 = vmatprep.subr.mxu0 0.0
        %4364 = vmatpush1.msra.mxu0 %v4320
        %4365 = vmatprep.subr.mxu0 0.0
        %4366 = vmatpush1.msra.mxu0 %v4319
        %4367 = vmatprep.subr.mxu0 0.0
        %4368 = vmatpush2.msra.mxu0 0.0
        %4369 = vmatprep.subr.mxu0 0.0
        %4370 = vmatpush2.msra.mxu0 0.0
        %4371 = vmatprep.subr.mxu0 0.0
        %4372 = vmatpush2.msra.mxu0 0.0
        %4373 = vmatprep.subr.mxu0 0.0
        %4374 = vmatpush2.msra.mxu0 0.0
        %4375 = vmatprep.subr.mxu0 0.0
        %4376 = vmatpush2.msra.mxu0 0.0
        %4377 = vmatprep.subr.mxu0 0.0
        %4378 = vmatpush2.msra.mxu0 0.0
        %4379 = vmatprep.subr.mxu0 0.0
        %4380 = vmatpush2.msra.mxu0 0.0
        %4381 = vmatprep.subr.mxu0 0.0
        %4382 = vmatpush2.msra.mxu0 0.0
        %4383 = vmatprep.subr.mxu0 0.0
        %4384 = vmatpush2.msra.mxu0 0.0
        %4385 = vmatprep.subr.mxu0 0.0
        %4386 = vmatpush2.msra.mxu0 0.0
        %4387 = vmatprep.subr.mxu0 0.0
        %4388 = vmatpush2.msra.mxu0 0.0
        %4389 = vmatprep.subr.mxu0 0.0
        %4390 = vmatpush2.msra.mxu0 0.0
        %4391 = vmatprep.subr.mxu0 0.0
        %4392 = vmatpush2.msra.mxu0 0.0
        %4393 = vmatprep.subr.mxu0 0.0
        %4394 = vmatpush2.msra.mxu0 0.0
        %4395 = vmatprep.subr.mxu0 0.0
        %4396 = vmatpush2.msra.mxu0 0.0
        %4397 = vmatprep.subr.mxu0 0.0
        %4398 = vmatpush2.msra.mxu0 0.0
        %4399 = vmatprep.mubr.f32.mxu0 0.0
        %4400 = vmatmul.mubr.f32.gmra.mxu0 %v4254
        %v4401 = vpop.f32.mrf.mxu0
        %v4402 = vadd.f32 0.0, %v4401
        %v4403 = vpop.f32.mrf.mxu0
        %4404 = vmatprep.mubr.f32.mxu0 0.0
        %4405 = vmatmul.mubr.f32.gmra.mxu0 %v4255
        %v4406 = vpop.f32.mrf.mxu0
        %v4407 = vadd.f32 0.0, %v4406
        %v4408 = vpop.f32.mrf.mxu0
        %4409 = vmatprep.mubr.f32.mxu0 0.0
        %4410 = vmatmul.mubr.f32.gmra.mxu0 %v4256
        %v4411 = vpop.f32.mrf.mxu0
        %v4412 = vadd.f32 0.0, %v4411
        %v4413 = vpop.f32.mrf.mxu0
        %4414 = vmatprep.mubr.f32.mxu0 0.0
        %4415 = vmatmul.mubr.f32.gmra.mxu0 %v4257
        %v4416 = vpop.f32.mrf.mxu0
        %v4417 = vadd.f32 0.0, %v4416
        %v4418 = vpop.f32.mrf.mxu0
        %4419 = vmatprep.mubr.f32.mxu0 0.0
        %4420 = vmatmul.mubr.f32.gmra.mxu0 %v4258
        %v4421 = vpop.f32.mrf.mxu0
        %v4422 = vadd.f32 0.0, %v4421
        %v4423 = vpop.f32.mrf.mxu0
        %4424 = vmatprep.mubr.f32.mxu0 0.0
        %4425 = vmatmul.mubr.f32.gmra.mxu0 %v4259
        %v4426 = vpop.f32.mrf.mxu0
        %v4427 = vadd.f32 0.0, %v4426
        %v4428 = vpop.f32.mrf.mxu0
        %4429 = vmatprep.mubr.f32.mxu0 0.0
        %4430 = vmatmul.mubr.f32.gmra.mxu0 %v4260
        %v4431 = vpop.f32.mrf.mxu0
        %v4432 = vadd.f32 0.0, %v4431
        %v4433 = vpop.f32.mrf.mxu0
        %4434 = vmatprep.mubr.f32.mxu0 0.0
        %4435 = vmatmul.mubr.f32.gmra.mxu0 %v4261
        %v4436 = vpop.f32.mrf.mxu0
        %v4437 = vadd.f32 0.0, %v4436
        %v4438 = vpop.f32.mrf.mxu0
        %4439 = vmatprep.mubr.f32.mxu0 0.0
        %4440 = vmatmul.mubr.f32.gmra.mxu0 %v4262
        %v4441 = vpop.f32.mrf.mxu0
        %v4442 = vadd.f32 0.0, %v4441
        %v4443 = vpop.f32.mrf.mxu0
        %4444 = vmatprep.mubr.f32.mxu0 0.0
        %4445 = vmatmul.mubr.f32.gmra.mxu0 %v4263
        %v4446 = vpop.f32.mrf.mxu0
        %v4447 = vadd.f32 0.0, %v4446
        %v4448 = vpop.f32.mrf.mxu0
        %4449 = vmatprep.mubr.f32.mxu0 0.0
        %4450 = vmatmul.mubr.f32.gmra.mxu0 %v4264
        %v4451 = vpop.f32.mrf.mxu0
        %v4452 = vadd.f32 0.0, %v4451
        %v4453 = vpop.f32.mrf.mxu0
        %4454 = vmatprep.mubr.f32.mxu0 0.0
        %4455 = vmatmul.mubr.f32.gmra.mxu0 %v4265
        %v4456 = vpop.f32.mrf.mxu0
        %v4457 = vadd.f32 0.0, %v4456
        %v4458 = vpop.f32.mrf.mxu0
        %4459 = vmatprep.mubr.f32.mxu0 0.0
        %4460 = vmatmul.mubr.f32.gmra.mxu0 %v4266
        %v4461 = vpop.f32.mrf.mxu0
        %v4462 = vadd.f32 0.0, %v4461
        %v4463 = vpop.f32.mrf.mxu0
        %4464 = vmatprep.mubr.f32.mxu0 0.0
        %4465 = vmatmul.mubr.f32.gmra.mxu0 %v4267
        %v4466 = vpop.f32.mrf.mxu0
        %v4467 = vadd.f32 0.0, %v4466
        %v4468 = vpop.f32.mrf.mxu0
        %4469 = vmatprep.mubr.f32.mxu0 0.0
        %4470 = vmatmul.mubr.f32.gmra.mxu0 %v4268
        %v4471 = vpop.f32.mrf.mxu0
        %v4472 = vadd.f32 0.0, %v4471
        %v4473 = vpop.f32.mrf.mxu0
        %4474 = vmatprep.mubr.f32.mxu0 0.0
        %4475 = vmatmul.mubr.f32.gmra.mxu0 %v4269
        %v4476 = vpop.f32.mrf.mxu0
        %v4477 = vadd.f32 0.0, %v4476
        %v4478 = vpop.f32.mrf.mxu0
        %4479 = vmatprep.mubr.f32.mxu0 0.0
        %4480 = vmatmul.mubr.f32.gmra.mxu0 %v4270
        %v4481 = vpop.f32.mrf.mxu0
        %v4482 = vadd.f32 0.0, %v4481
        %v4483 = vpop.f32.mrf.mxu0
        %4484 = vmatprep.mubr.f32.mxu0 0.0
        %4485 = vmatmul.mubr.f32.gmra.mxu0 %v4271
        %v4486 = vpop.f32.mrf.mxu0
        %v4487 = vadd.f32 0.0, %v4486
        %v4488 = vpop.f32.mrf.mxu0
        %4489 = vmatprep.mubr.f32.mxu0 0.0
        %4490 = vmatmul.mubr.f32.gmra.mxu0 %v4272
        %v4491 = vpop.f32.mrf.mxu0
        %v4492 = vadd.f32 0.0, %v4491
        %v4493 = vpop.f32.mrf.mxu0
        %4494 = vmatprep.mubr.f32.mxu0 0.0
        %4495 = vmatmul.mubr.f32.gmra.mxu0 %v4273
        %v4496 = vpop.f32.mrf.mxu0
        %v4497 = vadd.f32 0.0, %v4496
        %v4498 = vpop.f32.mrf.mxu0
        %4499 = vmatprep.mubr.f32.mxu0 0.0
        %4500 = vmatmul.mubr.f32.gmra.mxu0 %v4274
        %v4501 = vpop.f32.mrf.mxu0
        %v4502 = vadd.f32 0.0, %v4501
        %v4503 = vpop.f32.mrf.mxu0
        %4504 = vmatprep.mubr.f32.mxu0 0.0
        %4505 = vmatmul.mubr.f32.gmra.mxu0 %v4275
        %v4506 = vpop.f32.mrf.mxu0
        %v4507 = vadd.f32 0.0, %v4506
        %v4508 = vpop.f32.mrf.mxu0
        %4509 = vmatprep.mubr.f32.mxu0 0.0
        %4510 = vmatmul.mubr.f32.gmra.mxu0 %v4276
        %v4511 = vpop.f32.mrf.mxu0
        %v4512 = vadd.f32 0.0, %v4511
        %v4513 = vpop.f32.mrf.mxu0
        %4514 = vmatprep.mubr.f32.mxu0 0.0
        %4515 = vmatmul.mubr.f32.gmra.mxu0 %v4277
        %v4516 = vpop.f32.mrf.mxu0
        %v4517 = vadd.f32 0.0, %v4516
        %v4518 = vpop.f32.mrf.mxu0
        %4519 = vmatprep.mubr.f32.mxu0 0.0
        %4520 = vmatmul.mubr.f32.gmra.mxu0 %v4278
        %v4521 = vpop.f32.mrf.mxu0
        %v4522 = vadd.f32 0.0, %v4521
        %v4523 = vpop.f32.mrf.mxu0
        %4524 = vmatprep.mubr.f32.mxu0 0.0
        %4525 = vmatmul.mubr.f32.gmra.mxu0 %v4279
        %v4526 = vpop.f32.mrf.mxu0
        %v4527 = vadd.f32 0.0, %v4526
        %v4528 = vpop.f32.mrf.mxu0
        %4529 = vmatprep.mubr.f32.mxu0 0.0
        %4530 = vmatmul.mubr.f32.gmra.mxu0 %v4280
        %v4531 = vpop.f32.mrf.mxu0
        %v4532 = vadd.f32 0.0, %v4531
        %v4533 = vpop.f32.mrf.mxu0
        %4534 = vmatprep.mubr.f32.mxu0 0.0
        %4535 = vmatmul.mubr.f32.gmra.mxu0 %v4281
        %v4536 = vpop.f32.mrf.mxu0
        %v4537 = vadd.f32 0.0, %v4536
        %v4538 = vpop.f32.mrf.mxu0
        %4539 = vmatprep.mubr.f32.mxu0 0.0
        %4540 = vmatmul.mubr.f32.gmra.mxu0 %v4282
        %v4541 = vpop.f32.mrf.mxu0
        %v4542 = vadd.f32 0.0, %v4541
        %v4543 = vpop.f32.mrf.mxu0
        %4544 = vmatprep.mubr.f32.mxu0 0.0
        %4545 = vmatmul.mubr.f32.gmra.mxu0 %v4283
        %v4546 = vpop.f32.mrf.mxu0
        %v4547 = vadd.f32 0.0, %v4546
        %v4548 = vpop.f32.mrf.mxu0
        %4549 = vmatprep.mubr.f32.mxu0 0.0
        %4550 = vmatmul.mubr.f32.gmra.mxu0 %v4284
        %v4551 = vpop.f32.mrf.mxu0
        %v4552 = vadd.f32 0.0, %v4551
        %v4553 = vpop.f32.mrf.mxu0
        %4554 = vmatprep.mubr.f32.mxu0 0.0
        %4555 = vmatmul.mubr.f32.gmra.mxu0 %v4285
        %v4556 = vpop.f32.mrf.mxu0
        %v4557 = vadd.f32 0.0, %v4556
        %v4558 = vpop.f32.mrf.mxu0
        %4559 = vmatprep.mubr.f32.mxu0 0.0
        %4560 = vmatmul.mubr.f32.gmra.mxu0 %v4286
        %v4561 = vpop.f32.mrf.mxu0
        %v4562 = vadd.f32 0.0, %v4561
        %v4563 = vpop.f32.mrf.mxu0
        %4564 = vmatprep.mubr.f32.mxu0 0.0
        %4565 = vmatmul.mubr.f32.gmra.mxu0 %v4287
        %v4566 = vpop.f32.mrf.mxu0
        %v4567 = vadd.f32 0.0, %v4566
        %v4568 = vpop.f32.mrf.mxu0
        %4569 = vmatprep.mubr.f32.mxu0 0.0
        %4570 = vmatmul.mubr.f32.gmra.mxu0 %v4288
        %v4571 = vpop.f32.mrf.mxu0
        %v4572 = vadd.f32 0.0, %v4571
        %v4573 = vpop.f32.mrf.mxu0
        %4574 = vmatprep.mubr.f32.mxu0 0.0
        %4575 = vmatmul.mubr.f32.gmra.mxu0 %v4289
        %v4576 = vpop.f32.mrf.mxu0
        %v4577 = vadd.f32 0.0, %v4576
        %v4578 = vpop.f32.mrf.mxu0
        %4579 = vmatprep.mubr.f32.mxu0 0.0
        %4580 = vmatmul.mubr.f32.gmra.mxu0 %v4290
        %v4581 = vpop.f32.mrf.mxu0
        %v4582 = vadd.f32 0.0, %v4581
        %v4583 = vpop.f32.mrf.mxu0
        %4584 = vmatprep.mubr.f32.mxu0 0.0
        %4585 = vmatmul.mubr.f32.gmra.mxu0 %v4291
        %v4586 = vpop.f32.mrf.mxu0
        %v4587 = vadd.f32 0.0, %v4586
        %v4588 = vpop.f32.mrf.mxu0
        %4589 = vmatprep.mubr.f32.mxu0 0.0
        %4590 = vmatmul.mubr.f32.gmra.mxu0 %v4292
        %v4591 = vpop.f32.mrf.mxu0
        %v4592 = vadd.f32 0.0, %v4591
        %v4593 = vpop.f32.mrf.mxu0
        %4594 = vmatprep.mubr.f32.mxu0 0.0
        %4595 = vmatmul.mubr.f32.gmra.mxu0 %v4293
        %v4596 = vpop.f32.mrf.mxu0
        %v4597 = vadd.f32 0.0, %v4596
        %v4598 = vpop.f32.mrf.mxu0
        %4599 = vmatprep.mubr.f32.mxu0 0.0
        %4600 = vmatmul.mubr.f32.gmra.mxu0 %v4294
        %v4601 = vpop.f32.mrf.mxu0
        %v4602 = vadd.f32 0.0, %v4601
        %v4603 = vpop.f32.mrf.mxu0
        %4604 = vmatprep.mubr.f32.mxu0 0.0
        %4605 = vmatmul.mubr.f32.gmra.mxu0 %v4295
        %v4606 = vpop.f32.mrf.mxu0
        %v4607 = vadd.f32 0.0, %v4606
        %v4608 = vpop.f32.mrf.mxu0
        %4609 = vmatprep.mubr.f32.mxu0 0.0
        %4610 = vmatmul.mubr.f32.gmra.mxu0 %v4296
        %v4611 = vpop.f32.mrf.mxu0
        %v4612 = vadd.f32 0.0, %v4611
        %v4613 = vpop.f32.mrf.mxu0
        %4614 = vmatprep.mubr.f32.mxu0 0.0
        %4615 = vmatmul.mubr.f32.gmra.mxu0 %v4297
        %v4616 = vpop.f32.mrf.mxu0
        %v4617 = vadd.f32 0.0, %v4616
        %v4618 = vpop.f32.mrf.mxu0
        %4619 = vmatprep.mubr.f32.mxu0 0.0
        %4620 = vmatmul.mubr.f32.gmra.mxu0 %v4298
        %v4621 = vpop.f32.mrf.mxu0
        %v4622 = vadd.f32 0.0, %v4621
        %v4623 = vpop.f32.mrf.mxu0
        %4624 = vmatprep.mubr.f32.mxu0 0.0
        %4625 = vmatmul.mubr.f32.gmra.mxu0 %v4299
        %v4626 = vpop.f32.mrf.mxu0
        %v4627 = vadd.f32 0.0, %v4626
        %v4628 = vpop.f32.mrf.mxu0
        %4629 = vmatprep.mubr.f32.mxu0 0.0
        %4630 = vmatmul.mubr.f32.gmra.mxu0 %v4300
        %v4631 = vpop.f32.mrf.mxu0
        %v4632 = vadd.f32 0.0, %v4631
        %v4633 = vpop.f32.mrf.mxu0
        %4634 = vmatprep.mubr.f32.mxu0 0.0
        %4635 = vmatmul.mubr.f32.gmra.mxu0 %v4301
        %v4636 = vpop.f32.mrf.mxu0
        %v4637 = vadd.f32 0.0, %v4636
        %v4638 = vpop.f32.mrf.mxu0
        %4639 = vmatprep.mubr.f32.mxu0 0.0
        %4640 = vmatmul.mubr.f32.gmra.mxu0 %v4302
        %v4641 = vpop.f32.mrf.mxu0
        %v4642 = vadd.f32 0.0, %v4641
        %v4643 = vpop.f32.mrf.mxu0
        %4644 = vmatprep.mubr.f32.mxu0 0.0
        %4645 = vmatmul.mubr.f32.gmra.mxu0 %v4303
        %v4646 = vpop.f32.mrf.mxu0
        %v4647 = vadd.f32 0.0, %v4646
        %v4648 = vpop.f32.mrf.mxu0
        %4649 = vmatprep.mubr.f32.mxu0 0.0
        %4650 = vmatmul.mubr.f32.gmra.mxu0 %v4304
        %v4651 = vpop.f32.mrf.mxu0
        %v4652 = vadd.f32 0.0, %v4651
        %v4653 = vpop.f32.mrf.mxu0
        %4654 = vmatprep.mubr.f32.mxu0 0.0
        %4655 = vmatmul.mubr.f32.gmra.mxu0 %v4305
        %v4656 = vpop.f32.mrf.mxu0
        %v4657 = vadd.f32 0.0, %v4656
        %v4658 = vpop.f32.mrf.mxu0
        %4659 = vmatprep.mubr.f32.mxu0 0.0
        %4660 = vmatmul.mubr.f32.gmra.mxu0 %v4306
        %v4661 = vpop.f32.mrf.mxu0
        %v4662 = vadd.f32 0.0, %v4661
        %v4663 = vpop.f32.mrf.mxu0
        %4664 = vmatprep.mubr.f32.mxu0 0.0
        %4665 = vmatmul.mubr.f32.gmra.mxu0 %v4307
        %v4666 = vpop.f32.mrf.mxu0
        %v4667 = vadd.f32 0.0, %v4666
        %v4668 = vpop.f32.mrf.mxu0
        %4669 = vmatprep.mubr.f32.mxu0 0.0
        %4670 = vmatmul.mubr.f32.gmra.mxu0 %v4308
        %v4671 = vpop.f32.mrf.mxu0
        %v4672 = vadd.f32 0.0, %v4671
        %v4673 = vpop.f32.mrf.mxu0
        %4674 = vmatprep.mubr.f32.mxu0 0.0
        %4675 = vmatmul.mubr.f32.gmra.mxu0 %v4309
        %v4676 = vpop.f32.mrf.mxu0
        %v4677 = vadd.f32 0.0, %v4676
        %v4678 = vpop.f32.mrf.mxu0
        %4679 = vmatprep.mubr.f32.mxu0 0.0
        %4680 = vmatmul.mubr.f32.gmra.mxu0 %v4310
        %v4681 = vpop.f32.mrf.mxu0
        %v4682 = vadd.f32 0.0, %v4681
        %v4683 = vpop.f32.mrf.mxu0
        %4684 = vmatprep.mubr.f32.mxu0 0.0
        %4685 = vmatmul.mubr.f32.gmra.mxu0 %v4311
        %v4686 = vpop.f32.mrf.mxu0
        %v4687 = vadd.f32 0.0, %v4686
        %v4688 = vpop.f32.mrf.mxu0
        %4689 = vmatprep.mubr.f32.mxu0 0.0
        %4690 = vmatmul.mubr.f32.gmra.mxu0 %v4312
        %v4691 = vpop.f32.mrf.mxu0
        %v4692 = vadd.f32 0.0, %v4691
        %v4693 = vpop.f32.mrf.mxu0
        %4694 = vmatprep.mubr.f32.mxu0 0.0
        %4695 = vmatmul.mubr.f32.gmra.mxu0 %v4313
        %v4696 = vpop.f32.mrf.mxu0
        %v4697 = vadd.f32 0.0, %v4696
        %v4698 = vpop.f32.mrf.mxu0
        %4699 = vmatprep.mubr.f32.mxu0 0.0
        %4700 = vmatmul.mubr.f32.gmra.mxu0 %v4314
        %v4701 = vpop.f32.mrf.mxu0
        %v4702 = vadd.f32 0.0, %v4701
        %v4703 = vpop.f32.mrf.mxu0
        %4704 = vmatprep.mubr.f32.mxu0 0.0
        %4705 = vmatmul.mubr.f32.gmra.mxu0 %v4315
        %v4706 = vpop.f32.mrf.mxu0
        %v4707 = vadd.f32 0.0, %v4706
        %v4708 = vpop.f32.mrf.mxu0
        %4709 = vmatprep.mubr.f32.mxu0 0.0
        %4710 = vmatmul.mubr.f32.gmra.mxu0 %v4316
        %v4711 = vpop.f32.mrf.mxu0
        %v4712 = vadd.f32 0.0, %v4711
        %v4713 = vpop.f32.mrf.mxu0
        %4714 = vmatprep.mubr.f32.mxu0 0.0
        %4715 = vmatmul.mubr.f32.gmra.mxu0 %v4317
        %v4716 = vpop.f32.mrf.mxu0
        %v4717 = vadd.f32 0.0, %v4716
        %v4718 = vpop.f32.mrf.mxu0
        %4719 = vdwg.mxu0
        %s4720 = scalar_lea.vmem %s2, 256
        %v4721 = vld [vmem:[%s4720] sm:$0xff]
        %v4722 = vld [vmem:[%s4720 + $0x8] sm:$0xff]
        %v4723 = vld [vmem:[%s4720 + $0x10] sm:$0xff]
        %v4724 = vld [vmem:[%s4720 + $0x18] sm:$0xff]
        %v4725 = vld [vmem:[%s4720 + $0x20] sm:$0xff]
        %v4726 = vld [vmem:[%s4720 + $0x28] sm:$0xff]
        %v4727 = vld [vmem:[%s4720 + $0x30] sm:$0xff]
        %v4728 = vld [vmem:[%s4720 + $0x38] sm:$0xff]
        %v4729 = vld [vmem:[%s4720 + $0x40] sm:$0xff]
        %v4730 = vld [vmem:[%s4720 + $0x48] sm:$0xff]
        %v4731 = vld [vmem:[%s4720 + $0x50] sm:$0xff]
        %v4732 = vld [vmem:[%s4720 + $0x58] sm:$0xff]
        %v4733 = vld [vmem:[%s4720 + $0x60] sm:$0xff]
        %v4734 = vld [vmem:[%s4720 + $0x68] sm:$0xff]
        %v4735 = vld [vmem:[%s4720 + $0x70] sm:$0xff]
        %v4736 = vld [vmem:[%s4720 + $0x78] sm:$0xff]
        %4737 = vmatprep.subr.mxu0 0.0
        %4738 = vmatpush1.msra.mxu0 %v4736
        %4739 = vmatprep.subr.mxu0 0.0
        %4740 = vmatpush1.msra.mxu0 %v4735
        %4741 = vmatprep.subr.mxu0 0.0
        %4742 = vmatpush1.msra.mxu0 %v4734
        %4743 = vmatprep.subr.mxu0 0.0
        %4744 = vmatpush1.msra.mxu0 %v4733
        %4745 = vmatprep.subr.mxu0 0.0
        %4746 = vmatpush1.msra.mxu0 %v4732
        %4747 = vmatprep.subr.mxu0 0.0
        %4748 = vmatpush1.msra.mxu0 %v4731
        %4749 = vmatprep.subr.mxu0 0.0
        %4750 = vmatpush1.msra.mxu0 %v4730
        %4751 = vmatprep.subr.mxu0 0.0
        %4752 = vmatpush1.msra.mxu0 %v4729
        %4753 = vmatprep.subr.mxu0 0.0
        %4754 = vmatpush1.msra.mxu0 %v4728
        %4755 = vmatprep.subr.mxu0 0.0
        %4756 = vmatpush1.msra.mxu0 %v4727
        %4757 = vmatprep.subr.mxu0 0.0
        %4758 = vmatpush1.msra.mxu0 %v4726
        %4759 = vmatprep.subr.mxu0 0.0
        %4760 = vmatpush1.msra.mxu0 %v4725
        %4761 = vmatprep.subr.mxu0 0.0
        %4762 = vmatpush1.msra.mxu0 %v4724
        %4763 = vmatprep.subr.mxu0 0.0
        %4764 = vmatpush1.msra.mxu0 %v4723
        %4765 = vmatprep.subr.mxu0 0.0
        %4766 = vmatpush1.msra.mxu0 %v4722
        %4767 = vmatprep.subr.mxu0 0.0
        %4768 = vmatpush1.msra.mxu0 %v4721
        %4769 = vmatprep.subr.mxu0 0.0
        %4770 = vmatpush2.msra.mxu0 0.0
        %4771 = vmatprep.subr.mxu0 0.0
        %4772 = vmatpush2.msra.mxu0 0.0
        %4773 = vmatprep.subr.mxu0 0.0
        %4774 = vmatpush2.msra.mxu0 0.0
        %4775 = vmatprep.subr.mxu0 0.0
        %4776 = vmatpush2.msra.mxu0 0.0
        %4777 = vmatprep.subr.mxu0 0.0
        %4778 = vmatpush2.msra.mxu0 0.0
        %4779 = vmatprep.subr.mxu0 0.0
        %4780 = vmatpush2.msra.mxu0 0.0
        %4781 = vmatprep.subr.mxu0 0.0
        %4782 = vmatpush2.msra.mxu0 0.0
        %4783 = vmatprep.subr.mxu0 0.0
        %4784 = vmatpush2.msra.mxu0 0.0
        %4785 = vmatprep.subr.mxu0 0.0
        %4786 = vmatpush2.msra.mxu0 0.0
        %4787 = vmatprep.subr.mxu0 0.0
        %4788 = vmatpush2.msra.mxu0 0.0
        %4789 = vmatprep.subr.mxu0 0.0
        %4790 = vmatpush2.msra.mxu0 0.0
        %4791 = vmatprep.subr.mxu0 0.0
        %4792 = vmatpush2.msra.mxu0 0.0
        %4793 = vmatprep.subr.mxu0 0.0
        %4794 = vmatpush2.msra.mxu0 0.0
        %4795 = vmatprep.subr.mxu0 0.0
        %4796 = vmatpush2.msra.mxu0 0.0
        %4797 = vmatprep.subr.mxu0 0.0
        %4798 = vmatpush2.msra.mxu0 0.0
        %4799 = vmatprep.subr.mxu0 0.0
        %4800 = vmatpush2.msra.mxu0 0.0
        %4801 = vmatprep.mubr.f32.mxu0 0.0
        %4802 = vmatmul.mubr.f32.gmra.mxu0 %v4402
        %v4803 = vpop.f32.mrf.mxu0
        %v4804 = vadd.f32 0.0, %v4803
        %v4805 = vpop.f32.mrf.mxu0
        %4806 = vmatprep.mubr.f32.mxu0 0.0
        %4807 = vmatmul.mubr.f32.gmra.mxu0 %v4407
        %v4808 = vpop.f32.mrf.mxu0
        %v4809 = vadd.f32 0.0, %v4808
        %v4810 = vpop.f32.mrf.mxu0
        %4811 = vmatprep.mubr.f32.mxu0 0.0
        %4812 = vmatmul.mubr.f32.gmra.mxu0 %v4412
        %v4813 = vpop.f32.mrf.mxu0
        %v4814 = vadd.f32 0.0, %v4813
        %v4815 = vpop.f32.mrf.mxu0
        %4816 = vmatprep.mubr.f32.mxu0 0.0
        %4817 = vmatmul.mubr.f32.gmra.mxu0 %v4417
        %v4818 = vpop.f32.mrf.mxu0
        %v4819 = vadd.f32 0.0, %v4818
        %v4820 = vpop.f32.mrf.mxu0
        %4821 = vmatprep.mubr.f32.mxu0 0.0
        %4822 = vmatmul.mubr.f32.gmra.mxu0 %v4422
        %v4823 = vpop.f32.mrf.mxu0
        %v4824 = vadd.f32 0.0, %v4823
        %v4825 = vpop.f32.mrf.mxu0
        %4826 = vmatprep.mubr.f32.mxu0 0.0
        %4827 = vmatmul.mubr.f32.gmra.mxu0 %v4427
        %v4828 = vpop.f32.mrf.mxu0
        %v4829 = vadd.f32 0.0, %v4828
        %v4830 = vpop.f32.mrf.mxu0
        %4831 = vmatprep.mubr.f32.mxu0 0.0
        %4832 = vmatmul.mubr.f32.gmra.mxu0 %v4432
        %v4833 = vpop.f32.mrf.mxu0
        %v4834 = vadd.f32 0.0, %v4833
        %v4835 = vpop.f32.mrf.mxu0
        %4836 = vmatprep.mubr.f32.mxu0 0.0
        %4837 = vmatmul.mubr.f32.gmra.mxu0 %v4437
        %v4838 = vpop.f32.mrf.mxu0
        %v4839 = vadd.f32 0.0, %v4838
        %v4840 = vpop.f32.mrf.mxu0
        %4841 = vmatprep.mubr.f32.mxu0 0.0
        %4842 = vmatmul.mubr.f32.gmra.mxu0 %v4442
        %v4843 = vpop.f32.mrf.mxu0
        %v4844 = vadd.f32 0.0, %v4843
        %v4845 = vpop.f32.mrf.mxu0
        %4846 = vmatprep.mubr.f32.mxu0 0.0
        %4847 = vmatmul.mubr.f32.gmra.mxu0 %v4447
        %v4848 = vpop.f32.mrf.mxu0
        %v4849 = vadd.f32 0.0, %v4848
        %v4850 = vpop.f32.mrf.mxu0
        %4851 = vmatprep.mubr.f32.mxu0 0.0
        %4852 = vmatmul.mubr.f32.gmra.mxu0 %v4452
        %v4853 = vpop.f32.mrf.mxu0
        %v4854 = vadd.f32 0.0, %v4853
        %v4855 = vpop.f32.mrf.mxu0
        %4856 = vmatprep.mubr.f32.mxu0 0.0
        %4857 = vmatmul.mubr.f32.gmra.mxu0 %v4457
        %v4858 = vpop.f32.mrf.mxu0
        %v4859 = vadd.f32 0.0, %v4858
        %v4860 = vpop.f32.mrf.mxu0
        %4861 = vmatprep.mubr.f32.mxu0 0.0
        %4862 = vmatmul.mubr.f32.gmra.mxu0 %v4462
        %v4863 = vpop.f32.mrf.mxu0
        %v4864 = vadd.f32 0.0, %v4863
        %v4865 = vpop.f32.mrf.mxu0
        %4866 = vmatprep.mubr.f32.mxu0 0.0
        %4867 = vmatmul.mubr.f32.gmra.mxu0 %v4467
        %v4868 = vpop.f32.mrf.mxu0
        %v4869 = vadd.f32 0.0, %v4868
        %v4870 = vpop.f32.mrf.mxu0
        %4871 = vmatprep.mubr.f32.mxu0 0.0
        %4872 = vmatmul.mubr.f32.gmra.mxu0 %v4472
        %v4873 = vpop.f32.mrf.mxu0
        %v4874 = vadd.f32 0.0, %v4873
        %v4875 = vpop.f32.mrf.mxu0
        %4876 = vmatprep.mubr.f32.mxu0 0.0
        %4877 = vmatmul.mubr.f32.gmra.mxu0 %v4477
        %v4878 = vpop.f32.mrf.mxu0
        %v4879 = vadd.f32 0.0, %v4878
        %v4880 = vpop.f32.mrf.mxu0
        %4881 = vmatprep.mubr.f32.mxu0 0.0
        %4882 = vmatmul.mubr.f32.gmra.mxu0 %v4482
        %v4883 = vpop.f32.mrf.mxu0
        %v4884 = vadd.f32 0.0, %v4883
        %v4885 = vpop.f32.mrf.mxu0
        %4886 = vmatprep.mubr.f32.mxu0 0.0
        %4887 = vmatmul.mubr.f32.gmra.mxu0 %v4487
        %v4888 = vpop.f32.mrf.mxu0
        %v4889 = vadd.f32 0.0, %v4888
        %v4890 = vpop.f32.mrf.mxu0
        %4891 = vmatprep.mubr.f32.mxu0 0.0
        %4892 = vmatmul.mubr.f32.gmra.mxu0 %v4492
        %v4893 = vpop.f32.mrf.mxu0
        %v4894 = vadd.f32 0.0, %v4893
        %v4895 = vpop.f32.mrf.mxu0
        %4896 = vmatprep.mubr.f32.mxu0 0.0
        %4897 = vmatmul.mubr.f32.gmra.mxu0 %v4497
        %v4898 = vpop.f32.mrf.mxu0
        %v4899 = vadd.f32 0.0, %v4898
        %v4900 = vpop.f32.mrf.mxu0
        %4901 = vmatprep.mubr.f32.mxu0 0.0
        %4902 = vmatmul.mubr.f32.gmra.mxu0 %v4502
        %v4903 = vpop.f32.mrf.mxu0
        %v4904 = vadd.f32 0.0, %v4903
        %v4905 = vpop.f32.mrf.mxu0
        %4906 = vmatprep.mubr.f32.mxu0 0.0
        %4907 = vmatmul.mubr.f32.gmra.mxu0 %v4507
        %v4908 = vpop.f32.mrf.mxu0
        %v4909 = vadd.f32 0.0, %v4908
        %v4910 = vpop.f32.mrf.mxu0
        %4911 = vmatprep.mubr.f32.mxu0 0.0
        %4912 = vmatmul.mubr.f32.gmra.mxu0 %v4512
        %v4913 = vpop.f32.mrf.mxu0
        %v4914 = vadd.f32 0.0, %v4913
        %v4915 = vpop.f32.mrf.mxu0
        %4916 = vmatprep.mubr.f32.mxu0 0.0
        %4917 = vmatmul.mubr.f32.gmra.mxu0 %v4517
        %v4918 = vpop.f32.mrf.mxu0
        %v4919 = vadd.f32 0.0, %v4918
        %v4920 = vpop.f32.mrf.mxu0
        %4921 = vmatprep.mubr.f32.mxu0 0.0
        %4922 = vmatmul.mubr.f32.gmra.mxu0 %v4522
        %v4923 = vpop.f32.mrf.mxu0
        %v4924 = vadd.f32 0.0, %v4923
        %v4925 = vpop.f32.mrf.mxu0
        %4926 = vmatprep.mubr.f32.mxu0 0.0
        %4927 = vmatmul.mubr.f32.gmra.mxu0 %v4527
        %v4928 = vpop.f32.mrf.mxu0
        %v4929 = vadd.f32 0.0, %v4928
        %v4930 = vpop.f32.mrf.mxu0
        %4931 = vmatprep.mubr.f32.mxu0 0.0
        %4932 = vmatmul.mubr.f32.gmra.mxu0 %v4532
        %v4933 = vpop.f32.mrf.mxu0
        %v4934 = vadd.f32 0.0, %v4933
        %v4935 = vpop.f32.mrf.mxu0
        %4936 = vmatprep.mubr.f32.mxu0 0.0
        %4937 = vmatmul.mubr.f32.gmra.mxu0 %v4537
        %v4938 = vpop.f32.mrf.mxu0
        %v4939 = vadd.f32 0.0, %v4938
        %v4940 = vpop.f32.mrf.mxu0
        %4941 = vmatprep.mubr.f32.mxu0 0.0
        %4942 = vmatmul.mubr.f32.gmra.mxu0 %v4542
        %v4943 = vpop.f32.mrf.mxu0
        %v4944 = vadd.f32 0.0, %v4943
        %v4945 = vpop.f32.mrf.mxu0
        %4946 = vmatprep.mubr.f32.mxu0 0.0
        %4947 = vmatmul.mubr.f32.gmra.mxu0 %v4547
        %v4948 = vpop.f32.mrf.mxu0
        %v4949 = vadd.f32 0.0, %v4948
        %v4950 = vpop.f32.mrf.mxu0
        %4951 = vmatprep.mubr.f32.mxu0 0.0
        %4952 = vmatmul.mubr.f32.gmra.mxu0 %v4552
        %v4953 = vpop.f32.mrf.mxu0
        %v4954 = vadd.f32 0.0, %v4953
        %v4955 = vpop.f32.mrf.mxu0
        %4956 = vmatprep.mubr.f32.mxu0 0.0
        %4957 = vmatmul.mubr.f32.gmra.mxu0 %v4557
        %v4958 = vpop.f32.mrf.mxu0
        %v4959 = vadd.f32 0.0, %v4958
        %v4960 = vpop.f32.mrf.mxu0
        %4961 = vmatprep.mubr.f32.mxu0 0.0
        %4962 = vmatmul.mubr.f32.gmra.mxu0 %v4562
        %v4963 = vpop.f32.mrf.mxu0
        %v4964 = vadd.f32 0.0, %v4963
        %v4965 = vpop.f32.mrf.mxu0
        %4966 = vmatprep.mubr.f32.mxu0 0.0
        %4967 = vmatmul.mubr.f32.gmra.mxu0 %v4567
        %v4968 = vpop.f32.mrf.mxu0
        %v4969 = vadd.f32 0.0, %v4968
        %v4970 = vpop.f32.mrf.mxu0
        %4971 = vmatprep.mubr.f32.mxu0 0.0
        %4972 = vmatmul.mubr.f32.gmra.mxu0 %v4572
        %v4973 = vpop.f32.mrf.mxu0
        %v4974 = vadd.f32 0.0, %v4973
        %v4975 = vpop.f32.mrf.mxu0
        %4976 = vmatprep.mubr.f32.mxu0 0.0
        %4977 = vmatmul.mubr.f32.gmra.mxu0 %v4577
        %v4978 = vpop.f32.mrf.mxu0
        %v4979 = vadd.f32 0.0, %v4978
        %v4980 = vpop.f32.mrf.mxu0
        %4981 = vmatprep.mubr.f32.mxu0 0.0
        %4982 = vmatmul.mubr.f32.gmra.mxu0 %v4582
        %v4983 = vpop.f32.mrf.mxu0
        %v4984 = vadd.f32 0.0, %v4983
        %v4985 = vpop.f32.mrf.mxu0
        %4986 = vmatprep.mubr.f32.mxu0 0.0
        %4987 = vmatmul.mubr.f32.gmra.mxu0 %v4587
        %v4988 = vpop.f32.mrf.mxu0
        %v4989 = vadd.f32 0.0, %v4988
        %v4990 = vpop.f32.mrf.mxu0
        %4991 = vmatprep.mubr.f32.mxu0 0.0
        %4992 = vmatmul.mubr.f32.gmra.mxu0 %v4592
        %v4993 = vpop.f32.mrf.mxu0
        %v4994 = vadd.f32 0.0, %v4993
        %v4995 = vpop.f32.mrf.mxu0
        %4996 = vmatprep.mubr.f32.mxu0 0.0
        %4997 = vmatmul.mubr.f32.gmra.mxu0 %v4597
        %v4998 = vpop.f32.mrf.mxu0
        %v4999 = vadd.f32 0.0, %v4998
        %v5000 = vpop.f32.mrf.mxu0
        %5001 = vmatprep.mubr.f32.mxu0 0.0
        %5002 = vmatmul.mubr.f32.gmra.mxu0 %v4602
        %v5003 = vpop.f32.mrf.mxu0
        %v5004 = vadd.f32 0.0, %v5003
        %v5005 = vpop.f32.mrf.mxu0
        %5006 = vmatprep.mubr.f32.mxu0 0.0
        %5007 = vmatmul.mubr.f32.gmra.mxu0 %v4607
        %v5008 = vpop.f32.mrf.mxu0
        %v5009 = vadd.f32 0.0, %v5008
        %v5010 = vpop.f32.mrf.mxu0
        %5011 = vmatprep.mubr.f32.mxu0 0.0
        %5012 = vmatmul.mubr.f32.gmra.mxu0 %v4612
        %v5013 = vpop.f32.mrf.mxu0
        %v5014 = vadd.f32 0.0, %v5013
        %v5015 = vpop.f32.mrf.mxu0
        %5016 = vmatprep.mubr.f32.mxu0 0.0
        %5017 = vmatmul.mubr.f32.gmra.mxu0 %v4617
        %v5018 = vpop.f32.mrf.mxu0
        %v5019 = vadd.f32 0.0, %v5018
        %v5020 = vpop.f32.mrf.mxu0
        %5021 = vmatprep.mubr.f32.mxu0 0.0
        %5022 = vmatmul.mubr.f32.gmra.mxu0 %v4622
        %v5023 = vpop.f32.mrf.mxu0
        %v5024 = vadd.f32 0.0, %v5023
        %v5025 = vpop.f32.mrf.mxu0
        %5026 = vmatprep.mubr.f32.mxu0 0.0
        %5027 = vmatmul.mubr.f32.gmra.mxu0 %v4627
        %v5028 = vpop.f32.mrf.mxu0
        %v5029 = vadd.f32 0.0, %v5028
        %v5030 = vpop.f32.mrf.mxu0
        %5031 = vmatprep.mubr.f32.mxu0 0.0
        %5032 = vmatmul.mubr.f32.gmra.mxu0 %v4632
        %v5033 = vpop.f32.mrf.mxu0
        %v5034 = vadd.f32 0.0, %v5033
        %v5035 = vpop.f32.mrf.mxu0
        %5036 = vmatprep.mubr.f32.mxu0 0.0
        %5037 = vmatmul.mubr.f32.gmra.mxu0 %v4637
        %v5038 = vpop.f32.mrf.mxu0
        %v5039 = vadd.f32 0.0, %v5038
        %v5040 = vpop.f32.mrf.mxu0
        %5041 = vmatprep.mubr.f32.mxu0 0.0
        %5042 = vmatmul.mubr.f32.gmra.mxu0 %v4642
        %v5043 = vpop.f32.mrf.mxu0
        %v5044 = vadd.f32 0.0, %v5043
        %v5045 = vpop.f32.mrf.mxu0
        %5046 = vmatprep.mubr.f32.mxu0 0.0
        %5047 = vmatmul.mubr.f32.gmra.mxu0 %v4647
        %v5048 = vpop.f32.mrf.mxu0
        %v5049 = vadd.f32 0.0, %v5048
        %v5050 = vpop.f32.mrf.mxu0
        %5051 = vmatprep.mubr.f32.mxu0 0.0
        %5052 = vmatmul.mubr.f32.gmra.mxu0 %v4652
        %v5053 = vpop.f32.mrf.mxu0
        %v5054 = vadd.f32 0.0, %v5053
        %v5055 = vpop.f32.mrf.mxu0
        %5056 = vmatprep.mubr.f32.mxu0 0.0
        %5057 = vmatmul.mubr.f32.gmra.mxu0 %v4657
        %v5058 = vpop.f32.mrf.mxu0
        %v5059 = vadd.f32 0.0, %v5058
        %v5060 = vpop.f32.mrf.mxu0
        %5061 = vmatprep.mubr.f32.mxu0 0.0
        %5062 = vmatmul.mubr.f32.gmra.mxu0 %v4662
        %v5063 = vpop.f32.mrf.mxu0
        %v5064 = vadd.f32 0.0, %v5063
        %v5065 = vpop.f32.mrf.mxu0
        %5066 = vmatprep.mubr.f32.mxu0 0.0
        %5067 = vmatmul.mubr.f32.gmra.mxu0 %v4667
        %v5068 = vpop.f32.mrf.mxu0
        %v5069 = vadd.f32 0.0, %v5068
        %v5070 = vpop.f32.mrf.mxu0
        %5071 = vmatprep.mubr.f32.mxu0 0.0
        %5072 = vmatmul.mubr.f32.gmra.mxu0 %v4672
        %v5073 = vpop.f32.mrf.mxu0
        %v5074 = vadd.f32 0.0, %v5073
        %v5075 = vpop.f32.mrf.mxu0
        %5076 = vmatprep.mubr.f32.mxu0 0.0
        %5077 = vmatmul.mubr.f32.gmra.mxu0 %v4677
        %v5078 = vpop.f32.mrf.mxu0
        %v5079 = vadd.f32 0.0, %v5078
        %v5080 = vpop.f32.mrf.mxu0
        %5081 = vmatprep.mubr.f32.mxu0 0.0
        %5082 = vmatmul.mubr.f32.gmra.mxu0 %v4682
        %v5083 = vpop.f32.mrf.mxu0
        %v5084 = vadd.f32 0.0, %v5083
        %v5085 = vpop.f32.mrf.mxu0
        %5086 = vmatprep.mubr.f32.mxu0 0.0
        %5087 = vmatmul.mubr.f32.gmra.mxu0 %v4687
        %v5088 = vpop.f32.mrf.mxu0
        %v5089 = vadd.f32 0.0, %v5088
        %v5090 = vpop.f32.mrf.mxu0
        %5091 = vmatprep.mubr.f32.mxu0 0.0
        %5092 = vmatmul.mubr.f32.gmra.mxu0 %v4692
        %v5093 = vpop.f32.mrf.mxu0
        %v5094 = vadd.f32 0.0, %v5093
        %v5095 = vpop.f32.mrf.mxu0
        %5096 = vmatprep.mubr.f32.mxu0 0.0
        %5097 = vmatmul.mubr.f32.gmra.mxu0 %v4697
        %v5098 = vpop.f32.mrf.mxu0
        %v5099 = vadd.f32 0.0, %v5098
        %v5100 = vpop.f32.mrf.mxu0
        %5101 = vmatprep.mubr.f32.mxu0 0.0
        %5102 = vmatmul.mubr.f32.gmra.mxu0 %v4702
        %v5103 = vpop.f32.mrf.mxu0
        %v5104 = vadd.f32 0.0, %v5103
        %v5105 = vpop.f32.mrf.mxu0
        %5106 = vmatprep.mubr.f32.mxu0 0.0
        %5107 = vmatmul.mubr.f32.gmra.mxu0 %v4707
        %v5108 = vpop.f32.mrf.mxu0
        %v5109 = vadd.f32 0.0, %v5108
        %v5110 = vpop.f32.mrf.mxu0
        %5111 = vmatprep.mubr.f32.mxu0 0.0
        %5112 = vmatmul.mubr.f32.gmra.mxu0 %v4712
        %v5113 = vpop.f32.mrf.mxu0
        %v5114 = vadd.f32 0.0, %v5113
        %v5115 = vpop.f32.mrf.mxu0
        %5116 = vmatprep.mubr.f32.mxu0 0.0
        %5117 = vmatmul.mubr.f32.gmra.mxu0 %v4717
        %v5118 = vpop.f32.mrf.mxu0
        %v5119 = vadd.f32 0.0, %v5118
        %v5120 = vpop.f32.mrf.mxu0
        %5121 = vdwg.mxu0
        %vm5122 = vcmp.ge.f32.partialorder %v4804, 0.0
        %vm5123 = vcmp.ge.f32.partialorder %v4809, 0.0
        %vm5124 = vcmp.ge.f32.partialorder %v4814, 0.0
        %vm5125 = vcmp.ge.f32.partialorder %v4819, 0.0
        %vm5126 = vcmp.ge.f32.partialorder %v4824, 0.0
        %vm5127 = vcmp.ge.f32.partialorder %v4829, 0.0
        %vm5128 = vcmp.ge.f32.partialorder %v4834, 0.0
        %vm5129 = vcmp.ge.f32.partialorder %v4839, 0.0
        %vm5130 = vcmp.ge.f32.partialorder %v4844, 0.0
        %vm5131 = vcmp.ge.f32.partialorder %v4849, 0.0
        %vm5132 = vcmp.ge.f32.partialorder %v4854, 0.0
        %vm5133 = vcmp.ge.f32.partialorder %v4859, 0.0
        %vm5134 = vcmp.ge.f32.partialorder %v4864, 0.0
        %vm5135 = vcmp.ge.f32.partialorder %v4869, 0.0
        %vm5136 = vcmp.ge.f32.partialorder %v4874, 0.0
        %vm5137 = vcmp.ge.f32.partialorder %v4879, 0.0
        %vm5138 = vcmp.ge.f32.partialorder %v4884, 0.0
        %vm5139 = vcmp.ge.f32.partialorder %v4889, 0.0
        %vm5140 = vcmp.ge.f32.partialorder %v4894, 0.0
        %vm5141 = vcmp.ge.f32.partialorder %v4899, 0.0
        %vm5142 = vcmp.ge.f32.partialorder %v4904, 0.0
        %vm5143 = vcmp.ge.f32.partialorder %v4909, 0.0
        %vm5144 = vcmp.ge.f32.partialorder %v4914, 0.0
        %vm5145 = vcmp.ge.f32.partialorder %v4919, 0.0
        %vm5146 = vcmp.ge.f32.partialorder %v4924, 0.0
        %vm5147 = vcmp.ge.f32.partialorder %v4929, 0.0
        %vm5148 = vcmp.ge.f32.partialorder %v4934, 0.0
        %vm5149 = vcmp.ge.f32.partialorder %v4939, 0.0
        %vm5150 = vcmp.ge.f32.partialorder %v4944, 0.0
        %vm5151 = vcmp.ge.f32.partialorder %v4949, 0.0
        %vm5152 = vcmp.ge.f32.partialorder %v4954, 0.0
        %vm5153 = vcmp.ge.f32.partialorder %v4959, 0.0
        %vm5154 = vcmp.ge.f32.partialorder %v4964, 0.0
        %vm5155 = vcmp.ge.f32.partialorder %v4969, 0.0
        %vm5156 = vcmp.ge.f32.partialorder %v4974, 0.0
        %vm5157 = vcmp.ge.f32.partialorder %v4979, 0.0
        %vm5158 = vcmp.ge.f32.partialorder %v4984, 0.0
        %vm5159 = vcmp.ge.f32.partialorder %v4989, 0.0
        %vm5160 = vcmp.ge.f32.partialorder %v4994, 0.0
        %vm5161 = vcmp.ge.f32.partialorder %v4999, 0.0
        %vm5162 = vcmp.ge.f32.partialorder %v5004, 0.0
        %vm5163 = vcmp.ge.f32.partialorder %v5009, 0.0
        %vm5164 = vcmp.ge.f32.partialorder %v5014, 0.0
        %vm5165 = vcmp.ge.f32.partialorder %v5019, 0.0
        %vm5166 = vcmp.ge.f32.partialorder %v5024, 0.0
        %vm5167 = vcmp.ge.f32.partialorder %v5029, 0.0
        %vm5168 = vcmp.ge.f32.partialorder %v5034, 0.0
        %vm5169 = vcmp.ge.f32.partialorder %v5039, 0.0
        %vm5170 = vcmp.ge.f32.partialorder %v5044, 0.0
        %vm5171 = vcmp.ge.f32.partialorder %v5049, 0.0
        %vm5172 = vcmp.ge.f32.partialorder %v5054, 0.0
        %vm5173 = vcmp.ge.f32.partialorder %v5059, 0.0
        %vm5174 = vcmp.ge.f32.partialorder %v5064, 0.0
        %vm5175 = vcmp.ge.f32.partialorder %v5069, 0.0
        %vm5176 = vcmp.ge.f32.partialorder %v5074, 0.0
        %vm5177 = vcmp.ge.f32.partialorder %v5079, 0.0
        %vm5178 = vcmp.ge.f32.partialorder %v5084, 0.0
        %vm5179 = vcmp.ge.f32.partialorder %v5089, 0.0
        %vm5180 = vcmp.ge.f32.partialorder %v5094, 0.0
        %vm5181 = vcmp.ge.f32.partialorder %v5099, 0.0
        %vm5182 = vcmp.ge.f32.partialorder %v5104, 0.0
        %vm5183 = vcmp.ge.f32.partialorder %v5109, 0.0
        %vm5184 = vcmp.ge.f32.partialorder %v5114, 0.0
        %vm5185 = vcmp.ge.f32.partialorder %v5119, 0.0
        %v5186 = vmul.f32 %v4804, 0.2
        %v5187 = vmul.f32 %v4809, 0.2
        %v5188 = vmul.f32 %v4814, 0.2
        %v5189 = vmul.f32 %v4819, 0.2
        %v5190 = vmul.f32 %v4824, 0.2
        %v5191 = vmul.f32 %v4829, 0.2
        %v5192 = vmul.f32 %v4834, 0.2
        %v5193 = vmul.f32 %v4839, 0.2
        %v5194 = vmul.f32 %v4844, 0.2
        %v5195 = vmul.f32 %v4849, 0.2
        %v5196 = vmul.f32 %v4854, 0.2
        %v5197 = vmul.f32 %v4859, 0.2
        %v5198 = vmul.f32 %v4864, 0.2
        %v5199 = vmul.f32 %v4869, 0.2
        %v5200 = vmul.f32 %v4874, 0.2
        %v5201 = vmul.f32 %v4879, 0.2
        %v5202 = vmul.f32 %v4884, 0.2
        %v5203 = vmul.f32 %v4889, 0.2
        %v5204 = vmul.f32 %v4894, 0.2
        %v5205 = vmul.f32 %v4899, 0.2
        %v5206 = vmul.f32 %v4904, 0.2
        %v5207 = vmul.f32 %v4909, 0.2
        %v5208 = vmul.f32 %v4914, 0.2
        %v5209 = vmul.f32 %v4919, 0.2
        %v5210 = vmul.f32 %v4924, 0.2
        %v5211 = vmul.f32 %v4929, 0.2
        %v5212 = vmul.f32 %v4934, 0.2
        %v5213 = vmul.f32 %v4939, 0.2
        %v5214 = vmul.f32 %v4944, 0.2
        %v5215 = vmul.f32 %v4949, 0.2
        %v5216 = vmul.f32 %v4954, 0.2
        %v5217 = vmul.f32 %v4959, 0.2
        %v5218 = vmul.f32 %v4964, 0.2
        %v5219 = vmul.f32 %v4969, 0.2
        %v5220 = vmul.f32 %v4974, 0.2
        %v5221 = vmul.f32 %v4979, 0.2
        %v5222 = vmul.f32 %v4984, 0.2
        %v5223 = vmul.f32 %v4989, 0.2
        %v5224 = vmul.f32 %v4994, 0.2
        %v5225 = vmul.f32 %v4999, 0.2
        %v5226 = vmul.f32 %v5004, 0.2
        %v5227 = vmul.f32 %v5009, 0.2
        %v5228 = vmul.f32 %v5014, 0.2
        %v5229 = vmul.f32 %v5019, 0.2
        %v5230 = vmul.f32 %v5024, 0.2
        %v5231 = vmul.f32 %v5029, 0.2
        %v5232 = vmul.f32 %v5034, 0.2
        %v5233 = vmul.f32 %v5039, 0.2
        %v5234 = vmul.f32 %v5044, 0.2
        %v5235 = vmul.f32 %v5049, 0.2
        %v5236 = vmul.f32 %v5054, 0.2
        %v5237 = vmul.f32 %v5059, 0.2
        %v5238 = vmul.f32 %v5064, 0.2
        %v5239 = vmul.f32 %v5069, 0.2
        %v5240 = vmul.f32 %v5074, 0.2
        %v5241 = vmul.f32 %v5079, 0.2
        %v5242 = vmul.f32 %v5084, 0.2
        %v5243 = vmul.f32 %v5089, 0.2
        %v5244 = vmul.f32 %v5094, 0.2
        %v5245 = vmul.f32 %v5099, 0.2
        %v5246 = vmul.f32 %v5104, 0.2
        %v5247 = vmul.f32 %v5109, 0.2
        %v5248 = vmul.f32 %v5114, 0.2
        %v5249 = vmul.f32 %v5119, 0.2
        %v5250 = vsel %vm5122, %v4804, %v5186
        %v5251 = vsel %vm5123, %v4809, %v5187
        %v5252 = vsel %vm5124, %v4814, %v5188
        %v5253 = vsel %vm5125, %v4819, %v5189
        %v5254 = vsel %vm5126, %v4824, %v5190
        %v5255 = vsel %vm5127, %v4829, %v5191
        %v5256 = vsel %vm5128, %v4834, %v5192
        %v5257 = vsel %vm5129, %v4839, %v5193
        %v5258 = vsel %vm5130, %v4844, %v5194
        %v5259 = vsel %vm5131, %v4849, %v5195
        %v5260 = vsel %vm5132, %v4854, %v5196
        %v5261 = vsel %vm5133, %v4859, %v5197
        %v5262 = vsel %vm5134, %v4864, %v5198
        %v5263 = vsel %vm5135, %v4869, %v5199
        %v5264 = vsel %vm5136, %v4874, %v5200
        %v5265 = vsel %vm5137, %v4879, %v5201
        %v5266 = vsel %vm5138, %v4884, %v5202
        %v5267 = vsel %vm5139, %v4889, %v5203
        %v5268 = vsel %vm5140, %v4894, %v5204
        %v5269 = vsel %vm5141, %v4899, %v5205
        %v5270 = vsel %vm5142, %v4904, %v5206
        %v5271 = vsel %vm5143, %v4909, %v5207
        %v5272 = vsel %vm5144, %v4914, %v5208
        %v5273 = vsel %vm5145, %v4919, %v5209
        %v5274 = vsel %vm5146, %v4924, %v5210
        %v5275 = vsel %vm5147, %v4929, %v5211
        %v5276 = vsel %vm5148, %v4934, %v5212
        %v5277 = vsel %vm5149, %v4939, %v5213
        %v5278 = vsel %vm5150, %v4944, %v5214
        %v5279 = vsel %vm5151, %v4949, %v5215
        %v5280 = vsel %vm5152, %v4954, %v5216
        %v5281 = vsel %vm5153, %v4959, %v5217
        %v5282 = vsel %vm5154, %v4964, %v5218
        %v5283 = vsel %vm5155, %v4969, %v5219
        %v5284 = vsel %vm5156, %v4974, %v5220
        %v5285 = vsel %vm5157, %v4979, %v5221
        %v5286 = vsel %vm5158, %v4984, %v5222
        %v5287 = vsel %vm5159, %v4989, %v5223
        %v5288 = vsel %vm5160, %v4994, %v5224
        %v5289 = vsel %vm5161, %v4999, %v5225
        %v5290 = vsel %vm5162, %v5004, %v5226
        %v5291 = vsel %vm5163, %v5009, %v5227
        %v5292 = vsel %vm5164, %v5014, %v5228
        %v5293 = vsel %vm5165, %v5019, %v5229
        %v5294 = vsel %vm5166, %v5024, %v5230
        %v5295 = vsel %vm5167, %v5029, %v5231
        %v5296 = vsel %vm5168, %v5034, %v5232
        %v5297 = vsel %vm5169, %v5039, %v5233
        %v5298 = vsel %vm5170, %v5044, %v5234
        %v5299 = vsel %vm5171, %v5049, %v5235
        %v5300 = vsel %vm5172, %v5054, %v5236
        %v5301 = vsel %vm5173, %v5059, %v5237
        %v5302 = vsel %vm5174, %v5064, %v5238
        %v5303 = vsel %vm5175, %v5069, %v5239
        %v5304 = vsel %vm5176, %v5074, %v5240
        %v5305 = vsel %vm5177, %v5079, %v5241
        %v5306 = vsel %vm5178, %v5084, %v5242
        %v5307 = vsel %vm5179, %v5089, %v5243
        %v5308 = vsel %vm5180, %v5094, %v5244
        %v5309 = vsel %vm5181, %v5099, %v5245
        %v5310 = vsel %vm5182, %v5104, %v5246
        %v5311 = vsel %vm5183, %v5109, %v5247
        %v5312 = vsel %vm5184, %v5114, %v5248
        %v5313 = vsel %vm5185, %v5119, %v5249
        %v5314 = vmax.f32 %v2390, %v5250
        %v5315 = vmax.f32 %v2391, %v5251
        %v5316 = vmax.f32 %v2392, %v5252
        %v5317 = vmax.f32 %v2393, %v5253
        %v5318 = vmax.f32 %v2394, %v5254
        %v5319 = vmax.f32 %v2395, %v5255
        %v5320 = vmax.f32 %v2396, %v5256
        %v5321 = vmax.f32 %v2397, %v5257
        %v5322 = vmax.f32 %v2398, %v5258
        %v5323 = vmax.f32 %v2399, %v5259
        %v5324 = vmax.f32 %v2400, %v5260
        %v5325 = vmax.f32 %v2401, %v5261
        %v5326 = vmax.f32 %v2402, %v5262
        %v5327 = vmax.f32 %v2403, %v5263
        %v5328 = vmax.f32 %v2404, %v5264
        %v5329 = vmax.f32 %v2405, %v5265
        %v5330 = vmax.f32 %v2406, %v5266
        %v5331 = vmax.f32 %v2407, %v5267
        %v5332 = vmax.f32 %v2408, %v5268
        %v5333 = vmax.f32 %v2409, %v5269
        %v5334 = vmax.f32 %v2410, %v5270
        %v5335 = vmax.f32 %v2411, %v5271
        %v5336 = vmax.f32 %v2412, %v5272
        %v5337 = vmax.f32 %v2413, %v5273
        %v5338 = vmax.f32 %v2414, %v5274
        %v5339 = vmax.f32 %v2415, %v5275
        %v5340 = vmax.f32 %v2416, %v5276
        %v5341 = vmax.f32 %v2417, %v5277
        %v5342 = vmax.f32 %v2418, %v5278
        %v5343 = vmax.f32 %v2419, %v5279
        %v5344 = vmax.f32 %v2420, %v5280
        %v5345 = vmax.f32 %v2421, %v5281
        %v5346 = vmax.f32 %v2422, %v5282
        %v5347 = vmax.f32 %v2423, %v5283
        %v5348 = vmax.f32 %v2424, %v5284
        %v5349 = vmax.f32 %v2425, %v5285
        %v5350 = vmax.f32 %v2426, %v5286
        %v5351 = vmax.f32 %v2427, %v5287
        %v5352 = vmax.f32 %v2428, %v5288
        %v5353 = vmax.f32 %v2429, %v5289
        %v5354 = vmax.f32 %v2430, %v5290
        %v5355 = vmax.f32 %v2431, %v5291
        %v5356 = vmax.f32 %v2432, %v5292
        %v5357 = vmax.f32 %v2433, %v5293
        %v5358 = vmax.f32 %v2434, %v5294
        %v5359 = vmax.f32 %v2435, %v5295
        %v5360 = vmax.f32 %v2436, %v5296
        %v5361 = vmax.f32 %v2437, %v5297
        %v5362 = vmax.f32 %v2438, %v5298
        %v5363 = vmax.f32 %v2439, %v5299
        %v5364 = vmax.f32 %v2440, %v5300
        %v5365 = vmax.f32 %v2441, %v5301
        %v5366 = vmax.f32 %v2442, %v5302
        %v5367 = vmax.f32 %v2443, %v5303
        %v5368 = vmax.f32 %v2444, %v5304
        %v5369 = vmax.f32 %v2445, %v5305
        %v5370 = vmax.f32 %v2446, %v5306
        %v5371 = vmax.f32 %v2447, %v5307
        %v5372 = vmax.f32 %v2448, %v5308
        %v5373 = vmax.f32 %v2449, %v5309
        %v5374 = vmax.f32 %v2450, %v5310
        %v5375 = vmax.f32 %v2451, %v5311
        %v5376 = vmax.f32 %v2452, %v5312
        %v5377 = vmax.f32 %v2453, %v5313
        %v5378 = vsub.f32 %v2390, %v5314
        %v5379 = vsub.f32 %v2391, %v5315
        %v5380 = vsub.f32 %v2392, %v5316
        %v5381 = vsub.f32 %v2393, %v5317
        %v5382 = vsub.f32 %v2394, %v5318
        %v5383 = vsub.f32 %v2395, %v5319
        %v5384 = vsub.f32 %v2396, %v5320
        %v5385 = vsub.f32 %v2397, %v5321
        %v5386 = vsub.f32 %v2398, %v5322
        %v5387 = vsub.f32 %v2399, %v5323
        %v5388 = vsub.f32 %v2400, %v5324
        %v5389 = vsub.f32 %v2401, %v5325
        %v5390 = vsub.f32 %v2402, %v5326
        %v5391 = vsub.f32 %v2403, %v5327
        %v5392 = vsub.f32 %v2404, %v5328
        %v5393 = vsub.f32 %v2405, %v5329
        %v5394 = vsub.f32 %v2406, %v5330
        %v5395 = vsub.f32 %v2407, %v5331
        %v5396 = vsub.f32 %v2408, %v5332
        %v5397 = vsub.f32 %v2409, %v5333
        %v5398 = vsub.f32 %v2410, %v5334
        %v5399 = vsub.f32 %v2411, %v5335
        %v5400 = vsub.f32 %v2412, %v5336
        %v5401 = vsub.f32 %v2413, %v5337
        %v5402 = vsub.f32 %v2414, %v5338
        %v5403 = vsub.f32 %v2415, %v5339
        %v5404 = vsub.f32 %v2416, %v5340
        %v5405 = vsub.f32 %v2417, %v5341
        %v5406 = vsub.f32 %v2418, %v5342
        %v5407 = vsub.f32 %v2419, %v5343
        %v5408 = vsub.f32 %v2420, %v5344
        %v5409 = vsub.f32 %v2421, %v5345
        %v5410 = vsub.f32 %v2422, %v5346
        %v5411 = vsub.f32 %v2423, %v5347
        %v5412 = vsub.f32 %v2424, %v5348
        %v5413 = vsub.f32 %v2425, %v5349
        %v5414 = vsub.f32 %v2426, %v5350
        %v5415 = vsub.f32 %v2427, %v5351
        %v5416 = vsub.f32 %v2428, %v5352
        %v5417 = vsub.f32 %v2429, %v5353
        %v5418 = vsub.f32 %v2430, %v5354
        %v5419 = vsub.f32 %v2431, %v5355
        %v5420 = vsub.f32 %v2432, %v5356
        %v5421 = vsub.f32 %v2433, %v5357
        %v5422 = vsub.f32 %v2434, %v5358
        %v5423 = vsub.f32 %v2435, %v5359
        %v5424 = vsub.f32 %v2436, %v5360
        %v5425 = vsub.f32 %v2437, %v5361
        %v5426 = vsub.f32 %v2438, %v5362
        %v5427 = vsub.f32 %v2439, %v5363
        %v5428 = vsub.f32 %v2440, %v5364
        %v5429 = vsub.f32 %v2441, %v5365
        %v5430 = vsub.f32 %v2442, %v5366
        %v5431 = vsub.f32 %v2443, %v5367
        %v5432 = vsub.f32 %v2444, %v5368
        %v5433 = vsub.f32 %v2445, %v5369
        %v5434 = vsub.f32 %v2446, %v5370
        %v5435 = vsub.f32 %v2447, %v5371
        %v5436 = vsub.f32 %v2448, %v5372
        %v5437 = vsub.f32 %v2449, %v5373
        %v5438 = vsub.f32 %v2450, %v5374
        %v5439 = vsub.f32 %v2451, %v5375
        %v5440 = vsub.f32 %v2452, %v5376
        %v5441 = vsub.f32 %v2453, %v5377
        %v5442 = vmul.f32 %v5378, 1.442695
        %v5443 = vpow.pop %v5442
        %v5444 = vmul.f32 %v5379, 1.442695
        %v5445 = vpow.pop %v5444
        %v5446 = vmul.f32 %v5380, 1.442695
        %v5447 = vpow.pop %v5446
        %v5448 = vmul.f32 %v5381, 1.442695
        %v5449 = vpow.pop %v5448
        %v5450 = vmul.f32 %v5382, 1.442695
        %v5451 = vpow.pop %v5450
        %v5452 = vmul.f32 %v5383, 1.442695
        %v5453 = vpow.pop %v5452
        %v5454 = vmul.f32 %v5384, 1.442695
        %v5455 = vpow.pop %v5454
        %v5456 = vmul.f32 %v5385, 1.442695
        %v5457 = vpow.pop %v5456
        %v5458 = vmul.f32 %v5386, 1.442695
        %v5459 = vpow.pop %v5458
        %v5460 = vmul.f32 %v5387, 1.442695
        %v5461 = vpow.pop %v5460
        %v5462 = vmul.f32 %v5388, 1.442695
        %v5463 = vpow.pop %v5462
        %v5464 = vmul.f32 %v5389, 1.442695
        %v5465 = vpow.pop %v5464
        %v5466 = vmul.f32 %v5390, 1.442695
        %v5467 = vpow.pop %v5466
        %v5468 = vmul.f32 %v5391, 1.442695
        %v5469 = vpow.pop %v5468
        %v5470 = vmul.f32 %v5392, 1.442695
        %v5471 = vpow.pop %v5470
        %v5472 = vmul.f32 %v5393, 1.442695
        %v5473 = vpow.pop %v5472
        %v5474 = vmul.f32 %v5394, 1.442695
        %v5475 = vpow.pop %v5474
        %v5476 = vmul.f32 %v5395, 1.442695
        %v5477 = vpow.pop %v5476
        %v5478 = vmul.f32 %v5396, 1.442695
        %v5479 = vpow.pop %v5478
        %v5480 = vmul.f32 %v5397, 1.442695
        %v5481 = vpow.pop %v5480
        %v5482 = vmul.f32 %v5398, 1.442695
        %v5483 = vpow.pop %v5482
        %v5484 = vmul.f32 %v5399, 1.442695
        %v5485 = vpow.pop %v5484
        %v5486 = vmul.f32 %v5400, 1.442695
        %v5487 = vpow.pop %v5486
        %v5488 = vmul.f32 %v5401, 1.442695
        %v5489 = vpow.pop %v5488
        %v5490 = vmul.f32 %v5402, 1.442695
        %v5491 = vpow.pop %v5490
        %v5492 = vmul.f32 %v5403, 1.442695
        %v5493 = vpow.pop %v5492
        %v5494 = vmul.f32 %v5404, 1.442695
        %v5495 = vpow.pop %v5494
        %v5496 = vmul.f32 %v5405, 1.442695
        %v5497 = vpow.pop %v5496
        %v5498 = vmul.f32 %v5406, 1.442695
        %v5499 = vpow.pop %v5498
        %v5500 = vmul.f32 %v5407, 1.442695
        %v5501 = vpow.pop %v5500
        %v5502 = vmul.f32 %v5408, 1.442695
        %v5503 = vpow.pop %v5502
        %v5504 = vmul.f32 %v5409, 1.442695
        %v5505 = vpow.pop %v5504
        %v5506 = vmul.f32 %v5410, 1.442695
        %v5507 = vpow.pop %v5506
        %v5508 = vmul.f32 %v5411, 1.442695
        %v5509 = vpow.pop %v5508
        %v5510 = vmul.f32 %v5412, 1.442695
        %v5511 = vpow.pop %v5510
        %v5512 = vmul.f32 %v5413, 1.442695
        %v5513 = vpow.pop %v5512
        %v5514 = vmul.f32 %v5414, 1.442695
        %v5515 = vpow.pop %v5514
        %v5516 = vmul.f32 %v5415, 1.442695
        %v5517 = vpow.pop %v5516
        %v5518 = vmul.f32 %v5416, 1.442695
        %v5519 = vpow.pop %v5518
        %v5520 = vmul.f32 %v5417, 1.442695
        %v5521 = vpow.pop %v5520
        %v5522 = vmul.f32 %v5418, 1.442695
        %v5523 = vpow.pop %v5522
        %v5524 = vmul.f32 %v5419, 1.442695
        %v5525 = vpow.pop %v5524
        %v5526 = vmul.f32 %v5420, 1.442695
        %v5527 = vpow.pop %v5526
        %v5528 = vmul.f32 %v5421, 1.442695
        %v5529 = vpow.pop %v5528
        %v5530 = vmul.f32 %v5422, 1.442695
        %v5531 = vpow.pop %v5530
        %v5532 = vmul.f32 %v5423, 1.442695
        %v5533 = vpow.pop %v5532
        %v5534 = vmul.f32 %v5424, 1.442695
        %v5535 = vpow.pop %v5534
        %v5536 = vmul.f32 %v5425, 1.442695
        %v5537 = vpow.pop %v5536
        %v5538 = vmul.f32 %v5426, 1.442695
        %v5539 = vpow.pop %v5538
        %v5540 = vmul.f32 %v5427, 1.442695
        %v5541 = vpow.pop %v5540
        %v5542 = vmul.f32 %v5428, 1.442695
        %v5543 = vpow.pop %v5542
        %v5544 = vmul.f32 %v5429, 1.442695
        %v5545 = vpow.pop %v5544
        %v5546 = vmul.f32 %v5430, 1.442695
        %v5547 = vpow.pop %v5546
        %v5548 = vmul.f32 %v5431, 1.442695
        %v5549 = vpow.pop %v5548
        %v5550 = vmul.f32 %v5432, 1.442695
        %v5551 = vpow.pop %v5550
        %v5552 = vmul.f32 %v5433, 1.442695
        %v5553 = vpow.pop %v5552
        %v5554 = vmul.f32 %v5434, 1.442695
        %v5555 = vpow.pop %v5554
        %v5556 = vmul.f32 %v5435, 1.442695
        %v5557 = vpow.pop %v5556
        %v5558 = vmul.f32 %v5436, 1.442695
        %v5559 = vpow.pop %v5558
        %v5560 = vmul.f32 %v5437, 1.442695
        %v5561 = vpow.pop %v5560
        %v5562 = vmul.f32 %v5438, 1.442695
        %v5563 = vpow.pop %v5562
        %v5564 = vmul.f32 %v5439, 1.442695
        %v5565 = vpow.pop %v5564
        %v5566 = vmul.f32 %v5440, 1.442695
        %v5567 = vpow.pop %v5566
        %v5568 = vmul.f32 %v5441, 1.442695
        %v5569 = vpow.pop %v5568
        %v5570 = vsub.f32 %v5250, %v5314
        %v5571 = vsub.f32 %v5251, %v5315
        %v5572 = vsub.f32 %v5252, %v5316
        %v5573 = vsub.f32 %v5253, %v5317
        %v5574 = vsub.f32 %v5254, %v5318
        %v5575 = vsub.f32 %v5255, %v5319
        %v5576 = vsub.f32 %v5256, %v5320
        %v5577 = vsub.f32 %v5257, %v5321
        %v5578 = vsub.f32 %v5258, %v5322
        %v5579 = vsub.f32 %v5259, %v5323
        %v5580 = vsub.f32 %v5260, %v5324
        %v5581 = vsub.f32 %v5261, %v5325
        %v5582 = vsub.f32 %v5262, %v5326
        %v5583 = vsub.f32 %v5263, %v5327
        %v5584 = vsub.f32 %v5264, %v5328
        %v5585 = vsub.f32 %v5265, %v5329
        %v5586 = vsub.f32 %v5266, %v5330
        %v5587 = vsub.f32 %v5267, %v5331
        %v5588 = vsub.f32 %v5268, %v5332
        %v5589 = vsub.f32 %v5269, %v5333
        %v5590 = vsub.f32 %v5270, %v5334
        %v5591 = vsub.f32 %v5271, %v5335
        %v5592 = vsub.f32 %v5272, %v5336
        %v5593 = vsub.f32 %v5273, %v5337
        %v5594 = vsub.f32 %v5274, %v5338
        %v5595 = vsub.f32 %v5275, %v5339
        %v5596 = vsub.f32 %v5276, %v5340
        %v5597 = vsub.f32 %v5277, %v5341
        %v5598 = vsub.f32 %v5278, %v5342
        %v5599 = vsub.f32 %v5279, %v5343
        %v5600 = vsub.f32 %v5280, %v5344
        %v5601 = vsub.f32 %v5281, %v5345
        %v5602 = vsub.f32 %v5282, %v5346
        %v5603 = vsub.f32 %v5283, %v5347
        %v5604 = vsub.f32 %v5284, %v5348
        %v5605 = vsub.f32 %v5285, %v5349
        %v5606 = vsub.f32 %v5286, %v5350
        %v5607 = vsub.f32 %v5287, %v5351
        %v5608 = vsub.f32 %v5288, %v5352
        %v5609 = vsub.f32 %v5289, %v5353
        %v5610 = vsub.f32 %v5290, %v5354
        %v5611 = vsub.f32 %v5291, %v5355
        %v5612 = vsub.f32 %v5292, %v5356
        %v5613 = vsub.f32 %v5293, %v5357
        %v5614 = vsub.f32 %v5294, %v5358
        %v5615 = vsub.f32 %v5295, %v5359
        %v5616 = vsub.f32 %v5296, %v5360
        %v5617 = vsub.f32 %v5297, %v5361
        %v5618 = vsub.f32 %v5298, %v5362
        %v5619 = vsub.f32 %v5299, %v5363
        %v5620 = vsub.f32 %v5300, %v5364
        %v5621 = vsub.f32 %v5301, %v5365
        %v5622 = vsub.f32 %v5302, %v5366
        %v5623 = vsub.f32 %v5303, %v5367
        %v5624 = vsub.f32 %v5304, %v5368
        %v5625 = vsub.f32 %v5305, %v5369
        %v5626 = vsub.f32 %v5306, %v5370
        %v5627 = vsub.f32 %v5307, %v5371
        %v5628 = vsub.f32 %v5308, %v5372
        %v5629 = vsub.f32 %v5309, %v5373
        %v5630 = vsub.f32 %v5310, %v5374
        %v5631 = vsub.f32 %v5311, %v5375
        %v5632 = vsub.f32 %v5312, %v5376
        %v5633 = vsub.f32 %v5313, %v5377
        %v5634 = vmul.f32 %v5570, 1.442695
        %v5635 = vpow.pop %v5634
        %v5636 = vmul.f32 %v5571, 1.442695
        %v5637 = vpow.pop %v5636
        %v5638 = vmul.f32 %v5572, 1.442695
        %v5639 = vpow.pop %v5638
        %v5640 = vmul.f32 %v5573, 1.442695
        %v5641 = vpow.pop %v5640
        %v5642 = vmul.f32 %v5574, 1.442695
        %v5643 = vpow.pop %v5642
        %v5644 = vmul.f32 %v5575, 1.442695
        %v5645 = vpow.pop %v5644
        %v5646 = vmul.f32 %v5576, 1.442695
        %v5647 = vpow.pop %v5646
        %v5648 = vmul.f32 %v5577, 1.442695
        %v5649 = vpow.pop %v5648
        %v5650 = vmul.f32 %v5578, 1.442695
        %v5651 = vpow.pop %v5650
        %v5652 = vmul.f32 %v5579, 1.442695
        %v5653 = vpow.pop %v5652
        %v5654 = vmul.f32 %v5580, 1.442695
        %v5655 = vpow.pop %v5654
        %v5656 = vmul.f32 %v5581, 1.442695
        %v5657 = vpow.pop %v5656
        %v5658 = vmul.f32 %v5582, 1.442695
        %v5659 = vpow.pop %v5658
        %v5660 = vmul.f32 %v5583, 1.442695
        %v5661 = vpow.pop %v5660
        %v5662 = vmul.f32 %v5584, 1.442695
        %v5663 = vpow.pop %v5662
        %v5664 = vmul.f32 %v5585, 1.442695
        %v5665 = vpow.pop %v5664
        %v5666 = vmul.f32 %v5586, 1.442695
        %v5667 = vpow.pop %v5666
        %v5668 = vmul.f32 %v5587, 1.442695
        %v5669 = vpow.pop %v5668
        %v5670 = vmul.f32 %v5588, 1.442695
        %v5671 = vpow.pop %v5670
        %v5672 = vmul.f32 %v5589, 1.442695
        %v5673 = vpow.pop %v5672
        %v5674 = vmul.f32 %v5590, 1.442695
        %v5675 = vpow.pop %v5674
        %v5676 = vmul.f32 %v5591, 1.442695
        %v5677 = vpow.pop %v5676
        %v5678 = vmul.f32 %v5592, 1.442695
        %v5679 = vpow.pop %v5678
        %v5680 = vmul.f32 %v5593, 1.442695
        %v5681 = vpow.pop %v5680
        %v5682 = vmul.f32 %v5594, 1.442695
        %v5683 = vpow.pop %v5682
        %v5684 = vmul.f32 %v5595, 1.442695
        %v5685 = vpow.pop %v5684
        %v5686 = vmul.f32 %v5596, 1.442695
        %v5687 = vpow.pop %v5686
        %v5688 = vmul.f32 %v5597, 1.442695
        %v5689 = vpow.pop %v5688
        %v5690 = vmul.f32 %v5598, 1.442695
        %v5691 = vpow.pop %v5690
        %v5692 = vmul.f32 %v5599, 1.442695
        %v5693 = vpow.pop %v5692
        %v5694 = vmul.f32 %v5600, 1.442695
        %v5695 = vpow.pop %v5694
        %v5696 = vmul.f32 %v5601, 1.442695
        %v5697 = vpow.pop %v5696
        %v5698 = vmul.f32 %v5602, 1.442695
        %v5699 = vpow.pop %v5698
        %v5700 = vmul.f32 %v5603, 1.442695
        %v5701 = vpow.pop %v5700
        %v5702 = vmul.f32 %v5604, 1.442695
        %v5703 = vpow.pop %v5702
        %v5704 = vmul.f32 %v5605, 1.442695
        %v5705 = vpow.pop %v5704
        %v5706 = vmul.f32 %v5606, 1.442695
        %v5707 = vpow.pop %v5706
        %v5708 = vmul.f32 %v5607, 1.442695
        %v5709 = vpow.pop %v5708
        %v5710 = vmul.f32 %v5608, 1.442695
        %v5711 = vpow.pop %v5710
        %v5712 = vmul.f32 %v5609, 1.442695
        %v5713 = vpow.pop %v5712
        %v5714 = vmul.f32 %v5610, 1.442695
        %v5715 = vpow.pop %v5714
        %v5716 = vmul.f32 %v5611, 1.442695
        %v5717 = vpow.pop %v5716
        %v5718 = vmul.f32 %v5612, 1.442695
        %v5719 = vpow.pop %v5718
        %v5720 = vmul.f32 %v5613, 1.442695
        %v5721 = vpow.pop %v5720
        %v5722 = vmul.f32 %v5614, 1.442695
        %v5723 = vpow.pop %v5722
        %v5724 = vmul.f32 %v5615, 1.442695
        %v5725 = vpow.pop %v5724
        %v5726 = vmul.f32 %v5616, 1.442695
        %v5727 = vpow.pop %v5726
        %v5728 = vmul.f32 %v5617, 1.442695
        %v5729 = vpow.pop %v5728
        %v5730 = vmul.f32 %v5618, 1.442695
        %v5731 = vpow.pop %v5730
        %v5732 = vmul.f32 %v5619, 1.442695
        %v5733 = vpow.pop %v5732
        %v5734 = vmul.f32 %v5620, 1.442695
        %v5735 = vpow.pop %v5734
        %v5736 = vmul.f32 %v5621, 1.442695
        %v5737 = vpow.pop %v5736
        %v5738 = vmul.f32 %v5622, 1.442695
        %v5739 = vpow.pop %v5738
        %v5740 = vmul.f32 %v5623, 1.442695
        %v5741 = vpow.pop %v5740
        %v5742 = vmul.f32 %v5624, 1.442695
        %v5743 = vpow.pop %v5742
        %v5744 = vmul.f32 %v5625, 1.442695
        %v5745 = vpow.pop %v5744
        %v5746 = vmul.f32 %v5626, 1.442695
        %v5747 = vpow.pop %v5746
        %v5748 = vmul.f32 %v5627, 1.442695
        %v5749 = vpow.pop %v5748
        %v5750 = vmul.f32 %v5628, 1.442695
        %v5751 = vpow.pop %v5750
        %v5752 = vmul.f32 %v5629, 1.442695
        %v5753 = vpow.pop %v5752
        %v5754 = vmul.f32 %v5630, 1.442695
        %v5755 = vpow.pop %v5754
        %v5756 = vmul.f32 %v5631, 1.442695
        %v5757 = vpow.pop %v5756
        %v5758 = vmul.f32 %v5632, 1.442695
        %v5759 = vpow.pop %v5758
        %v5760 = vmul.f32 %v5633, 1.442695
        %v5761 = vpow.pop %v5760
        %v5762 = vmul.f32 %v5443, %v2838
        %v5763 = vmul.f32 %v5445, %v2839
        %v5764 = vmul.f32 %v5447, %v2840
        %v5765 = vmul.f32 %v5449, %v2841
        %v5766 = vmul.f32 %v5451, %v2842
        %v5767 = vmul.f32 %v5453, %v2843
        %v5768 = vmul.f32 %v5455, %v2844
        %v5769 = vmul.f32 %v5457, %v2845
        %v5770 = vmul.f32 %v5459, %v2846
        %v5771 = vmul.f32 %v5461, %v2847
        %v5772 = vmul.f32 %v5463, %v2848
        %v5773 = vmul.f32 %v5465, %v2849
        %v5774 = vmul.f32 %v5467, %v2850
        %v5775 = vmul.f32 %v5469, %v2851
        %v5776 = vmul.f32 %v5471, %v2852
        %v5777 = vmul.f32 %v5473, %v2853
        %v5778 = vmul.f32 %v5475, %v2854
        %v5779 = vmul.f32 %v5477, %v2855
        %v5780 = vmul.f32 %v5479, %v2856
        %v5781 = vmul.f32 %v5481, %v2857
        %v5782 = vmul.f32 %v5483, %v2858
        %v5783 = vmul.f32 %v5485, %v2859
        %v5784 = vmul.f32 %v5487, %v2860
        %v5785 = vmul.f32 %v5489, %v2861
        %v5786 = vmul.f32 %v5491, %v2862
        %v5787 = vmul.f32 %v5493, %v2863
        %v5788 = vmul.f32 %v5495, %v2864
        %v5789 = vmul.f32 %v5497, %v2865
        %v5790 = vmul.f32 %v5499, %v2866
        %v5791 = vmul.f32 %v5501, %v2867
        %v5792 = vmul.f32 %v5503, %v2868
        %v5793 = vmul.f32 %v5505, %v2869
        %v5794 = vmul.f32 %v5507, %v2870
        %v5795 = vmul.f32 %v5509, %v2871
        %v5796 = vmul.f32 %v5511, %v2872
        %v5797 = vmul.f32 %v5513, %v2873
        %v5798 = vmul.f32 %v5515, %v2874
        %v5799 = vmul.f32 %v5517, %v2875
        %v5800 = vmul.f32 %v5519, %v2876
        %v5801 = vmul.f32 %v5521, %v2877
        %v5802 = vmul.f32 %v5523, %v2878
        %v5803 = vmul.f32 %v5525, %v2879
        %v5804 = vmul.f32 %v5527, %v2880
        %v5805 = vmul.f32 %v5529, %v2881
        %v5806 = vmul.f32 %v5531, %v2882
        %v5807 = vmul.f32 %v5533, %v2883
        %v5808 = vmul.f32 %v5535, %v2884
        %v5809 = vmul.f32 %v5537, %v2885
        %v5810 = vmul.f32 %v5539, %v2886
        %v5811 = vmul.f32 %v5541, %v2887
        %v5812 = vmul.f32 %v5543, %v2888
        %v5813 = vmul.f32 %v5545, %v2889
        %v5814 = vmul.f32 %v5547, %v2890
        %v5815 = vmul.f32 %v5549, %v2891
        %v5816 = vmul.f32 %v5551, %v2892
        %v5817 = vmul.f32 %v5553, %v2893
        %v5818 = vmul.f32 %v5555, %v2894
        %v5819 = vmul.f32 %v5557, %v2895
        %v5820 = vmul.f32 %v5559, %v2896
        %v5821 = vmul.f32 %v5561, %v2897
        %v5822 = vmul.f32 %v5563, %v2898
        %v5823 = vmul.f32 %v5565, %v2899
        %v5824 = vmul.f32 %v5567, %v2900
        %v5825 = vmul.f32 %v5569, %v2901
        %v5826 = vadd.f32 %v5762, %v5635
        %v5827 = vadd.f32 %v5763, %v5637
        %v5828 = vadd.f32 %v5764, %v5639
        %v5829 = vadd.f32 %v5765, %v5641
        %v5830 = vadd.f32 %v5766, %v5643
        %v5831 = vadd.f32 %v5767, %v5645
        %v5832 = vadd.f32 %v5768, %v5647
        %v5833 = vadd.f32 %v5769, %v5649
        %v5834 = vadd.f32 %v5770, %v5651
        %v5835 = vadd.f32 %v5771, %v5653
        %v5836 = vadd.f32 %v5772, %v5655
        %v5837 = vadd.f32 %v5773, %v5657
        %v5838 = vadd.f32 %v5774, %v5659
        %v5839 = vadd.f32 %v5775, %v5661
        %v5840 = vadd.f32 %v5776, %v5663
        %v5841 = vadd.f32 %v5777, %v5665
        %v5842 = vadd.f32 %v5778, %v5667
        %v5843 = vadd.f32 %v5779, %v5669
        %v5844 = vadd.f32 %v5780, %v5671
        %v5845 = vadd.f32 %v5781, %v5673
        %v5846 = vadd.f32 %v5782, %v5675
        %v5847 = vadd.f32 %v5783, %v5677
        %v5848 = vadd.f32 %v5784, %v5679
        %v5849 = vadd.f32 %v5785, %v5681
        %v5850 = vadd.f32 %v5786, %v5683
        %v5851 = vadd.f32 %v5787, %v5685
        %v5852 = vadd.f32 %v5788, %v5687
        %v5853 = vadd.f32 %v5789, %v5689
        %v5854 = vadd.f32 %v5790, %v5691
        %v5855 = vadd.f32 %v5791, %v5693
        %v5856 = vadd.f32 %v5792, %v5695
        %v5857 = vadd.f32 %v5793, %v5697
        %v5858 = vadd.f32 %v5794, %v5699
        %v5859 = vadd.f32 %v5795, %v5701
        %v5860 = vadd.f32 %v5796, %v5703
        %v5861 = vadd.f32 %v5797, %v5705
        %v5862 = vadd.f32 %v5798, %v5707
        %v5863 = vadd.f32 %v5799, %v5709
        %v5864 = vadd.f32 %v5800, %v5711
        %v5865 = vadd.f32 %v5801, %v5713
        %v5866 = vadd.f32 %v5802, %v5715
        %v5867 = vadd.f32 %v5803, %v5717
        %v5868 = vadd.f32 %v5804, %v5719
        %v5869 = vadd.f32 %v5805, %v5721
        %v5870 = vadd.f32 %v5806, %v5723
        %v5871 = vadd.f32 %v5807, %v5725
        %v5872 = vadd.f32 %v5808, %v5727
        %v5873 = vadd.f32 %v5809, %v5729
        %v5874 = vadd.f32 %v5810, %v5731
        %v5875 = vadd.f32 %v5811, %v5733
        %v5876 = vadd.f32 %v5812, %v5735
        %v5877 = vadd.f32 %v5813, %v5737
        %v5878 = vadd.f32 %v5814, %v5739
        %v5879 = vadd.f32 %v5815, %v5741
        %v5880 = vadd.f32 %v5816, %v5743
        %v5881 = vadd.f32 %v5817, %v5745
        %v5882 = vadd.f32 %v5818, %v5747
        %v5883 = vadd.f32 %v5819, %v5749
        %v5884 = vadd.f32 %v5820, %v5751
        %v5885 = vadd.f32 %v5821, %v5753
        %v5886 = vadd.f32 %v5822, %v5755
        %v5887 = vadd.f32 %v5823, %v5757
        %v5888 = vadd.f32 %v5824, %v5759
        %v5889 = vadd.f32 %v5825, %v5761
        %v5891 = vsel %vm2902, %v5443, 0
        %v5894 = vsel %vm2902, %v5445, 0
        %v5897 = vsel %vm2902, %v5447, 0
        %v5900 = vsel %vm2902, %v5449, 0
        %v5903 = vsel %vm2902, %v5451, 0
        %v5906 = vsel %vm2902, %v5453, 0
        %v5909 = vsel %vm2902, %v5455, 0
        %v5912 = vsel %vm2902, %v5457, 0
        %v5915 = vsel %vm2902, %v5459, 0
        %v5918 = vsel %vm2902, %v5461, 0
        %v5921 = vsel %vm2902, %v5463, 0
        %v5924 = vsel %vm2902, %v5465, 0
        %v5927 = vsel %vm2902, %v5467, 0
        %v5930 = vsel %vm2902, %v5469, 0
        %v5933 = vsel %vm2902, %v5471, 0
        %v5936 = vsel %vm2902, %v5473, 0
        %v5939 = vsel %vm2902, %v5475, 0
        %v5942 = vsel %vm2902, %v5477, 0
        %v5945 = vsel %vm2902, %v5479, 0
        %v5948 = vsel %vm2902, %v5481, 0
        %v5951 = vsel %vm2902, %v5483, 0
        %v5954 = vsel %vm2902, %v5485, 0
        %v5957 = vsel %vm2902, %v5487, 0
        %v5960 = vsel %vm2902, %v5489, 0
        %v5963 = vsel %vm2902, %v5491, 0
        %v5966 = vsel %vm2902, %v5493, 0
        %v5969 = vsel %vm2902, %v5495, 0
        %v5972 = vsel %vm2902, %v5497, 0
        %v5975 = vsel %vm2902, %v5499, 0
        %v5978 = vsel %vm2902, %v5501, 0
        %v5981 = vsel %vm2902, %v5503, 0
        %v5984 = vsel %vm2902, %v5505, 0
        %v5987 = vsel %vm2902, %v5507, 0
        %v5990 = vsel %vm2902, %v5509, 0
        %v5993 = vsel %vm2902, %v5511, 0
        %v5996 = vsel %vm2902, %v5513, 0
        %v5999 = vsel %vm2902, %v5515, 0
        %v6002 = vsel %vm2902, %v5517, 0
        %v6005 = vsel %vm2902, %v5519, 0
        %v6008 = vsel %vm2902, %v5521, 0
        %v6011 = vsel %vm2902, %v5523, 0
        %v6014 = vsel %vm2902, %v5525, 0
        %v6017 = vsel %vm2902, %v5527, 0
        %v6020 = vsel %vm2902, %v5529, 0
        %v6023 = vsel %vm2902, %v5531, 0
        %v6026 = vsel %vm2902, %v5533, 0
        %v6029 = vsel %vm2902, %v5535, 0
        %v6032 = vsel %vm2902, %v5537, 0
        %v6035 = vsel %vm2902, %v5539, 0
        %v6038 = vsel %vm2902, %v5541, 0
        %v6041 = vsel %vm2902, %v5543, 0
        %v6044 = vsel %vm2902, %v5545, 0
        %v6047 = vsel %vm2902, %v5547, 0
        %v6050 = vsel %vm2902, %v5549, 0
        %v6053 = vsel %vm2902, %v5551, 0
        %v6056 = vsel %vm2902, %v5553, 0
        %v6059 = vsel %vm2902, %v5555, 0
        %v6062 = vsel %vm2902, %v5557, 0
        %v6065 = vsel %vm2902, %v5559, 0
        %v6068 = vsel %vm2902, %v5561, 0
        %v6071 = vsel %vm2902, %v5563, 0
        %v6074 = vsel %vm2902, %v5565, 0
        %v6077 = vsel %vm2902, %v5567, 0
        %v6080 = vsel %vm2902, %v5569, 0
        %6082 = vmatprep.subr.mxu0 0.0
        %6083 = vmatpush1.msra.mxu0 0.0
        %6084 = vmatprep.subr.mxu0 0.0
        %6085 = vmatpush1.msra.mxu0 0.0
        %6086 = vmatprep.subr.mxu0 0.0
        %6087 = vmatpush1.msra.mxu0 0.0
        %6088 = vmatprep.subr.mxu0 0.0
        %6089 = vmatpush1.msra.mxu0 0.0
        %6090 = vmatprep.subr.mxu0 0.0
        %6091 = vmatpush1.msra.mxu0 0.0
        %6092 = vmatprep.subr.mxu0 0.0
        %6093 = vmatpush1.msra.mxu0 0.0
        %6094 = vmatprep.subr.mxu0 0.0
        %6095 = vmatpush1.msra.mxu0 0.0
        %6096 = vmatprep.subr.mxu0 0.0
        %6097 = vmatpush1.msra.mxu0 0.0
        %6098 = vmatprep.subr.mxu0 0.0
        %6099 = vmatpush1.msra.mxu0 0.0
        %6100 = vmatprep.subr.mxu0 0.0
        %6101 = vmatpush1.msra.mxu0 0.0
        %6102 = vmatprep.subr.mxu0 0.0
        %6103 = vmatpush1.msra.mxu0 0.0
        %6104 = vmatprep.subr.mxu0 0.0
        %6105 = vmatpush1.msra.mxu0 0.0
        %6106 = vmatprep.subr.mxu0 0.0
        %6107 = vmatpush1.msra.mxu0 0.0
        %6108 = vmatprep.subr.mxu0 0.0
        %6109 = vmatpush1.msra.mxu0 0.0
        %6110 = vmatprep.subr.mxu0 0.0
        %6111 = vmatpush1.msra.mxu0 0.0
        %6112 = vmatprep.subr.mxu0 0.0
        %6113 = vmatpush1.msra.mxu0 %v3097
        %6114 = vmatprep.subr.mxu0 0.0
        %6115 = vmatpush2.msra.mxu0 0.0
        %6116 = vmatprep.subr.mxu0 0.0
        %6117 = vmatpush2.msra.mxu0 0.0
        %6118 = vmatprep.subr.mxu0 0.0
        %6119 = vmatpush2.msra.mxu0 0.0
        %6120 = vmatprep.subr.mxu0 0.0
        %6121 = vmatpush2.msra.mxu0 0.0
        %6122 = vmatprep.subr.mxu0 0.0
        %6123 = vmatpush2.msra.mxu0 0.0
        %6124 = vmatprep.subr.mxu0 0.0
        %6125 = vmatpush2.msra.mxu0 0.0
        %6126 = vmatprep.subr.mxu0 0.0
        %6127 = vmatpush2.msra.mxu0 0.0
        %6128 = vmatprep.subr.mxu0 0.0
        %6129 = vmatpush2.msra.mxu0 0.0
        %6130 = vmatprep.subr.mxu0 0.0
        %6131 = vmatpush2.msra.mxu0 0.0
        %6132 = vmatprep.subr.mxu0 0.0
        %6133 = vmatpush2.msra.mxu0 0.0
        %6134 = vmatprep.subr.mxu0 0.0
        %6135 = vmatpush2.msra.mxu0 0.0
        %6136 = vmatprep.subr.mxu0 0.0
        %6137 = vmatpush2.msra.mxu0 0.0
        %6138 = vmatprep.subr.mxu0 0.0
        %6139 = vmatpush2.msra.mxu0 0.0
        %6140 = vmatprep.subr.mxu0 0.0
        %6141 = vmatpush2.msra.mxu0 0.0
        %6142 = vmatprep.subr.mxu0 0.0
        %6143 = vmatpush2.msra.mxu0 0.0
        %6144 = vmatprep.subr.mxu0 0.0
        %6145 = vmatpush2.msra.mxu0 0.0
        %6146 = vmatprep.mubr.f32.mxu0 0.0
        %6147 = vmatmul.mubr.f32.gmra.mxu0 %v5891
        %v6148 = vpop.f32.mrf.mxu0
        %v6149 = vadd.f32 0.0, %v6148
        %v6150 = vpop.f32.mrf.mxu0
        %6151 = vmatprep.mubr.f32.mxu0 0.0
        %6152 = vmatmul.mubr.f32.gmra.mxu0 %v5894
        %v6153 = vpop.f32.mrf.mxu0
        %v6154 = vadd.f32 0.0, %v6153
        %v6155 = vpop.f32.mrf.mxu0
        %6156 = vmatprep.mubr.f32.mxu0 0.0
        %6157 = vmatmul.mubr.f32.gmra.mxu0 %v5897
        %v6158 = vpop.f32.mrf.mxu0
        %v6159 = vadd.f32 0.0, %v6158
        %v6160 = vpop.f32.mrf.mxu0
        %6161 = vmatprep.mubr.f32.mxu0 0.0
        %6162 = vmatmul.mubr.f32.gmra.mxu0 %v5900
        %v6163 = vpop.f32.mrf.mxu0
        %v6164 = vadd.f32 0.0, %v6163
        %v6165 = vpop.f32.mrf.mxu0
        %6166 = vmatprep.mubr.f32.mxu0 0.0
        %6167 = vmatmul.mubr.f32.gmra.mxu0 %v5903
        %v6168 = vpop.f32.mrf.mxu0
        %v6169 = vadd.f32 0.0, %v6168
        %v6170 = vpop.f32.mrf.mxu0
        %6171 = vmatprep.mubr.f32.mxu0 0.0
        %6172 = vmatmul.mubr.f32.gmra.mxu0 %v5906
        %v6173 = vpop.f32.mrf.mxu0
        %v6174 = vadd.f32 0.0, %v6173
        %v6175 = vpop.f32.mrf.mxu0
        %6176 = vmatprep.mubr.f32.mxu0 0.0
        %6177 = vmatmul.mubr.f32.gmra.mxu0 %v5909
        %v6178 = vpop.f32.mrf.mxu0
        %v6179 = vadd.f32 0.0, %v6178
        %v6180 = vpop.f32.mrf.mxu0
        %6181 = vmatprep.mubr.f32.mxu0 0.0
        %6182 = vmatmul.mubr.f32.gmra.mxu0 %v5912
        %v6183 = vpop.f32.mrf.mxu0
        %v6184 = vadd.f32 0.0, %v6183
        %v6185 = vpop.f32.mrf.mxu0
        %6186 = vmatprep.mubr.f32.mxu0 0.0
        %6187 = vmatmul.mubr.f32.gmra.mxu0 %v5915
        %v6188 = vpop.f32.mrf.mxu0
        %v6189 = vadd.f32 0.0, %v6188
        %v6190 = vpop.f32.mrf.mxu0
        %6191 = vmatprep.mubr.f32.mxu0 0.0
        %6192 = vmatmul.mubr.f32.gmra.mxu0 %v5918
        %v6193 = vpop.f32.mrf.mxu0
        %v6194 = vadd.f32 0.0, %v6193
        %v6195 = vpop.f32.mrf.mxu0
        %6196 = vmatprep.mubr.f32.mxu0 0.0
        %6197 = vmatmul.mubr.f32.gmra.mxu0 %v5921
        %v6198 = vpop.f32.mrf.mxu0
        %v6199 = vadd.f32 0.0, %v6198
        %v6200 = vpop.f32.mrf.mxu0
        %6201 = vmatprep.mubr.f32.mxu0 0.0
        %6202 = vmatmul.mubr.f32.gmra.mxu0 %v5924
        %v6203 = vpop.f32.mrf.mxu0
        %v6204 = vadd.f32 0.0, %v6203
        %v6205 = vpop.f32.mrf.mxu0
        %6206 = vmatprep.mubr.f32.mxu0 0.0
        %6207 = vmatmul.mubr.f32.gmra.mxu0 %v5927
        %v6208 = vpop.f32.mrf.mxu0
        %v6209 = vadd.f32 0.0, %v6208
        %v6210 = vpop.f32.mrf.mxu0
        %6211 = vmatprep.mubr.f32.mxu0 0.0
        %6212 = vmatmul.mubr.f32.gmra.mxu0 %v5930
        %v6213 = vpop.f32.mrf.mxu0
        %v6214 = vadd.f32 0.0, %v6213
        %v6215 = vpop.f32.mrf.mxu0
        %6216 = vmatprep.mubr.f32.mxu0 0.0
        %6217 = vmatmul.mubr.f32.gmra.mxu0 %v5933
        %v6218 = vpop.f32.mrf.mxu0
        %v6219 = vadd.f32 0.0, %v6218
        %v6220 = vpop.f32.mrf.mxu0
        %6221 = vmatprep.mubr.f32.mxu0 0.0
        %6222 = vmatmul.mubr.f32.gmra.mxu0 %v5936
        %v6223 = vpop.f32.mrf.mxu0
        %v6224 = vadd.f32 0.0, %v6223
        %v6225 = vpop.f32.mrf.mxu0
        %6226 = vmatprep.mubr.f32.mxu0 0.0
        %6227 = vmatmul.mubr.f32.gmra.mxu0 %v5939
        %v6228 = vpop.f32.mrf.mxu0
        %v6229 = vadd.f32 0.0, %v6228
        %v6230 = vpop.f32.mrf.mxu0
        %6231 = vmatprep.mubr.f32.mxu0 0.0
        %6232 = vmatmul.mubr.f32.gmra.mxu0 %v5942
        %v6233 = vpop.f32.mrf.mxu0
        %v6234 = vadd.f32 0.0, %v6233
        %v6235 = vpop.f32.mrf.mxu0
        %6236 = vmatprep.mubr.f32.mxu0 0.0
        %6237 = vmatmul.mubr.f32.gmra.mxu0 %v5945
        %v6238 = vpop.f32.mrf.mxu0
        %v6239 = vadd.f32 0.0, %v6238
        %v6240 = vpop.f32.mrf.mxu0
        %6241 = vmatprep.mubr.f32.mxu0 0.0
        %6242 = vmatmul.mubr.f32.gmra.mxu0 %v5948
        %v6243 = vpop.f32.mrf.mxu0
        %v6244 = vadd.f32 0.0, %v6243
        %v6245 = vpop.f32.mrf.mxu0
        %6246 = vmatprep.mubr.f32.mxu0 0.0
        %6247 = vmatmul.mubr.f32.gmra.mxu0 %v5951
        %v6248 = vpop.f32.mrf.mxu0
        %v6249 = vadd.f32 0.0, %v6248
        %v6250 = vpop.f32.mrf.mxu0
        %6251 = vmatprep.mubr.f32.mxu0 0.0
        %6252 = vmatmul.mubr.f32.gmra.mxu0 %v5954
        %v6253 = vpop.f32.mrf.mxu0
        %v6254 = vadd.f32 0.0, %v6253
        %v6255 = vpop.f32.mrf.mxu0
        %6256 = vmatprep.mubr.f32.mxu0 0.0
        %6257 = vmatmul.mubr.f32.gmra.mxu0 %v5957
        %v6258 = vpop.f32.mrf.mxu0
        %v6259 = vadd.f32 0.0, %v6258
        %v6260 = vpop.f32.mrf.mxu0
        %6261 = vmatprep.mubr.f32.mxu0 0.0
        %6262 = vmatmul.mubr.f32.gmra.mxu0 %v5960
        %v6263 = vpop.f32.mrf.mxu0
        %v6264 = vadd.f32 0.0, %v6263
        %v6265 = vpop.f32.mrf.mxu0
        %6266 = vmatprep.mubr.f32.mxu0 0.0
        %6267 = vmatmul.mubr.f32.gmra.mxu0 %v5963
        %v6268 = vpop.f32.mrf.mxu0
        %v6269 = vadd.f32 0.0, %v6268
        %v6270 = vpop.f32.mrf.mxu0
        %6271 = vmatprep.mubr.f32.mxu0 0.0
        %6272 = vmatmul.mubr.f32.gmra.mxu0 %v5966
        %v6273 = vpop.f32.mrf.mxu0
        %v6274 = vadd.f32 0.0, %v6273
        %v6275 = vpop.f32.mrf.mxu0
        %6276 = vmatprep.mubr.f32.mxu0 0.0
        %6277 = vmatmul.mubr.f32.gmra.mxu0 %v5969
        %v6278 = vpop.f32.mrf.mxu0
        %v6279 = vadd.f32 0.0, %v6278
        %v6280 = vpop.f32.mrf.mxu0
        %6281 = vmatprep.mubr.f32.mxu0 0.0
        %6282 = vmatmul.mubr.f32.gmra.mxu0 %v5972
        %v6283 = vpop.f32.mrf.mxu0
        %v6284 = vadd.f32 0.0, %v6283
        %v6285 = vpop.f32.mrf.mxu0
        %6286 = vmatprep.mubr.f32.mxu0 0.0
        %6287 = vmatmul.mubr.f32.gmra.mxu0 %v5975
        %v6288 = vpop.f32.mrf.mxu0
        %v6289 = vadd.f32 0.0, %v6288
        %v6290 = vpop.f32.mrf.mxu0
        %6291 = vmatprep.mubr.f32.mxu0 0.0
        %6292 = vmatmul.mubr.f32.gmra.mxu0 %v5978
        %v6293 = vpop.f32.mrf.mxu0
        %v6294 = vadd.f32 0.0, %v6293
        %v6295 = vpop.f32.mrf.mxu0
        %6296 = vmatprep.mubr.f32.mxu0 0.0
        %6297 = vmatmul.mubr.f32.gmra.mxu0 %v5981
        %v6298 = vpop.f32.mrf.mxu0
        %v6299 = vadd.f32 0.0, %v6298
        %v6300 = vpop.f32.mrf.mxu0
        %6301 = vmatprep.mubr.f32.mxu0 0.0
        %6302 = vmatmul.mubr.f32.gmra.mxu0 %v5984
        %v6303 = vpop.f32.mrf.mxu0
        %v6304 = vadd.f32 0.0, %v6303
        %v6305 = vpop.f32.mrf.mxu0
        %6306 = vmatprep.mubr.f32.mxu0 0.0
        %6307 = vmatmul.mubr.f32.gmra.mxu0 %v5987
        %v6308 = vpop.f32.mrf.mxu0
        %v6309 = vadd.f32 0.0, %v6308
        %v6310 = vpop.f32.mrf.mxu0
        %6311 = vmatprep.mubr.f32.mxu0 0.0
        %6312 = vmatmul.mubr.f32.gmra.mxu0 %v5990
        %v6313 = vpop.f32.mrf.mxu0
        %v6314 = vadd.f32 0.0, %v6313
        %v6315 = vpop.f32.mrf.mxu0
        %6316 = vmatprep.mubr.f32.mxu0 0.0
        %6317 = vmatmul.mubr.f32.gmra.mxu0 %v5993
        %v6318 = vpop.f32.mrf.mxu0
        %v6319 = vadd.f32 0.0, %v6318
        %v6320 = vpop.f32.mrf.mxu0
        %6321 = vmatprep.mubr.f32.mxu0 0.0
        %6322 = vmatmul.mubr.f32.gmra.mxu0 %v5996
        %v6323 = vpop.f32.mrf.mxu0
        %v6324 = vadd.f32 0.0, %v6323
        %v6325 = vpop.f32.mrf.mxu0
        %6326 = vmatprep.mubr.f32.mxu0 0.0
        %6327 = vmatmul.mubr.f32.gmra.mxu0 %v5999
        %v6328 = vpop.f32.mrf.mxu0
        %v6329 = vadd.f32 0.0, %v6328
        %v6330 = vpop.f32.mrf.mxu0
        %6331 = vmatprep.mubr.f32.mxu0 0.0
        %6332 = vmatmul.mubr.f32.gmra.mxu0 %v6002
        %v6333 = vpop.f32.mrf.mxu0
        %v6334 = vadd.f32 0.0, %v6333
        %v6335 = vpop.f32.mrf.mxu0
        %6336 = vmatprep.mubr.f32.mxu0 0.0
        %6337 = vmatmul.mubr.f32.gmra.mxu0 %v6005
        %v6338 = vpop.f32.mrf.mxu0
        %v6339 = vadd.f32 0.0, %v6338
        %v6340 = vpop.f32.mrf.mxu0
        %6341 = vmatprep.mubr.f32.mxu0 0.0
        %6342 = vmatmul.mubr.f32.gmra.mxu0 %v6008
        %v6343 = vpop.f32.mrf.mxu0
        %v6344 = vadd.f32 0.0, %v6343
        %v6345 = vpop.f32.mrf.mxu0
        %6346 = vmatprep.mubr.f32.mxu0 0.0
        %6347 = vmatmul.mubr.f32.gmra.mxu0 %v6011
        %v6348 = vpop.f32.mrf.mxu0
        %v6349 = vadd.f32 0.0, %v6348
        %v6350 = vpop.f32.mrf.mxu0
        %6351 = vmatprep.mubr.f32.mxu0 0.0
        %6352 = vmatmul.mubr.f32.gmra.mxu0 %v6014
        %v6353 = vpop.f32.mrf.mxu0
        %v6354 = vadd.f32 0.0, %v6353
        %v6355 = vpop.f32.mrf.mxu0
        %6356 = vmatprep.mubr.f32.mxu0 0.0
        %6357 = vmatmul.mubr.f32.gmra.mxu0 %v6017
        %v6358 = vpop.f32.mrf.mxu0
        %v6359 = vadd.f32 0.0, %v6358
        %v6360 = vpop.f32.mrf.mxu0
        %6361 = vmatprep.mubr.f32.mxu0 0.0
        %6362 = vmatmul.mubr.f32.gmra.mxu0 %v6020
        %v6363 = vpop.f32.mrf.mxu0
        %v6364 = vadd.f32 0.0, %v6363
        %v6365 = vpop.f32.mrf.mxu0
        %6366 = vmatprep.mubr.f32.mxu0 0.0
        %6367 = vmatmul.mubr.f32.gmra.mxu0 %v6023
        %v6368 = vpop.f32.mrf.mxu0
        %v6369 = vadd.f32 0.0, %v6368
        %v6370 = vpop.f32.mrf.mxu0
        %6371 = vmatprep.mubr.f32.mxu0 0.0
        %6372 = vmatmul.mubr.f32.gmra.mxu0 %v6026
        %v6373 = vpop.f32.mrf.mxu0
        %v6374 = vadd.f32 0.0, %v6373
        %v6375 = vpop.f32.mrf.mxu0
        %6376 = vmatprep.mubr.f32.mxu0 0.0
        %6377 = vmatmul.mubr.f32.gmra.mxu0 %v6029
        %v6378 = vpop.f32.mrf.mxu0
        %v6379 = vadd.f32 0.0, %v6378
        %v6380 = vpop.f32.mrf.mxu0
        %6381 = vmatprep.mubr.f32.mxu0 0.0
        %6382 = vmatmul.mubr.f32.gmra.mxu0 %v6032
        %v6383 = vpop.f32.mrf.mxu0
        %v6384 = vadd.f32 0.0, %v6383
        %v6385 = vpop.f32.mrf.mxu0
        %6386 = vmatprep.mubr.f32.mxu0 0.0
        %6387 = vmatmul.mubr.f32.gmra.mxu0 %v6035
        %v6388 = vpop.f32.mrf.mxu0
        %v6389 = vadd.f32 0.0, %v6388
        %v6390 = vpop.f32.mrf.mxu0
        %6391 = vmatprep.mubr.f32.mxu0 0.0
        %6392 = vmatmul.mubr.f32.gmra.mxu0 %v6038
        %v6393 = vpop.f32.mrf.mxu0
        %v6394 = vadd.f32 0.0, %v6393
        %v6395 = vpop.f32.mrf.mxu0
        %6396 = vmatprep.mubr.f32.mxu0 0.0
        %6397 = vmatmul.mubr.f32.gmra.mxu0 %v6041
        %v6398 = vpop.f32.mrf.mxu0
        %v6399 = vadd.f32 0.0, %v6398
        %v6400 = vpop.f32.mrf.mxu0
        %6401 = vmatprep.mubr.f32.mxu0 0.0
        %6402 = vmatmul.mubr.f32.gmra.mxu0 %v6044
        %v6403 = vpop.f32.mrf.mxu0
        %v6404 = vadd.f32 0.0, %v6403
        %v6405 = vpop.f32.mrf.mxu0
        %6406 = vmatprep.mubr.f32.mxu0 0.0
        %6407 = vmatmul.mubr.f32.gmra.mxu0 %v6047
        %v6408 = vpop.f32.mrf.mxu0
        %v6409 = vadd.f32 0.0, %v6408
        %v6410 = vpop.f32.mrf.mxu0
        %6411 = vmatprep.mubr.f32.mxu0 0.0
        %6412 = vmatmul.mubr.f32.gmra.mxu0 %v6050
        %v6413 = vpop.f32.mrf.mxu0
        %v6414 = vadd.f32 0.0, %v6413
        %v6415 = vpop.f32.mrf.mxu0
        %6416 = vmatprep.mubr.f32.mxu0 0.0
        %6417 = vmatmul.mubr.f32.gmra.mxu0 %v6053
        %v6418 = vpop.f32.mrf.mxu0
        %v6419 = vadd.f32 0.0, %v6418
        %v6420 = vpop.f32.mrf.mxu0
        %6421 = vmatprep.mubr.f32.mxu0 0.0
        %6422 = vmatmul.mubr.f32.gmra.mxu0 %v6056
        %v6423 = vpop.f32.mrf.mxu0
        %v6424 = vadd.f32 0.0, %v6423
        %v6425 = vpop.f32.mrf.mxu0
        %6426 = vmatprep.mubr.f32.mxu0 0.0
        %6427 = vmatmul.mubr.f32.gmra.mxu0 %v6059
        %v6428 = vpop.f32.mrf.mxu0
        %v6429 = vadd.f32 0.0, %v6428
        %v6430 = vpop.f32.mrf.mxu0
        %6431 = vmatprep.mubr.f32.mxu0 0.0
        %6432 = vmatmul.mubr.f32.gmra.mxu0 %v6062
        %v6433 = vpop.f32.mrf.mxu0
        %v6434 = vadd.f32 0.0, %v6433
        %v6435 = vpop.f32.mrf.mxu0
        %6436 = vmatprep.mubr.f32.mxu0 0.0
        %6437 = vmatmul.mubr.f32.gmra.mxu0 %v6065
        %v6438 = vpop.f32.mrf.mxu0
        %v6439 = vadd.f32 0.0, %v6438
        %v6440 = vpop.f32.mrf.mxu0
        %6441 = vmatprep.mubr.f32.mxu0 0.0
        %6442 = vmatmul.mubr.f32.gmra.mxu0 %v6068
        %v6443 = vpop.f32.mrf.mxu0
        %v6444 = vadd.f32 0.0, %v6443
        %v6445 = vpop.f32.mrf.mxu0
        %6446 = vmatprep.mubr.f32.mxu0 0.0
        %6447 = vmatmul.mubr.f32.gmra.mxu0 %v6071
        %v6448 = vpop.f32.mrf.mxu0
        %v6449 = vadd.f32 0.0, %v6448
        %v6450 = vpop.f32.mrf.mxu0
        %6451 = vmatprep.mubr.f32.mxu0 0.0
        %6452 = vmatmul.mubr.f32.gmra.mxu0 %v6074
        %v6453 = vpop.f32.mrf.mxu0
        %v6454 = vadd.f32 0.0, %v6453
        %v6455 = vpop.f32.mrf.mxu0
        %6456 = vmatprep.mubr.f32.mxu0 0.0
        %6457 = vmatmul.mubr.f32.gmra.mxu0 %v6077
        %v6458 = vpop.f32.mrf.mxu0
        %v6459 = vadd.f32 0.0, %v6458
        %v6460 = vpop.f32.mrf.mxu0
        %6461 = vmatprep.mubr.f32.mxu0 0.0
        %6462 = vmatmul.mubr.f32.gmra.mxu0 %v6080
        %v6463 = vpop.f32.mrf.mxu0
        %v6464 = vadd.f32 0.0, %v6463
        %v6465 = vpop.f32.mrf.mxu0
        %6466 = vdwg.mxu0
        %v6468 = vsel %vm2902, %v5635, 0
        %v6471 = vsel %vm2902, %v5637, 0
        %v6474 = vsel %vm2902, %v5639, 0
        %v6477 = vsel %vm2902, %v5641, 0
        %v6480 = vsel %vm2902, %v5643, 0
        %v6483 = vsel %vm2902, %v5645, 0
        %v6486 = vsel %vm2902, %v5647, 0
        %v6489 = vsel %vm2902, %v5649, 0
        %v6492 = vsel %vm2902, %v5651, 0
        %v6495 = vsel %vm2902, %v5653, 0
        %v6498 = vsel %vm2902, %v5655, 0
        %v6501 = vsel %vm2902, %v5657, 0
        %v6504 = vsel %vm2902, %v5659, 0
        %v6507 = vsel %vm2902, %v5661, 0
        %v6510 = vsel %vm2902, %v5663, 0
        %v6513 = vsel %vm2902, %v5665, 0
        %v6516 = vsel %vm2902, %v5667, 0
        %v6519 = vsel %vm2902, %v5669, 0
        %v6522 = vsel %vm2902, %v5671, 0
        %v6525 = vsel %vm2902, %v5673, 0
        %v6528 = vsel %vm2902, %v5675, 0
        %v6531 = vsel %vm2902, %v5677, 0
        %v6534 = vsel %vm2902, %v5679, 0
        %v6537 = vsel %vm2902, %v5681, 0
        %v6540 = vsel %vm2902, %v5683, 0
        %v6543 = vsel %vm2902, %v5685, 0
        %v6546 = vsel %vm2902, %v5687, 0
        %v6549 = vsel %vm2902, %v5689, 0
        %v6552 = vsel %vm2902, %v5691, 0
        %v6555 = vsel %vm2902, %v5693, 0
        %v6558 = vsel %vm2902, %v5695, 0
        %v6561 = vsel %vm2902, %v5697, 0
        %v6564 = vsel %vm2902, %v5699, 0
        %v6567 = vsel %vm2902, %v5701, 0
        %v6570 = vsel %vm2902, %v5703, 0
        %v6573 = vsel %vm2902, %v5705, 0
        %v6576 = vsel %vm2902, %v5707, 0
        %v6579 = vsel %vm2902, %v5709, 0
        %v6582 = vsel %vm2902, %v5711, 0
        %v6585 = vsel %vm2902, %v5713, 0
        %v6588 = vsel %vm2902, %v5715, 0
        %v6591 = vsel %vm2902, %v5717, 0
        %v6594 = vsel %vm2902, %v5719, 0
        %v6597 = vsel %vm2902, %v5721, 0
        %v6600 = vsel %vm2902, %v5723, 0
        %v6603 = vsel %vm2902, %v5725, 0
        %v6606 = vsel %vm2902, %v5727, 0
        %v6609 = vsel %vm2902, %v5729, 0
        %v6612 = vsel %vm2902, %v5731, 0
        %v6615 = vsel %vm2902, %v5733, 0
        %v6618 = vsel %vm2902, %v5735, 0
        %v6621 = vsel %vm2902, %v5737, 0
        %v6624 = vsel %vm2902, %v5739, 0
        %v6627 = vsel %vm2902, %v5741, 0
        %v6630 = vsel %vm2902, %v5743, 0
        %v6633 = vsel %vm2902, %v5745, 0
        %v6636 = vsel %vm2902, %v5747, 0
        %v6639 = vsel %vm2902, %v5749, 0
        %v6642 = vsel %vm2902, %v5751, 0
        %v6645 = vsel %vm2902, %v5753, 0
        %v6648 = vsel %vm2902, %v5755, 0
        %v6651 = vsel %vm2902, %v5757, 0
        %v6654 = vsel %vm2902, %v5759, 0
        %v6657 = vsel %vm2902, %v5761, 0
        %6659 = vmatprep.subr.mxu0 0.0
        %6660 = vmatpush1.msra.mxu0 0.0
        %6661 = vmatprep.subr.mxu0 0.0
        %6662 = vmatpush1.msra.mxu0 0.0
        %6663 = vmatprep.subr.mxu0 0.0
        %6664 = vmatpush1.msra.mxu0 0.0
        %6665 = vmatprep.subr.mxu0 0.0
        %6666 = vmatpush1.msra.mxu0 0.0
        %6667 = vmatprep.subr.mxu0 0.0
        %6668 = vmatpush1.msra.mxu0 0.0
        %6669 = vmatprep.subr.mxu0 0.0
        %6670 = vmatpush1.msra.mxu0 0.0
        %6671 = vmatprep.subr.mxu0 0.0
        %6672 = vmatpush1.msra.mxu0 0.0
        %6673 = vmatprep.subr.mxu0 0.0
        %6674 = vmatpush1.msra.mxu0 0.0
        %6675 = vmatprep.subr.mxu0 0.0
        %6676 = vmatpush1.msra.mxu0 0.0
        %6677 = vmatprep.subr.mxu0 0.0
        %6678 = vmatpush1.msra.mxu0 0.0
        %6679 = vmatprep.subr.mxu0 0.0
        %6680 = vmatpush1.msra.mxu0 0.0
        %6681 = vmatprep.subr.mxu0 0.0
        %6682 = vmatpush1.msra.mxu0 0.0
        %6683 = vmatprep.subr.mxu0 0.0
        %6684 = vmatpush1.msra.mxu0 0.0
        %6685 = vmatprep.subr.mxu0 0.0
        %6686 = vmatpush1.msra.mxu0 0.0
        %6687 = vmatprep.subr.mxu0 0.0
        %6688 = vmatpush1.msra.mxu0 0.0
        %6689 = vmatprep.subr.mxu0 0.0
        %6690 = vmatpush1.msra.mxu0 %v3097
        %6691 = vmatprep.subr.mxu0 0.0
        %6692 = vmatpush2.msra.mxu0 0.0
        %6693 = vmatprep.subr.mxu0 0.0
        %6694 = vmatpush2.msra.mxu0 0.0
        %6695 = vmatprep.subr.mxu0 0.0
        %6696 = vmatpush2.msra.mxu0 0.0
        %6697 = vmatprep.subr.mxu0 0.0
        %6698 = vmatpush2.msra.mxu0 0.0
        %6699 = vmatprep.subr.mxu0 0.0
        %6700 = vmatpush2.msra.mxu0 0.0
        %6701 = vmatprep.subr.mxu0 0.0
        %6702 = vmatpush2.msra.mxu0 0.0
        %6703 = vmatprep.subr.mxu0 0.0
        %6704 = vmatpush2.msra.mxu0 0.0
        %6705 = vmatprep.subr.mxu0 0.0
        %6706 = vmatpush2.msra.mxu0 0.0
        %6707 = vmatprep.subr.mxu0 0.0
        %6708 = vmatpush2.msra.mxu0 0.0
        %6709 = vmatprep.subr.mxu0 0.0
        %6710 = vmatpush2.msra.mxu0 0.0
        %6711 = vmatprep.subr.mxu0 0.0
        %6712 = vmatpush2.msra.mxu0 0.0
        %6713 = vmatprep.subr.mxu0 0.0
        %6714 = vmatpush2.msra.mxu0 0.0
        %6715 = vmatprep.subr.mxu0 0.0
        %6716 = vmatpush2.msra.mxu0 0.0
        %6717 = vmatprep.subr.mxu0 0.0
        %6718 = vmatpush2.msra.mxu0 0.0
        %6719 = vmatprep.subr.mxu0 0.0
        %6720 = vmatpush2.msra.mxu0 0.0
        %6721 = vmatprep.subr.mxu0 0.0
        %6722 = vmatpush2.msra.mxu0 0.0
        %6723 = vmatprep.mubr.f32.mxu0 0.0
        %6724 = vmatmul.mubr.f32.gmra.mxu0 %v6468
        %v6725 = vpop.f32.mrf.mxu0
        %v6726 = vadd.f32 0.0, %v6725
        %v6727 = vpop.f32.mrf.mxu0
        %6728 = vmatprep.mubr.f32.mxu0 0.0
        %6729 = vmatmul.mubr.f32.gmra.mxu0 %v6471
        %v6730 = vpop.f32.mrf.mxu0
        %v6731 = vadd.f32 0.0, %v6730
        %v6732 = vpop.f32.mrf.mxu0
        %6733 = vmatprep.mubr.f32.mxu0 0.0
        %6734 = vmatmul.mubr.f32.gmra.mxu0 %v6474
        %v6735 = vpop.f32.mrf.mxu0
        %v6736 = vadd.f32 0.0, %v6735
        %v6737 = vpop.f32.mrf.mxu0
        %6738 = vmatprep.mubr.f32.mxu0 0.0
        %6739 = vmatmul.mubr.f32.gmra.mxu0 %v6477
        %v6740 = vpop.f32.mrf.mxu0
        %v6741 = vadd.f32 0.0, %v6740
        %v6742 = vpop.f32.mrf.mxu0
        %6743 = vmatprep.mubr.f32.mxu0 0.0
        %6744 = vmatmul.mubr.f32.gmra.mxu0 %v6480
        %v6745 = vpop.f32.mrf.mxu0
        %v6746 = vadd.f32 0.0, %v6745
        %v6747 = vpop.f32.mrf.mxu0
        %6748 = vmatprep.mubr.f32.mxu0 0.0
        %6749 = vmatmul.mubr.f32.gmra.mxu0 %v6483
        %v6750 = vpop.f32.mrf.mxu0
        %v6751 = vadd.f32 0.0, %v6750
        %v6752 = vpop.f32.mrf.mxu0
        %6753 = vmatprep.mubr.f32.mxu0 0.0
        %6754 = vmatmul.mubr.f32.gmra.mxu0 %v6486
        %v6755 = vpop.f32.mrf.mxu0
        %v6756 = vadd.f32 0.0, %v6755
        %v6757 = vpop.f32.mrf.mxu0
        %6758 = vmatprep.mubr.f32.mxu0 0.0
        %6759 = vmatmul.mubr.f32.gmra.mxu0 %v6489
        %v6760 = vpop.f32.mrf.mxu0
        %v6761 = vadd.f32 0.0, %v6760
        %v6762 = vpop.f32.mrf.mxu0
        %6763 = vmatprep.mubr.f32.mxu0 0.0
        %6764 = vmatmul.mubr.f32.gmra.mxu0 %v6492
        %v6765 = vpop.f32.mrf.mxu0
        %v6766 = vadd.f32 0.0, %v6765
        %v6767 = vpop.f32.mrf.mxu0
        %6768 = vmatprep.mubr.f32.mxu0 0.0
        %6769 = vmatmul.mubr.f32.gmra.mxu0 %v6495
        %v6770 = vpop.f32.mrf.mxu0
        %v6771 = vadd.f32 0.0, %v6770
        %v6772 = vpop.f32.mrf.mxu0
        %6773 = vmatprep.mubr.f32.mxu0 0.0
        %6774 = vmatmul.mubr.f32.gmra.mxu0 %v6498
        %v6775 = vpop.f32.mrf.mxu0
        %v6776 = vadd.f32 0.0, %v6775
        %v6777 = vpop.f32.mrf.mxu0
        %6778 = vmatprep.mubr.f32.mxu0 0.0
        %6779 = vmatmul.mubr.f32.gmra.mxu0 %v6501
        %v6780 = vpop.f32.mrf.mxu0
        %v6781 = vadd.f32 0.0, %v6780
        %v6782 = vpop.f32.mrf.mxu0
        %6783 = vmatprep.mubr.f32.mxu0 0.0
        %6784 = vmatmul.mubr.f32.gmra.mxu0 %v6504
        %v6785 = vpop.f32.mrf.mxu0
        %v6786 = vadd.f32 0.0, %v6785
        %v6787 = vpop.f32.mrf.mxu0
        %6788 = vmatprep.mubr.f32.mxu0 0.0
        %6789 = vmatmul.mubr.f32.gmra.mxu0 %v6507
        %v6790 = vpop.f32.mrf.mxu0
        %v6791 = vadd.f32 0.0, %v6790
        %v6792 = vpop.f32.mrf.mxu0
        %6793 = vmatprep.mubr.f32.mxu0 0.0
        %6794 = vmatmul.mubr.f32.gmra.mxu0 %v6510
        %v6795 = vpop.f32.mrf.mxu0
        %v6796 = vadd.f32 0.0, %v6795
        %v6797 = vpop.f32.mrf.mxu0
        %6798 = vmatprep.mubr.f32.mxu0 0.0
        %6799 = vmatmul.mubr.f32.gmra.mxu0 %v6513
        %v6800 = vpop.f32.mrf.mxu0
        %v6801 = vadd.f32 0.0, %v6800
        %v6802 = vpop.f32.mrf.mxu0
        %6803 = vmatprep.mubr.f32.mxu0 0.0
        %6804 = vmatmul.mubr.f32.gmra.mxu0 %v6516
        %v6805 = vpop.f32.mrf.mxu0
        %v6806 = vadd.f32 0.0, %v6805
        %v6807 = vpop.f32.mrf.mxu0
        %6808 = vmatprep.mubr.f32.mxu0 0.0
        %6809 = vmatmul.mubr.f32.gmra.mxu0 %v6519
        %v6810 = vpop.f32.mrf.mxu0
        %v6811 = vadd.f32 0.0, %v6810
        %v6812 = vpop.f32.mrf.mxu0
        %6813 = vmatprep.mubr.f32.mxu0 0.0
        %6814 = vmatmul.mubr.f32.gmra.mxu0 %v6522
        %v6815 = vpop.f32.mrf.mxu0
        %v6816 = vadd.f32 0.0, %v6815
        %v6817 = vpop.f32.mrf.mxu0
        %6818 = vmatprep.mubr.f32.mxu0 0.0
        %6819 = vmatmul.mubr.f32.gmra.mxu0 %v6525
        %v6820 = vpop.f32.mrf.mxu0
        %v6821 = vadd.f32 0.0, %v6820
        %v6822 = vpop.f32.mrf.mxu0
        %6823 = vmatprep.mubr.f32.mxu0 0.0
        %6824 = vmatmul.mubr.f32.gmra.mxu0 %v6528
        %v6825 = vpop.f32.mrf.mxu0
        %v6826 = vadd.f32 0.0, %v6825
        %v6827 = vpop.f32.mrf.mxu0
        %6828 = vmatprep.mubr.f32.mxu0 0.0
        %6829 = vmatmul.mubr.f32.gmra.mxu0 %v6531
        %v6830 = vpop.f32.mrf.mxu0
        %v6831 = vadd.f32 0.0, %v6830
        %v6832 = vpop.f32.mrf.mxu0
        %6833 = vmatprep.mubr.f32.mxu0 0.0
        %6834 = vmatmul.mubr.f32.gmra.mxu0 %v6534
        %v6835 = vpop.f32.mrf.mxu0
        %v6836 = vadd.f32 0.0, %v6835
        %v6837 = vpop.f32.mrf.mxu0
        %6838 = vmatprep.mubr.f32.mxu0 0.0
        %6839 = vmatmul.mubr.f32.gmra.mxu0 %v6537
        %v6840 = vpop.f32.mrf.mxu0
        %v6841 = vadd.f32 0.0, %v6840
        %v6842 = vpop.f32.mrf.mxu0
        %6843 = vmatprep.mubr.f32.mxu0 0.0
        %6844 = vmatmul.mubr.f32.gmra.mxu0 %v6540
        %v6845 = vpop.f32.mrf.mxu0
        %v6846 = vadd.f32 0.0, %v6845
        %v6847 = vpop.f32.mrf.mxu0
        %6848 = vmatprep.mubr.f32.mxu0 0.0
        %6849 = vmatmul.mubr.f32.gmra.mxu0 %v6543
        %v6850 = vpop.f32.mrf.mxu0
        %v6851 = vadd.f32 0.0, %v6850
        %v6852 = vpop.f32.mrf.mxu0
        %6853 = vmatprep.mubr.f32.mxu0 0.0
        %6854 = vmatmul.mubr.f32.gmra.mxu0 %v6546
        %v6855 = vpop.f32.mrf.mxu0
        %v6856 = vadd.f32 0.0, %v6855
        %v6857 = vpop.f32.mrf.mxu0
        %6858 = vmatprep.mubr.f32.mxu0 0.0
        %6859 = vmatmul.mubr.f32.gmra.mxu0 %v6549
        %v6860 = vpop.f32.mrf.mxu0
        %v6861 = vadd.f32 0.0, %v6860
        %v6862 = vpop.f32.mrf.mxu0
        %6863 = vmatprep.mubr.f32.mxu0 0.0
        %6864 = vmatmul.mubr.f32.gmra.mxu0 %v6552
        %v6865 = vpop.f32.mrf.mxu0
        %v6866 = vadd.f32 0.0, %v6865
        %v6867 = vpop.f32.mrf.mxu0
        %6868 = vmatprep.mubr.f32.mxu0 0.0
        %6869 = vmatmul.mubr.f32.gmra.mxu0 %v6555
        %v6870 = vpop.f32.mrf.mxu0
        %v6871 = vadd.f32 0.0, %v6870
        %v6872 = vpop.f32.mrf.mxu0
        %6873 = vmatprep.mubr.f32.mxu0 0.0
        %6874 = vmatmul.mubr.f32.gmra.mxu0 %v6558
        %v6875 = vpop.f32.mrf.mxu0
        %v6876 = vadd.f32 0.0, %v6875
        %v6877 = vpop.f32.mrf.mxu0
        %6878 = vmatprep.mubr.f32.mxu0 0.0
        %6879 = vmatmul.mubr.f32.gmra.mxu0 %v6561
        %v6880 = vpop.f32.mrf.mxu0
        %v6881 = vadd.f32 0.0, %v6880
        %v6882 = vpop.f32.mrf.mxu0
        %6883 = vmatprep.mubr.f32.mxu0 0.0
        %6884 = vmatmul.mubr.f32.gmra.mxu0 %v6564
        %v6885 = vpop.f32.mrf.mxu0
        %v6886 = vadd.f32 0.0, %v6885
        %v6887 = vpop.f32.mrf.mxu0
        %6888 = vmatprep.mubr.f32.mxu0 0.0
        %6889 = vmatmul.mubr.f32.gmra.mxu0 %v6567
        %v6890 = vpop.f32.mrf.mxu0
        %v6891 = vadd.f32 0.0, %v6890
        %v6892 = vpop.f32.mrf.mxu0
        %6893 = vmatprep.mubr.f32.mxu0 0.0
        %6894 = vmatmul.mubr.f32.gmra.mxu0 %v6570
        %v6895 = vpop.f32.mrf.mxu0
        %v6896 = vadd.f32 0.0, %v6895
        %v6897 = vpop.f32.mrf.mxu0
        %6898 = vmatprep.mubr.f32.mxu0 0.0
        %6899 = vmatmul.mubr.f32.gmra.mxu0 %v6573
        %v6900 = vpop.f32.mrf.mxu0
        %v6901 = vadd.f32 0.0, %v6900
        %v6902 = vpop.f32.mrf.mxu0
        %6903 = vmatprep.mubr.f32.mxu0 0.0
        %6904 = vmatmul.mubr.f32.gmra.mxu0 %v6576
        %v6905 = vpop.f32.mrf.mxu0
        %v6906 = vadd.f32 0.0, %v6905
        %v6907 = vpop.f32.mrf.mxu0
        %6908 = vmatprep.mubr.f32.mxu0 0.0
        %6909 = vmatmul.mubr.f32.gmra.mxu0 %v6579
        %v6910 = vpop.f32.mrf.mxu0
        %v6911 = vadd.f32 0.0, %v6910
        %v6912 = vpop.f32.mrf.mxu0
        %6913 = vmatprep.mubr.f32.mxu0 0.0
        %6914 = vmatmul.mubr.f32.gmra.mxu0 %v6582
        %v6915 = vpop.f32.mrf.mxu0
        %v6916 = vadd.f32 0.0, %v6915
        %v6917 = vpop.f32.mrf.mxu0
        %6918 = vmatprep.mubr.f32.mxu0 0.0
        %6919 = vmatmul.mubr.f32.gmra.mxu0 %v6585
        %v6920 = vpop.f32.mrf.mxu0
        %v6921 = vadd.f32 0.0, %v6920
        %v6922 = vpop.f32.mrf.mxu0
        %6923 = vmatprep.mubr.f32.mxu0 0.0
        %6924 = vmatmul.mubr.f32.gmra.mxu0 %v6588
        %v6925 = vpop.f32.mrf.mxu0
        %v6926 = vadd.f32 0.0, %v6925
        %v6927 = vpop.f32.mrf.mxu0
        %6928 = vmatprep.mubr.f32.mxu0 0.0
        %6929 = vmatmul.mubr.f32.gmra.mxu0 %v6591
        %v6930 = vpop.f32.mrf.mxu0
        %v6931 = vadd.f32 0.0, %v6930
        %v6932 = vpop.f32.mrf.mxu0
        %6933 = vmatprep.mubr.f32.mxu0 0.0
        %6934 = vmatmul.mubr.f32.gmra.mxu0 %v6594
        %v6935 = vpop.f32.mrf.mxu0
        %v6936 = vadd.f32 0.0, %v6935
        %v6937 = vpop.f32.mrf.mxu0
        %6938 = vmatprep.mubr.f32.mxu0 0.0
        %6939 = vmatmul.mubr.f32.gmra.mxu0 %v6597
        %v6940 = vpop.f32.mrf.mxu0
        %v6941 = vadd.f32 0.0, %v6940
        %v6942 = vpop.f32.mrf.mxu0
        %6943 = vmatprep.mubr.f32.mxu0 0.0
        %6944 = vmatmul.mubr.f32.gmra.mxu0 %v6600
        %v6945 = vpop.f32.mrf.mxu0
        %v6946 = vadd.f32 0.0, %v6945
        %v6947 = vpop.f32.mrf.mxu0
        %6948 = vmatprep.mubr.f32.mxu0 0.0
        %6949 = vmatmul.mubr.f32.gmra.mxu0 %v6603
        %v6950 = vpop.f32.mrf.mxu0
        %v6951 = vadd.f32 0.0, %v6950
        %v6952 = vpop.f32.mrf.mxu0
        %6953 = vmatprep.mubr.f32.mxu0 0.0
        %6954 = vmatmul.mubr.f32.gmra.mxu0 %v6606
        %v6955 = vpop.f32.mrf.mxu0
        %v6956 = vadd.f32 0.0, %v6955
        %v6957 = vpop.f32.mrf.mxu0
        %6958 = vmatprep.mubr.f32.mxu0 0.0
        %6959 = vmatmul.mubr.f32.gmra.mxu0 %v6609
        %v6960 = vpop.f32.mrf.mxu0
        %v6961 = vadd.f32 0.0, %v6960
        %v6962 = vpop.f32.mrf.mxu0
        %6963 = vmatprep.mubr.f32.mxu0 0.0
        %6964 = vmatmul.mubr.f32.gmra.mxu0 %v6612
        %v6965 = vpop.f32.mrf.mxu0
        %v6966 = vadd.f32 0.0, %v6965
        %v6967 = vpop.f32.mrf.mxu0
        %6968 = vmatprep.mubr.f32.mxu0 0.0
        %6969 = vmatmul.mubr.f32.gmra.mxu0 %v6615
        %v6970 = vpop.f32.mrf.mxu0
        %v6971 = vadd.f32 0.0, %v6970
        %v6972 = vpop.f32.mrf.mxu0
        %6973 = vmatprep.mubr.f32.mxu0 0.0
        %6974 = vmatmul.mubr.f32.gmra.mxu0 %v6618
        %v6975 = vpop.f32.mrf.mxu0
        %v6976 = vadd.f32 0.0, %v6975
        %v6977 = vpop.f32.mrf.mxu0
        %6978 = vmatprep.mubr.f32.mxu0 0.0
        %6979 = vmatmul.mubr.f32.gmra.mxu0 %v6621
        %v6980 = vpop.f32.mrf.mxu0
        %v6981 = vadd.f32 0.0, %v6980
        %v6982 = vpop.f32.mrf.mxu0
        %6983 = vmatprep.mubr.f32.mxu0 0.0
        %6984 = vmatmul.mubr.f32.gmra.mxu0 %v6624
        %v6985 = vpop.f32.mrf.mxu0
        %v6986 = vadd.f32 0.0, %v6985
        %v6987 = vpop.f32.mrf.mxu0
        %6988 = vmatprep.mubr.f32.mxu0 0.0
        %6989 = vmatmul.mubr.f32.gmra.mxu0 %v6627
        %v6990 = vpop.f32.mrf.mxu0
        %v6991 = vadd.f32 0.0, %v6990
        %v6992 = vpop.f32.mrf.mxu0
        %6993 = vmatprep.mubr.f32.mxu0 0.0
        %6994 = vmatmul.mubr.f32.gmra.mxu0 %v6630
        %v6995 = vpop.f32.mrf.mxu0
        %v6996 = vadd.f32 0.0, %v6995
        %v6997 = vpop.f32.mrf.mxu0
        %6998 = vmatprep.mubr.f32.mxu0 0.0
        %6999 = vmatmul.mubr.f32.gmra.mxu0 %v6633
        %v7000 = vpop.f32.mrf.mxu0
        %v7001 = vadd.f32 0.0, %v7000
        %v7002 = vpop.f32.mrf.mxu0
        %7003 = vmatprep.mubr.f32.mxu0 0.0
        %7004 = vmatmul.mubr.f32.gmra.mxu0 %v6636
        %v7005 = vpop.f32.mrf.mxu0
        %v7006 = vadd.f32 0.0, %v7005
        %v7007 = vpop.f32.mrf.mxu0
        %7008 = vmatprep.mubr.f32.mxu0 0.0
        %7009 = vmatmul.mubr.f32.gmra.mxu0 %v6639
        %v7010 = vpop.f32.mrf.mxu0
        %v7011 = vadd.f32 0.0, %v7010
        %v7012 = vpop.f32.mrf.mxu0
        %7013 = vmatprep.mubr.f32.mxu0 0.0
        %7014 = vmatmul.mubr.f32.gmra.mxu0 %v6642
        %v7015 = vpop.f32.mrf.mxu0
        %v7016 = vadd.f32 0.0, %v7015
        %v7017 = vpop.f32.mrf.mxu0
        %7018 = vmatprep.mubr.f32.mxu0 0.0
        %7019 = vmatmul.mubr.f32.gmra.mxu0 %v6645
        %v7020 = vpop.f32.mrf.mxu0
        %v7021 = vadd.f32 0.0, %v7020
        %v7022 = vpop.f32.mrf.mxu0
        %7023 = vmatprep.mubr.f32.mxu0 0.0
        %7024 = vmatmul.mubr.f32.gmra.mxu0 %v6648
        %v7025 = vpop.f32.mrf.mxu0
        %v7026 = vadd.f32 0.0, %v7025
        %v7027 = vpop.f32.mrf.mxu0
        %7028 = vmatprep.mubr.f32.mxu0 0.0
        %7029 = vmatmul.mubr.f32.gmra.mxu0 %v6651
        %v7030 = vpop.f32.mrf.mxu0
        %v7031 = vadd.f32 0.0, %v7030
        %v7032 = vpop.f32.mrf.mxu0
        %7033 = vmatprep.mubr.f32.mxu0 0.0
        %7034 = vmatmul.mubr.f32.gmra.mxu0 %v6654
        %v7035 = vpop.f32.mrf.mxu0
        %v7036 = vadd.f32 0.0, %v7035
        %v7037 = vpop.f32.mrf.mxu0
        %7038 = vmatprep.mubr.f32.mxu0 0.0
        %7039 = vmatmul.mubr.f32.gmra.mxu0 %v6657
        %v7040 = vpop.f32.mrf.mxu0
        %v7041 = vadd.f32 0.0, %v7040
        %v7042 = vpop.f32.mrf.mxu0
        %7043 = vdwg.mxu0
        %v7044 = vmul.f32 %v6149, %v4189
        %v7045 = vmul.f32 %v6154, %v4190
        %v7046 = vmul.f32 %v6159, %v4191
        %v7047 = vmul.f32 %v6164, %v4192
        %v7048 = vmul.f32 %v6169, %v4193
        %v7049 = vmul.f32 %v6174, %v4194
        %v7050 = vmul.f32 %v6179, %v4195
        %v7051 = vmul.f32 %v6184, %v4196
        %v7052 = vmul.f32 %v6189, %v4197
        %v7053 = vmul.f32 %v6194, %v4198
        %v7054 = vmul.f32 %v6199, %v4199
        %v7055 = vmul.f32 %v6204, %v4200
        %v7056 = vmul.f32 %v6209, %v4201
        %v7057 = vmul.f32 %v6214, %v4202
        %v7058 = vmul.f32 %v6219, %v4203
        %v7059 = vmul.f32 %v6224, %v4204
        %v7060 = vmul.f32 %v6229, %v4205
        %v7061 = vmul.f32 %v6234, %v4206
        %v7062 = vmul.f32 %v6239, %v4207
        %v7063 = vmul.f32 %v6244, %v4208
        %v7064 = vmul.f32 %v6249, %v4209
        %v7065 = vmul.f32 %v6254, %v4210
        %v7066 = vmul.f32 %v6259, %v4211
        %v7067 = vmul.f32 %v6264, %v4212
        %v7068 = vmul.f32 %v6269, %v4213
        %v7069 = vmul.f32 %v6274, %v4214
        %v7070 = vmul.f32 %v6279, %v4215
        %v7071 = vmul.f32 %v6284, %v4216
        %v7072 = vmul.f32 %v6289, %v4217
        %v7073 = vmul.f32 %v6294, %v4218
        %v7074 = vmul.f32 %v6299, %v4219
        %v7075 = vmul.f32 %v6304, %v4220
        %v7076 = vmul.f32 %v6309, %v4221
        %v7077 = vmul.f32 %v6314, %v4222
        %v7078 = vmul.f32 %v6319, %v4223
        %v7079 = vmul.f32 %v6324, %v4224
        %v7080 = vmul.f32 %v6329, %v4225
        %v7081 = vmul.f32 %v6334, %v4226
        %v7082 = vmul.f32 %v6339, %v4227
        %v7083 = vmul.f32 %v6344, %v4228
        %v7084 = vmul.f32 %v6349, %v4229
        %v7085 = vmul.f32 %v6354, %v4230
        %v7086 = vmul.f32 %v6359, %v4231
        %v7087 = vmul.f32 %v6364, %v4232
        %v7088 = vmul.f32 %v6369, %v4233
        %v7089 = vmul.f32 %v6374, %v4234
        %v7090 = vmul.f32 %v6379, %v4235
        %v7091 = vmul.f32 %v6384, %v4236
        %v7092 = vmul.f32 %v6389, %v4237
        %v7093 = vmul.f32 %v6394, %v4238
        %v7094 = vmul.f32 %v6399, %v4239
        %v7095 = vmul.f32 %v6404, %v4240
        %v7096 = vmul.f32 %v6409, %v4241
        %v7097 = vmul.f32 %v6414, %v4242
        %v7098 = vmul.f32 %v6419, %v4243
        %v7099 = vmul.f32 %v6424, %v4244
        %v7100 = vmul.f32 %v6429, %v4245
        %v7101 = vmul.f32 %v6434, %v4246
        %v7102 = vmul.f32 %v6439, %v4247
        %v7103 = vmul.f32 %v6444, %v4248
        %v7104 = vmul.f32 %v6449, %v4249
        %v7105 = vmul.f32 %v6454, %v4250
        %v7106 = vmul.f32 %v6459, %v4251
        %v7107 = vmul.f32 %v6464, %v4252
        %v7108 = vmul.f32 %v6726, %v4402
        %v7109 = vmul.f32 %v6731, %v4407
        %v7110 = vmul.f32 %v6736, %v4412
        %v7111 = vmul.f32 %v6741, %v4417
        %v7112 = vmul.f32 %v6746, %v4422
        %v7113 = vmul.f32 %v6751, %v4427
        %v7114 = vmul.f32 %v6756, %v4432
        %v7115 = vmul.f32 %v6761, %v4437
        %v7116 = vmul.f32 %v6766, %v4442
        %v7117 = vmul.f32 %v6771, %v4447
        %v7118 = vmul.f32 %v6776, %v4452
        %v7119 = vmul.f32 %v6781, %v4457
        %v7120 = vmul.f32 %v6786, %v4462
        %v7121 = vmul.f32 %v6791, %v4467
        %v7122 = vmul.f32 %v6796, %v4472
        %v7123 = vmul.f32 %v6801, %v4477
        %v7124 = vmul.f32 %v6806, %v4482
        %v7125 = vmul.f32 %v6811, %v4487
        %v7126 = vmul.f32 %v6816, %v4492
        %v7127 = vmul.f32 %v6821, %v4497
        %v7128 = vmul.f32 %v6826, %v4502
        %v7129 = vmul.f32 %v6831, %v4507
        %v7130 = vmul.f32 %v6836, %v4512
        %v7131 = vmul.f32 %v6841, %v4517
        %v7132 = vmul.f32 %v6846, %v4522
        %v7133 = vmul.f32 %v6851, %v4527
        %v7134 = vmul.f32 %v6856, %v4532
        %v7135 = vmul.f32 %v6861, %v4537
        %v7136 = vmul.f32 %v6866, %v4542
        %v7137 = vmul.f32 %v6871, %v4547
        %v7138 = vmul.f32 %v6876, %v4552
        %v7139 = vmul.f32 %v6881, %v4557
        %v7140 = vmul.f32 %v6886, %v4562
        %v7141 = vmul.f32 %v6891, %v4567
        %v7142 = vmul.f32 %v6896, %v4572
        %v7143 = vmul.f32 %v6901, %v4577
        %v7144 = vmul.f32 %v6906, %v4582
        %v7145 = vmul.f32 %v6911, %v4587
        %v7146 = vmul.f32 %v6916, %v4592
        %v7147 = vmul.f32 %v6921, %v4597
        %v7148 = vmul.f32 %v6926, %v4602
        %v7149 = vmul.f32 %v6931, %v4607
        %v7150 = vmul.f32 %v6936, %v4612
        %v7151 = vmul.f32 %v6941, %v4617
        %v7152 = vmul.f32 %v6946, %v4622
        %v7153 = vmul.f32 %v6951, %v4627
        %v7154 = vmul.f32 %v6956, %v4632
        %v7155 = vmul.f32 %v6961, %v4637
        %v7156 = vmul.f32 %v6966, %v4642
        %v7157 = vmul.f32 %v6971, %v4647
        %v7158 = vmul.f32 %v6976, %v4652
        %v7159 = vmul.f32 %v6981, %v4657
        %v7160 = vmul.f32 %v6986, %v4662
        %v7161 = vmul.f32 %v6991, %v4667
        %v7162 = vmul.f32 %v6996, %v4672
        %v7163 = vmul.f32 %v7001, %v4677
        %v7164 = vmul.f32 %v7006, %v4682
        %v7165 = vmul.f32 %v7011, %v4687
        %v7166 = vmul.f32 %v7016, %v4692
        %v7167 = vmul.f32 %v7021, %v4697
        %v7168 = vmul.f32 %v7026, %v4702
        %v7169 = vmul.f32 %v7031, %v4707
        %v7170 = vmul.f32 %v7036, %v4712
        %v7171 = vmul.f32 %v7041, %v4717
        %v7172 = vadd.f32 %v7044, %v7108
        %v7173 = vadd.f32 %v7045, %v7109
        %v7174 = vadd.f32 %v7046, %v7110
        %v7175 = vadd.f32 %v7047, %v7111
        %v7176 = vadd.f32 %v7048, %v7112
        %v7177 = vadd.f32 %v7049, %v7113
        %v7178 = vadd.f32 %v7050, %v7114
        %v7179 = vadd.f32 %v7051, %v7115
        %v7180 = vadd.f32 %v7052, %v7116
        %v7181 = vadd.f32 %v7053, %v7117
        %v7182 = vadd.f32 %v7054, %v7118
        %v7183 = vadd.f32 %v7055, %v7119
        %v7184 = vadd.f32 %v7056, %v7120
        %v7185 = vadd.f32 %v7057, %v7121
        %v7186 = vadd.f32 %v7058, %v7122
        %v7187 = vadd.f32 %v7059, %v7123
        %v7188 = vadd.f32 %v7060, %v7124
        %v7189 = vadd.f32 %v7061, %v7125
        %v7190 = vadd.f32 %v7062, %v7126
        %v7191 = vadd.f32 %v7063, %v7127
        %v7192 = vadd.f32 %v7064, %v7128
        %v7193 = vadd.f32 %v7065, %v7129
        %v7194 = vadd.f32 %v7066, %v7130
        %v7195 = vadd.f32 %v7067, %v7131
        %v7196 = vadd.f32 %v7068, %v7132
        %v7197 = vadd.f32 %v7069, %v7133
        %v7198 = vadd.f32 %v7070, %v7134
        %v7199 = vadd.f32 %v7071, %v7135
        %v7200 = vadd.f32 %v7072, %v7136
        %v7201 = vadd.f32 %v7073, %v7137
        %v7202 = vadd.f32 %v7074, %v7138
        %v7203 = vadd.f32 %v7075, %v7139
        %v7204 = vadd.f32 %v7076, %v7140
        %v7205 = vadd.f32 %v7077, %v7141
        %v7206 = vadd.f32 %v7078, %v7142
        %v7207 = vadd.f32 %v7079, %v7143
        %v7208 = vadd.f32 %v7080, %v7144
        %v7209 = vadd.f32 %v7081, %v7145
        %v7210 = vadd.f32 %v7082, %v7146
        %v7211 = vadd.f32 %v7083, %v7147
        %v7212 = vadd.f32 %v7084, %v7148
        %v7213 = vadd.f32 %v7085, %v7149
        %v7214 = vadd.f32 %v7086, %v7150
        %v7215 = vadd.f32 %v7087, %v7151
        %v7216 = vadd.f32 %v7088, %v7152
        %v7217 = vadd.f32 %v7089, %v7153
        %v7218 = vadd.f32 %v7090, %v7154
        %v7219 = vadd.f32 %v7091, %v7155
        %v7220 = vadd.f32 %v7092, %v7156
        %v7221 = vadd.f32 %v7093, %v7157
        %v7222 = vadd.f32 %v7094, %v7158
        %v7223 = vadd.f32 %v7095, %v7159
        %v7224 = vadd.f32 %v7096, %v7160
        %v7225 = vadd.f32 %v7097, %v7161
        %v7226 = vadd.f32 %v7098, %v7162
        %v7227 = vadd.f32 %v7099, %v7163
        %v7228 = vadd.f32 %v7100, %v7164
        %v7229 = vadd.f32 %v7101, %v7165
        %v7230 = vadd.f32 %v7102, %v7166
        %v7231 = vadd.f32 %v7103, %v7167
        %v7232 = vadd.f32 %v7104, %v7168
        %v7233 = vadd.f32 %v7105, %v7169
        %v7234 = vadd.f32 %v7106, %v7170
        %v7235 = vadd.f32 %v7107, %v7171
        %v7236 = vrcp.pop %v5826
        %v7237 = vrcp.pop %v5827
        %v7238 = vrcp.pop %v5828
        %v7239 = vrcp.pop %v5829
        %v7240 = vrcp.pop %v5830
        %v7241 = vrcp.pop %v5831
        %v7242 = vrcp.pop %v5832
        %v7243 = vrcp.pop %v5833
        %v7244 = vrcp.pop %v5834
        %v7245 = vrcp.pop %v5835
        %v7246 = vrcp.pop %v5836
        %v7247 = vrcp.pop %v5837
        %v7248 = vrcp.pop %v5838
        %v7249 = vrcp.pop %v5839
        %v7250 = vrcp.pop %v5840
        %v7251 = vrcp.pop %v5841
        %v7252 = vrcp.pop %v5842
        %v7253 = vrcp.pop %v5843
        %v7254 = vrcp.pop %v5844
        %v7255 = vrcp.pop %v5845
        %v7256 = vrcp.pop %v5846
        %v7257 = vrcp.pop %v5847
        %v7258 = vrcp.pop %v5848
        %v7259 = vrcp.pop %v5849
        %v7260 = vrcp.pop %v5850
        %v7261 = vrcp.pop %v5851
        %v7262 = vrcp.pop %v5852
        %v7263 = vrcp.pop %v5853
        %v7264 = vrcp.pop %v5854
        %v7265 = vrcp.pop %v5855
        %v7266 = vrcp.pop %v5856
        %v7267 = vrcp.pop %v5857
        %v7268 = vrcp.pop %v5858
        %v7269 = vrcp.pop %v5859
        %v7270 = vrcp.pop %v5860
        %v7271 = vrcp.pop %v5861
        %v7272 = vrcp.pop %v5862
        %v7273 = vrcp.pop %v5863
        %v7274 = vrcp.pop %v5864
        %v7275 = vrcp.pop %v5865
        %v7276 = vrcp.pop %v5866
        %v7277 = vrcp.pop %v5867
        %v7278 = vrcp.pop %v5868
        %v7279 = vrcp.pop %v5869
        %v7280 = vrcp.pop %v5870
        %v7281 = vrcp.pop %v5871
        %v7282 = vrcp.pop %v5872
        %v7283 = vrcp.pop %v5873
        %v7284 = vrcp.pop %v5874
        %v7285 = vrcp.pop %v5875
        %v7286 = vrcp.pop %v5876
        %v7287 = vrcp.pop %v5877
        %v7288 = vrcp.pop %v5878
        %v7289 = vrcp.pop %v5879
        %v7290 = vrcp.pop %v5880
        %v7291 = vrcp.pop %v5881
        %v7292 = vrcp.pop %v5882
        %v7293 = vrcp.pop %v5883
        %v7294 = vrcp.pop %v5884
        %v7295 = vrcp.pop %v5885
        %v7296 = vrcp.pop %v5886
        %v7297 = vrcp.pop %v5887
        %v7298 = vrcp.pop %v5888
        %v7299 = vrcp.pop %v5889
        %v7301 = vsel %vm2902, %v7236, 0
        %v7304 = vsel %vm2902, %v7237, 0
        %v7307 = vsel %vm2902, %v7238, 0
        %v7310 = vsel %vm2902, %v7239, 0
        %v7313 = vsel %vm2902, %v7240, 0
        %v7316 = vsel %vm2902, %v7241, 0
        %v7319 = vsel %vm2902, %v7242, 0
        %v7322 = vsel %vm2902, %v7243, 0
        %v7325 = vsel %vm2902, %v7244, 0
        %v7328 = vsel %vm2902, %v7245, 0
        %v7331 = vsel %vm2902, %v7246, 0
        %v7334 = vsel %vm2902, %v7247, 0
        %v7337 = vsel %vm2902, %v7248, 0
        %v7340 = vsel %vm2902, %v7249, 0
        %v7343 = vsel %vm2902, %v7250, 0
        %v7346 = vsel %vm2902, %v7251, 0
        %v7349 = vsel %vm2902, %v7252, 0
        %v7352 = vsel %vm2902, %v7253, 0
        %v7355 = vsel %vm2902, %v7254, 0
        %v7358 = vsel %vm2902, %v7255, 0
        %v7361 = vsel %vm2902, %v7256, 0
        %v7364 = vsel %vm2902, %v7257, 0
        %v7367 = vsel %vm2902, %v7258, 0
        %v7370 = vsel %vm2902, %v7259, 0
        %v7373 = vsel %vm2902, %v7260, 0
        %v7376 = vsel %vm2902, %v7261, 0
        %v7379 = vsel %vm2902, %v7262, 0
        %v7382 = vsel %vm2902, %v7263, 0
        %v7385 = vsel %vm2902, %v7264, 0
        %v7388 = vsel %vm2902, %v7265, 0
        %v7391 = vsel %vm2902, %v7266, 0
        %v7394 = vsel %vm2902, %v7267, 0
        %v7397 = vsel %vm2902, %v7268, 0
        %v7400 = vsel %vm2902, %v7269, 0
        %v7403 = vsel %vm2902, %v7270, 0
        %v7406 = vsel %vm2902, %v7271, 0
        %v7409 = vsel %vm2902, %v7272, 0
        %v7412 = vsel %vm2902, %v7273, 0
        %v7415 = vsel %vm2902, %v7274, 0
        %v7418 = vsel %vm2902, %v7275, 0
        %v7421 = vsel %vm2902, %v7276, 0
        %v7424 = vsel %vm2902, %v7277, 0
        %v7427 = vsel %vm2902, %v7278, 0
        %v7430 = vsel %vm2902, %v7279, 0
        %v7433 = vsel %vm2902, %v7280, 0
        %v7436 = vsel %vm2902, %v7281, 0
        %v7439 = vsel %vm2902, %v7282, 0
        %v7442 = vsel %vm2902, %v7283, 0
        %v7445 = vsel %vm2902, %v7284, 0
        %v7448 = vsel %vm2902, %v7285, 0
        %v7451 = vsel %vm2902, %v7286, 0
        %v7454 = vsel %vm2902, %v7287, 0
        %v7457 = vsel %vm2902, %v7288, 0
        %v7460 = vsel %vm2902, %v7289, 0
        %v7463 = vsel %vm2902, %v7290, 0
        %v7466 = vsel %vm2902, %v7291, 0
        %v7469 = vsel %vm2902, %v7292, 0
        %v7472 = vsel %vm2902, %v7293, 0
        %v7475 = vsel %vm2902, %v7294, 0
        %v7478 = vsel %vm2902, %v7295, 0
        %v7481 = vsel %vm2902, %v7296, 0
        %v7484 = vsel %vm2902, %v7297, 0
        %v7487 = vsel %vm2902, %v7298, 0
        %v7490 = vsel %vm2902, %v7299, 0
        %7492 = vmatprep.subr.mxu0 0.0
        %7493 = vmatpush1.msra.mxu0 0.0
        %7494 = vmatprep.subr.mxu0 0.0
        %7495 = vmatpush1.msra.mxu0 0.0
        %7496 = vmatprep.subr.mxu0 0.0
        %7497 = vmatpush1.msra.mxu0 0.0
        %7498 = vmatprep.subr.mxu0 0.0
        %7499 = vmatpush1.msra.mxu0 0.0
        %7500 = vmatprep.subr.mxu0 0.0
        %7501 = vmatpush1.msra.mxu0 0.0
        %7502 = vmatprep.subr.mxu0 0.0
        %7503 = vmatpush1.msra.mxu0 0.0
        %7504 = vmatprep.subr.mxu0 0.0
        %7505 = vmatpush1.msra.mxu0 0.0
        %7506 = vmatprep.subr.mxu0 0.0
        %7507 = vmatpush1.msra.mxu0 0.0
        %7508 = vmatprep.subr.mxu0 0.0
        %7509 = vmatpush1.msra.mxu0 0.0
        %7510 = vmatprep.subr.mxu0 0.0
        %7511 = vmatpush1.msra.mxu0 0.0
        %7512 = vmatprep.subr.mxu0 0.0
        %7513 = vmatpush1.msra.mxu0 0.0
        %7514 = vmatprep.subr.mxu0 0.0
        %7515 = vmatpush1.msra.mxu0 0.0
        %7516 = vmatprep.subr.mxu0 0.0
        %7517 = vmatpush1.msra.mxu0 0.0
        %7518 = vmatprep.subr.mxu0 0.0
        %7519 = vmatpush1.msra.mxu0 0.0
        %7520 = vmatprep.subr.mxu0 0.0
        %7521 = vmatpush1.msra.mxu0 0.0
        %7522 = vmatprep.subr.mxu0 0.0
        %7523 = vmatpush1.msra.mxu0 %v3097
        %7524 = vmatprep.subr.mxu0 0.0
        %7525 = vmatpush2.msra.mxu0 0.0
        %7526 = vmatprep.subr.mxu0 0.0
        %7527 = vmatpush2.msra.mxu0 0.0
        %7528 = vmatprep.subr.mxu0 0.0
        %7529 = vmatpush2.msra.mxu0 0.0
        %7530 = vmatprep.subr.mxu0 0.0
        %7531 = vmatpush2.msra.mxu0 0.0
        %7532 = vmatprep.subr.mxu0 0.0
        %7533 = vmatpush2.msra.mxu0 0.0
        %7534 = vmatprep.subr.mxu0 0.0
        %7535 = vmatpush2.msra.mxu0 0.0
        %7536 = vmatprep.subr.mxu0 0.0
        %7537 = vmatpush2.msra.mxu0 0.0
        %7538 = vmatprep.subr.mxu0 0.0
        %7539 = vmatpush2.msra.mxu0 0.0
        %7540 = vmatprep.subr.mxu0 0.0
        %7541 = vmatpush2.msra.mxu0 0.0
        %7542 = vmatprep.subr.mxu0 0.0
        %7543 = vmatpush2.msra.mxu0 0.0
        %7544 = vmatprep.subr.mxu0 0.0
        %7545 = vmatpush2.msra.mxu0 0.0
        %7546 = vmatprep.subr.mxu0 0.0
        %7547 = vmatpush2.msra.mxu0 0.0
        %7548 = vmatprep.subr.mxu0 0.0
        %7549 = vmatpush2.msra.mxu0 0.0
        %7550 = vmatprep.subr.mxu0 0.0
        %7551 = vmatpush2.msra.mxu0 0.0
        %7552 = vmatprep.subr.mxu0 0.0
        %7553 = vmatpush2.msra.mxu0 0.0
        %7554 = vmatprep.subr.mxu0 0.0
        %7555 = vmatpush2.msra.mxu0 0.0
        %7556 = vmatprep.mubr.f32.mxu0 0.0
        %7557 = vmatmul.mubr.f32.gmra.mxu0 %v7301
        %v7558 = vpop.f32.mrf.mxu0
        %v7559 = vadd.f32 0.0, %v7558
        %v7560 = vpop.f32.mrf.mxu0
        %7561 = vmatprep.mubr.f32.mxu0 0.0
        %7562 = vmatmul.mubr.f32.gmra.mxu0 %v7304
        %v7563 = vpop.f32.mrf.mxu0
        %v7564 = vadd.f32 0.0, %v7563
        %v7565 = vpop.f32.mrf.mxu0
        %7566 = vmatprep.mubr.f32.mxu0 0.0
        %7567 = vmatmul.mubr.f32.gmra.mxu0 %v7307
        %v7568 = vpop.f32.mrf.mxu0
        %v7569 = vadd.f32 0.0, %v7568
        %v7570 = vpop.f32.mrf.mxu0
        %7571 = vmatprep.mubr.f32.mxu0 0.0
        %7572 = vmatmul.mubr.f32.gmra.mxu0 %v7310
        %v7573 = vpop.f32.mrf.mxu0
        %v7574 = vadd.f32 0.0, %v7573
        %v7575 = vpop.f32.mrf.mxu0
        %7576 = vmatprep.mubr.f32.mxu0 0.0
        %7577 = vmatmul.mubr.f32.gmra.mxu0 %v7313
        %v7578 = vpop.f32.mrf.mxu0
        %v7579 = vadd.f32 0.0, %v7578
        %v7580 = vpop.f32.mrf.mxu0
        %7581 = vmatprep.mubr.f32.mxu0 0.0
        %7582 = vmatmul.mubr.f32.gmra.mxu0 %v7316
        %v7583 = vpop.f32.mrf.mxu0
        %v7584 = vadd.f32 0.0, %v7583
        %v7585 = vpop.f32.mrf.mxu0
        %7586 = vmatprep.mubr.f32.mxu0 0.0
        %7587 = vmatmul.mubr.f32.gmra.mxu0 %v7319
        %v7588 = vpop.f32.mrf.mxu0
        %v7589 = vadd.f32 0.0, %v7588
        %v7590 = vpop.f32.mrf.mxu0
        %7591 = vmatprep.mubr.f32.mxu0 0.0
        %7592 = vmatmul.mubr.f32.gmra.mxu0 %v7322
        %v7593 = vpop.f32.mrf.mxu0
        %v7594 = vadd.f32 0.0, %v7593
        %v7595 = vpop.f32.mrf.mxu0
        %7596 = vmatprep.mubr.f32.mxu0 0.0
        %7597 = vmatmul.mubr.f32.gmra.mxu0 %v7325
        %v7598 = vpop.f32.mrf.mxu0
        %v7599 = vadd.f32 0.0, %v7598
        %v7600 = vpop.f32.mrf.mxu0
        %7601 = vmatprep.mubr.f32.mxu0 0.0
        %7602 = vmatmul.mubr.f32.gmra.mxu0 %v7328
        %v7603 = vpop.f32.mrf.mxu0
        %v7604 = vadd.f32 0.0, %v7603
        %v7605 = vpop.f32.mrf.mxu0
        %7606 = vmatprep.mubr.f32.mxu0 0.0
        %7607 = vmatmul.mubr.f32.gmra.mxu0 %v7331
        %v7608 = vpop.f32.mrf.mxu0
        %v7609 = vadd.f32 0.0, %v7608
        %v7610 = vpop.f32.mrf.mxu0
        %7611 = vmatprep.mubr.f32.mxu0 0.0
        %7612 = vmatmul.mubr.f32.gmra.mxu0 %v7334
        %v7613 = vpop.f32.mrf.mxu0
        %v7614 = vadd.f32 0.0, %v7613
        %v7615 = vpop.f32.mrf.mxu0
        %7616 = vmatprep.mubr.f32.mxu0 0.0
        %7617 = vmatmul.mubr.f32.gmra.mxu0 %v7337
        %v7618 = vpop.f32.mrf.mxu0
        %v7619 = vadd.f32 0.0, %v7618
        %v7620 = vpop.f32.mrf.mxu0
        %7621 = vmatprep.mubr.f32.mxu0 0.0
        %7622 = vmatmul.mubr.f32.gmra.mxu0 %v7340
        %v7623 = vpop.f32.mrf.mxu0
        %v7624 = vadd.f32 0.0, %v7623
        %v7625 = vpop.f32.mrf.mxu0
        %7626 = vmatprep.mubr.f32.mxu0 0.0
        %7627 = vmatmul.mubr.f32.gmra.mxu0 %v7343
        %v7628 = vpop.f32.mrf.mxu0
        %v7629 = vadd.f32 0.0, %v7628
        %v7630 = vpop.f32.mrf.mxu0
        %7631 = vmatprep.mubr.f32.mxu0 0.0
        %7632 = vmatmul.mubr.f32.gmra.mxu0 %v7346
        %v7633 = vpop.f32.mrf.mxu0
        %v7634 = vadd.f32 0.0, %v7633
        %v7635 = vpop.f32.mrf.mxu0
        %7636 = vmatprep.mubr.f32.mxu0 0.0
        %7637 = vmatmul.mubr.f32.gmra.mxu0 %v7349
        %v7638 = vpop.f32.mrf.mxu0
        %v7639 = vadd.f32 0.0, %v7638
        %v7640 = vpop.f32.mrf.mxu0
        %7641 = vmatprep.mubr.f32.mxu0 0.0
        %7642 = vmatmul.mubr.f32.gmra.mxu0 %v7352
        %v7643 = vpop.f32.mrf.mxu0
        %v7644 = vadd.f32 0.0, %v7643
        %v7645 = vpop.f32.mrf.mxu0
        %7646 = vmatprep.mubr.f32.mxu0 0.0
        %7647 = vmatmul.mubr.f32.gmra.mxu0 %v7355
        %v7648 = vpop.f32.mrf.mxu0
        %v7649 = vadd.f32 0.0, %v7648
        %v7650 = vpop.f32.mrf.mxu0
        %7651 = vmatprep.mubr.f32.mxu0 0.0
        %7652 = vmatmul.mubr.f32.gmra.mxu0 %v7358
        %v7653 = vpop.f32.mrf.mxu0
        %v7654 = vadd.f32 0.0, %v7653
        %v7655 = vpop.f32.mrf.mxu0
        %7656 = vmatprep.mubr.f32.mxu0 0.0
        %7657 = vmatmul.mubr.f32.gmra.mxu0 %v7361
        %v7658 = vpop.f32.mrf.mxu0
        %v7659 = vadd.f32 0.0, %v7658
        %v7660 = vpop.f32.mrf.mxu0
        %7661 = vmatprep.mubr.f32.mxu0 0.0
        %7662 = vmatmul.mubr.f32.gmra.mxu0 %v7364
        %v7663 = vpop.f32.mrf.mxu0
        %v7664 = vadd.f32 0.0, %v7663
        %v7665 = vpop.f32.mrf.mxu0
        %7666 = vmatprep.mubr.f32.mxu0 0.0
        %7667 = vmatmul.mubr.f32.gmra.mxu0 %v7367
        %v7668 = vpop.f32.mrf.mxu0
        %v7669 = vadd.f32 0.0, %v7668
        %v7670 = vpop.f32.mrf.mxu0
        %7671 = vmatprep.mubr.f32.mxu0 0.0
        %7672 = vmatmul.mubr.f32.gmra.mxu0 %v7370
        %v7673 = vpop.f32.mrf.mxu0
        %v7674 = vadd.f32 0.0, %v7673
        %v7675 = vpop.f32.mrf.mxu0
        %7676 = vmatprep.mubr.f32.mxu0 0.0
        %7677 = vmatmul.mubr.f32.gmra.mxu0 %v7373
        %v7678 = vpop.f32.mrf.mxu0
        %v7679 = vadd.f32 0.0, %v7678
        %v7680 = vpop.f32.mrf.mxu0
        %7681 = vmatprep.mubr.f32.mxu0 0.0
        %7682 = vmatmul.mubr.f32.gmra.mxu0 %v7376
        %v7683 = vpop.f32.mrf.mxu0
        %v7684 = vadd.f32 0.0, %v7683
        %v7685 = vpop.f32.mrf.mxu0
        %7686 = vmatprep.mubr.f32.mxu0 0.0
        %7687 = vmatmul.mubr.f32.gmra.mxu0 %v7379
        %v7688 = vpop.f32.mrf.mxu0
        %v7689 = vadd.f32 0.0, %v7688
        %v7690 = vpop.f32.mrf.mxu0
        %7691 = vmatprep.mubr.f32.mxu0 0.0
        %7692 = vmatmul.mubr.f32.gmra.mxu0 %v7382
        %v7693 = vpop.f32.mrf.mxu0
        %v7694 = vadd.f32 0.0, %v7693
        %v7695 = vpop.f32.mrf.mxu0
        %7696 = vmatprep.mubr.f32.mxu0 0.0
        %7697 = vmatmul.mubr.f32.gmra.mxu0 %v7385
        %v7698 = vpop.f32.mrf.mxu0
        %v7699 = vadd.f32 0.0, %v7698
        %v7700 = vpop.f32.mrf.mxu0
        %7701 = vmatprep.mubr.f32.mxu0 0.0
        %7702 = vmatmul.mubr.f32.gmra.mxu0 %v7388
        %v7703 = vpop.f32.mrf.mxu0
        %v7704 = vadd.f32 0.0, %v7703
        %v7705 = vpop.f32.mrf.mxu0
        %7706 = vmatprep.mubr.f32.mxu0 0.0
        %7707 = vmatmul.mubr.f32.gmra.mxu0 %v7391
        %v7708 = vpop.f32.mrf.mxu0
        %v7709 = vadd.f32 0.0, %v7708
        %v7710 = vpop.f32.mrf.mxu0
        %7711 = vmatprep.mubr.f32.mxu0 0.0
        %7712 = vmatmul.mubr.f32.gmra.mxu0 %v7394
        %v7713 = vpop.f32.mrf.mxu0
        %v7714 = vadd.f32 0.0, %v7713
        %v7715 = vpop.f32.mrf.mxu0
        %7716 = vmatprep.mubr.f32.mxu0 0.0
        %7717 = vmatmul.mubr.f32.gmra.mxu0 %v7397
        %v7718 = vpop.f32.mrf.mxu0
        %v7719 = vadd.f32 0.0, %v7718
        %v7720 = vpop.f32.mrf.mxu0
        %7721 = vmatprep.mubr.f32.mxu0 0.0
        %7722 = vmatmul.mubr.f32.gmra.mxu0 %v7400
        %v7723 = vpop.f32.mrf.mxu0
        %v7724 = vadd.f32 0.0, %v7723
        %v7725 = vpop.f32.mrf.mxu0
        %7726 = vmatprep.mubr.f32.mxu0 0.0
        %7727 = vmatmul.mubr.f32.gmra.mxu0 %v7403
        %v7728 = vpop.f32.mrf.mxu0
        %v7729 = vadd.f32 0.0, %v7728
        %v7730 = vpop.f32.mrf.mxu0
        %7731 = vmatprep.mubr.f32.mxu0 0.0
        %7732 = vmatmul.mubr.f32.gmra.mxu0 %v7406
        %v7733 = vpop.f32.mrf.mxu0
        %v7734 = vadd.f32 0.0, %v7733
        %v7735 = vpop.f32.mrf.mxu0
        %7736 = vmatprep.mubr.f32.mxu0 0.0
        %7737 = vmatmul.mubr.f32.gmra.mxu0 %v7409
        %v7738 = vpop.f32.mrf.mxu0
        %v7739 = vadd.f32 0.0, %v7738
        %v7740 = vpop.f32.mrf.mxu0
        %7741 = vmatprep.mubr.f32.mxu0 0.0
        %7742 = vmatmul.mubr.f32.gmra.mxu0 %v7412
        %v7743 = vpop.f32.mrf.mxu0
        %v7744 = vadd.f32 0.0, %v7743
        %v7745 = vpop.f32.mrf.mxu0
        %7746 = vmatprep.mubr.f32.mxu0 0.0
        %7747 = vmatmul.mubr.f32.gmra.mxu0 %v7415
        %v7748 = vpop.f32.mrf.mxu0
        %v7749 = vadd.f32 0.0, %v7748
        %v7750 = vpop.f32.mrf.mxu0
        %7751 = vmatprep.mubr.f32.mxu0 0.0
        %7752 = vmatmul.mubr.f32.gmra.mxu0 %v7418
        %v7753 = vpop.f32.mrf.mxu0
        %v7754 = vadd.f32 0.0, %v7753
        %v7755 = vpop.f32.mrf.mxu0
        %7756 = vmatprep.mubr.f32.mxu0 0.0
        %7757 = vmatmul.mubr.f32.gmra.mxu0 %v7421
        %v7758 = vpop.f32.mrf.mxu0
        %v7759 = vadd.f32 0.0, %v7758
        %v7760 = vpop.f32.mrf.mxu0
        %7761 = vmatprep.mubr.f32.mxu0 0.0
        %7762 = vmatmul.mubr.f32.gmra.mxu0 %v7424
        %v7763 = vpop.f32.mrf.mxu0
        %v7764 = vadd.f32 0.0, %v7763
        %v7765 = vpop.f32.mrf.mxu0
        %7766 = vmatprep.mubr.f32.mxu0 0.0
        %7767 = vmatmul.mubr.f32.gmra.mxu0 %v7427
        %v7768 = vpop.f32.mrf.mxu0
        %v7769 = vadd.f32 0.0, %v7768
        %v7770 = vpop.f32.mrf.mxu0
        %7771 = vmatprep.mubr.f32.mxu0 0.0
        %7772 = vmatmul.mubr.f32.gmra.mxu0 %v7430
        %v7773 = vpop.f32.mrf.mxu0
        %v7774 = vadd.f32 0.0, %v7773
        %v7775 = vpop.f32.mrf.mxu0
        %7776 = vmatprep.mubr.f32.mxu0 0.0
        %7777 = vmatmul.mubr.f32.gmra.mxu0 %v7433
        %v7778 = vpop.f32.mrf.mxu0
        %v7779 = vadd.f32 0.0, %v7778
        %v7780 = vpop.f32.mrf.mxu0
        %7781 = vmatprep.mubr.f32.mxu0 0.0
        %7782 = vmatmul.mubr.f32.gmra.mxu0 %v7436
        %v7783 = vpop.f32.mrf.mxu0
        %v7784 = vadd.f32 0.0, %v7783
        %v7785 = vpop.f32.mrf.mxu0
        %7786 = vmatprep.mubr.f32.mxu0 0.0
        %7787 = vmatmul.mubr.f32.gmra.mxu0 %v7439
        %v7788 = vpop.f32.mrf.mxu0
        %v7789 = vadd.f32 0.0, %v7788
        %v7790 = vpop.f32.mrf.mxu0
        %7791 = vmatprep.mubr.f32.mxu0 0.0
        %7792 = vmatmul.mubr.f32.gmra.mxu0 %v7442
        %v7793 = vpop.f32.mrf.mxu0
        %v7794 = vadd.f32 0.0, %v7793
        %v7795 = vpop.f32.mrf.mxu0
        %7796 = vmatprep.mubr.f32.mxu0 0.0
        %7797 = vmatmul.mubr.f32.gmra.mxu0 %v7445
        %v7798 = vpop.f32.mrf.mxu0
        %v7799 = vadd.f32 0.0, %v7798
        %v7800 = vpop.f32.mrf.mxu0
        %7801 = vmatprep.mubr.f32.mxu0 0.0
        %7802 = vmatmul.mubr.f32.gmra.mxu0 %v7448
        %v7803 = vpop.f32.mrf.mxu0
        %v7804 = vadd.f32 0.0, %v7803
        %v7805 = vpop.f32.mrf.mxu0
        %7806 = vmatprep.mubr.f32.mxu0 0.0
        %7807 = vmatmul.mubr.f32.gmra.mxu0 %v7451
        %v7808 = vpop.f32.mrf.mxu0
        %v7809 = vadd.f32 0.0, %v7808
        %v7810 = vpop.f32.mrf.mxu0
        %7811 = vmatprep.mubr.f32.mxu0 0.0
        %7812 = vmatmul.mubr.f32.gmra.mxu0 %v7454
        %v7813 = vpop.f32.mrf.mxu0
        %v7814 = vadd.f32 0.0, %v7813
        %v7815 = vpop.f32.mrf.mxu0
        %7816 = vmatprep.mubr.f32.mxu0 0.0
        %7817 = vmatmul.mubr.f32.gmra.mxu0 %v7457
        %v7818 = vpop.f32.mrf.mxu0
        %v7819 = vadd.f32 0.0, %v7818
        %v7820 = vpop.f32.mrf.mxu0
        %7821 = vmatprep.mubr.f32.mxu0 0.0
        %7822 = vmatmul.mubr.f32.gmra.mxu0 %v7460
        %v7823 = vpop.f32.mrf.mxu0
        %v7824 = vadd.f32 0.0, %v7823
        %v7825 = vpop.f32.mrf.mxu0
        %7826 = vmatprep.mubr.f32.mxu0 0.0
        %7827 = vmatmul.mubr.f32.gmra.mxu0 %v7463
        %v7828 = vpop.f32.mrf.mxu0
        %v7829 = vadd.f32 0.0, %v7828
        %v7830 = vpop.f32.mrf.mxu0
        %7831 = vmatprep.mubr.f32.mxu0 0.0
        %7832 = vmatmul.mubr.f32.gmra.mxu0 %v7466
        %v7833 = vpop.f32.mrf.mxu0
        %v7834 = vadd.f32 0.0, %v7833
        %v7835 = vpop.f32.mrf.mxu0
        %7836 = vmatprep.mubr.f32.mxu0 0.0
        %7837 = vmatmul.mubr.f32.gmra.mxu0 %v7469
        %v7838 = vpop.f32.mrf.mxu0
        %v7839 = vadd.f32 0.0, %v7838
        %v7840 = vpop.f32.mrf.mxu0
        %7841 = vmatprep.mubr.f32.mxu0 0.0
        %7842 = vmatmul.mubr.f32.gmra.mxu0 %v7472
        %v7843 = vpop.f32.mrf.mxu0
        %v7844 = vadd.f32 0.0, %v7843
        %v7845 = vpop.f32.mrf.mxu0
        %7846 = vmatprep.mubr.f32.mxu0 0.0
        %7847 = vmatmul.mubr.f32.gmra.mxu0 %v7475
        %v7848 = vpop.f32.mrf.mxu0
        %v7849 = vadd.f32 0.0, %v7848
        %v7850 = vpop.f32.mrf.mxu0
        %7851 = vmatprep.mubr.f32.mxu0 0.0
        %7852 = vmatmul.mubr.f32.gmra.mxu0 %v7478
        %v7853 = vpop.f32.mrf.mxu0
        %v7854 = vadd.f32 0.0, %v7853
        %v7855 = vpop.f32.mrf.mxu0
        %7856 = vmatprep.mubr.f32.mxu0 0.0
        %7857 = vmatmul.mubr.f32.gmra.mxu0 %v7481
        %v7858 = vpop.f32.mrf.mxu0
        %v7859 = vadd.f32 0.0, %v7858
        %v7860 = vpop.f32.mrf.mxu0
        %7861 = vmatprep.mubr.f32.mxu0 0.0
        %7862 = vmatmul.mubr.f32.gmra.mxu0 %v7484
        %v7863 = vpop.f32.mrf.mxu0
        %v7864 = vadd.f32 0.0, %v7863
        %v7865 = vpop.f32.mrf.mxu0
        %7866 = vmatprep.mubr.f32.mxu0 0.0
        %7867 = vmatmul.mubr.f32.gmra.mxu0 %v7487
        %v7868 = vpop.f32.mrf.mxu0
        %v7869 = vadd.f32 0.0, %v7868
        %v7870 = vpop.f32.mrf.mxu0
        %7871 = vmatprep.mubr.f32.mxu0 0.0
        %7872 = vmatmul.mubr.f32.gmra.mxu0 %v7490
        %v7873 = vpop.f32.mrf.mxu0
        %v7874 = vadd.f32 0.0, %v7873
        %v7875 = vpop.f32.mrf.mxu0
        %7876 = vdwg.mxu0
        %v7877 = vmul.f32 %v7172, %v7559
        %v7878 = vmul.f32 %v7173, %v7564
        %v7879 = vmul.f32 %v7174, %v7569
        %v7880 = vmul.f32 %v7175, %v7574
        %v7881 = vmul.f32 %v7176, %v7579
        %v7882 = vmul.f32 %v7177, %v7584
        %v7883 = vmul.f32 %v7178, %v7589
        %v7884 = vmul.f32 %v7179, %v7594
        %v7885 = vmul.f32 %v7180, %v7599
        %v7886 = vmul.f32 %v7181, %v7604
        %v7887 = vmul.f32 %v7182, %v7609
        %v7888 = vmul.f32 %v7183, %v7614
        %v7889 = vmul.f32 %v7184, %v7619
        %v7890 = vmul.f32 %v7185, %v7624
        %v7891 = vmul.f32 %v7186, %v7629
        %v7892 = vmul.f32 %v7187, %v7634
        %v7893 = vmul.f32 %v7188, %v7639
        %v7894 = vmul.f32 %v7189, %v7644
        %v7895 = vmul.f32 %v7190, %v7649
        %v7896 = vmul.f32 %v7191, %v7654
        %v7897 = vmul.f32 %v7192, %v7659
        %v7898 = vmul.f32 %v7193, %v7664
        %v7899 = vmul.f32 %v7194, %v7669
        %v7900 = vmul.f32 %v7195, %v7674
        %v7901 = vmul.f32 %v7196, %v7679
        %v7902 = vmul.f32 %v7197, %v7684
        %v7903 = vmul.f32 %v7198, %v7689
        %v7904 = vmul.f32 %v7199, %v7694
        %v7905 = vmul.f32 %v7200, %v7699
        %v7906 = vmul.f32 %v7201, %v7704
        %v7907 = vmul.f32 %v7202, %v7709
        %v7908 = vmul.f32 %v7203, %v7714
        %v7909 = vmul.f32 %v7204, %v7719
        %v7910 = vmul.f32 %v7205, %v7724
        %v7911 = vmul.f32 %v7206, %v7729
        %v7912 = vmul.f32 %v7207, %v7734
        %v7913 = vmul.f32 %v7208, %v7739
        %v7914 = vmul.f32 %v7209, %v7744
        %v7915 = vmul.f32 %v7210, %v7749
        %v7916 = vmul.f32 %v7211, %v7754
        %v7917 = vmul.f32 %v7212, %v7759
        %v7918 = vmul.f32 %v7213, %v7764
        %v7919 = vmul.f32 %v7214, %v7769
        %v7920 = vmul.f32 %v7215, %v7774
        %v7921 = vmul.f32 %v7216, %v7779
        %v7922 = vmul.f32 %v7217, %v7784
        %v7923 = vmul.f32 %v7218, %v7789
        %v7924 = vmul.f32 %v7219, %v7794
        %v7925 = vmul.f32 %v7220, %v7799
        %v7926 = vmul.f32 %v7221, %v7804
        %v7927 = vmul.f32 %v7222, %v7809
        %v7928 = vmul.f32 %v7223, %v7814
        %v7929 = vmul.f32 %v7224, %v7819
        %v7930 = vmul.f32 %v7225, %v7824
        %v7931 = vmul.f32 %v7226, %v7829
        %v7932 = vmul.f32 %v7227, %v7834
        %v7933 = vmul.f32 %v7228, %v7839
        %v7934 = vmul.f32 %v7229, %v7844
        %v7935 = vmul.f32 %v7230, %v7849
        %v7936 = vmul.f32 %v7231, %v7854
        %v7937 = vmul.f32 %v7232, %v7859
        %v7938 = vmul.f32 %v7233, %v7864
        %v7939 = vmul.f32 %v7234, %v7869
        %v7940 = vmul.f32 %v7235, %v7874
        %7941 = vst [vmem:[%s267] sm:$0xff] %v7877
        %7942 = vst [vmem:[%s267 + $0x8] sm:$0xff] %v7878
        %7943 = vst [vmem:[%s267 + $0x10] sm:$0xff] %v7879
        %7944 = vst [vmem:[%s267 + $0x18] sm:$0xff] %v7880
        %7945 = vst [vmem:[%s267 + $0x20] sm:$0xff] %v7881
        %7946 = vst [vmem:[%s267 + $0x28] sm:$0xff] %v7882
        %7947 = vst [vmem:[%s267 + $0x30] sm:$0xff] %v7883
        %7948 = vst [vmem:[%s267 + $0x38] sm:$0xff] %v7884
        %7949 = vst [vmem:[%s267 + $0x40] sm:$0xff] %v7885
        %7950 = vst [vmem:[%s267 + $0x48] sm:$0xff] %v7886
        %7951 = vst [vmem:[%s267 + $0x50] sm:$0xff] %v7887
        %7952 = vst [vmem:[%s267 + $0x58] sm:$0xff] %v7888
        %7953 = vst [vmem:[%s267 + $0x60] sm:$0xff] %v7889
        %7954 = vst [vmem:[%s267 + $0x68] sm:$0xff] %v7890
        %7955 = vst [vmem:[%s267 + $0x70] sm:$0xff] %v7891
        %7956 = vst [vmem:[%s267 + $0x78] sm:$0xff] %v7892
        %7957 = vst [vmem:[%s267 + $0x80] sm:$0xff] %v7893
        %7958 = vst [vmem:[%s267 + $0x88] sm:$0xff] %v7894
        %7959 = vst [vmem:[%s267 + $0x90] sm:$0xff] %v7895
        %7960 = vst [vmem:[%s267 + $0x98] sm:$0xff] %v7896
        %7961 = vst [vmem:[%s267 + $0xa0] sm:$0xff] %v7897
        %7962 = vst [vmem:[%s267 + $0xa8] sm:$0xff] %v7898
        %7963 = vst [vmem:[%s267 + $0xb0] sm:$0xff] %v7899
        %7964 = vst [vmem:[%s267 + $0xb8] sm:$0xff] %v7900
        %7965 = vst [vmem:[%s267 + $0xc0] sm:$0xff] %v7901
        %7966 = vst [vmem:[%s267 + $0xc8] sm:$0xff] %v7902
        %7967 = vst [vmem:[%s267 + $0xd0] sm:$0xff] %v7903
        %7968 = vst [vmem:[%s267 + $0xd8] sm:$0xff] %v7904
        %7969 = vst [vmem:[%s267 + $0xe0] sm:$0xff] %v7905
        %7970 = vst [vmem:[%s267 + $0xe8] sm:$0xff] %v7906
        %7971 = vst [vmem:[%s267 + $0xf0] sm:$0xff] %v7907
        %7972 = vst [vmem:[%s267 + $0xf8] sm:$0xff] %v7908
        %7973 = vst [vmem:[%s267 + $0x100] sm:$0xff] %v7909
        %7974 = vst [vmem:[%s267 + $0x108] sm:$0xff] %v7910
        %7975 = vst [vmem:[%s267 + $0x110] sm:$0xff] %v7911
        %7976 = vst [vmem:[%s267 + $0x118] sm:$0xff] %v7912
        %7977 = vst [vmem:[%s267 + $0x120] sm:$0xff] %v7913
        %7978 = vst [vmem:[%s267 + $0x128] sm:$0xff] %v7914
        %7979 = vst [vmem:[%s267 + $0x130] sm:$0xff] %v7915
        %7980 = vst [vmem:[%s267 + $0x138] sm:$0xff] %v7916
        %7981 = vst [vmem:[%s267 + $0x140] sm:$0xff] %v7917
        %7982 = vst [vmem:[%s267 + $0x148] sm:$0xff] %v7918
        %7983 = vst [vmem:[%s267 + $0x150] sm:$0xff] %v7919
        %7984 = vst [vmem:[%s267 + $0x158] sm:$0xff] %v7920
        %7985 = vst [vmem:[%s267 + $0x160] sm:$0xff] %v7921
        %7986 = vst [vmem:[%s267 + $0x168] sm:$0xff] %v7922
        %7987 = vst [vmem:[%s267 + $0x170] sm:$0xff] %v7923
        %7988 = vst [vmem:[%s267 + $0x178] sm:$0xff] %v7924
        %7989 = vst [vmem:[%s267 + $0x180] sm:$0xff] %v7925
        %7990 = vst [vmem:[%s267 + $0x188] sm:$0xff] %v7926
        %7991 = vst [vmem:[%s267 + $0x190] sm:$0xff] %v7927
        %7992 = vst [vmem:[%s267 + $0x198] sm:$0xff] %v7928
        %7993 = vst [vmem:[%s267 + $0x1a0] sm:$0xff] %v7929
        %7994 = vst [vmem:[%s267 + $0x1a8] sm:$0xff] %v7930
        %7995 = vst [vmem:[%s267 + $0x1b0] sm:$0xff] %v7931
        %7996 = vst [vmem:[%s267 + $0x1b8] sm:$0xff] %v7932
        %7997 = vst [vmem:[%s267 + $0x1c0] sm:$0xff] %v7933
        %7998 = vst [vmem:[%s267 + $0x1c8] sm:$0xff] %v7934
        %7999 = vst [vmem:[%s267 + $0x1d0] sm:$0xff] %v7935
        %8000 = vst [vmem:[%s267 + $0x1d8] sm:$0xff] %v7936
        %8001 = vst [vmem:[%s267 + $0x1e0] sm:$0xff] %v7937
        %8002 = vst [vmem:[%s267 + $0x1e8] sm:$0xff] %v7938
        %8003 = vst [vmem:[%s267 + $0x1f0] sm:$0xff] %v7939
        %8004 = vst [vmem:[%s267 + $0x1f8] sm:$0xff] %v7940
        %s8005 = sand.u32 %s119, 1
        %s8006 = scalar_lea.sflag [#allocation4], %s8005
        %s8007 = sand.u32 %s119, 1
        %s8008 = smul.addr %s8007, 512
        %s8009 = scalar_lea.vmem [#allocation8], %s8008
        // Predicated region
        $region49: #{tpu_custom_call.1} parent=35 // pred_check
          %p8010 = pneg %p129
        $region50: #{tpu_custom_call.1} parent=35 // pred_check_branch
          %8012 = sbr.rel (%p8010) target = $region52
        $region51: #{tpu_custom_call.1} parent=35 // pred_region
          %s8013 = smul.u32 64, %s22
          %s8015 = ssub.s32 8192, 8192
          %8016 = vsyncadd %s8006, %s8015
          %s8017 = smul.addr %s8013, 128
          %s8018 = scalar_lea.hbm %s4, %s8017
          %s8019 = sshll.u32 %s8009, 4
          %s8020 = int_to_ptr.vmem [resolvable:$true] %s8019
          %8025 = dma.vmem_to_hbm [thread:$0]  %s8020, 8192, %s8018, %s8006, 128, 128, 8
        $region52: #{tpu_custom_call.1} parent=35 // pred_fallthru
          _
      $region36: #{tpu_custom_call.1} parent=5 // pred_fallthru
        _
      %p8026 = scmp.le.s32.totalorder 2, %s17
      // Predicated region
      $region53: #{tpu_custom_call.1} parent=5 // pred_check
        %p8027 = pneg %p8026
      $region54: #{tpu_custom_call.1} parent=5 // pred_check_branch
        %8029 = sbr.rel (%p8027) target = $region56
      $region55: #{tpu_custom_call.1} parent=5 // pred_region
        %s8030 = ssub.s32 %s17, 2
        // Predicated region
        $region57: #{tpu_custom_call.1} parent=55 // pred_check
          %p8031 = pneg %p135
        $region58: #{tpu_custom_call.1} parent=55 // pred_check_branch
          %8033 = sbr.rel (%p8031) target = $region60
        $region59: #{tpu_custom_call.1} parent=55 // pred_region
          %s8034 = sand.u32 %s120, 1
          %s8035 = scalar_lea.sflag [#allocation4], %s8034
          %s8036 = sand.u32 %s120, 1
          %s8037 = smul.addr %s8036, 512
          %s8038 = scalar_lea.vmem [#allocation8], %s8037
          %8039 = dma.done %s8035, 8192
        $region60: #{tpu_custom_call.1} parent=55 // pred_fallthru
          _
      $region56: #{tpu_custom_call.1} parent=5 // pred_fallthru
        _
    $region6: #{tpu_custom_call.1} parent=1 // loop_footer
      %s21 = sadd.s32 1, %s17
    $region7: #{tpu_custom_call.1} parent=1 // loop_footer_branch
      %16 = sbr.rel target = $region3
    $region8: #{tpu_custom_call.1} parent=1 // loop_exit
      _
    %8040 = vsyncpa [#allocation3], 1
    %s8041 = scalar_lea.sflag [#allocation3], 1
    %8042 = vsyncpa %s8041, 1
    %8043 = vsyncpa [#allocation6], 1
    %8044 = vsyncpa [#allocation4], 1
    %s8045 = scalar_lea.sflag [#allocation4], 1
    %8046 = vsyncpa %s8045, 1

</llo_original>
